<compile_context>
chip_gen: v7x
topology: tpu7x:2x2x1
jax: 0.10.0
libtpu: 0.0.40
codegen_flags: <defaults>
</compile_context>

<pallas_src>
import functools

import jax
import jax.numpy as jnp
from jax.experimental import pallas as pl
from jax.experimental.pallas import tpu as pltpu


def _round_up(x, m):
    return (x + m - 1) // m * m


# ----------------------- tiled GEMM with fused BN (+ReLU) --------------------

def _matmul_bn_kernel(a_ref, b_ref, scale_ref, bias_ref, o_ref, acc_ref, *, relu):
    k = pl.program_id(2)

    @pl.when(k == 0)
    def _():
        acc_ref[...] = jnp.zeros_like(acc_ref)

    acc_ref[...] += jnp.dot(a_ref[...], b_ref[...],
                            preferred_element_type=jnp.float32)

    @pl.when(k == pl.num_programs(2) - 1)
    def _():
        y = acc_ref[...] * scale_ref[...] + bias_ref[...]   # folded BN, once
        if relu:
            y = jnp.maximum(y, 0.0)
        o_ref[...] = y.astype(o_ref.dtype)


def conv_bn_gemm(a, w, scale, bias, relu=True):
    """a: (M, K) bf16 rows, w: (K, N) bf16, scale/bias: (N,) f32 folded BN."""
    M, K = a.shape
    Kw, N = w.shape
    assert K == Kw

    # Pad to lane/sublane-friendly multiples, then pick tiles.
    Np = _round_up(N, 128)
    Kp = _round_up(K, 128)
    Mp0 = _round_up(M, 8)
    tm = min(256, Mp0)
    Mp = _round_up(Mp0, tm)
    tn = 256 if Np % 256 == 0 else 128
    tk = 512 if Kp % 512 == 0 else (256 if Kp % 256 == 0 else 128)

    a_p = jnp.pad(a, ((0, Mp - M), (0, Kp - K)))
    w_p = jnp.pad(w, ((0, Kp - K), (0, Np - N)))
    scale_p = jnp.pad(scale, (0, Np - N)).reshape(1, Np)
    bias_p = jnp.pad(bias, (0, Np - N)).reshape(1, Np)

    grid = (Mp // tm, Np // tn, Kp // tk)
    kernel = functools.partial(_matmul_bn_kernel, relu=relu)
    ce = pl.CostEstimate(
        flops=2 * Mp * Kp * Np,
        transcendentals=0,
        bytes_accessed=(Mp * Kp + Kp * Np) * 2 + Mp * Np * 4 + 2 * Np * 4)

    out = pl.pallas_call(
        kernel,
        out_shape=jax.ShapeDtypeStruct((Mp, Np), jnp.float32),
        grid=grid,
        in_specs=[
            pl.BlockSpec((tm, tk), lambda i, j, k: (i, k)),
            pl.BlockSpec((tk, tn), lambda i, j, k: (k, j)),
            pl.BlockSpec((1, tn), lambda i, j, k: (0, j)),
            pl.BlockSpec((1, tn), lambda i, j, k: (0, j)),
        ],
        out_specs=pl.BlockSpec((tm, tn), lambda i, j, k: (i, j)),
        scratch_shapes=[pltpu.VMEM((tm, tn), jnp.float32)],
        compiler_params=pltpu.CompilerParams(
            dimension_semantics=("parallel", "parallel", "arbitrary")),
        cost_estimate=ce,
    )(a_p, w_p, scale_p, bias_p)
    return out[:M, :N]


# ------------------------- MaxPool2d(3, stride=2, pad=1) ---------------------

def _maxpool3x3s2_kernel(p00_ref, p01_ref, p10_ref, p11_ref, o_ref):
    oh, ow = o_ref.shape[1], o_ref.shape[2]
    p00 = p00_ref[0]            # (oh+1, ow+1, C) even-row / even-col phase
    p01 = p01_ref[0]            # even-row / odd-col
    p10 = p10_ref[0]            # odd-row  / even-col
    p11 = p11_ref[0]            # odd-row  / odd-col
    # 9-tap window max as a VPU jnp.maximum chain over shifted unit-stride reads.
    m = p00[:oh, :ow]
    m = jnp.maximum(m, p00[:oh, 1:ow + 1])
    m = jnp.maximum(m, p00[1:oh + 1, :ow])
    m = jnp.maximum(m, p00[1:oh + 1, 1:ow + 1])
    m = jnp.maximum(m, p01[:oh, :ow])
    m = jnp.maximum(m, p01[1:oh + 1, :ow])
    m = jnp.maximum(m, p10[:oh, :ow])
    m = jnp.maximum(m, p10[:oh, 1:ow + 1])
    m = jnp.maximum(m, p11[:oh, :ow])
    o_ref[0] = m


def max_pool_3x3_s2_p1(x):
    """x: (B, H, W, C) f32 with even H, W  ->  (B, H//2, W//2, C)."""
    B, H, W, C = x.shape
    assert H % 2 == 0 and W % 2 == 0
    oh, ow = (H + 2 - 3) // 2 + 1, (W + 2 - 3) // 2 + 1
    xp = jnp.pad(x, ((0, 0), (1, 1), (1, 1), (0, 0)),
                 constant_values=-jnp.inf)
    # Stride-2 phase decomposition: pure slicing (~1x input in HBM) instead of
    # the previous 9x-inflated (M, 9, C) patch tensor.
    p00 = xp[:, 0::2, 0::2, :]
    p01 = xp[:, 0::2, 1::2, :]
    p10 = xp[:, 1::2, 0::2, :]
    p11 = xp[:, 1::2, 1::2, :]
    ph, pw = p00.shape[1], p00.shape[2]      # = oh+1, ow+1
    spec = pl.BlockSpec((1, ph, pw, C), lambda b: (b, 0, 0, 0))
    ce = pl.CostEstimate(flops=9 * B * oh * ow * C, transcendentals=0,
                         bytes_accessed=4 * B * ph * pw * C * 4 + B * oh * ow * C * 4)
    return pl.pallas_call(
        _maxpool3x3s2_kernel,
        out_shape=jax.ShapeDtypeStruct((B, oh, ow, C), jnp.float32),
        grid=(B,),
        in_specs=[spec, spec, spec, spec],
        out_specs=pl.BlockSpec((1, oh, ow, C), lambda b: (b, 0, 0, 0)),
        compiler_params=pltpu.CompilerParams(dimension_semantics=("parallel",)),
        cost_estimate=ce,
    )(p00, p01, p10, p11)


# ---------------- global avg + adaptive max pool + BatchNorm1d ---------------

def _pool_bn_kernel(x_ref, scale_ref, bias_ref, o_ref):
    x = x_ref[...]                                    # (B, HW, C)
    v = jnp.mean(x, axis=1) + jnp.max(x, axis=1)      # avgpool + adaptive maxpool(1,1)
    o_ref[...] = v * scale_ref[...] + bias_ref[...]   # BatchNorm1d (eval, folded)


def global_pool_bn(x, scale, bias):
    B, HW, C = x.shape
    ce = pl.CostEstimate(flops=4 * B * HW * C, transcendentals=0,
                         bytes_accessed=B * HW * C * 4 + B * C * 4 + 2 * C * 4)
    return pl.pallas_call(
        _pool_bn_kernel,
        out_shape=jax.ShapeDtypeStruct((B, C), jnp.float32),
        grid=(1,),
        in_specs=[
            pl.BlockSpec((B, HW, C), lambda i: (0, 0, 0)),
            pl.BlockSpec((1, C), lambda i: (0, 0)),
            pl.BlockSpec((1, C), lambda i: (0, 0)),
        ],
        out_specs=pl.BlockSpec((B, C), lambda i: (0, 0)),
        cost_estimate=ce,
    )(x, scale.reshape(1, C), bias.reshape(1, C))


# --------------------------------- JAX glue ----------------------------------

def extract_patches(x, kh, kw, stride, pad):
    """x: (B, H, W, C) -> (B, OH, OW, KH*KW, C) sliding windows (zero padded)."""
    if pad:
        x = jnp.pad(x, ((0, 0), (pad, pad), (pad, pad), (0, 0)))
    _, H, W, _ = x.shape
    oh = (H - kh) // stride + 1
    ow = (W - kw) // stride + 1
    cols = []
    for i in range(kh):
        for j in range(kw):
            cols.append(x[:, i:i + stride * oh:stride,
                          j:j + stride * ow:stride, :])
    return jnp.stack(cols, axis=3), oh, ow


def conv_bn_relu(x, params, stride, pad, relu=True):
    w, scale, bias = params["w"], params["scale"], params["bias"]
    kh, kw, cin, cout = w.shape
    B = x.shape[0]
    xb = x.astype(jnp.bfloat16)          # MXU-native; halves A-matrix HBM bytes
    wmat = w.reshape(kh * kw * cin, cout).astype(jnp.bfloat16)
    if kh == 1 and kw == 1 and stride == 1 and pad == 0:
        # 1x1 conv: activations feed the GEMM directly, no patch extraction.
        oh, ow = x.shape[1], x.shape[2]
        a = xb.reshape(B * oh * ow, cin)
    else:
        # TODO(synk): im2col still materializes a KH*KW-inflated (bf16) copy in
        # HBM; a direct-conv kernel reading shifted rows of the padded NHWC
        # input per tap would remove it entirely.
        p, oh, ow = extract_patches(xb, kh, kw, stride, pad)
        a = p.reshape(B * oh * ow, kh * kw * cin)
    y = conv_bn_gemm(a, wmat, scale, bias, relu=relu)
    return y.reshape(B, oh, ow, cout)


def init_conv_bn(key, kh, kw, cin, cout, eps=1e-5):
    # Conv2d(bias=False) weight + eval-mode BatchNorm2d folded into scale/bias.
    w = jax.random.normal(key, (kh, kw, cin, cout), jnp.float32)
    w = w / jnp.sqrt(jnp.float32(kh * kw * cin))
    gamma = jnp.ones((cout,), jnp.float32)
    beta = jnp.zeros((cout,), jnp.float32)
    rmean = jnp.zeros((cout,), jnp.float32)
    rvar = jnp.ones((cout,), jnp.float32)
    scale = gamma / jnp.sqrt(rvar + eps)
    bias = beta - rmean * scale
    return {"w": w, "scale": scale, "bias": bias}


def osnet_reid_forward(x_nchw, params):
    # PyTorch input convention NCHW -> kernel layout NHWC.
    x = jnp.transpose(x_nchw, (0, 2, 3, 1))
    x = conv_bn_relu(x, params["conv1"], stride=2, pad=3)       # 7x7, s2
    x = max_pool_3x3_s2_p1(x)                                   # MaxPool2d(3, 2, 1)
    # TODO(synk): OSNet conv2/conv3/conv4 are stacks of omni-scale residual
    # blocks (internals live in model_base, not in this module); simplified to
    # single Conv+BN+ReLU stages with OSNet's channel widths 256/384/512.
    x = conv_bn_relu(x, params["conv2"], stride=1, pad=1)       # 3x3, s1
    x = conv_bn_relu(x, params["conv3"], stride=2, pad=1)       # 3x3, s2
    x = conv_bn_relu(x, params["conv4"], stride=2, pad=1)       # 3x3, s2
    x = conv_bn_relu(x, params["conv5"], stride=1, pad=0)       # 1x1 (OSNet conv5)
    B, H, W, C = x.shape
    # v = avgpool(x) + adaptive_maxpool(x); v.view(B, -1); last_bn(v)
    return global_pool_bn(x.reshape(B, H * W, C),
                          params["last_bn"]["scale"],
                          params["last_bn"]["bias"])


if __name__ == "__main__":
    key = jax.random.PRNGKey(0)
    keys = jax.random.split(key, 8)
    params = {
        "conv1": init_conv_bn(keys[0], 7, 7, 3, 64),
        "conv2": init_conv_bn(keys[1], 3, 3, 64, 256),
        "conv3": init_conv_bn(keys[2], 3, 3, 256, 384),
        "conv4": init_conv_bn(keys[3], 3, 3, 384, 512),
        "conv5": init_conv_bn(keys[4], 1, 1, 512, 512),
    }
    # BatchNorm1d(512), eval-mode, deterministic init (gamma=1, beta=0, rm=0, rv=1)
    eps = 1e-5
    bn_scale = jnp.ones((512,), jnp.float32) / jnp.sqrt(jnp.ones((512,), jnp.float32) + eps)
    bn_bias = jnp.zeros((512,), jnp.float32)
    params["last_bn"] = {"scale": bn_scale, "bias": bn_bias}

    # Small synthetic input, PyTorch NCHW convention: (batch=2, C=3, 32, 32)
    x = jax.random.normal(keys[5], (2, 3, 32, 32), jnp.float32)

    out = jax.jit(osnet_reid_forward)(x, params)
    out = jax.block_until_ready(out)
    assert out.shape == (2, 512) and out.dtype == jnp.float32
    assert bool(jnp.all(jnp.isfinite(out)))
    print("KERNEL_OK")
</pallas_src>

<mosaic_0001>
module attributes {stable_mosaic.version = 11 : i64} {
  func.func @_matmul_bn_kernel(%arg0: i32, %arg1: i32, %arg2: i32, %arg3: memref<256x256xbf16, #tpu.memory_space<vmem>>, %arg4: memref<256x128xbf16, #tpu.memory_space<vmem>>, %arg5: memref<1x128xf32, #tpu.memory_space<vmem>>, %arg6: memref<1x128xf32, #tpu.memory_space<vmem>>, %arg7: memref<256x128xf32, #tpu.memory_space<vmem>>, %arg8: memref<256x128xf32, #tpu.memory_space<vmem>>) attributes {dimension_semantics = [#tpu.dimension_semantics<parallel>, #tpu.dimension_semantics<parallel>, #tpu.dimension_semantics<arbitrary>], iteration_bounds = array<i64: 2, 1, 1>, scalar_prefetch = 0 : i64, scratch_operands = 1 : i64, tpu.core_type = #tpu.core_type<tc>, window_params = [{transform_indices = @transform_0, window_bounds = array<i64: 256, 256>}, {transform_indices = @transform_1, window_bounds = array<i64: 256, 128>}, {transform_indices = @transform_2, window_bounds = array<i64: 1, 128>}, {transform_indices = @transform_3, window_bounds = array<i64: 1, 128>}, {transform_indices = @transform_4, window_bounds = array<i64: 256, 128>}]} {
    %c0_i32 = arith.constant 0 : i32
    %0 = arith.cmpi eq, %arg2, %c0_i32 : i32
    %1 = arith.extui %0 : i1 to i32
    %c0_i32_0 = arith.constant 0 : i32
    %2 = arith.cmpi ne, %1, %c0_i32_0 : i32
    scf.if %2 {
      %cst_10 = arith.constant 0.000000e+00 : f32
      %12 = vector.broadcast %cst_10 : f32 to vector<256x128xf32>
      %c0_11 = arith.constant 0 : index
      %c0_12 = arith.constant 0 : index
      %13 = vector.load %arg8[%c0_11, %c0_12] : memref<256x128xf32, #tpu.memory_space<vmem>>, vector<256x128xf32>
      tpu.vector_store %arg8[%c0_11, %c0_12], %12 {strides = array<i32>} : memref<256x128xf32, #tpu.memory_space<vmem>>, vector<256x128xf32>,
    } else {
    }
    %c0 = arith.constant 0 : index
    %c0_1 = arith.constant 0 : index
    %3 = vector.load %arg8[%c0, %c0_1] : memref<256x128xf32, #tpu.memory_space<vmem>>, vector<256x128xf32>
    %c0_2 = arith.constant 0 : index
    %c0_3 = arith.constant 0 : index
    %4 = vector.load %arg3[%c0_2, %c0_3] : memref<256x256xbf16, #tpu.memory_space<vmem>>, vector<256x256xbf16>
    %c0_4 = arith.constant 0 : index
    %c0_5 = arith.constant 0 : index
    %5 = vector.load %arg4[%c0_4, %c0_5] : memref<256x128xbf16, #tpu.memory_space<vmem>>, vector<256x128xbf16>
    %cst = arith.constant dense<0.000000e+00> : vector<256x128xf32>
    %6 = tpu.matmul %4, %5, %cst {dimension_numbers = #tpu.dot_dimension_numbers<[1], [0], [0], [1], [0, 0, 1, 1], [], []>} : vector<256x256xbf16>, vector<256x128xbf16>, vector<256x128xf32> -> vector<256x128xf32>
    %7 = arith.addf %3, %6 : vector<256x128xf32>
    %c0_6 = arith.constant 0 : index
    %c0_7 = arith.constant 0 : index
    %8 = vector.load %arg8[%c0_6, %c0_7] : memref<256x128xf32, #tpu.memory_space<vmem>>, vector<256x128xf32>
    tpu.vector_store %arg8[%c0_6, %c0_7], %7 {strides = array<i32>} : memref<256x128xf32, #tpu.memory_space<vmem>>, vector<256x128xf32>,
    %c0_i32_8 = arith.constant 0 : i32
    %9 = arith.cmpi eq, %arg2, %c0_i32_8 : i32
    %10 = arith.extui %9 : i1 to i32
    %c0_i32_9 = arith.constant 0 : i32
    %11 = arith.cmpi ne, %10, %c0_i32_9 : i32
    scf.if %11 {
      %c0_10 = arith.constant 0 : index
      %c0_11 = arith.constant 0 : index
      %12 = vector.load %arg8[%c0_10, %c0_11] : memref<256x128xf32, #tpu.memory_space<vmem>>, vector<256x128xf32>
      %c0_12 = arith.constant 0 : index
      %c0_13 = arith.constant 0 : index
      %13 = vector.load %arg5[%c0_12, %c0_13] : memref<1x128xf32, #tpu.memory_space<vmem>>, vector<1x128xf32>
      %14 = vector.broadcast %13 : vector<1x128xf32> to vector<256x128xf32>
      %15 = arith.mulf %12, %14 : vector<256x128xf32>
      %c0_14 = arith.constant 0 : index
      %c0_15 = arith.constant 0 : index
      %16 = vector.load %arg6[%c0_14, %c0_15] : memref<1x128xf32, #tpu.memory_space<vmem>>, vector<1x128xf32>
      %17 = vector.broadcast %16 : vector<1x128xf32> to vector<256x128xf32>
      %18 = arith.addf %15, %17 : vector<256x128xf32>
      %cst_16 = arith.constant 0.000000e+00 : f32
      %19 = vector.broadcast %cst_16 : f32 to vector<256x128xf32>
      %20 = arith.maximumf %18, %19 : vector<256x128xf32>
      %c0_17 = arith.constant 0 : index
      %c0_18 = arith.constant 0 : index
      %21 = vector.load %arg7[%c0_17, %c0_18] : memref<256x128xf32, #tpu.memory_space<vmem>>, vector<256x128xf32>
      tpu.vector_store %arg7[%c0_17, %c0_18], %20 {strides = array<i32>} : memref<256x128xf32, #tpu.memory_space<vmem>>, vector<256x128xf32>,
    } else {
    }
    return
  }
  func.func @transform_0(%arg0: i32, %arg1: i32, %arg2: i32) -> (i32, i32) {
    %c0_i32 = arith.constant 0 : i32
    return %arg0, %arg2 : i32, i32
  }
  func.func @transform_1(%arg0: i32, %arg1: i32, %arg2: i32) -> (i32, i32) {
    %c0_i32 = arith.constant 0 : i32
    return %arg2, %arg1 : i32, i32
  }
  func.func @transform_2(%arg0: i32, %arg1: i32, %arg2: i32) -> (i32, i32) {
    %c0_i32 = arith.constant 0 : i32
    %c0_i32_0 = arith.constant 0 : i32
    return %c0_i32, %arg1 : i32, i32
  }
  func.func @transform_3(%arg0: i32, %arg1: i32, %arg2: i32) -> (i32, i32) {
    %c0_i32 = arith.constant 0 : i32
    %c0_i32_0 = arith.constant 0 : i32
    return %c0_i32, %arg1 : i32, i32
  }
  func.func @transform_4(%arg0: i32, %arg1: i32, %arg2: i32) -> (i32, i32) {
    %c0_i32 = arith.constant 0 : i32
    return %arg0, %arg1 : i32, i32
  }
}

module attributes {stable_mosaic.version = 11 : i64} {
  func.func @_maxpool3x3s2_kernel(%arg0: i32, %arg1: memref<1x9x9x64xf32, #tpu.memory_space<vmem>>, %arg2: memref<1x9x9x64xf32, #tpu.memory_space<vmem>>, %arg3: memref<1x9x9x64xf32, #tpu.memory_space<vmem>>, %arg4: memref<1x9x9x64xf32, #tpu.memory_space<vmem>>, %arg5: memref<1x8x8x64xf32, #tpu.memory_space<vmem>>) attributes {dimension_semantics = [#tpu.dimension_semantics<parallel>], iteration_bounds = array<i64: 2>, scalar_prefetch = 0 : i64, scratch_operands = 0 : i64, tpu.core_type = #tpu.core_type<tc>, window_params = [{transform_indices = @transform_0, window_bounds = array<i64: 1, 9, 9, 64>}, {transform_indices = @transform_1, window_bounds = array<i64: 1, 9, 9, 64>}, {transform_indices = @transform_2, window_bounds = array<i64: 1, 9, 9, 64>}, {transform_indices = @transform_3, window_bounds = array<i64: 1, 9, 9, 64>}, {transform_indices = @transform_4, window_bounds = array<i64: 1, 8, 8, 64>}]} {
    %c0 = arith.constant 0 : index
    %c0_0 = arith.constant 0 : index
    %c0_1 = arith.constant 0 : index
    %c0_2 = arith.constant 0 : index
    %0 = vector.load %arg1[%c0, %c0_0, %c0_1, %c0_2] : memref<1x9x9x64xf32, #tpu.memory_space<vmem>>, vector<1x9x9x64xf32>
    %1 = vector.shape_cast %0 : vector<1x9x9x64xf32> to vector<9x9x64xf32>
    %c0_3 = arith.constant 0 : index
    %c0_4 = arith.constant 0 : index
    %c0_5 = arith.constant 0 : index
    %c0_6 = arith.constant 0 : index
    %2 = vector.load %arg2[%c0_3, %c0_4, %c0_5, %c0_6] : memref<1x9x9x64xf32, #tpu.memory_space<vmem>>, vector<1x9x9x64xf32>
    %3 = vector.shape_cast %2 : vector<1x9x9x64xf32> to vector<9x9x64xf32>
    %c0_7 = arith.constant 0 : index
    %c0_8 = arith.constant 0 : index
    %c0_9 = arith.constant 0 : index
    %c0_10 = arith.constant 0 : index
    %4 = vector.load %arg3[%c0_7, %c0_8, %c0_9, %c0_10] : memref<1x9x9x64xf32, #tpu.memory_space<vmem>>, vector<1x9x9x64xf32>
    %5 = vector.shape_cast %4 : vector<1x9x9x64xf32> to vector<9x9x64xf32>
    %c0_11 = arith.constant 0 : index
    %c0_12 = arith.constant 0 : index
    %c0_13 = arith.constant 0 : index
    %c0_14 = arith.constant 0 : index
    %6 = vector.load %arg4[%c0_11, %c0_12, %c0_13, %c0_14] : memref<1x9x9x64xf32, #tpu.memory_space<vmem>>, vector<1x9x9x64xf32>
    %7 = vector.shape_cast %6 : vector<1x9x9x64xf32> to vector<9x9x64xf32>
    %8 = vector.extract_strided_slice %1 {offsets = [0, 0, 0], sizes = [8, 8, 64], strides = [1, 1, 1]} : vector<9x9x64xf32> to vector<8x8x64xf32>
    %9 = vector.extract_strided_slice %1 {offsets = [0, 1, 0], sizes = [8, 8, 64], strides = [1, 1, 1]} : vector<9x9x64xf32> to vector<8x8x64xf32>
    %10 = arith.maximumf %8, %9 : vector<8x8x64xf32>
    %11 = vector.extract_strided_slice %1 {offsets = [1, 0, 0], sizes = [8, 8, 64], strides = [1, 1, 1]} : vector<9x9x64xf32> to vector<8x8x64xf32>
    %12 = arith.maximumf %10, %11 : vector<8x8x64xf32>
    %13 = vector.extract_strided_slice %1 {offsets = [1, 1, 0], sizes = [8, 8, 64], strides = [1, 1, 1]} : vector<9x9x64xf32> to vector<8x8x64xf32>
    %14 = arith.maximumf %12, %13 : vector<8x8x64xf32>
    %15 = vector.extract_strided_slice %3 {offsets = [0, 0, 0], sizes = [8, 8, 64], strides = [1, 1, 1]} : vector<9x9x64xf32> to vector<8x8x64xf32>
    %16 = arith.maximumf %14, %15 : vector<8x8x64xf32>
    %17 = vector.extract_strided_slice %3 {offsets = [1, 0, 0], sizes = [8, 8, 64], strides = [1, 1, 1]} : vector<9x9x64xf32> to vector<8x8x64xf32>
    %18 = arith.maximumf %16, %17 : vector<8x8x64xf32>
    %19 = vector.extract_strided_slice %5 {offsets = [0, 0, 0], sizes = [8, 8, 64], strides = [1, 1, 1]} : vector<9x9x64xf32> to vector<8x8x64xf32>
    %20 = arith.maximumf %18, %19 : vector<8x8x64xf32>
    %21 = vector.extract_strided_slice %5 {offsets = [0, 1, 0], sizes = [8, 8, 64], strides = [1, 1, 1]} : vector<9x9x64xf32> to vector<8x8x64xf32>
    %22 = arith.maximumf %20, %21 : vector<8x8x64xf32>
    %23 = vector.extract_strided_slice %7 {offsets = [0, 0, 0], sizes = [8, 8, 64], strides = [1, 1, 1]} : vector<9x9x64xf32> to vector<8x8x64xf32>
    %24 = arith.maximumf %22, %23 : vector<8x8x64xf32>
    %c0_15 = arith.constant 0 : index
    %c0_16 = arith.constant 0 : index
    %c0_17 = arith.constant 0 : index
    %c0_18 = arith.constant 0 : index
    %25 = vector.load %arg5[%c0_15, %c0_16, %c0_17, %c0_18] : memref<1x8x8x64xf32, #tpu.memory_space<vmem>>, vector<1x8x8x64xf32>
    %26 = vector.shape_cast %25 : vector<1x8x8x64xf32> to vector<8x8x64xf32>
    %27 = vector.shape_cast %24 : vector<8x8x64xf32> to vector<1x8x8x64xf32>
    tpu.vector_store %arg5[%c0_15, %c0_16, %c0_17, %c0_18], %27 {strides = array<i32>} : memref<1x8x8x64xf32, #tpu.memory_space<vmem>>, vector<1x8x8x64xf32>,
    return
  }
  func.func @transform_0(%arg0: i32) -> (i32, i32, i32, i32) {
    %c0_i32 = arith.constant 0 : i32
    %c0_i32_0 = arith.constant 0 : i32
    %c0_i32_1 = arith.constant 0 : i32
    %c0_i32_2 = arith.constant 0 : i32
    return %arg0, %c0_i32, %c0_i32_0, %c0_i32_1 : i32, i32, i32, i32
  }
  func.func @transform_1(%arg0: i32) -> (i32, i32, i32, i32) {
    %c0_i32 = arith.constant 0 : i32
    %c0_i32_0 = arith.constant 0 : i32
    %c0_i32_1 = arith.constant 0 : i32
    %c0_i32_2 = arith.constant 0 : i32
    return %arg0, %c0_i32, %c0_i32_0, %c0_i32_1 : i32, i32, i32, i32
  }
  func.func @transform_2(%arg0: i32) -> (i32, i32, i32, i32) {
    %c0_i32 = arith.constant 0 : i32
    %c0_i32_0 = arith.constant 0 : i32
    %c0_i32_1 = arith.constant 0 : i32
    %c0_i32_2 = arith.constant 0 : i32
    return %arg0, %c0_i32, %c0_i32_0, %c0_i32_1 : i32, i32, i32, i32
  }
  func.func @transform_3(%arg0: i32) -> (i32, i32, i32, i32) {
    %c0_i32 = arith.constant 0 : i32
    %c0_i32_0 = arith.constant 0 : i32
    %c0_i32_1 = arith.constant 0 : i32
    %c0_i32_2 = arith.constant 0 : i32
    return %arg0, %c0_i32, %c0_i32_0, %c0_i32_1 : i32, i32, i32, i32
  }
  func.func @transform_4(%arg0: i32) -> (i32, i32, i32, i32) {
    %c0_i32 = arith.constant 0 : i32
    %c0_i32_0 = arith.constant 0 : i32
    %c0_i32_1 = arith.constant 0 : i32
    %c0_i32_2 = arith.constant 0 : i32
    return %arg0, %c0_i32, %c0_i32_0, %c0_i32_1 : i32, i32, i32, i32
  }
}

module attributes {stable_mosaic.version = 11 : i64} {
  func.func @_matmul_bn_kernel(%arg0: i32, %arg1: i32, %arg2: i32, %arg3: memref<128x128xbf16, #tpu.memory_space<vmem>>, %arg4: memref<128x256xbf16, #tpu.memory_space<vmem>>, %arg5: memref<1x256xf32, #tpu.memory_space<vmem>>, %arg6: memref<1x256xf32, #tpu.memory_space<vmem>>, %arg7: memref<128x256xf32, #tpu.memory_space<vmem>>, %arg8: memref<128x256xf32, #tpu.memory_space<vmem>>) attributes {dimension_semantics = [#tpu.dimension_semantics<parallel>, #tpu.dimension_semantics<parallel>, #tpu.dimension_semantics<arbitrary>], iteration_bounds = array<i64: 1, 1, 5>, scalar_prefetch = 0 : i64, scratch_operands = 1 : i64, tpu.core_type = #tpu.core_type<tc>, window_params = [{transform_indices = @transform_0, window_bounds = array<i64: 128, 128>}, {transform_indices = @transform_1, window_bounds = array<i64: 128, 256>}, {transform_indices = @transform_2, window_bounds = array<i64: 1, 256>}, {transform_indices = @transform_3, window_bounds = array<i64: 1, 256>}, {transform_indices = @transform_4, window_bounds = array<i64: 128, 256>}]} {
    %c0_i32 = arith.constant 0 : i32
    %0 = arith.cmpi eq, %arg2, %c0_i32 : i32
    %1 = arith.extui %0 : i1 to i32
    %c0_i32_0 = arith.constant 0 : i32
    %2 = arith.cmpi ne, %1, %c0_i32_0 : i32
    scf.if %2 {
      %cst_9 = arith.constant 0.000000e+00 : f32
      %12 = vector.broadcast %cst_9 : f32 to vector<128x256xf32>
      %c0_10 = arith.constant 0 : index
      %c0_11 = arith.constant 0 : index
      %13 = vector.load %arg8[%c0_10, %c0_11] : memref<128x256xf32, #tpu.memory_space<vmem>>, vector<128x256xf32>
      tpu.vector_store %arg8[%c0_10, %c0_11], %12 {strides = array<i32>} : memref<128x256xf32, #tpu.memory_space<vmem>>, vector<128x256xf32>,
    } else {
    }
    %c0 = arith.constant 0 : index
    %c0_1 = arith.constant 0 : index
    %3 = vector.load %arg8[%c0, %c0_1] : memref<128x256xf32, #tpu.memory_space<vmem>>, vector<128x256xf32>
    %c0_2 = arith.constant 0 : index
    %c0_3 = arith.constant 0 : index
    %4 = vector.load %arg3[%c0_2, %c0_3] : memref<128x128xbf16, #tpu.memory_space<vmem>>, vector<128x128xbf16>
    %c0_4 = arith.constant 0 : index
    %c0_5 = arith.constant 0 : index
    %5 = vector.load %arg4[%c0_4, %c0_5] : memref<128x256xbf16, #tpu.memory_space<vmem>>, vector<128x256xbf16>
    %cst = arith.constant dense<0.000000e+00> : vector<128x256xf32>
    %6 = tpu.matmul %4, %5, %cst {dimension_numbers = #tpu.dot_dimension_numbers<[1], [0], [0], [1], [0, 0, 1, 1], [], []>} : vector<128x128xbf16>, vector<128x256xbf16>, vector<128x256xf32> -> vector<128x256xf32>
    %7 = arith.addf %3, %6 : vector<128x256xf32>
    %c0_6 = arith.constant 0 : index
    %c0_7 = arith.constant 0 : index
    %8 = vector.load %arg8[%c0_6, %c0_7] : memref<128x256xf32, #tpu.memory_space<vmem>>, vector<128x256xf32>
    tpu.vector_store %arg8[%c0_6, %c0_7], %7 {strides = array<i32>} : memref<128x256xf32, #tpu.memory_space<vmem>>, vector<128x256xf32>,
    %c4_i32 = arith.constant 4 : i32
    %9 = arith.cmpi eq, %arg2, %c4_i32 : i32
    %10 = arith.extui %9 : i1 to i32
    %c0_i32_8 = arith.constant 0 : i32
    %11 = arith.cmpi ne, %10, %c0_i32_8 : i32
    scf.if %11 {
      %c0_9 = arith.constant 0 : index
      %c0_10 = arith.constant 0 : index
      %12 = vector.load %arg8[%c0_9, %c0_10] : memref<128x256xf32, #tpu.memory_space<vmem>>, vector<128x256xf32>
      %c0_11 = arith.constant 0 : index
      %c0_12 = arith.constant 0 : index
      %13 = vector.load %arg5[%c0_11, %c0_12] : memref<1x256xf32, #tpu.memory_space<vmem>>, vector<1x256xf32>
      %14 = vector.broadcast %13 : vector<1x256xf32> to vector<128x256xf32>
      %15 = arith.mulf %12, %14 : vector<128x256xf32>
      %c0_13 = arith.constant 0 : index
      %c0_14 = arith.constant 0 : index
      %16 = vector.load %arg6[%c0_13, %c0_14] : memref<1x256xf32, #tpu.memory_space<vmem>>, vector<1x256xf32>
      %17 = vector.broadcast %16 : vector<1x256xf32> to vector<128x256xf32>
      %18 = arith.addf %15, %17 : vector<128x256xf32>
      %cst_15 = arith.constant 0.000000e+00 : f32
      %19 = vector.broadcast %cst_15 : f32 to vector<128x256xf32>
      %20 = arith.maximumf %18, %19 : vector<128x256xf32>
      %c0_16 = arith.constant 0 : index
      %c0_17 = arith.constant 0 : index
      %21 = vector.load %arg7[%c0_16, %c0_17] : memref<128x256xf32, #tpu.memory_space<vmem>>, vector<128x256xf32>
      tpu.vector_store %arg7[%c0_16, %c0_17], %20 {strides = array<i32>} : memref<128x256xf32, #tpu.memory_space<vmem>>, vector<128x256xf32>,
    } else {
    }
    return
  }
  func.func @transform_0(%arg0: i32, %arg1: i32, %arg2: i32) -> (i32, i32) {
    %c0_i32 = arith.constant 0 : i32
    return %arg0, %arg2 : i32, i32
  }
  func.func @transform_1(%arg0: i32, %arg1: i32, %arg2: i32) -> (i32, i32) {
    %c0_i32 = arith.constant 0 : i32
    return %arg2, %arg1 : i32, i32
  }
  func.func @transform_2(%arg0: i32, %arg1: i32, %arg2: i32) -> (i32, i32) {
    %c0_i32 = arith.constant 0 : i32
    %c0_i32_0 = arith.constant 0 : i32
    return %c0_i32, %arg1 : i32, i32
  }
  func.func @transform_3(%arg0: i32, %arg1: i32, %arg2: i32) -> (i32, i32) {
    %c0_i32 = arith.constant 0 : i32
    %c0_i32_0 = arith.constant 0 : i32
    return %c0_i32, %arg1 : i32, i32
  }
  func.func @transform_4(%arg0: i32, %arg1: i32, %arg2: i32) -> (i32, i32) {
    %c0_i32 = arith.constant 0 : i32
    return %arg0, %arg1 : i32, i32
  }
}

module attributes {stable_mosaic.version = 11 : i64} {
  func.func @_matmul_bn_kernel(%arg0: i32, %arg1: i32, %arg2: i32, %arg3: memref<32x256xbf16, #tpu.memory_space<vmem>>, %arg4: memref<256x128xbf16, #tpu.memory_space<vmem>>, %arg5: memref<1x128xf32, #tpu.memory_space<vmem>>, %arg6: memref<1x128xf32, #tpu.memory_space<vmem>>, %arg7: memref<32x128xf32, #tpu.memory_space<vmem>>, %arg8: memref<32x128xf32, #tpu.memory_space<vmem>>) attributes {dimension_semantics = [#tpu.dimension_semantics<parallel>, #tpu.dimension_semantics<parallel>, #tpu.dimension_semantics<arbitrary>], iteration_bounds = array<i64: 1, 3, 9>, scalar_prefetch = 0 : i64, scratch_operands = 1 : i64, tpu.core_type = #tpu.core_type<tc>, window_params = [{transform_indices = @transform_0, window_bounds = array<i64: 32, 256>}, {transform_indices = @transform_1, window_bounds = array<i64: 256, 128>}, {transform_indices = @transform_2, window_bounds = array<i64: 1, 128>}, {transform_indices = @transform_3, window_bounds = array<i64: 1, 128>}, {transform_indices = @transform_4, window_bounds = array<i64: 32, 128>}]} {
    %c0_i32 = arith.constant 0 : i32
    %0 = arith.cmpi eq, %arg2, %c0_i32 : i32
    %1 = arith.extui %0 : i1 to i32
    %c0_i32_0 = arith.constant 0 : i32
    %2 = arith.cmpi ne, %1, %c0_i32_0 : i32
    scf.if %2 {
      %cst_9 = arith.constant 0.000000e+00 : f32
      %12 = vector.broadcast %cst_9 : f32 to vector<32x128xf32>
      %c0_10 = arith.constant 0 : index
      %c0_11 = arith.constant 0 : index
      %13 = vector.load %arg8[%c0_10, %c0_11] : memref<32x128xf32, #tpu.memory_space<vmem>>, vector<32x128xf32>
      tpu.vector_store %arg8[%c0_10, %c0_11], %12 {strides = array<i32>} : memref<32x128xf32, #tpu.memory_space<vmem>>, vector<32x128xf32>,
    } else {
    }
    %c0 = arith.constant 0 : index
    %c0_1 = arith.constant 0 : index
    %3 = vector.load %arg8[%c0, %c0_1] : memref<32x128xf32, #tpu.memory_space<vmem>>, vector<32x128xf32>
    %c0_2 = arith.constant 0 : index
    %c0_3 = arith.constant 0 : index
    %4 = vector.load %arg3[%c0_2, %c0_3] : memref<32x256xbf16, #tpu.memory_space<vmem>>, vector<32x256xbf16>
    %c0_4 = arith.constant 0 : index
    %c0_5 = arith.constant 0 : index
    %5 = vector.load %arg4[%c0_4, %c0_5] : memref<256x128xbf16, #tpu.memory_space<vmem>>, vector<256x128xbf16>
    %cst = arith.constant dense<0.000000e+00> : vector<32x128xf32>
    %6 = tpu.matmul %4, %5, %cst {dimension_numbers = #tpu.dot_dimension_numbers<[1], [0], [0], [1], [0, 0, 1, 1], [], []>} : vector<32x256xbf16>, vector<256x128xbf16>, vector<32x128xf32> -> vector<32x128xf32>
    %7 = arith.addf %3, %6 : vector<32x128xf32>
    %c0_6 = arith.constant 0 : index
    %c0_7 = arith.constant 0 : index
    %8 = vector.load %arg8[%c0_6, %c0_7] : memref<32x128xf32, #tpu.memory_space<vmem>>, vector<32x128xf32>
    tpu.vector_store %arg8[%c0_6, %c0_7], %7 {strides = array<i32>} : memref<32x128xf32, #tpu.memory_space<vmem>>, vector<32x128xf32>,
    %c8_i32 = arith.constant 8 : i32
    %9 = arith.cmpi eq, %arg2, %c8_i32 : i32
    %10 = arith.extui %9 : i1 to i32
    %c0_i32_8 = arith.constant 0 : i32
    %11 = arith.cmpi ne, %10, %c0_i32_8 : i32
    scf.if %11 {
      %c0_9 = arith.constant 0 : index
      %c0_10 = arith.constant 0 : index
      %12 = vector.load %arg8[%c0_9, %c0_10] : memref<32x128xf32, #tpu.memory_space<vmem>>, vector<32x128xf32>
      %c0_11 = arith.constant 0 : index
      %c0_12 = arith.constant 0 : index
      %13 = vector.load %arg5[%c0_11, %c0_12] : memref<1x128xf32, #tpu.memory_space<vmem>>, vector<1x128xf32>
      %14 = vector.broadcast %13 : vector<1x128xf32> to vector<32x128xf32>
      %15 = arith.mulf %12, %14 : vector<32x128xf32>
      %c0_13 = arith.constant 0 : index
      %c0_14 = arith.constant 0 : index
      %16 = vector.load %arg6[%c0_13, %c0_14] : memref<1x128xf32, #tpu.memory_space<vmem>>, vector<1x128xf32>
      %17 = vector.broadcast %16 : vector<1x128xf32> to vector<32x128xf32>
      %18 = arith.addf %15, %17 : vector<32x128xf32>
      %cst_15 = arith.constant 0.000000e+00 : f32
      %19 = vector.broadcast %cst_15 : f32 to vector<32x128xf32>
      %20 = arith.maximumf %18, %19 : vector<32x128xf32>
      %c0_16 = arith.constant 0 : index
      %c0_17 = arith.constant 0 : index
      %21 = vector.load %arg7[%c0_16, %c0_17] : memref<32x128xf32, #tpu.memory_space<vmem>>, vector<32x128xf32>
      tpu.vector_store %arg7[%c0_16, %c0_17], %20 {strides = array<i32>} : memref<32x128xf32, #tpu.memory_space<vmem>>, vector<32x128xf32>,
    } else {
    }
    return
  }
  func.func @transform_0(%arg0: i32, %arg1: i32, %arg2: i32) -> (i32, i32) {
    %c0_i32 = arith.constant 0 : i32
    return %arg0, %arg2 : i32, i32
  }
  func.func @transform_1(%arg0: i32, %arg1: i32, %arg2: i32) -> (i32, i32) {
    %c0_i32 = arith.constant 0 : i32
    return %arg2, %arg1 : i32, i32
  }
  func.func @transform_2(%arg0: i32, %arg1: i32, %arg2: i32) -> (i32, i32) {
    %c0_i32 = arith.constant 0 : i32
    %c0_i32_0 = arith.constant 0 : i32
    return %c0_i32, %arg1 : i32, i32
  }
  func.func @transform_3(%arg0: i32, %arg1: i32, %arg2: i32) -> (i32, i32) {
    %c0_i32 = arith.constant 0 : i32
    %c0_i32_0 = arith.constant 0 : i32
    return %c0_i32, %arg1 : i32, i32
  }
  func.func @transform_4(%arg0: i32, %arg1: i32, %arg2: i32) -> (i32, i32) {
    %c0_i32 = arith.constant 0 : i32
    return %arg0, %arg1 : i32, i32
  }
}

module attributes {stable_mosaic.version = 11 : i64} {
  func.func @_matmul_bn_kernel(%arg0: i32, %arg1: i32, %arg2: i32, %arg3: memref<8x128xbf16, #tpu.memory_space<vmem>>, %arg4: memref<128x256xbf16, #tpu.memory_space<vmem>>, %arg5: memref<1x256xf32, #tpu.memory_space<vmem>>, %arg6: memref<1x256xf32, #tpu.memory_space<vmem>>, %arg7: memref<8x256xf32, #tpu.memory_space<vmem>>, %arg8: memref<8x256xf32, #tpu.memory_space<vmem>>) attributes {dimension_semantics = [#tpu.dimension_semantics<parallel>, #tpu.dimension_semantics<parallel>, #tpu.dimension_semantics<arbitrary>], iteration_bounds = array<i64: 1, 2, 27>, scalar_prefetch = 0 : i64, scratch_operands = 1 : i64, tpu.core_type = #tpu.core_type<tc>, window_params = [{transform_indices = @transform_0, window_bounds = array<i64: 8, 128>}, {transform_indices = @transform_1, window_bounds = array<i64: 128, 256>}, {transform_indices = @transform_2, window_bounds = array<i64: 1, 256>}, {transform_indices = @transform_3, window_bounds = array<i64: 1, 256>}, {transform_indices = @transform_4, window_bounds = array<i64: 8, 256>}]} {
    %c0_i32 = arith.constant 0 : i32
    %0 = arith.cmpi eq, %arg2, %c0_i32 : i32
    %1 = arith.extui %0 : i1 to i32
    %c0_i32_0 = arith.constant 0 : i32
    %2 = arith.cmpi ne, %1, %c0_i32_0 : i32
    scf.if %2 {
      %cst_9 = arith.constant 0.000000e+00 : f32
      %12 = vector.broadcast %cst_9 : f32 to vector<8x256xf32>
      %c0_10 = arith.constant 0 : index
      %c0_11 = arith.constant 0 : index
      %13 = vector.load %arg8[%c0_10, %c0_11] : memref<8x256xf32, #tpu.memory_space<vmem>>, vector<8x256xf32>
      tpu.vector_store %arg8[%c0_10, %c0_11], %12 {strides = array<i32>} : memref<8x256xf32, #tpu.memory_space<vmem>>, vector<8x256xf32>,
    } else {
    }
    %c0 = arith.constant 0 : index
    %c0_1 = arith.constant 0 : index
    %3 = vector.load %arg8[%c0, %c0_1] : memref<8x256xf32, #tpu.memory_space<vmem>>, vector<8x256xf32>
    %c0_2 = arith.constant 0 : index
    %c0_3 = arith.constant 0 : index
    %4 = vector.load %arg3[%c0_2, %c0_3] : memref<8x128xbf16, #tpu.memory_space<vmem>>, vector<8x128xbf16>
    %c0_4 = arith.constant 0 : index
    %c0_5 = arith.constant 0 : index
    %5 = vector.load %arg4[%c0_4, %c0_5] : memref<128x256xbf16, #tpu.memory_space<vmem>>, vector<128x256xbf16>
    %cst = arith.constant dense<0.000000e+00> : vector<8x256xf32>
    %6 = tpu.matmul %4, %5, %cst {dimension_numbers = #tpu.dot_dimension_numbers<[1], [0], [0], [1], [0, 0, 1, 1], [], []>} : vector<8x128xbf16>, vector<128x256xbf16>, vector<8x256xf32> -> vector<8x256xf32>
    %7 = arith.addf %3, %6 : vector<8x256xf32>
    %c0_6 = arith.constant 0 : index
    %c0_7 = arith.constant 0 : index
    %8 = vector.load %arg8[%c0_6, %c0_7] : memref<8x256xf32, #tpu.memory_space<vmem>>, vector<8x256xf32>
    tpu.vector_store %arg8[%c0_6, %c0_7], %7 {strides = array<i32>} : memref<8x256xf32, #tpu.memory_space<vmem>>, vector<8x256xf32>,
    %c26_i32 = arith.constant 26 : i32
    %9 = arith.cmpi eq, %arg2, %c26_i32 : i32
    %10 = arith.extui %9 : i1 to i32
    %c0_i32_8 = arith.constant 0 : i32
    %11 = arith.cmpi ne, %10, %c0_i32_8 : i32
    scf.if %11 {
      %c0_9 = arith.constant 0 : index
      %c0_10 = arith.constant 0 : index
      %12 = vector.load %arg8[%c0_9, %c0_10] : memref<8x256xf32, #tpu.memory_space<vmem>>, vector<8x256xf32>
      %c0_11 = arith.constant 0 : index
      %c0_12 = arith.constant 0 : index
      %13 = vector.load %arg5[%c0_11, %c0_12] : memref<1x256xf32, #tpu.memory_space<vmem>>, vector<1x256xf32>
      %14 = vector.broadcast %13 : vector<1x256xf32> to vector<8x256xf32>
      %15 = arith.mulf %12, %14 : vector<8x256xf32>
      %c0_13 = arith.constant 0 : index
      %c0_14 = arith.constant 0 : index
      %16 = vector.load %arg6[%c0_13, %c0_14] : memref<1x256xf32, #tpu.memory_space<vmem>>, vector<1x256xf32>
      %17 = vector.broadcast %16 : vector<1x256xf32> to vector<8x256xf32>
      %18 = arith.addf %15, %17 : vector<8x256xf32>
      %cst_15 = arith.constant 0.000000e+00 : f32
      %19 = vector.broadcast %cst_15 : f32 to vector<8x256xf32>
      %20 = arith.maximumf %18, %19 : vector<8x256xf32>
      %c0_16 = arith.constant 0 : index
      %c0_17 = arith.constant 0 : index
      %21 = vector.load %arg7[%c0_16, %c0_17] : memref<8x256xf32, #tpu.memory_space<vmem>>, vector<8x256xf32>
      tpu.vector_store %arg7[%c0_16, %c0_17], %20 {strides = array<i32>} : memref<8x256xf32, #tpu.memory_space<vmem>>, vector<8x256xf32>,
    } else {
    }
    return
  }
  func.func @transform_0(%arg0: i32, %arg1: i32, %arg2: i32) -> (i32, i32) {
    %c0_i32 = arith.constant 0 : i32
    return %arg0, %arg2 : i32, i32
  }
  func.func @transform_1(%arg0: i32, %arg1: i32, %arg2: i32) -> (i32, i32) {
    %c0_i32 = arith.constant 0 : i32
    return %arg2, %arg1 : i32, i32
  }
  func.func @transform_2(%arg0: i32, %arg1: i32, %arg2: i32) -> (i32, i32) {
    %c0_i32 = arith.constant 0 : i32
    %c0_i32_0 = arith.constant 0 : i32
    return %c0_i32, %arg1 : i32, i32
  }
  func.func @transform_3(%arg0: i32, %arg1: i32, %arg2: i32) -> (i32, i32) {
    %c0_i32 = arith.constant 0 : i32
    %c0_i32_0 = arith.constant 0 : i32
    return %c0_i32, %arg1 : i32, i32
  }
  func.func @transform_4(%arg0: i32, %arg1: i32, %arg2: i32) -> (i32, i32) {
    %c0_i32 = arith.constant 0 : i32
    return %arg0, %arg1 : i32, i32
  }
}

module attributes {stable_mosaic.version = 11 : i64} {
  func.func @_matmul_bn_kernel(%arg0: i32, %arg1: i32, %arg2: i32, %arg3: memref<8x512xbf16, #tpu.memory_space<vmem>>, %arg4: memref<512x256xbf16, #tpu.memory_space<vmem>>, %arg5: memref<1x256xf32, #tpu.memory_space<vmem>>, %arg6: memref<1x256xf32, #tpu.memory_space<vmem>>, %arg7: memref<8x256xf32, #tpu.memory_space<vmem>>, %arg8: memref<8x256xf32, #tpu.memory_space<vmem>>) attributes {dimension_semantics = [#tpu.dimension_semantics<parallel>, #tpu.dimension_semantics<parallel>, #tpu.dimension_semantics<arbitrary>], iteration_bounds = array<i64: 1, 2, 1>, scalar_prefetch = 0 : i64, scratch_operands = 1 : i64, tpu.core_type = #tpu.core_type<tc>, window_params = [{transform_indices = @transform_0, window_bounds = array<i64: 8, 512>}, {transform_indices = @transform_1, window_bounds = array<i64: 512, 256>}, {transform_indices = @transform_2, window_bounds = array<i64: 1, 256>}, {transform_indices = @transform_3, window_bounds = array<i64: 1, 256>}, {transform_indices = @transform_4, window_bounds = array<i64: 8, 256>}]} {
    %c0_i32 = arith.constant 0 : i32
    %0 = arith.cmpi eq, %arg2, %c0_i32 : i32
    %1 = arith.extui %0 : i1 to i32
    %c0_i32_0 = arith.constant 0 : i32
    %2 = arith.cmpi ne, %1, %c0_i32_0 : i32
    scf.if %2 {
      %cst_10 = arith.constant 0.000000e+00 : f32
      %12 = vector.broadcast %cst_10 : f32 to vector<8x256xf32>
      %c0_11 = arith.constant 0 : index
      %c0_12 = arith.constant 0 : index
      %13 = vector.load %arg8[%c0_11, %c0_12] : memref<8x256xf32, #tpu.memory_space<vmem>>, vector<8x256xf32>
      tpu.vector_store %arg8[%c0_11, %c0_12], %12 {strides = array<i32>} : memref<8x256xf32, #tpu.memory_space<vmem>>, vector<8x256xf32>,
    } else {
    }
    %c0 = arith.constant 0 : index
    %c0_1 = arith.constant 0 : index
    %3 = vector.load %arg8[%c0, %c0_1] : memref<8x256xf32, #tpu.memory_space<vmem>>, vector<8x256xf32>
    %c0_2 = arith.constant 0 : index
    %c0_3 = arith.constant 0 : index
    %4 = vector.load %arg3[%c0_2, %c0_3] : memref<8x512xbf16, #tpu.memory_space<vmem>>, vector<8x512xbf16>
    %c0_4 = arith.constant 0 : index
    %c0_5 = arith.constant 0 : index
    %5 = vector.load %arg4[%c0_4, %c0_5] : memref<512x256xbf16, #tpu.memory_space<vmem>>, vector<512x256xbf16>
    %cst = arith.constant dense<0.000000e+00> : vector<8x256xf32>
    %6 = tpu.matmul %4, %5, %cst {dimension_numbers = #tpu.dot_dimension_numbers<[1], [0], [0], [1], [0, 0, 1, 1], [], []>} : vector<8x512xbf16>, vector<512x256xbf16>, vector<8x256xf32> -> vector<8x256xf32>
    %7 = arith.addf %3, %6 : vector<8x256xf32>
    %c0_6 = arith.constant 0 : index
    %c0_7 = arith.constant 0 : index
    %8 = vector.load %arg8[%c0_6, %c0_7] : memref<8x256xf32, #tpu.memory_space<vmem>>, vector<8x256xf32>
    tpu.vector_store %arg8[%c0_6, %c0_7], %7 {strides = array<i32>} : memref<8x256xf32, #tpu.memory_space<vmem>>, vector<8x256xf32>,
    %c0_i32_8 = arith.constant 0 : i32
    %9 = arith.cmpi eq, %arg2, %c0_i32_8 : i32
    %10 = arith.extui %9 : i1 to i32
    %c0_i32_9 = arith.constant 0 : i32
    %11 = arith.cmpi ne, %10, %c0_i32_9 : i32
    scf.if %11 {
      %c0_10 = arith.constant 0 : index
      %c0_11 = arith.constant 0 : index
      %12 = vector.load %arg8[%c0_10, %c0_11] : memref<8x256xf32, #tpu.memory_space<vmem>>, vector<8x256xf32>
      %c0_12 = arith.constant 0 : index
      %c0_13 = arith.constant 0 : index
      %13 = vector.load %arg5[%c0_12, %c0_13] : memref<1x256xf32, #tpu.memory_space<vmem>>, vector<1x256xf32>
      %14 = vector.broadcast %13 : vector<1x256xf32> to vector<8x256xf32>
      %15 = arith.mulf %12, %14 : vector<8x256xf32>
      %c0_14 = arith.constant 0 : index
      %c0_15 = arith.constant 0 : index
      %16 = vector.load %arg6[%c0_14, %c0_15] : memref<1x256xf32, #tpu.memory_space<vmem>>, vector<1x256xf32>
      %17 = vector.broadcast %16 : vector<1x256xf32> to vector<8x256xf32>
      %18 = arith.addf %15, %17 : vector<8x256xf32>
      %cst_16 = arith.constant 0.000000e+00 : f32
      %19 = vector.broadcast %cst_16 : f32 to vector<8x256xf32>
      %20 = arith.maximumf %18, %19 : vector<8x256xf32>
      %c0_17 = arith.constant 0 : index
      %c0_18 = arith.constant 0 : index
      %21 = vector.load %arg7[%c0_17, %c0_18] : memref<8x256xf32, #tpu.memory_space<vmem>>, vector<8x256xf32>
      tpu.vector_store %arg7[%c0_17, %c0_18], %20 {strides = array<i32>} : memref<8x256xf32, #tpu.memory_space<vmem>>, vector<8x256xf32>,
    } else {
    }
    return
  }
  func.func @transform_0(%arg0: i32, %arg1: i32, %arg2: i32) -> (i32, i32) {
    %c0_i32 = arith.constant 0 : i32
    return %arg0, %arg2 : i32, i32
  }
  func.func @transform_1(%arg0: i32, %arg1: i32, %arg2: i32) -> (i32, i32) {
    %c0_i32 = arith.constant 0 : i32
    return %arg2, %arg1 : i32, i32
  }
  func.func @transform_2(%arg0: i32, %arg1: i32, %arg2: i32) -> (i32, i32) {
    %c0_i32 = arith.constant 0 : i32
    %c0_i32_0 = arith.constant 0 : i32
    return %c0_i32, %arg1 : i32, i32
  }
  func.func @transform_3(%arg0: i32, %arg1: i32, %arg2: i32) -> (i32, i32) {
    %c0_i32 = arith.constant 0 : i32
    %c0_i32_0 = arith.constant 0 : i32
    return %c0_i32, %arg1 : i32, i32
  }
  func.func @transform_4(%arg0: i32, %arg1: i32, %arg2: i32) -> (i32, i32) {
    %c0_i32 = arith.constant 0 : i32
    return %arg0, %arg1 : i32, i32
  }
}

module attributes {stable_mosaic.version = 11 : i64} {
  func.func @_pool_bn_kernel(%arg0: i32, %arg1: memref<2x4x512xf32, #tpu.memory_space<vmem>>, %arg2: memref<1x512xf32, #tpu.memory_space<vmem>>, %arg3: memref<1x512xf32, #tpu.memory_space<vmem>>, %arg4: memref<2x512xf32, #tpu.memory_space<vmem>>) attributes {dimension_semantics = [#tpu.dimension_semantics<arbitrary>], iteration_bounds = array<i64: 1>, scalar_prefetch = 0 : i64, scratch_operands = 0 : i64, tpu.core_type = #tpu.core_type<tc>, window_params = [{pipeline_mode = #tpu.pipeline_mode<synchronous>, transform_indices = @transform_0, window_bounds = array<i64: 2, 4, 512>}, {pipeline_mode = #tpu.pipeline_mode<synchronous>, transform_indices = @transform_1, window_bounds = array<i64: 1, 512>}, {pipeline_mode = #tpu.pipeline_mode<synchronous>, transform_indices = @transform_2, window_bounds = array<i64: 1, 512>}, {pipeline_mode = #tpu.pipeline_mode<synchronous>, transform_indices = @transform_3, window_bounds = array<i64: 2, 512>}]} {
    %c0 = arith.constant 0 : index
    %c0_0 = arith.constant 0 : index
    %c0_1 = arith.constant 0 : index
    %0 = vector.load %arg1[%c0, %c0_0, %c0_1] : memref<2x4x512xf32, #tpu.memory_space<vmem>>, vector<2x4x512xf32>
    %cst = arith.constant dense<0.000000e+00> : vector<2x512xf32>
    %1 = vector.multi_reduction <add>, %0, %cst [1] : vector<2x4x512xf32> to vector<2x512xf32>
    %cst_2 = arith.constant 4.000000e+00 : f32
    %2 = vector.broadcast %cst_2 : f32 to vector<2x512xf32>
    %3 = arith.divf %1, %2 : vector<2x512xf32>
    %cst_3 = arith.constant dense<0xFF800000> : vector<2x512xf32>
    %4 = vector.multi_reduction <maximumf>, %0, %cst_3 [1] : vector<2x4x512xf32> to vector<2x512xf32>
    %5 = arith.addf %3, %4 : vector<2x512xf32>
    %c0_4 = arith.constant 0 : index
    %c0_5 = arith.constant 0 : index
    %6 = vector.load %arg2[%c0_4, %c0_5] : memref<1x512xf32, #tpu.memory_space<vmem>>, vector<1x512xf32>
    %7 = vector.broadcast %6 : vector<1x512xf32> to vector<2x512xf32>
    %8 = arith.mulf %5, %7 : vector<2x512xf32>
    %c0_6 = arith.constant 0 : index
    %c0_7 = arith.constant 0 : index
    %9 = vector.load %arg3[%c0_6, %c0_7] : memref<1x512xf32, #tpu.memory_space<vmem>>, vector<1x512xf32>
    %10 = vector.broadcast %9 : vector<1x512xf32> to vector<2x512xf32>
    %11 = arith.addf %8, %10 : vector<2x512xf32>
    %c0_8 = arith.constant 0 : index
    %c0_9 = arith.constant 0 : index
    %12 = vector.load %arg4[%c0_8, %c0_9] : memref<2x512xf32, #tpu.memory_space<vmem>>, vector<2x512xf32>
    tpu.vector_store %arg4[%c0_8, %c0_9], %11 {strides = array<i32>} : memref<2x512xf32, #tpu.memory_space<vmem>>, vector<2x512xf32>,
    return
  }
  func.func @transform_0(%arg0: i32) -> (i32, i32, i32) {
    %c0_i32 = arith.constant 0 : i32
    %c0_i32_0 = arith.constant 0 : i32
    %c0_i32_1 = arith.constant 0 : i32
    %c0_i32_2 = arith.constant 0 : i32
    return %c0_i32, %c0_i32_0, %c0_i32_1 : i32, i32, i32
  }
  func.func @transform_1(%arg0: i32) -> (i32, i32) {
    %c0_i32 = arith.constant 0 : i32
    %c0_i32_0 = arith.constant 0 : i32
    %c0_i32_1 = arith.constant 0 : i32
    return %c0_i32, %c0_i32_0 : i32, i32
  }
  func.func @transform_2(%arg0: i32) -> (i32, i32) {
    %c0_i32 = arith.constant 0 : i32
    %c0_i32_0 = arith.constant 0 : i32
    %c0_i32_1 = arith.constant 0 : i32
    return %c0_i32, %c0_i32_0 : i32, i32
  }
  func.func @transform_3(%arg0: i32) -> (i32, i32) {
    %c0_i32 = arith.constant 0 : i32
    %c0_i32_0 = arith.constant 0 : i32
    %c0_i32_1 = arith.constant 0 : i32
    return %c0_i32, %c0_i32_0 : i32, i32
  }
}

</mosaic_0001>

<llo_original>
// kernel: osnet_reid_forward.7
$region0: #{osnet_reid_forward.7}
  #allocation0 [shape = 'u32[]', space=smem, size = 0x4, offset = 0x4, fixed_abs, tag = 'smem constant byte address 0x4 - core index']
  #allocation1 [shape = 'u32[144,128]{1,0:T(1,128)}', space=vmem, size = 0x12000, scoped, tag = 'internal scratch']
  #allocation2 [shape = 'f32[256,128]{1,0:T(8,128)}', space=vmem, size = 0x20000, scoped, tag = 'scratch operand']
  %s0 = inlined_call_operand.vmem [shape: bf16[512,256], index: 0, kind: input, shape index: {}]
  %s1 = inlined_call_operand.vmem [shape: bf16[256,128], index: 1, kind: input, shape index: {}]
  %s2 = inlined_call_operand.vmem [shape: f32[1,128], index: 2, kind: input, shape index: {}]
  %s3 = inlined_call_operand.vmem [shape: f32[1,128], index: 3, kind: input, shape index: {}]
  %s4 = inlined_call_operand.vmem [shape: f32[512,128], index: 4, kind: output, shape index: {}]
  %s5 = sld [smem:[#allocation0]]
  $region57: #{osnet_reid_forward.7} parent=0
    _
  %s7 = ssub.s32 1, %s5
  %s8 = scalar_select 0, %s7, %s5
  loop: start=0, step=1, limit=4
  $region2: #{osnet_reid_forward.7} parent=0 // loop_pre_header
    _
  $region3: #{osnet_reid_forward.7} parent=0 // loop_header
    %s10 = sphi 0, %s14
    %p11 = scmp.ge.s32.totalorder %s10, 4
    %s17 = sphi 0, %s36
    %s18 = sphi 0, %s32
    %s19 = sphi 0, %s28
    %s20 = sphi 0, %s17
    %s21 = sphi 0, %s18
    %s22 = sphi 0, %s19
    %s23 = sphi 0, %s20
    %s24 = sphi 0, %s21
    %s25 = sphi 0, %s22
    %s41 = sphi 0, %s43
    %s44 = sphi 0, %s41
    %s45 = sphi 0, %s44
    %s61 = sphi 0, %s45
    %s69 = sphi 0, %s71
    %s72 = sphi 0, %s69
    %s73 = sphi 0, %s72
    %s89 = sphi 0, %s73
    %s95 = sphi 0, %s97
    %s98 = sphi 0, %s95
    %s99 = sphi 0, %s98
    %s115 = sphi 0, %s99
    %s121 = sphi 0, %s123
    %s124 = sphi 0, %s121
    %s125 = sphi 0, %s124
    %s141 = sphi 0, %s125
    %s149 = sphi 0, %s151
    %s152 = sphi 0, %s149
    %s153 = sphi 0, %s152
    %s169 = sphi 0, %s153
  $region4: #{osnet_reid_forward.7} parent=0 // loop_header_branch
    %13 = sbr.rel (%p11) target = $region8
  $region5: #{osnet_reid_forward.7} parent=0 // loop_body
    %s15 = ssub.s32 %s10, 1
    %s16 = ssub.s32 %s10, 2
    %s26 = sadd.s32 1, %s19
    %p27 = scmp.ge.s32.totalorder %s26, 1
    %s28 = scalar_select %p27, 0, %s26
    %s29 = sadd.s32 1, %s18
    %s30 = scalar_select %p27, %s29, %s18
    %p31 = scmp.ge.s32.totalorder %s30, 1
    %s32 = scalar_select %p31, 0, %s30
    %s33 = sadd.s32 1, %s17
    %s34 = scalar_select %p31, %s33, %s17
    %p35 = scmp.ge.s32.totalorder %s34, 2
    %s36 = scalar_select %p35, 0, %s34
    %s37 = ssub.s32 %s17, %s36
    %s38 = ssub.s32 %s19, %s28
    %s39 = sor.u32 %s37, %s38
    %p40 = scmp.eq.s32.totalorder %s39, 0
    %s42 = sadd.s32 %s41, 1
    %s43 = scalar_select %p40, %s41, %s42
    %p46 = pneg %p40
    %p47 = scmp.eq.s32.totalorder %s10, 1
    %p48 = por %p46, %p47
    %p49 = scmp.ne.s32.totalorder %s41, %s44
    %p50 = scmp.eq.s32.totalorder %s10, 0
    %p51 = por %p49, %p50
    %p52 = scmp.ne.s32.totalorder %s41, %s44
    %p53 = scmp.eq.s32.totalorder %s15, 1
    %p54 = por %p52, %p53
    %p55 = scmp.ne.s32.totalorder %s44, %s45
    %p56 = scmp.eq.s32.totalorder %s15, 0
    %p57 = por %p55, %p56
    %p58 = scmp.ne.s32.totalorder %s44, %s45
    %p59 = scmp.eq.s32.totalorder %s16, 1
    %p60 = por %p58, %p59
    %p62 = scmp.ne.s32.totalorder %s45, %s61
    %p63 = scmp.eq.s32.totalorder %s16, 0
    %p64 = por %p62, %p63
    %s65 = ssub.s32 %s19, %s28
    %s66 = ssub.s32 %s18, %s32
    %s67 = sor.u32 %s65, %s66
    %p68 = scmp.eq.s32.totalorder %s67, 0
    %s70 = sadd.s32 %s69, 1
    %s71 = scalar_select %p68, %s69, %s70
    %p74 = pneg %p68
    %p75 = scmp.eq.s32.totalorder %s10, 1
    %p76 = por %p74, %p75
    %p77 = scmp.ne.s32.totalorder %s69, %s72
    %p78 = scmp.eq.s32.totalorder %s10, 0
    %p79 = por %p77, %p78
    %p80 = scmp.ne.s32.totalorder %s69, %s72
    %p81 = scmp.eq.s32.totalorder %s15, 1
    %p82 = por %p80, %p81
    %p83 = scmp.ne.s32.totalorder %s72, %s73
    %p84 = scmp.eq.s32.totalorder %s15, 0
    %p85 = por %p83, %p84
    %p86 = scmp.ne.s32.totalorder %s72, %s73
    %p87 = scmp.eq.s32.totalorder %s16, 1
    %p88 = por %p86, %p87
    %p90 = scmp.ne.s32.totalorder %s73, %s89
    %p91 = scmp.eq.s32.totalorder %s16, 0
    %p92 = por %p90, %p91
    %s93 = ssub.s32 %s18, %s32
    %p94 = scmp.eq.s32.totalorder %s93, 0
    %s96 = sadd.s32 %s95, 1
    %s97 = scalar_select %p94, %s95, %s96
    %p100 = pneg %p94
    %p101 = scmp.eq.s32.totalorder %s10, 1
    %p102 = por %p100, %p101
    %p103 = scmp.ne.s32.totalorder %s95, %s98
    %p104 = scmp.eq.s32.totalorder %s10, 0
    %p105 = por %p103, %p104
    %p106 = scmp.ne.s32.totalorder %s95, %s98
    %p107 = scmp.eq.s32.totalorder %s15, 1
    %p108 = por %p106, %p107
    %p109 = scmp.ne.s32.totalorder %s98, %s99
    %p110 = scmp.eq.s32.totalorder %s15, 0
    %p111 = por %p109, %p110
    %p112 = scmp.ne.s32.totalorder %s98, %s99
    %p113 = scmp.eq.s32.totalorder %s16, 1
    %p114 = por %p112, %p113
    %p116 = scmp.ne.s32.totalorder %s99, %s115
    %p117 = scmp.eq.s32.totalorder %s16, 0
    %p118 = por %p116, %p117
    %s119 = ssub.s32 %s18, %s32
    %p120 = scmp.eq.s32.totalorder %s119, 0
    %s122 = sadd.s32 %s121, 1
    %s123 = scalar_select %p120, %s121, %s122
    %p126 = pneg %p120
    %p127 = scmp.eq.s32.totalorder %s10, 1
    %p128 = por %p126, %p127
    %p129 = scmp.ne.s32.totalorder %s121, %s124
    %p130 = scmp.eq.s32.totalorder %s10, 0
    %p131 = por %p129, %p130
    %p132 = scmp.ne.s32.totalorder %s121, %s124
    %p133 = scmp.eq.s32.totalorder %s15, 1
    %p134 = por %p132, %p133
    %p135 = scmp.ne.s32.totalorder %s124, %s125
    %p136 = scmp.eq.s32.totalorder %s15, 0
    %p137 = por %p135, %p136
    %p138 = scmp.ne.s32.totalorder %s124, %s125
    %p139 = scmp.eq.s32.totalorder %s16, 1
    %p140 = por %p138, %p139
    %p142 = scmp.ne.s32.totalorder %s125, %s141
    %p143 = scmp.eq.s32.totalorder %s16, 0
    %p144 = por %p142, %p143
    %s145 = ssub.s32 %s17, %s36
    %s146 = ssub.s32 %s18, %s32
    %s147 = sor.u32 %s145, %s146
    %p148 = scmp.eq.s32.totalorder %s147, 0
    %s150 = sadd.s32 %s149, 1
    %s151 = scalar_select %p148, %s149, %s150
    %p154 = pneg %p148
    %p155 = scmp.eq.s32.totalorder %s10, 1
    %p156 = por %p154, %p155
    %p157 = scmp.ne.s32.totalorder %s149, %s152
    %p158 = scmp.eq.s32.totalorder %s10, 0
    %p159 = por %p157, %p158
    %p160 = scmp.ne.s32.totalorder %s149, %s152
    %p161 = scmp.eq.s32.totalorder %s15, 1
    %p162 = por %p160, %p161
    %p163 = scmp.ne.s32.totalorder %s152, %s153
    %p164 = scmp.eq.s32.totalorder %s15, 0
    %p165 = por %p163, %p164
    %p166 = scmp.ne.s32.totalorder %s152, %s153
    %p167 = scmp.eq.s32.totalorder %s16, 1
    %p168 = por %p166, %p167
    %p170 = scmp.ne.s32.totalorder %s153, %s169
    %p171 = scmp.eq.s32.totalorder %s16, 0
    %p172 = por %p170, %p171
    %p173 = scmp.le.s32.totalorder 1, %s10
    %p174 = scmp.lt.s32.totalorder %s10, 3
    %p175 = pnand %p173, %p174
    %p176 = pneg %p175
    // Predicated region
    $region9: #{osnet_reid_forward.7} parent=5 // pred_check
      _
    $region10: #{osnet_reid_forward.7} parent=5 // pred_check_branch
      %178 = sbr.rel (%p175) target = $region12
    $region11: #{osnet_reid_forward.7} parent=5 // pred_region
      %s179 = ssub.s32 %s10, 1
      // Predicated region
      $region13: #{osnet_reid_forward.7} parent=11 // pred_check
        %p180 = pneg %p85
      $region14: #{osnet_reid_forward.7} parent=11 // pred_check_branch
        %182 = sbr.rel (%p180) target = $region16
      $region15: #{osnet_reid_forward.7} parent=11 // pred_region
        %s183 = smul.u32 32, %s22
        %p184 = scmp.lt.s32.totalorder %s183, 31
        %s185 = scalar_select %p184, %s183, 31
        %p186 = scmp.lt.s32.totalorder %s21, 0
        %s187 = scalar_select %p186, %s21, 0
        %s188 = sadd.s32 %s187, %s185
        %s189 = smul.addr %s188, 4
        %s190 = scalar_lea.vmem %s1, %s189
        %s191 = smul.u32 32, %s22
      $region16: #{osnet_reid_forward.7} parent=11 // pred_fallthru
        _
      // Predicated region
      $region17: #{osnet_reid_forward.7} parent=11 // pred_check
        %p192 = pneg %p111
      $region18: #{osnet_reid_forward.7} parent=11 // pred_check_branch
        %194 = sbr.rel (%p192) target = $region20
      $region19: #{osnet_reid_forward.7} parent=11 // pred_region
        %p195 = scmp.lt.s32.totalorder %s21, 0
        %s196 = scalar_select %p195, %s21, 0
        %s197 = scalar_lea.vmem %s2, %s196
      $region20: #{osnet_reid_forward.7} parent=11 // pred_fallthru
        _
      // Predicated region
      $region21: #{osnet_reid_forward.7} parent=11 // pred_check
        %p198 = pneg %p137
      $region22: #{osnet_reid_forward.7} parent=11 // pred_check_branch
        %200 = sbr.rel (%p198) target = $region24
      $region23: #{osnet_reid_forward.7} parent=11 // pred_region
        %p201 = scmp.lt.s32.totalorder %s21, 0
        %s202 = scalar_select %p201, %s21, 0
        %s203 = scalar_lea.vmem %s3, %s202
      $region24: #{osnet_reid_forward.7} parent=11 // pred_fallthru
        _
    $region12: #{osnet_reid_forward.7} parent=5 // pred_fallthru
      _
    %p204 = scmp.lt.s32.totalorder %s10, 2
    // Predicated region
    $region25: #{osnet_reid_forward.7} parent=5 // pred_check
      %p205 = pneg %p204
    $region26: #{osnet_reid_forward.7} parent=5 // pred_check_branch
      %207 = sbr.rel (%p205) target = $region28
    $region27: #{osnet_reid_forward.7} parent=5 // pred_region
      // Predicated region
      $region29: #{osnet_reid_forward.7} parent=27 // pred_check
        %p208 = pneg %p51
      $region30: #{osnet_reid_forward.7} parent=27 // pred_check_branch
        %210 = sbr.rel (%p208) target = $region32
      $region31: #{osnet_reid_forward.7} parent=27 // pred_region
        %s211 = smul.u32 32, %s17
        %s212 = smul.u32 2, %s19
        %p213 = scmp.lt.s32.totalorder %s211, 63
        %s214 = scalar_select %p213, %s211, 63
        %p215 = scmp.lt.s32.totalorder %s212, 1
        %s216 = scalar_select %p215, %s212, 1
        %s217 = smul.addr %s214, 2
        %s218 = sadd.s32 %s216, %s217
        %s219 = smul.addr %s218, 4
        %s220 = scalar_lea.vmem %s0, %s219
        %s221 = smul.u32 32, %s17
        %s222 = smul.u32 2, %s19
      $region32: #{osnet_reid_forward.7} parent=27 // pred_fallthru
        _
    $region28: #{osnet_reid_forward.7} parent=5 // pred_fallthru
      _
    %p223 = scmp.le.s32.totalorder 1, %s10
    %p224 = scmp.lt.s32.totalorder %s10, 3
    %p225 = pnand %p223, %p224
    %p226 = pneg %p225
    // Predicated region
    $region33: #{osnet_reid_forward.7} parent=5 // pred_check
      _
    $region34: #{osnet_reid_forward.7} parent=5 // pred_check_branch
      %228 = sbr.rel (%p225) target = $region36
    $region35: #{osnet_reid_forward.7} parent=5 // pred_region
      %s229 = ssub.s32 %s10, 1
      %s230 = smul.u32 32, %s20
      %s231 = smul.u32 2, %s22
      %p232 = scmp.lt.s32.totalorder %s230, 63
      %s233 = scalar_select %p232, %s230, 63
      %p234 = scmp.lt.s32.totalorder %s231, 1
      %s235 = scalar_select %p234, %s231, 1
      %s236 = smul.addr %s233, 2
      %s237 = sadd.s32 %s235, %s236
      %s238 = smul.addr %s237, 4
      %s239 = scalar_lea.vmem %s0, %s238
      %p240 = pneg %p57
      %p241 = pneg %p54
      %s242 = smul.u32 32, %s22
      %p243 = scmp.lt.s32.totalorder %s242, 31
      %s244 = scalar_select %p243, %s242, 31
      %p245 = scmp.lt.s32.totalorder %s21, 0
      %s246 = scalar_select %p245, %s21, 0
      %s247 = sadd.s32 %s246, %s244
      %s248 = smul.addr %s247, 4
      %s249 = scalar_lea.vmem %s1, %s248
      %p250 = pneg %p85
      %p251 = pneg %p82
      %p252 = scmp.lt.s32.totalorder %s21, 0
      %s253 = scalar_select %p252, %s21, 0
      %s254 = scalar_lea.vmem %s2, %s253
      %p255 = pneg %p111
      %p256 = pneg %p108
      %p257 = scmp.lt.s32.totalorder %s21, 0
      %s258 = scalar_select %p257, %s21, 0
      %s259 = scalar_lea.vmem %s3, %s258
      %p260 = pneg %p137
      %p261 = pneg %p134
      %p262 = pneg %p165
      %p263 = pneg %p162
      %s264 = smul.u32 32, %s20
      %p265 = scmp.lt.s32.totalorder %s264, 63
      %s266 = scalar_select %p265, %s264, 63
      %p267 = scmp.lt.s32.totalorder %s21, 0
      %s268 = scalar_select %p267, %s21, 0
      %s269 = sadd.s32 %s268, %s266
      %s270 = smul.addr %s269, 8
      %s271 = scalar_lea.vmem %s4, %s270
      %s272 = smul.u32 32, %s20
      %s273 = smul.u32 2, %s22
      %p274 = scmp.lt.s32.totalorder %s272, 63
      %s275 = scalar_select %p274, %s272, 63
      %p276 = scmp.lt.s32.totalorder %s273, 1
      %s277 = scalar_select %p276, %s273, 1
      %s278 = smul.addr %s275, 2
      %s279 = sadd.s32 %s277, %s278
      %s280 = smul.addr %s279, 4
      %s281 = scalar_lea.vmem %s0, %s280
      %s282 = smul.u32 32, %s20
      %s283 = smul.u32 2, %s22
      %s284 = smul.u32 32, %s22
      %p285 = scmp.lt.s32.totalorder %s284, 31
      %s286 = scalar_select %p285, %s284, 31
      %p287 = scmp.lt.s32.totalorder %s21, 0
      %s288 = scalar_select %p287, %s21, 0
      %s289 = sadd.s32 %s288, %s286
      %s290 = smul.addr %s289, 4
      %s291 = scalar_lea.vmem %s1, %s290
      %s292 = smul.u32 32, %s22
      %p293 = scmp.lt.s32.totalorder %s21, 0
      %s294 = scalar_select %p293, %s21, 0
      %s295 = scalar_lea.vmem %s2, %s294
      %p296 = scmp.lt.s32.totalorder %s21, 0
      %s297 = scalar_select %p296, %s21, 0
      %s298 = scalar_lea.vmem %s3, %s297
      %s299 = smul.u32 32, %s20
      %p300 = scmp.lt.s32.totalorder %s299, 63
      %s301 = scalar_select %p300, %s299, 63
      %p302 = scmp.lt.s32.totalorder %s21, 0
      %s303 = scalar_select %p302, %s21, 0
      %s304 = sadd.s32 %s303, %s301
      %s305 = smul.addr %s304, 8
      %s306 = scalar_lea.vmem %s4, %s305
      %s307 = smul.u32 32, %s20
      %p309 = scmp.eq.s32.totalorder %s22, 0
      // Predicated region
      $region37: #{osnet_reid_forward.7} parent=35 // pred_check
        %p310 = pneg %p309
      $region38: #{osnet_reid_forward.7} parent=35 // pred_check_branch
        %312 = sbr.rel (%p310) target = $region40
      $region39: #{osnet_reid_forward.7} parent=35 // pred_region
        %313 = vst [vmem:[#allocation2] sm:$0xff] 0.0
        %314 = vst [vmem:[#allocation2 + $0x8] sm:$0xff] 0.0
        %315 = vst [vmem:[#allocation2 + $0x10] sm:$0xff] 0.0
        %316 = vst [vmem:[#allocation2 + $0x18] sm:$0xff] 0.0
        %317 = vst [vmem:[#allocation2 + $0x20] sm:$0xff] 0.0
        %318 = vst [vmem:[#allocation2 + $0x28] sm:$0xff] 0.0
        %319 = vst [vmem:[#allocation2 + $0x30] sm:$0xff] 0.0
        %320 = vst [vmem:[#allocation2 + $0x38] sm:$0xff] 0.0
        %321 = vst [vmem:[#allocation2 + $0x40] sm:$0xff] 0.0
        %322 = vst [vmem:[#allocation2 + $0x48] sm:$0xff] 0.0
        %323 = vst [vmem:[#allocation2 + $0x50] sm:$0xff] 0.0
        %324 = vst [vmem:[#allocation2 + $0x58] sm:$0xff] 0.0
        %325 = vst [vmem:[#allocation2 + $0x60] sm:$0xff] 0.0
        %326 = vst [vmem:[#allocation2 + $0x68] sm:$0xff] 0.0
        %327 = vst [vmem:[#allocation2 + $0x70] sm:$0xff] 0.0
        %328 = vst [vmem:[#allocation2 + $0x78] sm:$0xff] 0.0
        %329 = vst [vmem:[#allocation2 + $0x80] sm:$0xff] 0.0
        %330 = vst [vmem:[#allocation2 + $0x88] sm:$0xff] 0.0
        %331 = vst [vmem:[#allocation2 + $0x90] sm:$0xff] 0.0
        %332 = vst [vmem:[#allocation2 + $0x98] sm:$0xff] 0.0
        %333 = vst [vmem:[#allocation2 + $0xa0] sm:$0xff] 0.0
        %334 = vst [vmem:[#allocation2 + $0xa8] sm:$0xff] 0.0
        %335 = vst [vmem:[#allocation2 + $0xb0] sm:$0xff] 0.0
        %336 = vst [vmem:[#allocation2 + $0xb8] sm:$0xff] 0.0
        %337 = vst [vmem:[#allocation2 + $0xc0] sm:$0xff] 0.0
        %338 = vst [vmem:[#allocation2 + $0xc8] sm:$0xff] 0.0
        %339 = vst [vmem:[#allocation2 + $0xd0] sm:$0xff] 0.0
        %340 = vst [vmem:[#allocation2 + $0xd8] sm:$0xff] 0.0
        %341 = vst [vmem:[#allocation2 + $0xe0] sm:$0xff] 0.0
        %342 = vst [vmem:[#allocation2 + $0xe8] sm:$0xff] 0.0
        %343 = vst [vmem:[#allocation2 + $0xf0] sm:$0xff] 0.0
        %344 = vst [vmem:[#allocation2 + $0xf8] sm:$0xff] 0.0
      $region40: #{osnet_reid_forward.7} parent=35 // pred_fallthru
        _
      %v345 = vld [vmem:[#allocation2] sm:$0xff]
      %v346 = vld [vmem:[#allocation2 + $0x8] sm:$0xff]
      %v347 = vld [vmem:[#allocation2 + $0x10] sm:$0xff]
      %v348 = vld [vmem:[#allocation2 + $0x18] sm:$0xff]
      %v349 = vld [vmem:[#allocation2 + $0x20] sm:$0xff]
      %v350 = vld [vmem:[#allocation2 + $0x28] sm:$0xff]
      %v351 = vld [vmem:[#allocation2 + $0x30] sm:$0xff]
      %v352 = vld [vmem:[#allocation2 + $0x38] sm:$0xff]
      %v353 = vld [vmem:[#allocation2 + $0x40] sm:$0xff]
      %v354 = vld [vmem:[#allocation2 + $0x48] sm:$0xff]
      %v355 = vld [vmem:[#allocation2 + $0x50] sm:$0xff]
      %v356 = vld [vmem:[#allocation2 + $0x58] sm:$0xff]
      %v357 = vld [vmem:[#allocation2 + $0x60] sm:$0xff]
      %v358 = vld [vmem:[#allocation2 + $0x68] sm:$0xff]
      %v359 = vld [vmem:[#allocation2 + $0x70] sm:$0xff]
      %v360 = vld [vmem:[#allocation2 + $0x78] sm:$0xff]
      %v361 = vld [vmem:[#allocation2 + $0x80] sm:$0xff]
      %v362 = vld [vmem:[#allocation2 + $0x88] sm:$0xff]
      %v363 = vld [vmem:[#allocation2 + $0x90] sm:$0xff]
      %v364 = vld [vmem:[#allocation2 + $0x98] sm:$0xff]
      %v365 = vld [vmem:[#allocation2 + $0xa0] sm:$0xff]
      %v366 = vld [vmem:[#allocation2 + $0xa8] sm:$0xff]
      %v367 = vld [vmem:[#allocation2 + $0xb0] sm:$0xff]
      %v368 = vld [vmem:[#allocation2 + $0xb8] sm:$0xff]
      %v369 = vld [vmem:[#allocation2 + $0xc0] sm:$0xff]
      %v370 = vld [vmem:[#allocation2 + $0xc8] sm:$0xff]
      %v371 = vld [vmem:[#allocation2 + $0xd0] sm:$0xff]
      %v372 = vld [vmem:[#allocation2 + $0xd8] sm:$0xff]
      %v373 = vld [vmem:[#allocation2 + $0xe0] sm:$0xff]
      %v374 = vld [vmem:[#allocation2 + $0xe8] sm:$0xff]
      %v375 = vld [vmem:[#allocation2 + $0xf0] sm:$0xff]
      %v376 = vld [vmem:[#allocation2 + $0xf8] sm:$0xff]
      %v377 = vld [vmem:[%s281] sm:$0xff]
      %v378 = vld [vmem:[%s281 + $0x8] sm:$0xff]
      %v379 = vld [vmem:[%s281 + $0x10] sm:$0xff]
      %v380 = vld [vmem:[%s281 + $0x18] sm:$0xff]
      %v381 = vld [vmem:[%s281 + $0x20] sm:$0xff]
      %v382 = vld [vmem:[%s281 + $0x28] sm:$0xff]
      %v383 = vld [vmem:[%s281 + $0x30] sm:$0xff]
      %v384 = vld [vmem:[%s281 + $0x38] sm:$0xff]
      %v385 = vld [vmem:[%s281 + $0x40] sm:$0xff]
      %v386 = vld [vmem:[%s281 + $0x48] sm:$0xff]
      %v387 = vld [vmem:[%s281 + $0x50] sm:$0xff]
      %v388 = vld [vmem:[%s281 + $0x58] sm:$0xff]
      %v389 = vld [vmem:[%s281 + $0x60] sm:$0xff]
      %v390 = vld [vmem:[%s281 + $0x68] sm:$0xff]
      %v391 = vld [vmem:[%s281 + $0x70] sm:$0xff]
      %v392 = vld [vmem:[%s281 + $0x78] sm:$0xff]
      %v393 = vld [vmem:[%s281 + $0x80] sm:$0xff]
      %v394 = vld [vmem:[%s281 + $0x88] sm:$0xff]
      %v395 = vld [vmem:[%s281 + $0x90] sm:$0xff]
      %v396 = vld [vmem:[%s281 + $0x98] sm:$0xff]
      %v397 = vld [vmem:[%s281 + $0xa0] sm:$0xff]
      %v398 = vld [vmem:[%s281 + $0xa8] sm:$0xff]
      %v399 = vld [vmem:[%s281 + $0xb0] sm:$0xff]
      %v400 = vld [vmem:[%s281 + $0xb8] sm:$0xff]
      %v401 = vld [vmem:[%s281 + $0xc0] sm:$0xff]
      %v402 = vld [vmem:[%s281 + $0xc8] sm:$0xff]
      %v403 = vld [vmem:[%s281 + $0xd0] sm:$0xff]
      %v404 = vld [vmem:[%s281 + $0xd8] sm:$0xff]
      %v405 = vld [vmem:[%s281 + $0xe0] sm:$0xff]
      %v406 = vld [vmem:[%s281 + $0xe8] sm:$0xff]
      %v407 = vld [vmem:[%s281 + $0xf0] sm:$0xff]
      %v408 = vld [vmem:[%s281 + $0xf8] sm:$0xff]
      %v409 = vld [vmem:[%s291] sm:$0xf]
      %v410 = vld [vmem:[%s291 + $0x4] sm:$0xf]
      %v411 = vld [vmem:[%s291 + $0x8] sm:$0xf]
      %v412 = vld [vmem:[%s291 + $0xc] sm:$0xf]
      %v413 = vld [vmem:[%s291 + $0x10] sm:$0xf]
      %v414 = vld [vmem:[%s291 + $0x14] sm:$0xf]
      %v415 = vld [vmem:[%s291 + $0x18] sm:$0xf]
      %v416 = vld [vmem:[%s291 + $0x1c] sm:$0xf]
      %v417 = vld [vmem:[%s291 + $0x20] sm:$0xf]
      %v418 = vld [vmem:[%s291 + $0x24] sm:$0xf]
      %v419 = vld [vmem:[%s291 + $0x28] sm:$0xf]
      %v420 = vld [vmem:[%s291 + $0x2c] sm:$0xf]
      %v421 = vld [vmem:[%s291 + $0x30] sm:$0xf]
      %v422 = vld [vmem:[%s291 + $0x34] sm:$0xf]
      %v423 = vld [vmem:[%s291 + $0x38] sm:$0xf]
      %v424 = vld [vmem:[%s291 + $0x3c] sm:$0xf]
      %v425 = vld [vmem:[%s291 + $0x40] sm:$0xf]
      %v426 = vld [vmem:[%s291 + $0x44] sm:$0xf]
      %v427 = vld [vmem:[%s291 + $0x48] sm:$0xf]
      %v428 = vld [vmem:[%s291 + $0x4c] sm:$0xf]
      %v429 = vld [vmem:[%s291 + $0x50] sm:$0xf]
      %v430 = vld [vmem:[%s291 + $0x54] sm:$0xf]
      %v431 = vld [vmem:[%s291 + $0x58] sm:$0xf]
      %v432 = vld [vmem:[%s291 + $0x5c] sm:$0xf]
      %v433 = vld [vmem:[%s291 + $0x60] sm:$0xf]
      %v434 = vld [vmem:[%s291 + $0x64] sm:$0xf]
      %v435 = vld [vmem:[%s291 + $0x68] sm:$0xf]
      %v436 = vld [vmem:[%s291 + $0x6c] sm:$0xf]
      %v437 = vld [vmem:[%s291 + $0x70] sm:$0xf]
      %v438 = vld [vmem:[%s291 + $0x74] sm:$0xf]
      %v439 = vld [vmem:[%s291 + $0x78] sm:$0xf]
      %v440 = vld [vmem:[%s291 + $0x7c] sm:$0xf]
      %v473 = vunpack.c.l.b16 %v377
      %v474 = vunpack.c.h.b16 %v377
      %v475 = vunpack.c.l.b16 %v378
      %v476 = vunpack.c.h.b16 %v378
      %v477 = vunpack.c.l.b16 %v379
      %v478 = vunpack.c.h.b16 %v379
      %v479 = vunpack.c.l.b16 %v380
      %v480 = vunpack.c.h.b16 %v380
      %v481 = vunpack.c.l.b16 %v381
      %v482 = vunpack.c.h.b16 %v381
      %v483 = vunpack.c.l.b16 %v382
      %v484 = vunpack.c.h.b16 %v382
      %v485 = vunpack.c.l.b16 %v383
      %v486 = vunpack.c.h.b16 %v383
      %v487 = vunpack.c.l.b16 %v384
      %v488 = vunpack.c.h.b16 %v384
      %v489 = vunpack.c.l.b16 %v385
      %v490 = vunpack.c.h.b16 %v385
      %v491 = vunpack.c.l.b16 %v386
      %v492 = vunpack.c.h.b16 %v386
      %v493 = vunpack.c.l.b16 %v387
      %v494 = vunpack.c.h.b16 %v387
      %v495 = vunpack.c.l.b16 %v388
      %v496 = vunpack.c.h.b16 %v388
      %v497 = vunpack.c.l.b16 %v389
      %v498 = vunpack.c.h.b16 %v389
      %v499 = vunpack.c.l.b16 %v390
      %v500 = vunpack.c.h.b16 %v390
      %v501 = vunpack.c.l.b16 %v391
      %v502 = vunpack.c.h.b16 %v391
      %v503 = vunpack.c.l.b16 %v392
      %v504 = vunpack.c.h.b16 %v392
      %v505 = vunpack.c.l.b16 %v393
      %v506 = vunpack.c.h.b16 %v393
      %v507 = vunpack.c.l.b16 %v394
      %v508 = vunpack.c.h.b16 %v394
      %v509 = vunpack.c.l.b16 %v395
      %v510 = vunpack.c.h.b16 %v395
      %v511 = vunpack.c.l.b16 %v396
      %v512 = vunpack.c.h.b16 %v396
      %v513 = vunpack.c.l.b16 %v397
      %v514 = vunpack.c.h.b16 %v397
      %v515 = vunpack.c.l.b16 %v398
      %v516 = vunpack.c.h.b16 %v398
      %v517 = vunpack.c.l.b16 %v399
      %v518 = vunpack.c.h.b16 %v399
      %v519 = vunpack.c.l.b16 %v400
      %v520 = vunpack.c.h.b16 %v400
      %v521 = vunpack.c.l.b16 %v401
      %v522 = vunpack.c.h.b16 %v401
      %v523 = vunpack.c.l.b16 %v402
      %v524 = vunpack.c.h.b16 %v402
      %v525 = vunpack.c.l.b16 %v403
      %v526 = vunpack.c.h.b16 %v403
      %v527 = vunpack.c.l.b16 %v404
      %v528 = vunpack.c.h.b16 %v404
      %v529 = vunpack.c.l.b16 %v405
      %v530 = vunpack.c.h.b16 %v405
      %v531 = vunpack.c.l.b16 %v406
      %v532 = vunpack.c.h.b16 %v406
      %v533 = vunpack.c.l.b16 %v407
      %v534 = vunpack.c.h.b16 %v407
      %v535 = vunpack.c.l.b16 %v408
      %v536 = vunpack.c.h.b16 %v408
      %v537 = vpack.c.b16 %v475, %v473
      %v538 = vpack.c.b16 %v476, %v474
      %v539 = vpack.c.b16 %v479, %v477
      %v540 = vpack.c.b16 %v480, %v478
      %v541 = vpack.c.b16 %v483, %v481
      %v542 = vpack.c.b16 %v484, %v482
      %v543 = vpack.c.b16 %v487, %v485
      %v544 = vpack.c.b16 %v488, %v486
      %v545 = vpack.c.b16 %v491, %v489
      %v546 = vpack.c.b16 %v492, %v490
      %v547 = vpack.c.b16 %v495, %v493
      %v548 = vpack.c.b16 %v496, %v494
      %v549 = vpack.c.b16 %v499, %v497
      %v550 = vpack.c.b16 %v500, %v498
      %v551 = vpack.c.b16 %v503, %v501
      %v552 = vpack.c.b16 %v504, %v502
      %v553 = vpack.c.b16 %v507, %v505
      %v554 = vpack.c.b16 %v508, %v506
      %v555 = vpack.c.b16 %v511, %v509
      %v556 = vpack.c.b16 %v512, %v510
      %v557 = vpack.c.b16 %v515, %v513
      %v558 = vpack.c.b16 %v516, %v514
      %v559 = vpack.c.b16 %v519, %v517
      %v560 = vpack.c.b16 %v520, %v518
      %v561 = vpack.c.b16 %v523, %v521
      %v562 = vpack.c.b16 %v524, %v522
      %v563 = vpack.c.b16 %v527, %v525
      %v564 = vpack.c.b16 %v528, %v526
      %v565 = vpack.c.b16 %v531, %v529
      %v566 = vpack.c.b16 %v532, %v530
      %v567 = vpack.c.b16 %v535, %v533
      %v568 = vpack.c.b16 %v536, %v534
      %v633 = vunpack.c.l.b16 %v409
      %v634 = vunpack.c.l.b16 %v410
      %v635 = vunpack.c.l.b16 %v411
      %v636 = vunpack.c.l.b16 %v412
      %v637 = vunpack.c.l.b16 %v413
      %v638 = vunpack.c.l.b16 %v414
      %v639 = vunpack.c.l.b16 %v415
      %v640 = vunpack.c.l.b16 %v416
      %v641 = vunpack.c.l.b16 %v417
      %v642 = vunpack.c.l.b16 %v418
      %v643 = vunpack.c.l.b16 %v419
      %v644 = vunpack.c.l.b16 %v420
      %v645 = vunpack.c.l.b16 %v421
      %v646 = vunpack.c.l.b16 %v422
      %v647 = vunpack.c.l.b16 %v423
      %v648 = vunpack.c.l.b16 %v424
      %v649 = vunpack.c.l.b16 %v425
      %v650 = vunpack.c.l.b16 %v426
      %v651 = vunpack.c.l.b16 %v427
      %v652 = vunpack.c.l.b16 %v428
      %v653 = vunpack.c.l.b16 %v429
      %v654 = vunpack.c.l.b16 %v430
      %v655 = vunpack.c.l.b16 %v431
      %v656 = vunpack.c.l.b16 %v432
      %v657 = vunpack.c.l.b16 %v433
      %v658 = vunpack.c.l.b16 %v434
      %v659 = vunpack.c.l.b16 %v435
      %v660 = vunpack.c.l.b16 %v436
      %v661 = vunpack.c.l.b16 %v437
      %v662 = vunpack.c.l.b16 %v438
      %v663 = vunpack.c.l.b16 %v439
      %v664 = vunpack.c.l.b16 %v440
      %v665 = vpack.c.b16 %v634, %v633
      %v666 = vpack.c.b16 %v636, %v635
      %v667 = vpack.c.b16 %v638, %v637
      %v668 = vpack.c.b16 %v640, %v639
      %v669 = vpack.c.b16 %v642, %v641
      %v670 = vpack.c.b16 %v644, %v643
      %v671 = vpack.c.b16 %v646, %v645
      %v672 = vpack.c.b16 %v648, %v647
      %v673 = vpack.c.b16 %v650, %v649
      %v674 = vpack.c.b16 %v652, %v651
      %v675 = vpack.c.b16 %v654, %v653
      %v676 = vpack.c.b16 %v656, %v655
      %v677 = vpack.c.b16 %v658, %v657
      %v678 = vpack.c.b16 %v660, %v659
      %v679 = vpack.c.b16 %v662, %v661
      %v680 = vpack.c.b16 %v664, %v663
      %697 = vmatprep.subr.bf16.mxu0 0
      %698 = vmatpush1.bf16.msra.mxu0 %v665
      %699 = vmatprep.subr.bf16.mxu0 0
      %700 = vmatpush1.bf16.msra.mxu0 %v666
      %701 = vmatprep.subr.bf16.mxu0 0
      %702 = vmatpush1.bf16.msra.mxu0 %v667
      %703 = vmatprep.subr.bf16.mxu0 0
      %704 = vmatpush1.bf16.msra.mxu0 %v668
      %705 = vmatprep.subr.bf16.mxu0 0
      %706 = vmatpush1.bf16.msra.mxu0 %v669
      %707 = vmatprep.subr.bf16.mxu0 0
      %708 = vmatpush1.bf16.msra.mxu0 %v670
      %709 = vmatprep.subr.bf16.mxu0 0
      %710 = vmatpush1.bf16.msra.mxu0 %v671
      %711 = vmatprep.subr.bf16.mxu0 0
      %712 = vmatpush1.bf16.msra.mxu0 %v672
      %713 = vmatprep.subr.bf16.mxu0 0
      %714 = vmatpush1.bf16.msra.mxu0 %v673
      %715 = vmatprep.subr.bf16.mxu0 0
      %716 = vmatpush1.bf16.msra.mxu0 %v674
      %717 = vmatprep.subr.bf16.mxu0 0
      %718 = vmatpush1.bf16.msra.mxu0 %v675
      %719 = vmatprep.subr.bf16.mxu0 0
      %720 = vmatpush1.bf16.msra.mxu0 %v676
      %721 = vmatprep.subr.bf16.mxu0 0
      %722 = vmatpush1.bf16.msra.mxu0 %v677
      %723 = vmatprep.subr.bf16.mxu0 0
      %724 = vmatpush1.bf16.msra.mxu0 %v678
      %725 = vmatprep.subr.bf16.mxu0 0
      %726 = vmatpush1.bf16.msra.mxu0 %v679
      %727 = vmatprep.subr.bf16.mxu0 0
      %728 = vmatpush1.bf16.msra.mxu0 %v680
      %729 = vmatprep.mubr.bf16.mxu0 %v538
      %730 = vmatmul.mubr.bf16.gmra.mrb[0].mxu0 %v537
      %v731 = vpop.f32.mrb[0].mxu0
      %v732 = vadd.f32 0.0, %v731
      %v733 = vpop.f32.mrb[0].mxu0
      %v734 = vpop.f32.mrb[0].mxu0
      %v735 = vadd.f32 0.0, %v734
      %v736 = vpop.f32.mrb[0].mxu0
      %737 = vmatprep.mubr.bf16.mxu0 %v540
      %738 = vmatmul.mubr.bf16.gmra.mrb[0].mxu0 %v539
      %v739 = vpop.f32.mrb[0].mxu0
      %v740 = vadd.f32 0.0, %v739
      %v741 = vpop.f32.mrb[0].mxu0
      %v742 = vpop.f32.mrb[0].mxu0
      %v743 = vadd.f32 0.0, %v742
      %v744 = vpop.f32.mrb[0].mxu0
      %745 = vmatprep.mubr.bf16.mxu0 %v542
      %746 = vmatmul.mubr.bf16.gmra.mrb[0].mxu0 %v541
      %v747 = vpop.f32.mrb[0].mxu0
      %v748 = vadd.f32 0.0, %v747
      %v749 = vpop.f32.mrb[0].mxu0
      %v750 = vpop.f32.mrb[0].mxu0
      %v751 = vadd.f32 0.0, %v750
      %v752 = vpop.f32.mrb[0].mxu0
      %753 = vmatprep.mubr.bf16.mxu0 %v544
      %754 = vmatmul.mubr.bf16.gmra.mrb[0].mxu0 %v543
      %v755 = vpop.f32.mrb[0].mxu0
      %v756 = vadd.f32 0.0, %v755
      %v757 = vpop.f32.mrb[0].mxu0
      %v758 = vpop.f32.mrb[0].mxu0
      %v759 = vadd.f32 0.0, %v758
      %v760 = vpop.f32.mrb[0].mxu0
      %761 = vmatprep.mubr.bf16.mxu0 %v546
      %762 = vmatmul.mubr.bf16.gmra.mrb[0].mxu0 %v545
      %v763 = vpop.f32.mrb[0].mxu0
      %v764 = vadd.f32 0.0, %v763
      %v765 = vpop.f32.mrb[0].mxu0
      %v766 = vpop.f32.mrb[0].mxu0
      %v767 = vadd.f32 0.0, %v766
      %v768 = vpop.f32.mrb[0].mxu0
      %769 = vmatprep.mubr.bf16.mxu0 %v548
      %770 = vmatmul.mubr.bf16.gmra.mrb[0].mxu0 %v547
      %v771 = vpop.f32.mrb[0].mxu0
      %v772 = vadd.f32 0.0, %v771
      %v773 = vpop.f32.mrb[0].mxu0
      %v774 = vpop.f32.mrb[0].mxu0
      %v775 = vadd.f32 0.0, %v774
      %v776 = vpop.f32.mrb[0].mxu0
      %777 = vmatprep.mubr.bf16.mxu0 %v550
      %778 = vmatmul.mubr.bf16.gmra.mrb[0].mxu0 %v549
      %v779 = vpop.f32.mrb[0].mxu0
      %v780 = vadd.f32 0.0, %v779
      %v781 = vpop.f32.mrb[0].mxu0
      %v782 = vpop.f32.mrb[0].mxu0
      %v783 = vadd.f32 0.0, %v782
      %v784 = vpop.f32.mrb[0].mxu0
      %785 = vmatprep.mubr.bf16.mxu0 %v552
      %786 = vmatmul.mubr.bf16.gmra.mrb[0].mxu0 %v551
      %v787 = vpop.f32.mrb[0].mxu0
      %v788 = vadd.f32 0.0, %v787
      %v789 = vpop.f32.mrb[0].mxu0
      %v790 = vpop.f32.mrb[0].mxu0
      %v791 = vadd.f32 0.0, %v790
      %v792 = vpop.f32.mrb[0].mxu0
      %793 = vmatprep.mubr.bf16.mxu0 %v554
      %794 = vmatmul.mubr.bf16.gmra.mrb[0].mxu0 %v553
      %v795 = vpop.f32.mrb[0].mxu0
      %v796 = vadd.f32 0.0, %v795
      %v797 = vpop.f32.mrb[0].mxu0
      %v798 = vpop.f32.mrb[0].mxu0
      %v799 = vadd.f32 0.0, %v798
      %v800 = vpop.f32.mrb[0].mxu0
      %801 = vmatprep.mubr.bf16.mxu0 %v556
      %802 = vmatmul.mubr.bf16.gmra.mrb[0].mxu0 %v555
      %v803 = vpop.f32.mrb[0].mxu0
      %v804 = vadd.f32 0.0, %v803
      %v805 = vpop.f32.mrb[0].mxu0
      %v806 = vpop.f32.mrb[0].mxu0
      %v807 = vadd.f32 0.0, %v806
      %v808 = vpop.f32.mrb[0].mxu0
      %809 = vmatprep.mubr.bf16.mxu0 %v558
      %810 = vmatmul.mubr.bf16.gmra.mrb[0].mxu0 %v557
      %v811 = vpop.f32.mrb[0].mxu0
      %v812 = vadd.f32 0.0, %v811
      %v813 = vpop.f32.mrb[0].mxu0
      %v814 = vpop.f32.mrb[0].mxu0
      %v815 = vadd.f32 0.0, %v814
      %v816 = vpop.f32.mrb[0].mxu0
      %817 = vmatprep.mubr.bf16.mxu0 %v560
      %818 = vmatmul.mubr.bf16.gmra.mrb[0].mxu0 %v559
      %v819 = vpop.f32.mrb[0].mxu0
      %v820 = vadd.f32 0.0, %v819
      %v821 = vpop.f32.mrb[0].mxu0
      %v822 = vpop.f32.mrb[0].mxu0
      %v823 = vadd.f32 0.0, %v822
      %v824 = vpop.f32.mrb[0].mxu0
      %825 = vmatprep.mubr.bf16.mxu0 %v562
      %826 = vmatmul.mubr.bf16.gmra.mrb[0].mxu0 %v561
      %v827 = vpop.f32.mrb[0].mxu0
      %v828 = vadd.f32 0.0, %v827
      %v829 = vpop.f32.mrb[0].mxu0
      %v830 = vpop.f32.mrb[0].mxu0
      %v831 = vadd.f32 0.0, %v830
      %v832 = vpop.f32.mrb[0].mxu0
      %833 = vmatprep.mubr.bf16.mxu0 %v564
      %834 = vmatmul.mubr.bf16.gmra.mrb[0].mxu0 %v563
      %v835 = vpop.f32.mrb[0].mxu0
      %v836 = vadd.f32 0.0, %v835
      %v837 = vpop.f32.mrb[0].mxu0
      %v838 = vpop.f32.mrb[0].mxu0
      %v839 = vadd.f32 0.0, %v838
      %v840 = vpop.f32.mrb[0].mxu0
      %841 = vmatprep.mubr.bf16.mxu0 %v566
      %842 = vmatmul.mubr.bf16.gmra.mrb[0].mxu0 %v565
      %v843 = vpop.f32.mrb[0].mxu0
      %v844 = vadd.f32 0.0, %v843
      %v845 = vpop.f32.mrb[0].mxu0
      %v846 = vpop.f32.mrb[0].mxu0
      %v847 = vadd.f32 0.0, %v846
      %v848 = vpop.f32.mrb[0].mxu0
      %849 = vmatprep.mubr.bf16.mxu0 %v568
      %850 = vmatmul.mubr.bf16.gmra.mrb[0].mxu0 %v567
      %v851 = vpop.f32.mrb[0].mxu0
      %v852 = vadd.f32 0.0, %v851
      %v853 = vpop.f32.mrb[0].mxu0
      %v854 = vpop.f32.mrb[0].mxu0
      %v855 = vadd.f32 0.0, %v854
      %v856 = vpop.f32.mrb[0].mxu0
      %857 = vdwg.mxu0
      %v858 = vadd.f32 %v345, %v732
      %v859 = vadd.f32 %v346, %v735
      %v860 = vadd.f32 %v347, %v740
      %v861 = vadd.f32 %v348, %v743
      %v862 = vadd.f32 %v349, %v748
      %v863 = vadd.f32 %v350, %v751
      %v864 = vadd.f32 %v351, %v756
      %v865 = vadd.f32 %v352, %v759
      %v866 = vadd.f32 %v353, %v764
      %v867 = vadd.f32 %v354, %v767
      %v868 = vadd.f32 %v355, %v772
      %v869 = vadd.f32 %v356, %v775
      %v870 = vadd.f32 %v357, %v780
      %v871 = vadd.f32 %v358, %v783
      %v872 = vadd.f32 %v359, %v788
      %v873 = vadd.f32 %v360, %v791
      %v874 = vadd.f32 %v361, %v796
      %v875 = vadd.f32 %v362, %v799
      %v876 = vadd.f32 %v363, %v804
      %v877 = vadd.f32 %v364, %v807
      %v878 = vadd.f32 %v365, %v812
      %v879 = vadd.f32 %v366, %v815
      %v880 = vadd.f32 %v367, %v820
      %v881 = vadd.f32 %v368, %v823
      %v882 = vadd.f32 %v369, %v828
      %v883 = vadd.f32 %v370, %v831
      %v884 = vadd.f32 %v371, %v836
      %v885 = vadd.f32 %v372, %v839
      %v886 = vadd.f32 %v373, %v844
      %v887 = vadd.f32 %v374, %v847
      %v888 = vadd.f32 %v375, %v852
      %v889 = vadd.f32 %v376, %v855
      %890 = vst [vmem:[#allocation2] sm:$0xff] %v858
      %891 = vst [vmem:[#allocation2 + $0x8] sm:$0xff] %v859
      %892 = vst [vmem:[#allocation2 + $0x10] sm:$0xff] %v860
      %893 = vst [vmem:[#allocation2 + $0x18] sm:$0xff] %v861
      %894 = vst [vmem:[#allocation2 + $0x20] sm:$0xff] %v862
      %895 = vst [vmem:[#allocation2 + $0x28] sm:$0xff] %v863
      %896 = vst [vmem:[#allocation2 + $0x30] sm:$0xff] %v864
      %897 = vst [vmem:[#allocation2 + $0x38] sm:$0xff] %v865
      %898 = vst [vmem:[#allocation2 + $0x40] sm:$0xff] %v866
      %899 = vst [vmem:[#allocation2 + $0x48] sm:$0xff] %v867
      %900 = vst [vmem:[#allocation2 + $0x50] sm:$0xff] %v868
      %901 = vst [vmem:[#allocation2 + $0x58] sm:$0xff] %v869
      %902 = vst [vmem:[#allocation2 + $0x60] sm:$0xff] %v870
      %903 = vst [vmem:[#allocation2 + $0x68] sm:$0xff] %v871
      %904 = vst [vmem:[#allocation2 + $0x70] sm:$0xff] %v872
      %905 = vst [vmem:[#allocation2 + $0x78] sm:$0xff] %v873
      %906 = vst [vmem:[#allocation2 + $0x80] sm:$0xff] %v874
      %907 = vst [vmem:[#allocation2 + $0x88] sm:$0xff] %v875
      %908 = vst [vmem:[#allocation2 + $0x90] sm:$0xff] %v876
      %909 = vst [vmem:[#allocation2 + $0x98] sm:$0xff] %v877
      %910 = vst [vmem:[#allocation2 + $0xa0] sm:$0xff] %v878
      %911 = vst [vmem:[#allocation2 + $0xa8] sm:$0xff] %v879
      %912 = vst [vmem:[#allocation2 + $0xb0] sm:$0xff] %v880
      %913 = vst [vmem:[#allocation2 + $0xb8] sm:$0xff] %v881
      %914 = vst [vmem:[#allocation2 + $0xc0] sm:$0xff] %v882
      %915 = vst [vmem:[#allocation2 + $0xc8] sm:$0xff] %v883
      %916 = vst [vmem:[#allocation2 + $0xd0] sm:$0xff] %v884
      %917 = vst [vmem:[#allocation2 + $0xd8] sm:$0xff] %v885
      %918 = vst [vmem:[#allocation2 + $0xe0] sm:$0xff] %v886
      %919 = vst [vmem:[#allocation2 + $0xe8] sm:$0xff] %v887
      %920 = vst [vmem:[#allocation2 + $0xf0] sm:$0xff] %v888
      %921 = vst [vmem:[#allocation2 + $0xf8] sm:$0xff] %v889
      // Predicated region
      $region41: #{osnet_reid_forward.7} parent=35 // pred_check
        %p922 = pneg %p309
      $region42: #{osnet_reid_forward.7} parent=35 // pred_check_branch
        %924 = sbr.rel (%p922) target = $region44
      $region43: #{osnet_reid_forward.7} parent=35 // pred_region
        %v925 = vld [vmem:[#allocation2] sm:$0xff]
        %v926 = vld [vmem:[#allocation2 + $0x8] sm:$0xff]
        %v927 = vld [vmem:[#allocation2 + $0x10] sm:$0xff]
        %v928 = vld [vmem:[#allocation2 + $0x18] sm:$0xff]
        %v929 = vld [vmem:[#allocation2 + $0x20] sm:$0xff]
        %v930 = vld [vmem:[#allocation2 + $0x28] sm:$0xff]
        %v931 = vld [vmem:[#allocation2 + $0x30] sm:$0xff]
        %v932 = vld [vmem:[#allocation2 + $0x38] sm:$0xff]
        %v933 = vld [vmem:[#allocation2 + $0x40] sm:$0xff]
        %v934 = vld [vmem:[#allocation2 + $0x48] sm:$0xff]
        %v935 = vld [vmem:[#allocation2 + $0x50] sm:$0xff]
        %v936 = vld [vmem:[#allocation2 + $0x58] sm:$0xff]
        %v937 = vld [vmem:[#allocation2 + $0x60] sm:$0xff]
        %v938 = vld [vmem:[#allocation2 + $0x68] sm:$0xff]
        %v939 = vld [vmem:[#allocation2 + $0x70] sm:$0xff]
        %v940 = vld [vmem:[#allocation2 + $0x78] sm:$0xff]
        %v941 = vld [vmem:[#allocation2 + $0x80] sm:$0xff]
        %v942 = vld [vmem:[#allocation2 + $0x88] sm:$0xff]
        %v943 = vld [vmem:[#allocation2 + $0x90] sm:$0xff]
        %v944 = vld [vmem:[#allocation2 + $0x98] sm:$0xff]
        %v945 = vld [vmem:[#allocation2 + $0xa0] sm:$0xff]
        %v946 = vld [vmem:[#allocation2 + $0xa8] sm:$0xff]
        %v947 = vld [vmem:[#allocation2 + $0xb0] sm:$0xff]
        %v948 = vld [vmem:[#allocation2 + $0xb8] sm:$0xff]
        %v949 = vld [vmem:[#allocation2 + $0xc0] sm:$0xff]
        %v950 = vld [vmem:[#allocation2 + $0xc8] sm:$0xff]
        %v951 = vld [vmem:[#allocation2 + $0xd0] sm:$0xff]
        %v952 = vld [vmem:[#allocation2 + $0xd8] sm:$0xff]
        %v953 = vld [vmem:[#allocation2 + $0xe0] sm:$0xff]
        %v954 = vld [vmem:[#allocation2 + $0xe8] sm:$0xff]
        %v955 = vld [vmem:[#allocation2 + $0xf0] sm:$0xff]
        %v956 = vld [vmem:[#allocation2 + $0xf8] sm:$0xff]
        %v957 = vld [vmem:[%s295] sm:$0x1]
        %v959 = vlaneseq
        %v960 = vshrl.u32 %v959, 7
        %v961 = vsub.s32 0, %v960
        %v962 = vrot.slane %v957, %v961
        %v964 = vmul.f32 %v925, %v962
        %v965 = vmul.f32 %v926, %v962
        %v966 = vmul.f32 %v927, %v962
        %v967 = vmul.f32 %v928, %v962
        %v968 = vmul.f32 %v929, %v962
        %v969 = vmul.f32 %v930, %v962
        %v970 = vmul.f32 %v931, %v962
        %v971 = vmul.f32 %v932, %v962
        %v972 = vmul.f32 %v933, %v962
        %v973 = vmul.f32 %v934, %v962
        %v974 = vmul.f32 %v935, %v962
        %v975 = vmul.f32 %v936, %v962
        %v976 = vmul.f32 %v937, %v962
        %v977 = vmul.f32 %v938, %v962
        %v978 = vmul.f32 %v939, %v962
        %v979 = vmul.f32 %v940, %v962
        %v980 = vmul.f32 %v941, %v962
        %v981 = vmul.f32 %v942, %v962
        %v982 = vmul.f32 %v943, %v962
        %v983 = vmul.f32 %v944, %v962
        %v984 = vmul.f32 %v945, %v962
        %v985 = vmul.f32 %v946, %v962
        %v986 = vmul.f32 %v947, %v962
        %v987 = vmul.f32 %v948, %v962
        %v988 = vmul.f32 %v949, %v962
        %v989 = vmul.f32 %v950, %v962
        %v990 = vmul.f32 %v951, %v962
        %v991 = vmul.f32 %v952, %v962
        %v992 = vmul.f32 %v953, %v962
        %v993 = vmul.f32 %v954, %v962
        %v994 = vmul.f32 %v955, %v962
        %v995 = vmul.f32 %v956, %v962
        %v996 = vld [vmem:[%s298] sm:$0x1]
        %v998 = vlaneseq
        %v999 = vshrl.u32 %v998, 7
        %v1000 = vsub.s32 0, %v999
        %v1001 = vrot.slane %v996, %v1000
        %v1003 = vadd.f32 %v964, %v1001
        %v1004 = vadd.f32 %v965, %v1001
        %v1005 = vadd.f32 %v966, %v1001
        %v1006 = vadd.f32 %v967, %v1001
        %v1007 = vadd.f32 %v968, %v1001
        %v1008 = vadd.f32 %v969, %v1001
        %v1009 = vadd.f32 %v970, %v1001
        %v1010 = vadd.f32 %v971, %v1001
        %v1011 = vadd.f32 %v972, %v1001
        %v1012 = vadd.f32 %v973, %v1001
        %v1013 = vadd.f32 %v974, %v1001
        %v1014 = vadd.f32 %v975, %v1001
        %v1015 = vadd.f32 %v976, %v1001
        %v1016 = vadd.f32 %v977, %v1001
        %v1017 = vadd.f32 %v978, %v1001
        %v1018 = vadd.f32 %v979, %v1001
        %v1019 = vadd.f32 %v980, %v1001
        %v1020 = vadd.f32 %v981, %v1001
        %v1021 = vadd.f32 %v982, %v1001
        %v1022 = vadd.f32 %v983, %v1001
        %v1023 = vadd.f32 %v984, %v1001
        %v1024 = vadd.f32 %v985, %v1001
        %v1025 = vadd.f32 %v986, %v1001
        %v1026 = vadd.f32 %v987, %v1001
        %v1027 = vadd.f32 %v988, %v1001
        %v1028 = vadd.f32 %v989, %v1001
        %v1029 = vadd.f32 %v990, %v1001
        %v1030 = vadd.f32 %v991, %v1001
        %v1031 = vadd.f32 %v992, %v1001
        %v1032 = vadd.f32 %v993, %v1001
        %v1033 = vadd.f32 %v994, %v1001
        %v1034 = vadd.f32 %v995, %v1001
        %v1035 = vmax.f32 %v1003, 0.0
        %v1036 = vmax.f32 %v1004, 0.0
        %v1037 = vmax.f32 %v1005, 0.0
        %v1038 = vmax.f32 %v1006, 0.0
        %v1039 = vmax.f32 %v1007, 0.0
        %v1040 = vmax.f32 %v1008, 0.0
        %v1041 = vmax.f32 %v1009, 0.0
        %v1042 = vmax.f32 %v1010, 0.0
        %v1043 = vmax.f32 %v1011, 0.0
        %v1044 = vmax.f32 %v1012, 0.0
        %v1045 = vmax.f32 %v1013, 0.0
        %v1046 = vmax.f32 %v1014, 0.0
        %v1047 = vmax.f32 %v1015, 0.0
        %v1048 = vmax.f32 %v1016, 0.0
        %v1049 = vmax.f32 %v1017, 0.0
        %v1050 = vmax.f32 %v1018, 0.0
        %v1051 = vmax.f32 %v1019, 0.0
        %v1052 = vmax.f32 %v1020, 0.0
        %v1053 = vmax.f32 %v1021, 0.0
        %v1054 = vmax.f32 %v1022, 0.0
        %v1055 = vmax.f32 %v1023, 0.0
        %v1056 = vmax.f32 %v1024, 0.0
        %v1057 = vmax.f32 %v1025, 0.0
        %v1058 = vmax.f32 %v1026, 0.0
        %v1059 = vmax.f32 %v1027, 0.0
        %v1060 = vmax.f32 %v1028, 0.0
        %v1061 = vmax.f32 %v1029, 0.0
        %v1062 = vmax.f32 %v1030, 0.0
        %v1063 = vmax.f32 %v1031, 0.0
        %v1064 = vmax.f32 %v1032, 0.0
        %v1065 = vmax.f32 %v1033, 0.0
        %v1066 = vmax.f32 %v1034, 0.0
        %1067 = vst [vmem:[%s306] sm:$0xff] %v1035
        %1068 = vst [vmem:[%s306 + $0x8] sm:$0xff] %v1036
        %1069 = vst [vmem:[%s306 + $0x10] sm:$0xff] %v1037
        %1070 = vst [vmem:[%s306 + $0x18] sm:$0xff] %v1038
        %1071 = vst [vmem:[%s306 + $0x20] sm:$0xff] %v1039
        %1072 = vst [vmem:[%s306 + $0x28] sm:$0xff] %v1040
        %1073 = vst [vmem:[%s306 + $0x30] sm:$0xff] %v1041
        %1074 = vst [vmem:[%s306 + $0x38] sm:$0xff] %v1042
        %1075 = vst [vmem:[%s306 + $0x40] sm:$0xff] %v1043
        %1076 = vst [vmem:[%s306 + $0x48] sm:$0xff] %v1044
        %1077 = vst [vmem:[%s306 + $0x50] sm:$0xff] %v1045
        %1078 = vst [vmem:[%s306 + $0x58] sm:$0xff] %v1046
        %1079 = vst [vmem:[%s306 + $0x60] sm:$0xff] %v1047
        %1080 = vst [vmem:[%s306 + $0x68] sm:$0xff] %v1048
        %1081 = vst [vmem:[%s306 + $0x70] sm:$0xff] %v1049
        %1082 = vst [vmem:[%s306 + $0x78] sm:$0xff] %v1050
        %1083 = vst [vmem:[%s306 + $0x80] sm:$0xff] %v1051
        %1084 = vst [vmem:[%s306 + $0x88] sm:$0xff] %v1052
        %1085 = vst [vmem:[%s306 + $0x90] sm:$0xff] %v1053
        %1086 = vst [vmem:[%s306 + $0x98] sm:$0xff] %v1054
        %1087 = vst [vmem:[%s306 + $0xa0] sm:$0xff] %v1055
        %1088 = vst [vmem:[%s306 + $0xa8] sm:$0xff] %v1056
        %1089 = vst [vmem:[%s306 + $0xb0] sm:$0xff] %v1057
        %1090 = vst [vmem:[%s306 + $0xb8] sm:$0xff] %v1058
        %1091 = vst [vmem:[%s306 + $0xc0] sm:$0xff] %v1059
        %1092 = vst [vmem:[%s306 + $0xc8] sm:$0xff] %v1060
        %1093 = vst [vmem:[%s306 + $0xd0] sm:$0xff] %v1061
        %1094 = vst [vmem:[%s306 + $0xd8] sm:$0xff] %v1062
        %1095 = vst [vmem:[%s306 + $0xe0] sm:$0xff] %v1063
        %1096 = vst [vmem:[%s306 + $0xe8] sm:$0xff] %v1064
        %1097 = vst [vmem:[%s306 + $0xf0] sm:$0xff] %v1065
        %1098 = vst [vmem:[%s306 + $0xf8] sm:$0xff] %v1066
      $region44: #{osnet_reid_forward.7} parent=35 // pred_fallthru
        _
      %s1099 = smul.u32 32, %s20
      %p1100 = scmp.lt.s32.totalorder %s1099, 63
      %s1101 = scalar_select %p1100, %s1099, 63
      %p1102 = scmp.lt.s32.totalorder %s21, 0
      %s1103 = scalar_select %p1102, %s21, 0
      %s1104 = sadd.s32 %s1103, %s1101
      %s1105 = smul.addr %s1104, 8
      %s1106 = scalar_lea.vmem %s4, %s1105
      // Predicated region
      $region45: #{osnet_reid_forward.7} parent=35 // pred_check
        %p1107 = pneg %p162
      $region46: #{osnet_reid_forward.7} parent=35 // pred_check_branch
        %1109 = sbr.rel (%p1107) target = $region48
      $region47: #{osnet_reid_forward.7} parent=35 // pred_region
        %s1110 = smul.u32 32, %s20
      $region48: #{osnet_reid_forward.7} parent=35 // pred_fallthru
        _
    $region36: #{osnet_reid_forward.7} parent=5 // pred_fallthru
      _
    %p1111 = scmp.le.s32.totalorder 2, %s10
    // Predicated region
    $region49: #{osnet_reid_forward.7} parent=5 // pred_check
      %p1112 = pneg %p1111
    $region50: #{osnet_reid_forward.7} parent=5 // pred_check_branch
      %1114 = sbr.rel (%p1112) target = $region52
    $region51: #{osnet_reid_forward.7} parent=5 // pred_region
      %s1115 = ssub.s32 %s10, 2
      // Predicated region
      $region53: #{osnet_reid_forward.7} parent=51 // pred_check
        %p1116 = pneg %p168
      $region54: #{osnet_reid_forward.7} parent=51 // pred_check_branch
        %1118 = sbr.rel (%p1116) target = $region56
      $region55: #{osnet_reid_forward.7} parent=51 // pred_region
        %s1119 = smul.u32 32, %s23
        %p1120 = scmp.lt.s32.totalorder %s1119, 63
        %s1121 = scalar_select %p1120, %s1119, 63
        %p1122 = scmp.lt.s32.totalorder %s24, 0
        %s1123 = scalar_select %p1122, %s24, 0
        %s1124 = sadd.s32 %s1123, %s1121
        %s1125 = smul.addr %s1124, 8
        %s1126 = scalar_lea.vmem %s4, %s1125
      $region56: #{osnet_reid_forward.7} parent=51 // pred_fallthru
        _
    $region52: #{osnet_reid_forward.7} parent=5 // pred_fallthru
      _
  $region6: #{osnet_reid_forward.7} parent=0 // loop_footer
    %s14 = sadd.s32 1, %s10
  $region7: #{osnet_reid_forward.7} parent=0 // loop_footer_branch
    %9 = sbr.rel target = $region3
  $region8: #{osnet_reid_forward.7} parent=0 // loop_exit
    _

// kernel: osnet_reid_forward.8
$region0: #{osnet_reid_forward.8}
  #allocation0 [shape = 'u32[]', space=smem, size = 0x4, offset = 0x4, fixed_abs, tag = 'smem constant byte address 0x4 - core index']
  #allocation1 [shape = 'u32[144,128]{1,0:T(1,128)}', space=vmem, size = 0x12000, scoped, tag = 'internal scratch']
  %s0 = inlined_call_operand.vmem [shape: f32[2,9,9,64], index: 0, kind: input, shape index: {}]
  %s1 = inlined_call_operand.vmem [shape: f32[2,9,9,64], index: 1, kind: input, shape index: {}]
  %s2 = inlined_call_operand.vmem [shape: f32[2,9,9,64], index: 2, kind: input, shape index: {}]
  %s3 = inlined_call_operand.vmem [shape: f32[2,9,9,64], index: 3, kind: input, shape index: {}]
  %s4 = inlined_call_operand.vmem [shape: f32[2,8,8,64], index: 4, kind: output, shape index: {}]
  %s5 = sld [smem:[#allocation0]]
  $region49: #{osnet_reid_forward.8} parent=0
    _
  %s7 = ssub.s32 1, %s5
  %s8 = scalar_select 0, %s7, %s5
  loop: start=0, step=1, limit=4
  $region2: #{osnet_reid_forward.8} parent=0 // loop_pre_header
    _
  $region3: #{osnet_reid_forward.8} parent=0 // loop_header
    %s10 = sphi 0, %s14
    %p11 = scmp.ge.s32.totalorder %s10, 4
    %s20 = sphi 0, %s22
    %s23 = sphi 0, %s20
    %s24 = sphi 0, %s23
    %s40 = sphi 0, %s24
    %s46 = sphi 0, %s48
    %s49 = sphi 0, %s46
    %s50 = sphi 0, %s49
    %s66 = sphi 0, %s50
    %s72 = sphi 0, %s74
    %s75 = sphi 0, %s72
    %s76 = sphi 0, %s75
    %s92 = sphi 0, %s76
    %s98 = sphi 0, %s100
    %s101 = sphi 0, %s98
    %s102 = sphi 0, %s101
    %s118 = sphi 0, %s102
    %s124 = sphi 0, %s126
    %s127 = sphi 0, %s124
    %s128 = sphi 0, %s127
    %s144 = sphi 0, %s128
  $region4: #{osnet_reid_forward.8} parent=0 // loop_header_branch
    %13 = sbr.rel (%p11) target = $region8
  $region5: #{osnet_reid_forward.8} parent=0 // loop_body
    %s15 = ssub.s32 %s10, 1
    %s16 = ssub.s32 %s10, 2
    %s17 = sadd.s32 %s10, 1
    %s18 = ssub.s32 %s10, %s17
    %p19 = scmp.eq.s32.totalorder %s18, 0
    %s21 = sadd.s32 %s20, 1
    %s22 = scalar_select %p19, %s20, %s21
    %p25 = pneg %p19
    %p26 = scmp.eq.s32.totalorder %s10, 1
    %p27 = por %p25, %p26
    %p28 = scmp.ne.s32.totalorder %s20, %s23
    %p29 = scmp.eq.s32.totalorder %s10, 0
    %p30 = por %p28, %p29
    %p31 = scmp.ne.s32.totalorder %s20, %s23
    %p32 = scmp.eq.s32.totalorder %s15, 1
    %p33 = por %p31, %p32
    %p34 = scmp.ne.s32.totalorder %s23, %s24
    %p35 = scmp.eq.s32.totalorder %s15, 0
    %p36 = por %p34, %p35
    %p37 = scmp.ne.s32.totalorder %s23, %s24
    %p38 = scmp.eq.s32.totalorder %s16, 1
    %p39 = por %p37, %p38
    %p41 = scmp.ne.s32.totalorder %s24, %s40
    %p42 = scmp.eq.s32.totalorder %s16, 0
    %p43 = por %p41, %p42
    %s44 = ssub.s32 %s10, %s17
    %p45 = scmp.eq.s32.totalorder %s44, 0
    %s47 = sadd.s32 %s46, 1
    %s48 = scalar_select %p45, %s46, %s47
    %p51 = pneg %p45
    %p52 = scmp.eq.s32.totalorder %s10, 1
    %p53 = por %p51, %p52
    %p54 = scmp.ne.s32.totalorder %s46, %s49
    %p55 = scmp.eq.s32.totalorder %s10, 0
    %p56 = por %p54, %p55
    %p57 = scmp.ne.s32.totalorder %s46, %s49
    %p58 = scmp.eq.s32.totalorder %s15, 1
    %p59 = por %p57, %p58
    %p60 = scmp.ne.s32.totalorder %s49, %s50
    %p61 = scmp.eq.s32.totalorder %s15, 0
    %p62 = por %p60, %p61
    %p63 = scmp.ne.s32.totalorder %s49, %s50
    %p64 = scmp.eq.s32.totalorder %s16, 1
    %p65 = por %p63, %p64
    %p67 = scmp.ne.s32.totalorder %s50, %s66
    %p68 = scmp.eq.s32.totalorder %s16, 0
    %p69 = por %p67, %p68
    %s70 = ssub.s32 %s10, %s17
    %p71 = scmp.eq.s32.totalorder %s70, 0
    %s73 = sadd.s32 %s72, 1
    %s74 = scalar_select %p71, %s72, %s73
    %p77 = pneg %p71
    %p78 = scmp.eq.s32.totalorder %s10, 1
    %p79 = por %p77, %p78
    %p80 = scmp.ne.s32.totalorder %s72, %s75
    %p81 = scmp.eq.s32.totalorder %s10, 0
    %p82 = por %p80, %p81
    %p83 = scmp.ne.s32.totalorder %s72, %s75
    %p84 = scmp.eq.s32.totalorder %s15, 1
    %p85 = por %p83, %p84
    %p86 = scmp.ne.s32.totalorder %s75, %s76
    %p87 = scmp.eq.s32.totalorder %s15, 0
    %p88 = por %p86, %p87
    %p89 = scmp.ne.s32.totalorder %s75, %s76
    %p90 = scmp.eq.s32.totalorder %s16, 1
    %p91 = por %p89, %p90
    %p93 = scmp.ne.s32.totalorder %s76, %s92
    %p94 = scmp.eq.s32.totalorder %s16, 0
    %p95 = por %p93, %p94
    %s96 = ssub.s32 %s10, %s17
    %p97 = scmp.eq.s32.totalorder %s96, 0
    %s99 = sadd.s32 %s98, 1
    %s100 = scalar_select %p97, %s98, %s99
    %p103 = pneg %p97
    %p104 = scmp.eq.s32.totalorder %s10, 1
    %p105 = por %p103, %p104
    %p106 = scmp.ne.s32.totalorder %s98, %s101
    %p107 = scmp.eq.s32.totalorder %s10, 0
    %p108 = por %p106, %p107
    %p109 = scmp.ne.s32.totalorder %s98, %s101
    %p110 = scmp.eq.s32.totalorder %s15, 1
    %p111 = por %p109, %p110
    %p112 = scmp.ne.s32.totalorder %s101, %s102
    %p113 = scmp.eq.s32.totalorder %s15, 0
    %p114 = por %p112, %p113
    %p115 = scmp.ne.s32.totalorder %s101, %s102
    %p116 = scmp.eq.s32.totalorder %s16, 1
    %p117 = por %p115, %p116
    %p119 = scmp.ne.s32.totalorder %s102, %s118
    %p120 = scmp.eq.s32.totalorder %s16, 0
    %p121 = por %p119, %p120
    %s122 = ssub.s32 %s10, %s17
    %p123 = scmp.eq.s32.totalorder %s122, 0
    %s125 = sadd.s32 %s124, 1
    %s126 = scalar_select %p123, %s124, %s125
    %p129 = pneg %p123
    %p130 = scmp.eq.s32.totalorder %s10, 1
    %p131 = por %p129, %p130
    %p132 = scmp.ne.s32.totalorder %s124, %s127
    %p133 = scmp.eq.s32.totalorder %s10, 0
    %p134 = por %p132, %p133
    %p135 = scmp.ne.s32.totalorder %s124, %s127
    %p136 = scmp.eq.s32.totalorder %s15, 1
    %p137 = por %p135, %p136
    %p138 = scmp.ne.s32.totalorder %s127, %s128
    %p139 = scmp.eq.s32.totalorder %s15, 0
    %p140 = por %p138, %p139
    %p141 = scmp.ne.s32.totalorder %s127, %s128
    %p142 = scmp.eq.s32.totalorder %s16, 1
    %p143 = por %p141, %p142
    %p145 = scmp.ne.s32.totalorder %s128, %s144
    %p146 = scmp.eq.s32.totalorder %s16, 0
    %p147 = por %p145, %p146
    %p148 = scmp.le.s32.totalorder 1, %s10
    %p149 = scmp.lt.s32.totalorder %s10, 3
    %p150 = pnand %p148, %p149
    %p151 = pneg %p150
    // Predicated region
    $region9: #{osnet_reid_forward.8} parent=5 // pred_check
      _
    $region10: #{osnet_reid_forward.8} parent=5 // pred_check_branch
      %153 = sbr.rel (%p150) target = $region12
    $region11: #{osnet_reid_forward.8} parent=5 // pred_region
      %s154 = ssub.s32 %s10, 1
    $region12: #{osnet_reid_forward.8} parent=5 // pred_fallthru
      _
    %p155 = scmp.lt.s32.totalorder %s10, 2
    // Predicated region
    $region13: #{osnet_reid_forward.8} parent=5 // pred_check
      %p156 = pneg %p155
    $region14: #{osnet_reid_forward.8} parent=5 // pred_check_branch
      %158 = sbr.rel (%p156) target = $region16
    $region15: #{osnet_reid_forward.8} parent=5 // pred_region
      // Predicated region
      $region17: #{osnet_reid_forward.8} parent=15 // pred_check
        %p159 = pneg %p30
      $region18: #{osnet_reid_forward.8} parent=15 // pred_check_branch
        %161 = sbr.rel (%p159) target = $region20
      $region19: #{osnet_reid_forward.8} parent=15 // pred_region
        %p162 = scmp.lt.s32.totalorder %s10, 1
        %s163 = scalar_select %p162, %s10, 1
        %s164 = smul.addr %s163, 18
        %s165 = smul.addr %s164, 8
        %s166 = scalar_lea.vmem %s0, %s165
      $region20: #{osnet_reid_forward.8} parent=15 // pred_fallthru
        _
      // Predicated region
      $region21: #{osnet_reid_forward.8} parent=15 // pred_check
        %p167 = pneg %p56
      $region22: #{osnet_reid_forward.8} parent=15 // pred_check_branch
        %169 = sbr.rel (%p167) target = $region24
      $region23: #{osnet_reid_forward.8} parent=15 // pred_region
        %p170 = scmp.lt.s32.totalorder %s10, 1
        %s171 = scalar_select %p170, %s10, 1
        %s172 = smul.addr %s171, 18
        %s173 = smul.addr %s172, 8
        %s174 = scalar_lea.vmem %s1, %s173
      $region24: #{osnet_reid_forward.8} parent=15 // pred_fallthru
        _
      // Predicated region
      $region25: #{osnet_reid_forward.8} parent=15 // pred_check
        %p175 = pneg %p82
      $region26: #{osnet_reid_forward.8} parent=15 // pred_check_branch
        %177 = sbr.rel (%p175) target = $region28
      $region27: #{osnet_reid_forward.8} parent=15 // pred_region
        %p178 = scmp.lt.s32.totalorder %s10, 1
        %s179 = scalar_select %p178, %s10, 1
        %s180 = smul.addr %s179, 18
        %s181 = smul.addr %s180, 8
        %s182 = scalar_lea.vmem %s2, %s181
      $region28: #{osnet_reid_forward.8} parent=15 // pred_fallthru
        _
      // Predicated region
      $region29: #{osnet_reid_forward.8} parent=15 // pred_check
        %p183 = pneg %p108
      $region30: #{osnet_reid_forward.8} parent=15 // pred_check_branch
        %185 = sbr.rel (%p183) target = $region32
      $region31: #{osnet_reid_forward.8} parent=15 // pred_region
        %p186 = scmp.lt.s32.totalorder %s10, 1
        %s187 = scalar_select %p186, %s10, 1
        %s188 = smul.addr %s187, 18
        %s189 = smul.addr %s188, 8
        %s190 = scalar_lea.vmem %s3, %s189
      $region32: #{osnet_reid_forward.8} parent=15 // pred_fallthru
        _
    $region16: #{osnet_reid_forward.8} parent=5 // pred_fallthru
      _
    %p191 = scmp.le.s32.totalorder 1, %s10
    %p192 = scmp.lt.s32.totalorder %s10, 3
    %p193 = pnand %p191, %p192
    %p194 = pneg %p193
    // Predicated region
    $region33: #{osnet_reid_forward.8} parent=5 // pred_check
      _
    $region34: #{osnet_reid_forward.8} parent=5 // pred_check_branch
      %196 = sbr.rel (%p193) target = $region36
    $region35: #{osnet_reid_forward.8} parent=5 // pred_region
      %s197 = ssub.s32 %s10, 1
      %p198 = scmp.lt.s32.totalorder %s15, 1
      %s199 = scalar_select %p198, %s15, 1
      %s200 = smul.addr %s199, 18
      %s201 = smul.addr %s200, 8
      %s202 = scalar_lea.vmem %s0, %s201
      %p203 = pneg %p36
      %p204 = pneg %p33
      %p205 = scmp.lt.s32.totalorder %s15, 1
      %s206 = scalar_select %p205, %s15, 1
      %s207 = smul.addr %s206, 18
      %s208 = smul.addr %s207, 8
      %s209 = scalar_lea.vmem %s1, %s208
      %p210 = pneg %p62
      %p211 = pneg %p59
      %p212 = scmp.lt.s32.totalorder %s15, 1
      %s213 = scalar_select %p212, %s15, 1
      %s214 = smul.addr %s213, 18
      %s215 = smul.addr %s214, 8
      %s216 = scalar_lea.vmem %s2, %s215
      %p217 = pneg %p88
      %p218 = pneg %p85
      %p219 = scmp.lt.s32.totalorder %s15, 1
      %s220 = scalar_select %p219, %s15, 1
      %s221 = smul.addr %s220, 18
      %s222 = smul.addr %s221, 8
      %s223 = scalar_lea.vmem %s3, %s222
      %p224 = pneg %p114
      %p225 = pneg %p111
      %p226 = pneg %p140
      %p227 = pneg %p137
      %p228 = scmp.lt.s32.totalorder %s15, 1
      %s229 = scalar_select %p228, %s15, 1
      %s230 = smul.addr %s229, 8
      %s231 = smul.addr %s230, 8
      %s232 = scalar_lea.vmem %s4, %s231
      %p233 = scmp.lt.s32.totalorder %s15, 1
      %s234 = scalar_select %p233, %s15, 1
      %s235 = smul.addr %s234, 18
      %s236 = smul.addr %s235, 8
      %s237 = scalar_lea.vmem %s0, %s236
      %p238 = scmp.lt.s32.totalorder %s15, 1
      %s239 = scalar_select %p238, %s15, 1
      %s240 = smul.addr %s239, 18
      %s241 = smul.addr %s240, 8
      %s242 = scalar_lea.vmem %s1, %s241
      %p243 = scmp.lt.s32.totalorder %s15, 1
      %s244 = scalar_select %p243, %s15, 1
      %s245 = smul.addr %s244, 18
      %s246 = smul.addr %s245, 8
      %s247 = scalar_lea.vmem %s2, %s246
      %p248 = scmp.lt.s32.totalorder %s15, 1
      %s249 = scalar_select %p248, %s15, 1
      %s250 = smul.addr %s249, 18
      %s251 = smul.addr %s250, 8
      %s252 = scalar_lea.vmem %s3, %s251
      %p253 = scmp.lt.s32.totalorder %s15, 1
      %s254 = scalar_select %p253, %s15, 1
      %s255 = smul.addr %s254, 8
      %s256 = smul.addr %s255, 8
      %s257 = scalar_lea.vmem %s4, %s256
      %v258 = vld [vmem:[%s237] sm:$0xff]
      %v259 = vld [vmem:[%s237 + $0x8] sm:$0x1]
      %v260 = vld [vmem:[%s237 + $0x10] sm:$0xff]
      %v261 = vld [vmem:[%s237 + $0x18] sm:$0x1]
      %v262 = vld [vmem:[%s237 + $0x20] sm:$0xff]
      %v263 = vld [vmem:[%s237 + $0x28] sm:$0x1]
      %v264 = vld [vmem:[%s237 + $0x30] sm:$0xff]
      %v265 = vld [vmem:[%s237 + $0x38] sm:$0x1]
      %v266 = vld [vmem:[%s237 + $0x40] sm:$0xff]
      %v267 = vld [vmem:[%s237 + $0x48] sm:$0x1]
      %v268 = vld [vmem:[%s237 + $0x50] sm:$0xff]
      %v269 = vld [vmem:[%s237 + $0x58] sm:$0x1]
      %v270 = vld [vmem:[%s237 + $0x60] sm:$0xff]
      %v271 = vld [vmem:[%s237 + $0x68] sm:$0x1]
      %v272 = vld [vmem:[%s237 + $0x70] sm:$0xff]
      %v273 = vld [vmem:[%s237 + $0x78] sm:$0x1]
      %v274 = vld [vmem:[%s237 + $0x80] sm:$0xff]
      %v275 = vld [vmem:[%s237 + $0x88] sm:$0x1]
      %v276 = vld [vmem:[%s242] sm:$0xff]
      %v277 = vld [vmem:[%s242 + $0x10] sm:$0xff]
      %v278 = vld [vmem:[%s242 + $0x20] sm:$0xff]
      %v279 = vld [vmem:[%s242 + $0x30] sm:$0xff]
      %v280 = vld [vmem:[%s242 + $0x40] sm:$0xff]
      %v281 = vld [vmem:[%s242 + $0x50] sm:$0xff]
      %v282 = vld [vmem:[%s242 + $0x60] sm:$0xff]
      %v283 = vld [vmem:[%s242 + $0x70] sm:$0xff]
      %v284 = vld [vmem:[%s242 + $0x80] sm:$0xff]
      %v285 = vld [vmem:[%s247] sm:$0xff]
      %v286 = vld [vmem:[%s247 + $0x8] sm:$0x1]
      %v287 = vld [vmem:[%s247 + $0x10] sm:$0xff]
      %v288 = vld [vmem:[%s247 + $0x18] sm:$0x1]
      %v289 = vld [vmem:[%s247 + $0x20] sm:$0xff]
      %v290 = vld [vmem:[%s247 + $0x28] sm:$0x1]
      %v291 = vld [vmem:[%s247 + $0x30] sm:$0xff]
      %v292 = vld [vmem:[%s247 + $0x38] sm:$0x1]
      %v293 = vld [vmem:[%s247 + $0x40] sm:$0xff]
      %v294 = vld [vmem:[%s247 + $0x48] sm:$0x1]
      %v295 = vld [vmem:[%s247 + $0x50] sm:$0xff]
      %v296 = vld [vmem:[%s247 + $0x58] sm:$0x1]
      %v297 = vld [vmem:[%s247 + $0x60] sm:$0xff]
      %v298 = vld [vmem:[%s247 + $0x68] sm:$0x1]
      %v299 = vld [vmem:[%s247 + $0x70] sm:$0xff]
      %v300 = vld [vmem:[%s247 + $0x78] sm:$0x1]
      %v301 = vld [vmem:[%s252] sm:$0xff]
      %v302 = vld [vmem:[%s252 + $0x10] sm:$0xff]
      %v303 = vld [vmem:[%s252 + $0x20] sm:$0xff]
      %v304 = vld [vmem:[%s252 + $0x30] sm:$0xff]
      %v305 = vld [vmem:[%s252 + $0x40] sm:$0xff]
      %v306 = vld [vmem:[%s252 + $0x50] sm:$0xff]
      %v307 = vld [vmem:[%s252 + $0x60] sm:$0xff]
      %v308 = vld [vmem:[%s252 + $0x70] sm:$0xff]
      %vm325 = vcmask 1046528
      %v326 = vrot.slane %v258, 1
      %v327 = vrot.slane %v259, 1
      %v328 = vsel %vm325, %v326, %v327
      %v329 = vrot.slane %v260, 1
      %v330 = vrot.slane %v261, 1
      %v331 = vsel %vm325, %v329, %v330
      %v332 = vrot.slane %v262, 1
      %v333 = vrot.slane %v263, 1
      %v334 = vsel %vm325, %v332, %v333
      %v335 = vrot.slane %v264, 1
      %v336 = vrot.slane %v265, 1
      %v337 = vsel %vm325, %v335, %v336
      %v338 = vrot.slane %v266, 1
      %v339 = vrot.slane %v267, 1
      %v340 = vsel %vm325, %v338, %v339
      %v341 = vrot.slane %v268, 1
      %v342 = vrot.slane %v269, 1
      %v343 = vsel %vm325, %v341, %v342
      %v344 = vrot.slane %v270, 1
      %v345 = vrot.slane %v271, 1
      %v346 = vsel %vm325, %v344, %v345
      %v347 = vrot.slane %v272, 1
      %v348 = vrot.slane %v273, 1
      %v349 = vsel %vm325, %v347, %v348
      %v358 = vmax.f32 %v258, %v328
      %v359 = vmax.f32 %v260, %v331
      %v360 = vmax.f32 %v262, %v334
      %v361 = vmax.f32 %v264, %v337
      %v362 = vmax.f32 %v266, %v340
      %v363 = vmax.f32 %v268, %v343
      %v364 = vmax.f32 %v270, %v346
      %v365 = vmax.f32 %v272, %v349
      %v366 = vmax.f32 %v358, %v260
      %v367 = vmax.f32 %v359, %v262
      %v368 = vmax.f32 %v360, %v264
      %v369 = vmax.f32 %v361, %v266
      %v370 = vmax.f32 %v362, %v268
      %v371 = vmax.f32 %v363, %v270
      %v372 = vmax.f32 %v364, %v272
      %v373 = vmax.f32 %v365, %v274
      %v376 = vrot.slane %v274, 1
      %v377 = vrot.slane %v275, 1
      %v378 = vsel %vm325, %v376, %v377
      %v380 = vmax.f32 %v366, %v331
      %v381 = vmax.f32 %v367, %v334
      %v382 = vmax.f32 %v368, %v337
      %v383 = vmax.f32 %v369, %v340
      %v384 = vmax.f32 %v370, %v343
      %v385 = vmax.f32 %v371, %v346
      %v386 = vmax.f32 %v372, %v349
      %v387 = vmax.f32 %v373, %v378
      %v388 = vmax.f32 %v380, %v276
      %v389 = vmax.f32 %v381, %v277
      %v390 = vmax.f32 %v382, %v278
      %v391 = vmax.f32 %v383, %v279
      %v392 = vmax.f32 %v384, %v280
      %v393 = vmax.f32 %v385, %v281
      %v394 = vmax.f32 %v386, %v282
      %v395 = vmax.f32 %v387, %v283
      %v396 = vmax.f32 %v388, %v277
      %v397 = vmax.f32 %v389, %v278
      %v398 = vmax.f32 %v390, %v279
      %v399 = vmax.f32 %v391, %v280
      %v400 = vmax.f32 %v392, %v281
      %v401 = vmax.f32 %v393, %v282
      %v402 = vmax.f32 %v394, %v283
      %v403 = vmax.f32 %v395, %v284
      %v404 = vmax.f32 %v396, %v285
      %v405 = vmax.f32 %v397, %v287
      %v406 = vmax.f32 %v398, %v289
      %v407 = vmax.f32 %v399, %v291
      %v408 = vmax.f32 %v400, %v293
      %v409 = vmax.f32 %v401, %v295
      %v410 = vmax.f32 %v402, %v297
      %v411 = vmax.f32 %v403, %v299
      %v428 = vrot.slane %v285, 1
      %v429 = vrot.slane %v286, 1
      %v430 = vsel %vm325, %v428, %v429
      %v431 = vrot.slane %v287, 1
      %v432 = vrot.slane %v288, 1
      %v433 = vsel %vm325, %v431, %v432
      %v434 = vrot.slane %v289, 1
      %v435 = vrot.slane %v290, 1
      %v436 = vsel %vm325, %v434, %v435
      %v437 = vrot.slane %v291, 1
      %v438 = vrot.slane %v292, 1
      %v439 = vsel %vm325, %v437, %v438
      %v440 = vrot.slane %v293, 1
      %v441 = vrot.slane %v294, 1
      %v442 = vsel %vm325, %v440, %v441
      %v443 = vrot.slane %v295, 1
      %v444 = vrot.slane %v296, 1
      %v445 = vsel %vm325, %v443, %v444
      %v446 = vrot.slane %v297, 1
      %v447 = vrot.slane %v298, 1
      %v448 = vsel %vm325, %v446, %v447
      %v449 = vrot.slane %v299, 1
      %v450 = vrot.slane %v300, 1
      %v451 = vsel %vm325, %v449, %v450
      %v460 = vmax.f32 %v404, %v430
      %v461 = vmax.f32 %v405, %v433
      %v462 = vmax.f32 %v406, %v436
      %v463 = vmax.f32 %v407, %v439
      %v464 = vmax.f32 %v408, %v442
      %v465 = vmax.f32 %v409, %v445
      %v466 = vmax.f32 %v410, %v448
      %v467 = vmax.f32 %v411, %v451
      %v468 = vmax.f32 %v460, %v301
      %v469 = vmax.f32 %v461, %v302
      %v470 = vmax.f32 %v462, %v303
      %v471 = vmax.f32 %v463, %v304
      %v472 = vmax.f32 %v464, %v305
      %v473 = vmax.f32 %v465, %v306
      %v474 = vmax.f32 %v466, %v307
      %v475 = vmax.f32 %v467, %v308
      %vm476 = vcmask 523264
      %477 = vst.msk [vmem:[%s257] sm:$0xff] %vm476, %v468
      %478 = vst.msk [vmem:[%s257 + $0x8] sm:$0xff] %vm476, %v469
      %479 = vst.msk [vmem:[%s257 + $0x10] sm:$0xff] %vm476, %v470
      %480 = vst.msk [vmem:[%s257 + $0x18] sm:$0xff] %vm476, %v471
      %481 = vst.msk [vmem:[%s257 + $0x20] sm:$0xff] %vm476, %v472
      %482 = vst.msk [vmem:[%s257 + $0x28] sm:$0xff] %vm476, %v473
      %483 = vst.msk [vmem:[%s257 + $0x30] sm:$0xff] %vm476, %v474
      %484 = vst.msk [vmem:[%s257 + $0x38] sm:$0xff] %vm476, %v475
      %p485 = scmp.lt.s32.totalorder %s15, 1
      %s486 = scalar_select %p485, %s15, 1
      %s487 = smul.addr %s486, 8
      %s488 = smul.addr %s487, 8
      %s489 = scalar_lea.vmem %s4, %s488
      // Predicated region
      $region37: #{osnet_reid_forward.8} parent=35 // pred_check
        %p490 = pneg %p137
      $region38: #{osnet_reid_forward.8} parent=35 // pred_check_branch
        %492 = sbr.rel (%p490) target = $region40
      $region39: #{osnet_reid_forward.8} parent=35 // pred_region
        _
      $region40: #{osnet_reid_forward.8} parent=35 // pred_fallthru
        _
    $region36: #{osnet_reid_forward.8} parent=5 // pred_fallthru
      _
    %p493 = scmp.le.s32.totalorder 2, %s10
    // Predicated region
    $region41: #{osnet_reid_forward.8} parent=5 // pred_check
      %p494 = pneg %p493
    $region42: #{osnet_reid_forward.8} parent=5 // pred_check_branch
      %496 = sbr.rel (%p494) target = $region44
    $region43: #{osnet_reid_forward.8} parent=5 // pred_region
      %s497 = ssub.s32 %s10, 2
      // Predicated region
      $region45: #{osnet_reid_forward.8} parent=43 // pred_check
        %p498 = pneg %p143
      $region46: #{osnet_reid_forward.8} parent=43 // pred_check_branch
        %500 = sbr.rel (%p498) target = $region48
      $region47: #{osnet_reid_forward.8} parent=43 // pred_region
        %p501 = scmp.lt.s32.totalorder %s16, 1
        %s502 = scalar_select %p501, %s16, 1
        %s503 = smul.addr %s502, 8
        %s504 = smul.addr %s503, 8
        %s505 = scalar_lea.vmem %s4, %s504
      $region48: #{osnet_reid_forward.8} parent=43 // pred_fallthru
        _
    $region44: #{osnet_reid_forward.8} parent=5 // pred_fallthru
      _
  $region6: #{osnet_reid_forward.8} parent=0 // loop_footer
    %s14 = sadd.s32 1, %s10
  $region7: #{osnet_reid_forward.8} parent=0 // loop_footer_branch
    %9 = sbr.rel target = $region3
  $region8: #{osnet_reid_forward.8} parent=0 // loop_exit
    _

// kernel: osnet_reid_forward.9
$region0: #{osnet_reid_forward.9}
  #allocation0 [shape = 'u32[]', space=smem, size = 0x4, offset = 0x4, fixed_abs, tag = 'smem constant byte address 0x4 - core index']
  #allocation1 [shape = 'u32[144,128]{1,0:T(1,128)}', space=vmem, size = 0x12000, scoped, tag = 'internal scratch']
  #allocation2 [shape = 'f32[128,256]{1,0:T(8,128)}', space=vmem, size = 0x20000, scoped, tag = 'scratch operand']
  %s0 = inlined_call_operand.vmem [shape: bf16[128,640], index: 0, kind: input, shape index: {}]
  %s1 = inlined_call_operand.vmem [shape: bf16[640,256], index: 1, kind: input, shape index: {}]
  %s2 = inlined_call_operand.vmem [shape: f32[1,256], index: 2, kind: input, shape index: {}]
  %s3 = inlined_call_operand.vmem [shape: f32[1,256], index: 3, kind: input, shape index: {}]
  %s4 = inlined_call_operand.vmem [shape: f32[128,256], index: 4, kind: output, shape index: {}]
  %s5 = sld [smem:[#allocation0]]
  $region98: #{osnet_reid_forward.9} parent=0
    _
  %s7 = ssub.s32 1, %s5
  %s8 = scalar_select 0, %s7, %s5
  $region1: #{osnet_reid_forward.9} parent=0
    #allocation3 [shape = 'u8[65536]{0}', space=vmem, size = 0x10000, scoped, tag = 'input window, operand 0']
    loop: start=0, step=1, limit=7
    $region2: #{osnet_reid_forward.9} parent=1 // loop_pre_header
      _
    $region3: #{osnet_reid_forward.9} parent=1 // loop_header
      %s10 = sphi 0, %s14
      %p11 = scmp.ge.s32.totalorder %s10, 7
      %s17 = sphi 0, %s36
      %s18 = sphi 0, %s32
      %s19 = sphi 0, %s28
      %s20 = sphi 0, %s17
      %s21 = sphi 0, %s18
      %s22 = sphi 0, %s19
      %s23 = sphi 0, %s20
      %s24 = sphi 0, %s21
      %s25 = sphi 0, %s22
      %s41 = sphi 0, %s43
      %s44 = sphi 0, %s41
      %s45 = sphi 0, %s44
      %s61 = sphi 0, %s45
      %s69 = sphi 0, %s71
      %s72 = sphi 0, %s69
      %s73 = sphi 0, %s72
      %s89 = sphi 0, %s73
      %s95 = sphi 0, %s97
      %s98 = sphi 0, %s95
      %s99 = sphi 0, %s98
      %s115 = sphi 0, %s99
      %s121 = sphi 0, %s123
      %s124 = sphi 0, %s121
      %s125 = sphi 0, %s124
      %s141 = sphi 0, %s125
      %s149 = sphi 0, %s151
      %s152 = sphi 0, %s149
      %s153 = sphi 0, %s152
      %s169 = sphi 0, %s153
    $region4: #{osnet_reid_forward.9} parent=1 // loop_header_branch
      %13 = sbr.rel (%p11) target = $region8
    $region5: #{osnet_reid_forward.9} parent=1 // loop_body
      %s15 = ssub.s32 %s10, 1
      %s16 = ssub.s32 %s10, 2
      %s26 = sadd.s32 1, %s19
      %p27 = scmp.ge.s32.totalorder %s26, 5
      %s28 = scalar_select %p27, 0, %s26
      %s29 = sadd.s32 1, %s18
      %s30 = scalar_select %p27, %s29, %s18
      %p31 = scmp.ge.s32.totalorder %s30, 1
      %s32 = scalar_select %p31, 0, %s30
      %s33 = sadd.s32 1, %s17
      %s34 = scalar_select %p31, %s33, %s17
      %p35 = scmp.ge.s32.totalorder %s34, 1
      %s36 = scalar_select %p35, 0, %s34
      %s37 = ssub.s32 %s17, %s36
      %s38 = ssub.s32 %s19, %s28
      %s39 = sor.u32 %s37, %s38
      %p40 = scmp.eq.s32.totalorder %s39, 0
      %s42 = sadd.s32 %s41, 1
      %s43 = scalar_select %p40, %s41, %s42
      %p46 = pneg %p40
      %p47 = scmp.eq.s32.totalorder %s10, 4
      %p48 = por %p46, %p47
      %p49 = scmp.ne.s32.totalorder %s41, %s44
      %p50 = scmp.eq.s32.totalorder %s10, 0
      %p51 = por %p49, %p50
      %p52 = scmp.ne.s32.totalorder %s41, %s44
      %p53 = scmp.eq.s32.totalorder %s15, 4
      %p54 = por %p52, %p53
      %p55 = scmp.ne.s32.totalorder %s44, %s45
      %p56 = scmp.eq.s32.totalorder %s15, 0
      %p57 = por %p55, %p56
      %p58 = scmp.ne.s32.totalorder %s44, %s45
      %p59 = scmp.eq.s32.totalorder %s16, 4
      %p60 = por %p58, %p59
      %p62 = scmp.ne.s32.totalorder %s45, %s61
      %p63 = scmp.eq.s32.totalorder %s16, 0
      %p64 = por %p62, %p63
      %s65 = ssub.s32 %s19, %s28
      %s66 = ssub.s32 %s18, %s32
      %s67 = sor.u32 %s65, %s66
      %p68 = scmp.eq.s32.totalorder %s67, 0
      %s70 = sadd.s32 %s69, 1
      %s71 = scalar_select %p68, %s69, %s70
      %p74 = pneg %p68
      %p75 = scmp.eq.s32.totalorder %s10, 4
      %p76 = por %p74, %p75
      %p77 = scmp.ne.s32.totalorder %s69, %s72
      %p78 = scmp.eq.s32.totalorder %s10, 0
      %p79 = por %p77, %p78
      %p80 = scmp.ne.s32.totalorder %s69, %s72
      %p81 = scmp.eq.s32.totalorder %s15, 4
      %p82 = por %p80, %p81
      %p83 = scmp.ne.s32.totalorder %s72, %s73
      %p84 = scmp.eq.s32.totalorder %s15, 0
      %p85 = por %p83, %p84
      %p86 = scmp.ne.s32.totalorder %s72, %s73
      %p87 = scmp.eq.s32.totalorder %s16, 4
      %p88 = por %p86, %p87
      %p90 = scmp.ne.s32.totalorder %s73, %s89
      %p91 = scmp.eq.s32.totalorder %s16, 0
      %p92 = por %p90, %p91
      %s93 = ssub.s32 %s18, %s32
      %p94 = scmp.eq.s32.totalorder %s93, 0
      %s96 = sadd.s32 %s95, 1
      %s97 = scalar_select %p94, %s95, %s96
      %p100 = pneg %p94
      %p101 = scmp.eq.s32.totalorder %s10, 4
      %p102 = por %p100, %p101
      %p103 = scmp.ne.s32.totalorder %s95, %s98
      %p104 = scmp.eq.s32.totalorder %s10, 0
      %p105 = por %p103, %p104
      %p106 = scmp.ne.s32.totalorder %s95, %s98
      %p107 = scmp.eq.s32.totalorder %s15, 4
      %p108 = por %p106, %p107
      %p109 = scmp.ne.s32.totalorder %s98, %s99
      %p110 = scmp.eq.s32.totalorder %s15, 0
      %p111 = por %p109, %p110
      %p112 = scmp.ne.s32.totalorder %s98, %s99
      %p113 = scmp.eq.s32.totalorder %s16, 4
      %p114 = por %p112, %p113
      %p116 = scmp.ne.s32.totalorder %s99, %s115
      %p117 = scmp.eq.s32.totalorder %s16, 0
      %p118 = por %p116, %p117
      %s119 = ssub.s32 %s18, %s32
      %p120 = scmp.eq.s32.totalorder %s119, 0
      %s122 = sadd.s32 %s121, 1
      %s123 = scalar_select %p120, %s121, %s122
      %p126 = pneg %p120
      %p127 = scmp.eq.s32.totalorder %s10, 4
      %p128 = por %p126, %p127
      %p129 = scmp.ne.s32.totalorder %s121, %s124
      %p130 = scmp.eq.s32.totalorder %s10, 0
      %p131 = por %p129, %p130
      %p132 = scmp.ne.s32.totalorder %s121, %s124
      %p133 = scmp.eq.s32.totalorder %s15, 4
      %p134 = por %p132, %p133
      %p135 = scmp.ne.s32.totalorder %s124, %s125
      %p136 = scmp.eq.s32.totalorder %s15, 0
      %p137 = por %p135, %p136
      %p138 = scmp.ne.s32.totalorder %s124, %s125
      %p139 = scmp.eq.s32.totalorder %s16, 4
      %p140 = por %p138, %p139
      %p142 = scmp.ne.s32.totalorder %s125, %s141
      %p143 = scmp.eq.s32.totalorder %s16, 0
      %p144 = por %p142, %p143
      %s145 = ssub.s32 %s17, %s36
      %s146 = ssub.s32 %s18, %s32
      %s147 = sor.u32 %s145, %s146
      %p148 = scmp.eq.s32.totalorder %s147, 0
      %s150 = sadd.s32 %s149, 1
      %s151 = scalar_select %p148, %s149, %s150
      %p154 = pneg %p148
      %p155 = scmp.eq.s32.totalorder %s10, 4
      %p156 = por %p154, %p155
      %p157 = scmp.ne.s32.totalorder %s149, %s152
      %p158 = scmp.eq.s32.totalorder %s10, 0
      %p159 = por %p157, %p158
      %p160 = scmp.ne.s32.totalorder %s149, %s152
      %p161 = scmp.eq.s32.totalorder %s15, 4
      %p162 = por %p160, %p161
      %p163 = scmp.ne.s32.totalorder %s152, %s153
      %p164 = scmp.eq.s32.totalorder %s15, 0
      %p165 = por %p163, %p164
      %p166 = scmp.ne.s32.totalorder %s152, %s153
      %p167 = scmp.eq.s32.totalorder %s16, 4
      %p168 = por %p166, %p167
      %p170 = scmp.ne.s32.totalorder %s153, %s169
      %p171 = scmp.eq.s32.totalorder %s16, 0
      %p172 = por %p170, %p171
      %p173 = scmp.le.s32.totalorder 1, %s10
      %p174 = scmp.lt.s32.totalorder %s10, 6
      %p175 = pnand %p173, %p174
      %p176 = pneg %p175
      // Predicated region
      $region9: #{osnet_reid_forward.9} parent=5 // pred_check
        _
      $region10: #{osnet_reid_forward.9} parent=5 // pred_check_branch
        %178 = sbr.rel (%p175) target = $region12
      $region11: #{osnet_reid_forward.9} parent=5 // pred_region
        %s179 = ssub.s32 %s10, 1
        // Predicated region
        $region13: #{osnet_reid_forward.9} parent=11 // pred_check
          %p180 = pneg %p111
        $region14: #{osnet_reid_forward.9} parent=11 // pred_check_branch
          %182 = sbr.rel (%p180) target = $region16
        $region15: #{osnet_reid_forward.9} parent=11 // pred_region
          %s183 = smul.u32 2, %s21
          %p184 = scmp.lt.s32.totalorder %s183, 1
          %s185 = scalar_select %p184, %s183, 1
          %s186 = scalar_lea.vmem %s2, %s185
          %s187 = smul.u32 2, %s21
        $region16: #{osnet_reid_forward.9} parent=11 // pred_fallthru
          _
        // Predicated region
        $region17: #{osnet_reid_forward.9} parent=11 // pred_check
          %p188 = pneg %p137
        $region18: #{osnet_reid_forward.9} parent=11 // pred_check_branch
          %190 = sbr.rel (%p188) target = $region20
        $region19: #{osnet_reid_forward.9} parent=11 // pred_region
          %s191 = smul.u32 2, %s21
          %p192 = scmp.lt.s32.totalorder %s191, 1
          %s193 = scalar_select %p192, %s191, 1
          %s194 = scalar_lea.vmem %s3, %s193
          %s195 = smul.u32 2, %s21
        $region20: #{osnet_reid_forward.9} parent=11 // pred_fallthru
          _
      $region12: #{osnet_reid_forward.9} parent=5 // pred_fallthru
        _
      %p196 = scmp.lt.s32.totalorder %s10, 5
      // Predicated region
      $region21: #{osnet_reid_forward.9} parent=5 // pred_check
        %p197 = pneg %p196
      $region22: #{osnet_reid_forward.9} parent=5 // pred_check_branch
        %199 = sbr.rel (%p197) target = $region24
      $region23: #{osnet_reid_forward.9} parent=5 // pred_region
        // Predicated region
        $region25: #{osnet_reid_forward.9} parent=23 // pred_check
          %p200 = pneg %p51
        $region26: #{osnet_reid_forward.9} parent=23 // pred_check_branch
          %202 = sbr.rel (%p200) target = $region28
        $region27: #{osnet_reid_forward.9} parent=23 // pred_region
          %s203 = sand.u32 %s41, 1
          %s204 = sand.u32 %s41, 1
          %s205 = smul.addr %s204, 64
          %s206 = scalar_lea.vmem [#allocation3], %s205
          %s207 = smul.u32 16, %s17
          %s208 = smul.addr %s207, 5
          %s209 = sadd.s32 %s19, %s208
          %s210 = smul.addr %s209, 4
          %s211 = scalar_lea.vmem %s0, %s210
          // Predicated region
          $region29: #{osnet_reid_forward.9} parent=27 // pred_check
            _
          $region30: #{osnet_reid_forward.9} parent=27 // pred_check_branch
            %213 = sbr.rel (0) target = $region32
          $region31: #{osnet_reid_forward.9} parent=27 // pred_region
            // Predicated region
            $region33: #{osnet_reid_forward.9} parent=31 // pred_check
              _
            $region34: #{osnet_reid_forward.9} parent=31 // pred_check_branch
              %215 = sbr.rel target = $region36
            $region35: #{osnet_reid_forward.9} parent=31 // pred_region
              // Predicated region
              $region48: #{osnet_reid_forward.9} parent=35 // pred_check
                _
              $region49: #{osnet_reid_forward.9} parent=35 // pred_check_branch
                %260 = sbr.rel (0) target = $region51
              $region50: #{osnet_reid_forward.9} parent=35 // pred_region
                loop: start=0, step=1, limit=1
                $region52: #{osnet_reid_forward.9} parent=50 // loop_pre_header
                  _
                $region53: #{osnet_reid_forward.9} parent=50 // loop_header
                  %s262 = sphi 0, %s266
                  %p263 = scmp.ge.s32.totalorder %s262, 1
                  %s267 = sphi %s211, %s211
                  %s268 = sphi %s206, %s206
                $region54: #{osnet_reid_forward.9} parent=50 // loop_header_branch
                  %265 = sbr.rel (%p263) target = $region58
                $region55: #{osnet_reid_forward.9} parent=50 // loop_body
                  _
                $region56: #{osnet_reid_forward.9} parent=50 // loop_footer
                  %s266 = sadd.s32 1, %s262
                $region57: #{osnet_reid_forward.9} parent=50 // loop_footer_branch
                  %261 = sbr.rel target = $region53
                $region58: #{osnet_reid_forward.9} parent=50 // loop_exit
                  _
                loop: start=0, step=1, limit=1
                $region59: #{osnet_reid_forward.9} parent=50 // loop_pre_header
                  _
                $region60: #{osnet_reid_forward.9} parent=50 // loop_header
                  %s271 = sphi 0, %s275
                  %p272 = scmp.ge.s32.totalorder %s271, 1
                  %s276 = sphi %s211, %s211
                  %s277 = sphi %s206, %s206
                $region61: #{osnet_reid_forward.9} parent=50 // loop_header_branch
                  %274 = sbr.rel (%p272) target = $region65
                $region62: #{osnet_reid_forward.9} parent=50 // loop_body
                  %v278 = vld [vmem:[%s276] sm:$0xf]
                  %279 = vst [vmem:[%s277] sm:$0xf] %v278
                  %v280 = vld [vmem:[%s276 + $0x14] sm:$0xf]
                  %281 = vst [vmem:[%s277 + $0x4] sm:$0xf] %v280
                  %v282 = vld [vmem:[%s276 + $0x28] sm:$0xf]
                  %283 = vst [vmem:[%s277 + $0x8] sm:$0xf] %v282
                  %v284 = vld [vmem:[%s276 + $0x3c] sm:$0xf]
                  %285 = vst [vmem:[%s277 + $0xc] sm:$0xf] %v284
                  %v286 = vld [vmem:[%s276 + $0x50] sm:$0xf]
                  %287 = vst [vmem:[%s277 + $0x10] sm:$0xf] %v286
                  %v288 = vld [vmem:[%s276 + $0x64] sm:$0xf]
                  %289 = vst [vmem:[%s277 + $0x14] sm:$0xf] %v288
                  %v290 = vld [vmem:[%s276 + $0x78] sm:$0xf]
                  %291 = vst [vmem:[%s277 + $0x18] sm:$0xf] %v290
                  %v292 = vld [vmem:[%s276 + $0x8c] sm:$0xf]
                  %293 = vst [vmem:[%s277 + $0x1c] sm:$0xf] %v292
                  %v294 = vld [vmem:[%s276 + $0xa0] sm:$0xf]
                  %295 = vst [vmem:[%s277 + $0x20] sm:$0xf] %v294
                  %v296 = vld [vmem:[%s276 + $0xb4] sm:$0xf]
                  %297 = vst [vmem:[%s277 + $0x24] sm:$0xf] %v296
                  %v298 = vld [vmem:[%s276 + $0xc8] sm:$0xf]
                  %299 = vst [vmem:[%s277 + $0x28] sm:$0xf] %v298
                  %v300 = vld [vmem:[%s276 + $0xdc] sm:$0xf]
                  %301 = vst [vmem:[%s277 + $0x2c] sm:$0xf] %v300
                  %v302 = vld [vmem:[%s276 + $0xf0] sm:$0xf]
                  %303 = vst [vmem:[%s277 + $0x30] sm:$0xf] %v302
                  %v304 = vld [vmem:[%s276 + $0x104] sm:$0xf]
                  %305 = vst [vmem:[%s277 + $0x34] sm:$0xf] %v304
                  %v306 = vld [vmem:[%s276 + $0x118] sm:$0xf]
                  %307 = vst [vmem:[%s277 + $0x38] sm:$0xf] %v306
                  %v308 = vld [vmem:[%s276 + $0x12c] sm:$0xf]
                  %309 = vst [vmem:[%s277 + $0x3c] sm:$0xf] %v308
                $region63: #{osnet_reid_forward.9} parent=50 // loop_footer
                  %s275 = sadd.s32 1, %s271
                $region64: #{osnet_reid_forward.9} parent=50 // loop_footer_branch
                  %270 = sbr.rel target = $region60
                $region65: #{osnet_reid_forward.9} parent=50 // loop_exit
                  _
              $region51: #{osnet_reid_forward.9} parent=35 // pred_fallthru
                _
            $region36: #{osnet_reid_forward.9} parent=31 // pred_fallthru
              _
            // Predicated region
            $region37: #{osnet_reid_forward.9} parent=31 // pred_check
              _
            $region38: #{osnet_reid_forward.9} parent=31 // pred_check_branch
              %217 = sbr.rel (0) target = $region40
            $region39: #{osnet_reid_forward.9} parent=31 // pred_region
              loop: start=0, step=1, limit=1
              $region41: #{osnet_reid_forward.9} parent=39 // loop_pre_header
                _
              $region42: #{osnet_reid_forward.9} parent=39 // loop_header
                %s220 = sphi 0, %s224
                %p221 = scmp.ge.s32.totalorder %s220, 1
                %s225 = sphi %s211, %s211
                %s226 = sphi %s206, %s206
              $region43: #{osnet_reid_forward.9} parent=39 // loop_header_branch
                %223 = sbr.rel (%p221) target = $region47
              $region44: #{osnet_reid_forward.9} parent=39 // loop_body
                %v227 = vld [vmem:[%s225] sm:$0xf]
                %228 = vst [vmem:[%s226] sm:$0xf] %v227
                %v229 = vld [vmem:[%s225 + $0x14] sm:$0xf]
                %230 = vst [vmem:[%s226 + $0x4] sm:$0xf] %v229
                %v231 = vld [vmem:[%s225 + $0x28] sm:$0xf]
                %232 = vst [vmem:[%s226 + $0x8] sm:$0xf] %v231
                %v233 = vld [vmem:[%s225 + $0x3c] sm:$0xf]
                %234 = vst [vmem:[%s226 + $0xc] sm:$0xf] %v233
                %v235 = vld [vmem:[%s225 + $0x50] sm:$0xf]
                %236 = vst [vmem:[%s226 + $0x10] sm:$0xf] %v235
                %v237 = vld [vmem:[%s225 + $0x64] sm:$0xf]
                %238 = vst [vmem:[%s226 + $0x14] sm:$0xf] %v237
                %v239 = vld [vmem:[%s225 + $0x78] sm:$0xf]
                %240 = vst [vmem:[%s226 + $0x18] sm:$0xf] %v239
                %v241 = vld [vmem:[%s225 + $0x8c] sm:$0xf]
                %242 = vst [vmem:[%s226 + $0x1c] sm:$0xf] %v241
                %v243 = vld [vmem:[%s225 + $0xa0] sm:$0xf]
                %244 = vst [vmem:[%s226 + $0x20] sm:$0xf] %v243
                %v245 = vld [vmem:[%s225 + $0xb4] sm:$0xf]
                %246 = vst [vmem:[%s226 + $0x24] sm:$0xf] %v245
                %v247 = vld [vmem:[%s225 + $0xc8] sm:$0xf]
                %248 = vst [vmem:[%s226 + $0x28] sm:$0xf] %v247
                %v249 = vld [vmem:[%s225 + $0xdc] sm:$0xf]
                %250 = vst [vmem:[%s226 + $0x2c] sm:$0xf] %v249
                %v251 = vld [vmem:[%s225 + $0xf0] sm:$0xf]
                %252 = vst [vmem:[%s226 + $0x30] sm:$0xf] %v251
                %v253 = vld [vmem:[%s225 + $0x104] sm:$0xf]
                %254 = vst [vmem:[%s226 + $0x34] sm:$0xf] %v253
                %v255 = vld [vmem:[%s225 + $0x118] sm:$0xf]
                %256 = vst [vmem:[%s226 + $0x38] sm:$0xf] %v255
                %v257 = vld [vmem:[%s225 + $0x12c] sm:$0xf]
                %258 = vst [vmem:[%s226 + $0x3c] sm:$0xf] %v257
              $region45: #{osnet_reid_forward.9} parent=39 // loop_footer
                %s224 = sadd.s32 1, %s220
              $region46: #{osnet_reid_forward.9} parent=39 // loop_footer_branch
                %219 = sbr.rel target = $region42
              $region47: #{osnet_reid_forward.9} parent=39 // loop_exit
                _
            $region40: #{osnet_reid_forward.9} parent=31 // pred_fallthru
              _
          $region32: #{osnet_reid_forward.9} parent=27 // pred_fallthru
            _
          %310 = vnop
        $region28: #{osnet_reid_forward.9} parent=23 // pred_fallthru
          _
        // Predicated region
        $region66: #{osnet_reid_forward.9} parent=23 // pred_check
          %p311 = pneg %p79
        $region67: #{osnet_reid_forward.9} parent=23 // pred_check_branch
          %313 = sbr.rel (%p311) target = $region69
        $region68: #{osnet_reid_forward.9} parent=23 // pred_region
          %s314 = smul.u32 16, %s19
          %s315 = smul.u32 2, %s18
          %p316 = scmp.lt.s32.totalorder %s314, 79
          %s317 = scalar_select %p316, %s314, 79
          %p318 = scmp.lt.s32.totalorder %s315, 1
          %s319 = scalar_select %p318, %s315, 1
          %s320 = smul.addr %s317, 2
          %s321 = sadd.s32 %s319, %s320
          %s322 = smul.addr %s321, 4
          %s323 = scalar_lea.vmem %s1, %s322
          %s324 = smul.u32 16, %s19
          %s325 = smul.u32 2, %s18
        $region69: #{osnet_reid_forward.9} parent=23 // pred_fallthru
          _
      $region24: #{osnet_reid_forward.9} parent=5 // pred_fallthru
        _
      %p326 = scmp.le.s32.totalorder 1, %s10
      %p327 = scmp.lt.s32.totalorder %s10, 6
      %p328 = pnand %p326, %p327
      %p329 = pneg %p328
      // Predicated region
      $region70: #{osnet_reid_forward.9} parent=5 // pred_check
        _
      $region71: #{osnet_reid_forward.9} parent=5 // pred_check_branch
        %331 = sbr.rel (%p328) target = $region73
      $region72: #{osnet_reid_forward.9} parent=5 // pred_region
        %s332 = ssub.s32 %s10, 1
        %s333 = sand.u32 %s44, 1
        %s334 = sand.u32 %s44, 1
        %s335 = smul.addr %s334, 64
        %s336 = scalar_lea.vmem [#allocation3], %s335
        // Predicated region
        $region74: #{osnet_reid_forward.9} parent=72 // pred_check
          %p337 = pneg %p57
        $region75: #{osnet_reid_forward.9} parent=72 // pred_check_branch
          %339 = sbr.rel (%p337) target = $region77
        $region76: #{osnet_reid_forward.9} parent=72 // pred_region
          _
        $region77: #{osnet_reid_forward.9} parent=72 // pred_fallthru
          _
        %s340 = sand.u32 %s44, 1
        %s341 = sand.u32 %s44, 1
        %s342 = smul.addr %s341, 64
        %s343 = scalar_lea.vmem [#allocation3], %s342
        %p344 = pneg %p57
        %p345 = pneg %p54
        %s346 = smul.u32 16, %s22
        %s347 = smul.u32 2, %s21
        %p348 = scmp.lt.s32.totalorder %s346, 79
        %s349 = scalar_select %p348, %s346, 79
        %p350 = scmp.lt.s32.totalorder %s347, 1
        %s351 = scalar_select %p350, %s347, 1
        %s352 = smul.addr %s349, 2
        %s353 = sadd.s32 %s351, %s352
        %s354 = smul.addr %s353, 4
        %s355 = scalar_lea.vmem %s1, %s354
        %p356 = pneg %p85
        %p357 = pneg %p82
        %s358 = smul.u32 2, %s21
        %p359 = scmp.lt.s32.totalorder %s358, 1
        %s360 = scalar_select %p359, %s358, 1
        %s361 = scalar_lea.vmem %s2, %s360
        %p362 = pneg %p111
        %p363 = pneg %p108
        %s364 = smul.u32 2, %s21
        %p365 = scmp.lt.s32.totalorder %s364, 1
        %s366 = scalar_select %p365, %s364, 1
        %s367 = scalar_lea.vmem %s3, %s366
        %p368 = pneg %p137
        %p369 = pneg %p134
        %p370 = pneg %p165
        %p371 = pneg %p162
        %s372 = smul.u32 16, %s20
        %s373 = smul.u32 2, %s21
        %p374 = scmp.lt.s32.totalorder %s372, 15
        %s375 = scalar_select %p374, %s372, 15
        %p376 = scmp.lt.s32.totalorder %s373, 1
        %s377 = scalar_select %p376, %s373, 1
        %s378 = smul.addr %s375, 2
        %s379 = sadd.s32 %s377, %s378
        %s380 = smul.addr %s379, 8
        %s381 = scalar_lea.vmem %s4, %s380
        %s382 = smul.u32 16, %s20
        %s383 = smul.u32 16, %s22
        %s384 = smul.u32 2, %s21
        %p385 = scmp.lt.s32.totalorder %s383, 79
        %s386 = scalar_select %p385, %s383, 79
        %p387 = scmp.lt.s32.totalorder %s384, 1
        %s388 = scalar_select %p387, %s384, 1
        %s389 = smul.addr %s386, 2
        %s390 = sadd.s32 %s388, %s389
        %s391 = smul.addr %s390, 4
        %s392 = scalar_lea.vmem %s1, %s391
        %s393 = smul.u32 16, %s22
        %s394 = smul.u32 2, %s21
        %s395 = smul.u32 2, %s21
        %p396 = scmp.lt.s32.totalorder %s395, 1
        %s397 = scalar_select %p396, %s395, 1
        %s398 = scalar_lea.vmem %s2, %s397
        %s399 = smul.u32 2, %s21
        %s400 = smul.u32 2, %s21
        %p401 = scmp.lt.s32.totalorder %s400, 1
        %s402 = scalar_select %p401, %s400, 1
        %s403 = scalar_lea.vmem %s3, %s402
        %s404 = smul.u32 2, %s21
        %s405 = smul.u32 16, %s20
        %s406 = smul.u32 2, %s21
        %p407 = scmp.lt.s32.totalorder %s405, 15
        %s408 = scalar_select %p407, %s405, 15
        %p409 = scmp.lt.s32.totalorder %s406, 1
        %s410 = scalar_select %p409, %s406, 1
        %s411 = smul.addr %s408, 2
        %s412 = sadd.s32 %s410, %s411
        %s413 = smul.addr %s412, 8
        %s414 = scalar_lea.vmem %s4, %s413
        %s415 = smul.u32 16, %s20
        %s416 = smul.u32 2, %s21
        %p418 = scmp.eq.s32.totalorder %s22, 0
        // Predicated region
        $region78: #{osnet_reid_forward.9} parent=72 // pred_check
          %p419 = pneg %p418
        $region79: #{osnet_reid_forward.9} parent=72 // pred_check_branch
          %421 = sbr.rel (%p419) target = $region81
        $region80: #{osnet_reid_forward.9} parent=72 // pred_region
          %422 = vst [vmem:[#allocation2] sm:$0xff] 0.0
          %423 = vst [vmem:[#allocation2 + $0x8] sm:$0xff] 0.0
          %424 = vst [vmem:[#allocation2 + $0x10] sm:$0xff] 0.0
          %425 = vst [vmem:[#allocation2 + $0x18] sm:$0xff] 0.0
          %426 = vst [vmem:[#allocation2 + $0x20] sm:$0xff] 0.0
          %427 = vst [vmem:[#allocation2 + $0x28] sm:$0xff] 0.0
          %428 = vst [vmem:[#allocation2 + $0x30] sm:$0xff] 0.0
          %429 = vst [vmem:[#allocation2 + $0x38] sm:$0xff] 0.0
          %430 = vst [vmem:[#allocation2 + $0x40] sm:$0xff] 0.0
          %431 = vst [vmem:[#allocation2 + $0x48] sm:$0xff] 0.0
          %432 = vst [vmem:[#allocation2 + $0x50] sm:$0xff] 0.0
          %433 = vst [vmem:[#allocation2 + $0x58] sm:$0xff] 0.0
          %434 = vst [vmem:[#allocation2 + $0x60] sm:$0xff] 0.0
          %435 = vst [vmem:[#allocation2 + $0x68] sm:$0xff] 0.0
          %436 = vst [vmem:[#allocation2 + $0x70] sm:$0xff] 0.0
          %437 = vst [vmem:[#allocation2 + $0x78] sm:$0xff] 0.0
          %438 = vst [vmem:[#allocation2 + $0x80] sm:$0xff] 0.0
          %439 = vst [vmem:[#allocation2 + $0x88] sm:$0xff] 0.0
          %440 = vst [vmem:[#allocation2 + $0x90] sm:$0xff] 0.0
          %441 = vst [vmem:[#allocation2 + $0x98] sm:$0xff] 0.0
          %442 = vst [vmem:[#allocation2 + $0xa0] sm:$0xff] 0.0
          %443 = vst [vmem:[#allocation2 + $0xa8] sm:$0xff] 0.0
          %444 = vst [vmem:[#allocation2 + $0xb0] sm:$0xff] 0.0
          %445 = vst [vmem:[#allocation2 + $0xb8] sm:$0xff] 0.0
          %446 = vst [vmem:[#allocation2 + $0xc0] sm:$0xff] 0.0
          %447 = vst [vmem:[#allocation2 + $0xc8] sm:$0xff] 0.0
          %448 = vst [vmem:[#allocation2 + $0xd0] sm:$0xff] 0.0
          %449 = vst [vmem:[#allocation2 + $0xd8] sm:$0xff] 0.0
          %450 = vst [vmem:[#allocation2 + $0xe0] sm:$0xff] 0.0
          %451 = vst [vmem:[#allocation2 + $0xe8] sm:$0xff] 0.0
          %452 = vst [vmem:[#allocation2 + $0xf0] sm:$0xff] 0.0
          %453 = vst [vmem:[#allocation2 + $0xf8] sm:$0xff] 0.0
        $region81: #{osnet_reid_forward.9} parent=72 // pred_fallthru
          _
        %v454 = vld [vmem:[#allocation2] sm:$0xff]
        %v455 = vld [vmem:[#allocation2 + $0x8] sm:$0xff]
        %v456 = vld [vmem:[#allocation2 + $0x10] sm:$0xff]
        %v457 = vld [vmem:[#allocation2 + $0x18] sm:$0xff]
        %v458 = vld [vmem:[#allocation2 + $0x20] sm:$0xff]
        %v459 = vld [vmem:[#allocation2 + $0x28] sm:$0xff]
        %v460 = vld [vmem:[#allocation2 + $0x30] sm:$0xff]
        %v461 = vld [vmem:[#allocation2 + $0x38] sm:$0xff]
        %v462 = vld [vmem:[#allocation2 + $0x40] sm:$0xff]
        %v463 = vld [vmem:[#allocation2 + $0x48] sm:$0xff]
        %v464 = vld [vmem:[#allocation2 + $0x50] sm:$0xff]
        %v465 = vld [vmem:[#allocation2 + $0x58] sm:$0xff]
        %v466 = vld [vmem:[#allocation2 + $0x60] sm:$0xff]
        %v467 = vld [vmem:[#allocation2 + $0x68] sm:$0xff]
        %v468 = vld [vmem:[#allocation2 + $0x70] sm:$0xff]
        %v469 = vld [vmem:[#allocation2 + $0x78] sm:$0xff]
        %v470 = vld [vmem:[#allocation2 + $0x80] sm:$0xff]
        %v471 = vld [vmem:[#allocation2 + $0x88] sm:$0xff]
        %v472 = vld [vmem:[#allocation2 + $0x90] sm:$0xff]
        %v473 = vld [vmem:[#allocation2 + $0x98] sm:$0xff]
        %v474 = vld [vmem:[#allocation2 + $0xa0] sm:$0xff]
        %v475 = vld [vmem:[#allocation2 + $0xa8] sm:$0xff]
        %v476 = vld [vmem:[#allocation2 + $0xb0] sm:$0xff]
        %v477 = vld [vmem:[#allocation2 + $0xb8] sm:$0xff]
        %v478 = vld [vmem:[#allocation2 + $0xc0] sm:$0xff]
        %v479 = vld [vmem:[#allocation2 + $0xc8] sm:$0xff]
        %v480 = vld [vmem:[#allocation2 + $0xd0] sm:$0xff]
        %v481 = vld [vmem:[#allocation2 + $0xd8] sm:$0xff]
        %v482 = vld [vmem:[#allocation2 + $0xe0] sm:$0xff]
        %v483 = vld [vmem:[#allocation2 + $0xe8] sm:$0xff]
        %v484 = vld [vmem:[#allocation2 + $0xf0] sm:$0xff]
        %v485 = vld [vmem:[#allocation2 + $0xf8] sm:$0xff]
        %v486 = vld [vmem:[%s336] sm:$0xf]
        %v487 = vld [vmem:[%s336 + $0x4] sm:$0xf]
        %v488 = vld [vmem:[%s336 + $0x8] sm:$0xf]
        %v489 = vld [vmem:[%s336 + $0xc] sm:$0xf]
        %v490 = vld [vmem:[%s336 + $0x10] sm:$0xf]
        %v491 = vld [vmem:[%s336 + $0x14] sm:$0xf]
        %v492 = vld [vmem:[%s336 + $0x18] sm:$0xf]
        %v493 = vld [vmem:[%s336 + $0x1c] sm:$0xf]
        %v494 = vld [vmem:[%s336 + $0x20] sm:$0xf]
        %v495 = vld [vmem:[%s336 + $0x24] sm:$0xf]
        %v496 = vld [vmem:[%s336 + $0x28] sm:$0xf]
        %v497 = vld [vmem:[%s336 + $0x2c] sm:$0xf]
        %v498 = vld [vmem:[%s336 + $0x30] sm:$0xf]
        %v499 = vld [vmem:[%s336 + $0x34] sm:$0xf]
        %v500 = vld [vmem:[%s336 + $0x38] sm:$0xf]
        %v501 = vld [vmem:[%s336 + $0x3c] sm:$0xf]
        %v502 = vld [vmem:[%s392] sm:$0xff]
        %v503 = vld [vmem:[%s392 + $0x8] sm:$0xff]
        %v504 = vld [vmem:[%s392 + $0x10] sm:$0xff]
        %v505 = vld [vmem:[%s392 + $0x18] sm:$0xff]
        %v506 = vld [vmem:[%s392 + $0x20] sm:$0xff]
        %v507 = vld [vmem:[%s392 + $0x28] sm:$0xff]
        %v508 = vld [vmem:[%s392 + $0x30] sm:$0xff]
        %v509 = vld [vmem:[%s392 + $0x38] sm:$0xff]
        %v510 = vld [vmem:[%s392 + $0x40] sm:$0xff]
        %v511 = vld [vmem:[%s392 + $0x48] sm:$0xff]
        %v512 = vld [vmem:[%s392 + $0x50] sm:$0xff]
        %v513 = vld [vmem:[%s392 + $0x58] sm:$0xff]
        %v514 = vld [vmem:[%s392 + $0x60] sm:$0xff]
        %v515 = vld [vmem:[%s392 + $0x68] sm:$0xff]
        %v516 = vld [vmem:[%s392 + $0x70] sm:$0xff]
        %v517 = vld [vmem:[%s392 + $0x78] sm:$0xff]
        %v534 = vunpack.c.l.b16 %v486
        %v535 = vunpack.c.l.b16 %v487
        %v536 = vunpack.c.l.b16 %v488
        %v537 = vunpack.c.l.b16 %v489
        %v538 = vunpack.c.l.b16 %v490
        %v539 = vunpack.c.l.b16 %v491
        %v540 = vunpack.c.l.b16 %v492
        %v541 = vunpack.c.l.b16 %v493
        %v542 = vunpack.c.l.b16 %v494
        %v543 = vunpack.c.l.b16 %v495
        %v544 = vunpack.c.l.b16 %v496
        %v545 = vunpack.c.l.b16 %v497
        %v546 = vunpack.c.l.b16 %v498
        %v547 = vunpack.c.l.b16 %v499
        %v548 = vunpack.c.l.b16 %v500
        %v549 = vunpack.c.l.b16 %v501
        %v550 = vpack.c.b16 %v535, %v534
        %v551 = vpack.c.b16 %v537, %v536
        %v552 = vpack.c.b16 %v539, %v538
        %v553 = vpack.c.b16 %v541, %v540
        %v554 = vpack.c.b16 %v543, %v542
        %v555 = vpack.c.b16 %v545, %v544
        %v556 = vpack.c.b16 %v547, %v546
        %v557 = vpack.c.b16 %v549, %v548
        %v582 = vunpack.c.l.b16 %v502
        %v583 = vunpack.c.h.b16 %v502
        %v584 = vunpack.c.l.b16 %v503
        %v585 = vunpack.c.h.b16 %v503
        %v586 = vunpack.c.l.b16 %v504
        %v587 = vunpack.c.h.b16 %v504
        %v588 = vunpack.c.l.b16 %v505
        %v589 = vunpack.c.h.b16 %v505
        %v590 = vunpack.c.l.b16 %v506
        %v591 = vunpack.c.h.b16 %v506
        %v592 = vunpack.c.l.b16 %v507
        %v593 = vunpack.c.h.b16 %v507
        %v594 = vunpack.c.l.b16 %v508
        %v595 = vunpack.c.h.b16 %v508
        %v596 = vunpack.c.l.b16 %v509
        %v597 = vunpack.c.h.b16 %v509
        %v598 = vunpack.c.l.b16 %v510
        %v599 = vunpack.c.h.b16 %v510
        %v600 = vunpack.c.l.b16 %v511
        %v601 = vunpack.c.h.b16 %v511
        %v602 = vunpack.c.l.b16 %v512
        %v603 = vunpack.c.h.b16 %v512
        %v604 = vunpack.c.l.b16 %v513
        %v605 = vunpack.c.h.b16 %v513
        %v606 = vunpack.c.l.b16 %v514
        %v607 = vunpack.c.h.b16 %v514
        %v608 = vunpack.c.l.b16 %v515
        %v609 = vunpack.c.h.b16 %v515
        %v610 = vunpack.c.l.b16 %v516
        %v611 = vunpack.c.h.b16 %v516
        %v612 = vunpack.c.l.b16 %v517
        %v613 = vunpack.c.h.b16 %v517
        %v614 = vpack.c.b16 %v584, %v582
        %v615 = vpack.c.b16 %v585, %v583
        %v616 = vpack.c.b16 %v588, %v586
        %v617 = vpack.c.b16 %v589, %v587
        %v618 = vpack.c.b16 %v592, %v590
        %v619 = vpack.c.b16 %v593, %v591
        %v620 = vpack.c.b16 %v596, %v594
        %v621 = vpack.c.b16 %v597, %v595
        %v622 = vpack.c.b16 %v600, %v598
        %v623 = vpack.c.b16 %v601, %v599
        %v624 = vpack.c.b16 %v604, %v602
        %v625 = vpack.c.b16 %v605, %v603
        %v626 = vpack.c.b16 %v608, %v606
        %v627 = vpack.c.b16 %v609, %v607
        %v628 = vpack.c.b16 %v612, %v610
        %v629 = vpack.c.b16 %v613, %v611
        %646 = vmatprep.subr.bf16.mxu0 %v615
        %647 = vmatpush1.bf16.msra.mxu0 %v614
        %648 = vmatprep.subr.bf16.mxu0 %v617
        %649 = vmatpush1.bf16.msra.mxu0 %v616
        %650 = vmatprep.subr.bf16.mxu0 %v619
        %651 = vmatpush1.bf16.msra.mxu0 %v618
        %652 = vmatprep.subr.bf16.mxu0 %v621
        %653 = vmatpush1.bf16.msra.mxu0 %v620
        %654 = vmatprep.subr.bf16.mxu0 %v623
        %655 = vmatpush1.bf16.msra.mxu0 %v622
        %656 = vmatprep.subr.bf16.mxu0 %v625
        %657 = vmatpush1.bf16.msra.mxu0 %v624
        %658 = vmatprep.subr.bf16.mxu0 %v627
        %659 = vmatpush1.bf16.msra.mxu0 %v626
        %660 = vmatprep.subr.bf16.mxu0 %v629
        %661 = vmatpush1.bf16.msra.mxu0 %v628
        %662 = vmatprep.subr.bf16.mxu0 0
        %663 = vmatpush1.bf16.msra.mxu0 0
        %664 = vmatprep.subr.bf16.mxu0 0
        %665 = vmatpush1.bf16.msra.mxu0 0
        %666 = vmatprep.subr.bf16.mxu0 0
        %667 = vmatpush1.bf16.msra.mxu0 0
        %668 = vmatprep.subr.bf16.mxu0 0
        %669 = vmatpush1.bf16.msra.mxu0 0
        %670 = vmatprep.subr.bf16.mxu0 0
        %671 = vmatpush1.bf16.msra.mxu0 0
        %672 = vmatprep.subr.bf16.mxu0 0
        %673 = vmatpush1.bf16.msra.mxu0 0
        %674 = vmatprep.subr.bf16.mxu0 0
        %675 = vmatpush1.bf16.msra.mxu0 0
        %676 = vmatprep.subr.bf16.mxu0 0
        %677 = vmatpush1.bf16.msra.mxu0 0
        %678 = vmatprep.mubr.bf16.mxu0 0
        %679 = vmatmul.mubr.bf16.gmra.mrb[0].mxu0 %v550
        %v680 = vpop.f32.mrb[0].mxu0
        %v681 = vadd.f32 0.0, %v680
        %v682 = vpop.f32.mrb[0].mxu0
        %v683 = vadd.f32 0.0, %v682
        %v684 = vpop.f32.mrb[0].mxu0
        %v685 = vadd.f32 0.0, %v684
        %v686 = vpop.f32.mrb[0].mxu0
        %v687 = vadd.f32 0.0, %v686
        %688 = vmatprep.mubr.bf16.mxu0 0
        %689 = vmatmul.mubr.bf16.gmra.mrb[0].mxu0 %v551
        %v690 = vpop.f32.mrb[0].mxu0
        %v691 = vadd.f32 0.0, %v690
        %v692 = vpop.f32.mrb[0].mxu0
        %v693 = vadd.f32 0.0, %v692
        %v694 = vpop.f32.mrb[0].mxu0
        %v695 = vadd.f32 0.0, %v694
        %v696 = vpop.f32.mrb[0].mxu0
        %v697 = vadd.f32 0.0, %v696
        %698 = vmatprep.mubr.bf16.mxu0 0
        %699 = vmatmul.mubr.bf16.gmra.mrb[0].mxu0 %v552
        %v700 = vpop.f32.mrb[0].mxu0
        %v701 = vadd.f32 0.0, %v700
        %v702 = vpop.f32.mrb[0].mxu0
        %v703 = vadd.f32 0.0, %v702
        %v704 = vpop.f32.mrb[0].mxu0
        %v705 = vadd.f32 0.0, %v704
        %v706 = vpop.f32.mrb[0].mxu0
        %v707 = vadd.f32 0.0, %v706
        %708 = vmatprep.mubr.bf16.mxu0 0
        %709 = vmatmul.mubr.bf16.gmra.mrb[0].mxu0 %v553
        %v710 = vpop.f32.mrb[0].mxu0
        %v711 = vadd.f32 0.0, %v710
        %v712 = vpop.f32.mrb[0].mxu0
        %v713 = vadd.f32 0.0, %v712
        %v714 = vpop.f32.mrb[0].mxu0
        %v715 = vadd.f32 0.0, %v714
        %v716 = vpop.f32.mrb[0].mxu0
        %v717 = vadd.f32 0.0, %v716
        %718 = vmatprep.mubr.bf16.mxu0 0
        %719 = vmatmul.mubr.bf16.gmra.mrb[0].mxu0 %v554
        %v720 = vpop.f32.mrb[0].mxu0
        %v721 = vadd.f32 0.0, %v720
        %v722 = vpop.f32.mrb[0].mxu0
        %v723 = vadd.f32 0.0, %v722
        %v724 = vpop.f32.mrb[0].mxu0
        %v725 = vadd.f32 0.0, %v724
        %v726 = vpop.f32.mrb[0].mxu0
        %v727 = vadd.f32 0.0, %v726
        %728 = vmatprep.mubr.bf16.mxu0 0
        %729 = vmatmul.mubr.bf16.gmra.mrb[0].mxu0 %v555
        %v730 = vpop.f32.mrb[0].mxu0
        %v731 = vadd.f32 0.0, %v730
        %v732 = vpop.f32.mrb[0].mxu0
        %v733 = vadd.f32 0.0, %v732
        %v734 = vpop.f32.mrb[0].mxu0
        %v735 = vadd.f32 0.0, %v734
        %v736 = vpop.f32.mrb[0].mxu0
        %v737 = vadd.f32 0.0, %v736
        %738 = vmatprep.mubr.bf16.mxu0 0
        %739 = vmatmul.mubr.bf16.gmra.mrb[0].mxu0 %v556
        %v740 = vpop.f32.mrb[0].mxu0
        %v741 = vadd.f32 0.0, %v740
        %v742 = vpop.f32.mrb[0].mxu0
        %v743 = vadd.f32 0.0, %v742
        %v744 = vpop.f32.mrb[0].mxu0
        %v745 = vadd.f32 0.0, %v744
        %v746 = vpop.f32.mrb[0].mxu0
        %v747 = vadd.f32 0.0, %v746
        %748 = vmatprep.mubr.bf16.mxu0 0
        %749 = vmatmul.mubr.bf16.gmra.mrb[0].mxu0 %v557
        %v750 = vpop.f32.mrb[0].mxu0
        %v751 = vadd.f32 0.0, %v750
        %v752 = vpop.f32.mrb[0].mxu0
        %v753 = vadd.f32 0.0, %v752
        %v754 = vpop.f32.mrb[0].mxu0
        %v755 = vadd.f32 0.0, %v754
        %v756 = vpop.f32.mrb[0].mxu0
        %v757 = vadd.f32 0.0, %v756
        %758 = vdwg.mxu0
        %v759 = vadd.f32 %v454, %v681
        %v760 = vadd.f32 %v455, %v683
        %v761 = vadd.f32 %v456, %v685
        %v762 = vadd.f32 %v457, %v687
        %v763 = vadd.f32 %v458, %v691
        %v764 = vadd.f32 %v459, %v693
        %v765 = vadd.f32 %v460, %v695
        %v766 = vadd.f32 %v461, %v697
        %v767 = vadd.f32 %v462, %v701
        %v768 = vadd.f32 %v463, %v703
        %v769 = vadd.f32 %v464, %v705
        %v770 = vadd.f32 %v465, %v707
        %v771 = vadd.f32 %v466, %v711
        %v772 = vadd.f32 %v467, %v713
        %v773 = vadd.f32 %v468, %v715
        %v774 = vadd.f32 %v469, %v717
        %v775 = vadd.f32 %v470, %v721
        %v776 = vadd.f32 %v471, %v723
        %v777 = vadd.f32 %v472, %v725
        %v778 = vadd.f32 %v473, %v727
        %v779 = vadd.f32 %v474, %v731
        %v780 = vadd.f32 %v475, %v733
        %v781 = vadd.f32 %v476, %v735
        %v782 = vadd.f32 %v477, %v737
        %v783 = vadd.f32 %v478, %v741
        %v784 = vadd.f32 %v479, %v743
        %v785 = vadd.f32 %v480, %v745
        %v786 = vadd.f32 %v481, %v747
        %v787 = vadd.f32 %v482, %v751
        %v788 = vadd.f32 %v483, %v753
        %v789 = vadd.f32 %v484, %v755
        %v790 = vadd.f32 %v485, %v757
        %791 = vst [vmem:[#allocation2] sm:$0xff] %v759
        %792 = vst [vmem:[#allocation2 + $0x8] sm:$0xff] %v760
        %793 = vst [vmem:[#allocation2 + $0x10] sm:$0xff] %v761
        %794 = vst [vmem:[#allocation2 + $0x18] sm:$0xff] %v762
        %795 = vst [vmem:[#allocation2 + $0x20] sm:$0xff] %v763
        %796 = vst [vmem:[#allocation2 + $0x28] sm:$0xff] %v764
        %797 = vst [vmem:[#allocation2 + $0x30] sm:$0xff] %v765
        %798 = vst [vmem:[#allocation2 + $0x38] sm:$0xff] %v766
        %799 = vst [vmem:[#allocation2 + $0x40] sm:$0xff] %v767
        %800 = vst [vmem:[#allocation2 + $0x48] sm:$0xff] %v768
        %801 = vst [vmem:[#allocation2 + $0x50] sm:$0xff] %v769
        %802 = vst [vmem:[#allocation2 + $0x58] sm:$0xff] %v770
        %803 = vst [vmem:[#allocation2 + $0x60] sm:$0xff] %v771
        %804 = vst [vmem:[#allocation2 + $0x68] sm:$0xff] %v772
        %805 = vst [vmem:[#allocation2 + $0x70] sm:$0xff] %v773
        %806 = vst [vmem:[#allocation2 + $0x78] sm:$0xff] %v774
        %807 = vst [vmem:[#allocation2 + $0x80] sm:$0xff] %v775
        %808 = vst [vmem:[#allocation2 + $0x88] sm:$0xff] %v776
        %809 = vst [vmem:[#allocation2 + $0x90] sm:$0xff] %v777
        %810 = vst [vmem:[#allocation2 + $0x98] sm:$0xff] %v778
        %811 = vst [vmem:[#allocation2 + $0xa0] sm:$0xff] %v779
        %812 = vst [vmem:[#allocation2 + $0xa8] sm:$0xff] %v780
        %813 = vst [vmem:[#allocation2 + $0xb0] sm:$0xff] %v781
        %814 = vst [vmem:[#allocation2 + $0xb8] sm:$0xff] %v782
        %815 = vst [vmem:[#allocation2 + $0xc0] sm:$0xff] %v783
        %816 = vst [vmem:[#allocation2 + $0xc8] sm:$0xff] %v784
        %817 = vst [vmem:[#allocation2 + $0xd0] sm:$0xff] %v785
        %818 = vst [vmem:[#allocation2 + $0xd8] sm:$0xff] %v786
        %819 = vst [vmem:[#allocation2 + $0xe0] sm:$0xff] %v787
        %820 = vst [vmem:[#allocation2 + $0xe8] sm:$0xff] %v788
        %821 = vst [vmem:[#allocation2 + $0xf0] sm:$0xff] %v789
        %822 = vst [vmem:[#allocation2 + $0xf8] sm:$0xff] %v790
        %p823 = scmp.eq.s32.totalorder %s22, 4
        // Predicated region
        $region82: #{osnet_reid_forward.9} parent=72 // pred_check
          %p824 = pneg %p823
        $region83: #{osnet_reid_forward.9} parent=72 // pred_check_branch
          %826 = sbr.rel (%p824) target = $region85
        $region84: #{osnet_reid_forward.9} parent=72 // pred_region
          %v827 = vld [vmem:[#allocation2] sm:$0xff]
          %v828 = vld [vmem:[#allocation2 + $0x8] sm:$0xff]
          %v829 = vld [vmem:[#allocation2 + $0x10] sm:$0xff]
          %v830 = vld [vmem:[#allocation2 + $0x18] sm:$0xff]
          %v831 = vld [vmem:[#allocation2 + $0x20] sm:$0xff]
          %v832 = vld [vmem:[#allocation2 + $0x28] sm:$0xff]
          %v833 = vld [vmem:[#allocation2 + $0x30] sm:$0xff]
          %v834 = vld [vmem:[#allocation2 + $0x38] sm:$0xff]
          %v835 = vld [vmem:[#allocation2 + $0x40] sm:$0xff]
          %v836 = vld [vmem:[#allocation2 + $0x48] sm:$0xff]
          %v837 = vld [vmem:[#allocation2 + $0x50] sm:$0xff]
          %v838 = vld [vmem:[#allocation2 + $0x58] sm:$0xff]
          %v839 = vld [vmem:[#allocation2 + $0x60] sm:$0xff]
          %v840 = vld [vmem:[#allocation2 + $0x68] sm:$0xff]
          %v841 = vld [vmem:[#allocation2 + $0x70] sm:$0xff]
          %v842 = vld [vmem:[#allocation2 + $0x78] sm:$0xff]
          %v843 = vld [vmem:[#allocation2 + $0x80] sm:$0xff]
          %v844 = vld [vmem:[#allocation2 + $0x88] sm:$0xff]
          %v845 = vld [vmem:[#allocation2 + $0x90] sm:$0xff]
          %v846 = vld [vmem:[#allocation2 + $0x98] sm:$0xff]
          %v847 = vld [vmem:[#allocation2 + $0xa0] sm:$0xff]
          %v848 = vld [vmem:[#allocation2 + $0xa8] sm:$0xff]
          %v849 = vld [vmem:[#allocation2 + $0xb0] sm:$0xff]
          %v850 = vld [vmem:[#allocation2 + $0xb8] sm:$0xff]
          %v851 = vld [vmem:[#allocation2 + $0xc0] sm:$0xff]
          %v852 = vld [vmem:[#allocation2 + $0xc8] sm:$0xff]
          %v853 = vld [vmem:[#allocation2 + $0xd0] sm:$0xff]
          %v854 = vld [vmem:[#allocation2 + $0xd8] sm:$0xff]
          %v855 = vld [vmem:[#allocation2 + $0xe0] sm:$0xff]
          %v856 = vld [vmem:[#allocation2 + $0xe8] sm:$0xff]
          %v857 = vld [vmem:[#allocation2 + $0xf0] sm:$0xff]
          %v858 = vld [vmem:[#allocation2 + $0xf8] sm:$0xff]
          %v859 = vld [vmem:[%s398] sm:$0x3]
          %v861 = vlaneseq
          %v862 = vshrl.u32 %v861, 7
          %v863 = vsub.s32 0, %v862
          %v864 = vrot.slane %v859, %v863
          %v865 = vlaneseq
          %v866 = vshrl.u32 %v865, 7
          %v867 = vsub.s32 1, %v866
          %v868 = vrot.slane %v859, %v867
          %v871 = vmul.f32 %v827, %v864
          %v872 = vmul.f32 %v828, %v868
          %v873 = vmul.f32 %v829, %v864
          %v874 = vmul.f32 %v830, %v868
          %v875 = vmul.f32 %v831, %v864
          %v876 = vmul.f32 %v832, %v868
          %v877 = vmul.f32 %v833, %v864
          %v878 = vmul.f32 %v834, %v868
          %v879 = vmul.f32 %v835, %v864
          %v880 = vmul.f32 %v836, %v868
          %v881 = vmul.f32 %v837, %v864
          %v882 = vmul.f32 %v838, %v868
          %v883 = vmul.f32 %v839, %v864
          %v884 = vmul.f32 %v840, %v868
          %v885 = vmul.f32 %v841, %v864
          %v886 = vmul.f32 %v842, %v868
          %v887 = vmul.f32 %v843, %v864
          %v888 = vmul.f32 %v844, %v868
          %v889 = vmul.f32 %v845, %v864
          %v890 = vmul.f32 %v846, %v868
          %v891 = vmul.f32 %v847, %v864
          %v892 = vmul.f32 %v848, %v868
          %v893 = vmul.f32 %v849, %v864
          %v894 = vmul.f32 %v850, %v868
          %v895 = vmul.f32 %v851, %v864
          %v896 = vmul.f32 %v852, %v868
          %v897 = vmul.f32 %v853, %v864
          %v898 = vmul.f32 %v854, %v868
          %v899 = vmul.f32 %v855, %v864
          %v900 = vmul.f32 %v856, %v868
          %v901 = vmul.f32 %v857, %v864
          %v902 = vmul.f32 %v858, %v868
          %v903 = vld [vmem:[%s403] sm:$0x3]
          %v905 = vlaneseq
          %v906 = vshrl.u32 %v905, 7
          %v907 = vsub.s32 0, %v906
          %v908 = vrot.slane %v903, %v907
          %v909 = vlaneseq
          %v910 = vshrl.u32 %v909, 7
          %v911 = vsub.s32 1, %v910
          %v912 = vrot.slane %v903, %v911
          %v915 = vadd.f32 %v871, %v908
          %v916 = vadd.f32 %v872, %v912
          %v917 = vadd.f32 %v873, %v908
          %v918 = vadd.f32 %v874, %v912
          %v919 = vadd.f32 %v875, %v908
          %v920 = vadd.f32 %v876, %v912
          %v921 = vadd.f32 %v877, %v908
          %v922 = vadd.f32 %v878, %v912
          %v923 = vadd.f32 %v879, %v908
          %v924 = vadd.f32 %v880, %v912
          %v925 = vadd.f32 %v881, %v908
          %v926 = vadd.f32 %v882, %v912
          %v927 = vadd.f32 %v883, %v908
          %v928 = vadd.f32 %v884, %v912
          %v929 = vadd.f32 %v885, %v908
          %v930 = vadd.f32 %v886, %v912
          %v931 = vadd.f32 %v887, %v908
          %v932 = vadd.f32 %v888, %v912
          %v933 = vadd.f32 %v889, %v908
          %v934 = vadd.f32 %v890, %v912
          %v935 = vadd.f32 %v891, %v908
          %v936 = vadd.f32 %v892, %v912
          %v937 = vadd.f32 %v893, %v908
          %v938 = vadd.f32 %v894, %v912
          %v939 = vadd.f32 %v895, %v908
          %v940 = vadd.f32 %v896, %v912
          %v941 = vadd.f32 %v897, %v908
          %v942 = vadd.f32 %v898, %v912
          %v943 = vadd.f32 %v899, %v908
          %v944 = vadd.f32 %v900, %v912
          %v945 = vadd.f32 %v901, %v908
          %v946 = vadd.f32 %v902, %v912
          %v947 = vmax.f32 %v915, 0.0
          %v948 = vmax.f32 %v916, 0.0
          %v949 = vmax.f32 %v917, 0.0
          %v950 = vmax.f32 %v918, 0.0
          %v951 = vmax.f32 %v919, 0.0
          %v952 = vmax.f32 %v920, 0.0
          %v953 = vmax.f32 %v921, 0.0
          %v954 = vmax.f32 %v922, 0.0
          %v955 = vmax.f32 %v923, 0.0
          %v956 = vmax.f32 %v924, 0.0
          %v957 = vmax.f32 %v925, 0.0
          %v958 = vmax.f32 %v926, 0.0
          %v959 = vmax.f32 %v927, 0.0
          %v960 = vmax.f32 %v928, 0.0
          %v961 = vmax.f32 %v929, 0.0
          %v962 = vmax.f32 %v930, 0.0
          %v963 = vmax.f32 %v931, 0.0
          %v964 = vmax.f32 %v932, 0.0
          %v965 = vmax.f32 %v933, 0.0
          %v966 = vmax.f32 %v934, 0.0
          %v967 = vmax.f32 %v935, 0.0
          %v968 = vmax.f32 %v936, 0.0
          %v969 = vmax.f32 %v937, 0.0
          %v970 = vmax.f32 %v938, 0.0
          %v971 = vmax.f32 %v939, 0.0
          %v972 = vmax.f32 %v940, 0.0
          %v973 = vmax.f32 %v941, 0.0
          %v974 = vmax.f32 %v942, 0.0
          %v975 = vmax.f32 %v943, 0.0
          %v976 = vmax.f32 %v944, 0.0
          %v977 = vmax.f32 %v945, 0.0
          %v978 = vmax.f32 %v946, 0.0
          %979 = vst [vmem:[%s414] sm:$0xff] %v947
          %980 = vst [vmem:[%s414 + $0x8] sm:$0xff] %v948
          %981 = vst [vmem:[%s414 + $0x10] sm:$0xff] %v949
          %982 = vst [vmem:[%s414 + $0x18] sm:$0xff] %v950
          %983 = vst [vmem:[%s414 + $0x20] sm:$0xff] %v951
          %984 = vst [vmem:[%s414 + $0x28] sm:$0xff] %v952
          %985 = vst [vmem:[%s414 + $0x30] sm:$0xff] %v953
          %986 = vst [vmem:[%s414 + $0x38] sm:$0xff] %v954
          %987 = vst [vmem:[%s414 + $0x40] sm:$0xff] %v955
          %988 = vst [vmem:[%s414 + $0x48] sm:$0xff] %v956
          %989 = vst [vmem:[%s414 + $0x50] sm:$0xff] %v957
          %990 = vst [vmem:[%s414 + $0x58] sm:$0xff] %v958
          %991 = vst [vmem:[%s414 + $0x60] sm:$0xff] %v959
          %992 = vst [vmem:[%s414 + $0x68] sm:$0xff] %v960
          %993 = vst [vmem:[%s414 + $0x70] sm:$0xff] %v961
          %994 = vst [vmem:[%s414 + $0x78] sm:$0xff] %v962
          %995 = vst [vmem:[%s414 + $0x80] sm:$0xff] %v963
          %996 = vst [vmem:[%s414 + $0x88] sm:$0xff] %v964
          %997 = vst [vmem:[%s414 + $0x90] sm:$0xff] %v965
          %998 = vst [vmem:[%s414 + $0x98] sm:$0xff] %v966
          %999 = vst [vmem:[%s414 + $0xa0] sm:$0xff] %v967
          %1000 = vst [vmem:[%s414 + $0xa8] sm:$0xff] %v968
          %1001 = vst [vmem:[%s414 + $0xb0] sm:$0xff] %v969
          %1002 = vst [vmem:[%s414 + $0xb8] sm:$0xff] %v970
          %1003 = vst [vmem:[%s414 + $0xc0] sm:$0xff] %v971
          %1004 = vst [vmem:[%s414 + $0xc8] sm:$0xff] %v972
          %1005 = vst [vmem:[%s414 + $0xd0] sm:$0xff] %v973
          %1006 = vst [vmem:[%s414 + $0xd8] sm:$0xff] %v974
          %1007 = vst [vmem:[%s414 + $0xe0] sm:$0xff] %v975
          %1008 = vst [vmem:[%s414 + $0xe8] sm:$0xff] %v976
          %1009 = vst [vmem:[%s414 + $0xf0] sm:$0xff] %v977
          %1010 = vst [vmem:[%s414 + $0xf8] sm:$0xff] %v978
        $region85: #{osnet_reid_forward.9} parent=72 // pred_fallthru
          _
        %s1011 = smul.u32 16, %s20
        %s1012 = smul.u32 2, %s21
        %p1013 = scmp.lt.s32.totalorder %s1011, 15
        %s1014 = scalar_select %p1013, %s1011, 15
        %p1015 = scmp.lt.s32.totalorder %s1012, 1
        %s1016 = scalar_select %p1015, %s1012, 1
        %s1017 = smul.addr %s1014, 2
        %s1018 = sadd.s32 %s1016, %s1017
        %s1019 = smul.addr %s1018, 8
        %s1020 = scalar_lea.vmem %s4, %s1019
        // Predicated region
        $region86: #{osnet_reid_forward.9} parent=72 // pred_check
          %p1021 = pneg %p162
        $region87: #{osnet_reid_forward.9} parent=72 // pred_check_branch
          %1023 = sbr.rel (%p1021) target = $region89
        $region88: #{osnet_reid_forward.9} parent=72 // pred_region
          %s1024 = smul.u32 16, %s20
          %s1025 = smul.u32 2, %s21
        $region89: #{osnet_reid_forward.9} parent=72 // pred_fallthru
          _
        // Predicated region
        $region90: #{osnet_reid_forward.9} parent=72 // pred_check
          %p1026 = pneg %p162
        $region91: #{osnet_reid_forward.9} parent=72 // pred_check_branch
          %1028 = sbr.rel (%p1026) target = $region93
        $region92: #{osnet_reid_forward.9} parent=72 // pred_region
          %s1029 = smul.u32 16, %s20
          %s1030 = smul.u32 2, %s21
          %p1031 = scmp.lt.s32.totalorder %s1029, 15
          %s1032 = scalar_select %p1031, %s1029, 15
          %p1033 = scmp.lt.s32.totalorder %s1030, 1
          %s1034 = scalar_select %p1033, %s1030, 1
          %s1035 = smul.addr %s1032, 2
          %s1036 = sadd.s32 %s1034, %s1035
          %s1037 = smul.addr %s1036, 8
          %s1038 = scalar_lea.vmem %s4, %s1037
        $region93: #{osnet_reid_forward.9} parent=72 // pred_fallthru
          _
      $region73: #{osnet_reid_forward.9} parent=5 // pred_fallthru
        _
      %p1039 = scmp.le.s32.totalorder 2, %s10
      // Predicated region
      $region94: #{osnet_reid_forward.9} parent=5 // pred_check
        %p1040 = pneg %p1039
      $region95: #{osnet_reid_forward.9} parent=5 // pred_check_branch
        %1042 = sbr.rel (%p1040) target = $region97
      $region96: #{osnet_reid_forward.9} parent=5 // pred_region
        %s1043 = ssub.s32 %s10, 2
      $region97: #{osnet_reid_forward.9} parent=5 // pred_fallthru
        _
    $region6: #{osnet_reid_forward.9} parent=1 // loop_footer
      %s14 = sadd.s32 1, %s10
    $region7: #{osnet_reid_forward.9} parent=1 // loop_footer_branch
      %9 = sbr.rel target = $region3
    $region8: #{osnet_reid_forward.9} parent=1 // loop_exit
      _

// kernel: osnet_reid_forward.10
$region0: #{osnet_reid_forward.10}
  #allocation0 [shape = 'u32[]', space=smem, size = 0x4, offset = 0x4, fixed_abs, tag = 'smem constant byte address 0x4 - core index']
  #allocation1 [shape = 'u32[144,128]{1,0:T(1,128)}', space=vmem, size = 0x12000, scoped, tag = 'internal scratch']
  #allocation2 [shape = 'f32[32,128]{1,0:T(8,128)}', space=vmem, size = 0x4000, scoped, tag = 'scratch operand']
  %s0 = inlined_call_operand.vmem [shape: bf16[32,2304], index: 0, kind: input, shape index: {}]
  %s1 = inlined_call_operand.vmem [shape: bf16[2304,384], index: 1, kind: input, shape index: {}]
  %s2 = inlined_call_operand.vmem [shape: f32[1,384], index: 2, kind: input, shape index: {}]
  %s3 = inlined_call_operand.vmem [shape: f32[1,384], index: 3, kind: input, shape index: {}]
  %s4 = inlined_call_operand.vmem [shape: f32[32,384], index: 4, kind: output, shape index: {}]
  %s5 = sld [smem:[#allocation0]]
  $region170: #{osnet_reid_forward.10} parent=0
    _
  %s7 = ssub.s32 1, %s5
  %s8 = scalar_select 0, %s7, %s5
  $region1: #{osnet_reid_forward.10} parent=0
    #allocation3 [shape = 'u8[32768]{0}', space=vmem, size = 0x8000, scoped, tag = 'input window, operand 0']
    #allocation4 [shape = 'u8[131072]{0}', space=vmem, size = 0x20000, scoped, tag = 'input window, operand 1']
    #allocation5 [shape = 'u8[32768]{0}', space=vmem, size = 0x8000, scoped, tag = 'output window, operand 0']
    loop: start=0, step=1, limit=29
    $region2: #{osnet_reid_forward.10} parent=1 // loop_pre_header
      _
    $region3: #{osnet_reid_forward.10} parent=1 // loop_header
      %s10 = sphi 0, %s14
      %p11 = scmp.ge.s32.totalorder %s10, 29
      %s17 = sphi 0, %s36
      %s18 = sphi 0, %s32
      %s19 = sphi 0, %s28
      %s20 = sphi 0, %s17
      %s21 = sphi 0, %s18
      %s22 = sphi 0, %s19
      %s23 = sphi 0, %s20
      %s24 = sphi 0, %s21
      %s25 = sphi 0, %s22
      %s41 = sphi 0, %s43
      %s44 = sphi 0, %s41
      %s45 = sphi 0, %s44
      %s61 = sphi 0, %s45
      %s69 = sphi 0, %s71
      %s72 = sphi 0, %s69
      %s73 = sphi 0, %s72
      %s89 = sphi 0, %s73
      %s95 = sphi 0, %s97
      %s98 = sphi 0, %s95
      %s99 = sphi 0, %s98
      %s115 = sphi 0, %s99
      %s121 = sphi 0, %s123
      %s124 = sphi 0, %s121
      %s125 = sphi 0, %s124
      %s141 = sphi 0, %s125
      %s149 = sphi 0, %s151
      %s152 = sphi 0, %s149
      %s153 = sphi 0, %s152
      %s169 = sphi 0, %s153
    $region4: #{osnet_reid_forward.10} parent=1 // loop_header_branch
      %13 = sbr.rel (%p11) target = $region8
    $region5: #{osnet_reid_forward.10} parent=1 // loop_body
      %s15 = ssub.s32 %s10, 1
      %s16 = ssub.s32 %s10, 2
      %s26 = sadd.s32 1, %s19
      %p27 = scmp.ge.s32.totalorder %s26, 9
      %s28 = scalar_select %p27, 0, %s26
      %s29 = sadd.s32 1, %s18
      %s30 = scalar_select %p27, %s29, %s18
      %p31 = scmp.ge.s32.totalorder %s30, 3
      %s32 = scalar_select %p31, 0, %s30
      %s33 = sadd.s32 1, %s17
      %s34 = scalar_select %p31, %s33, %s17
      %p35 = scmp.ge.s32.totalorder %s34, 1
      %s36 = scalar_select %p35, 0, %s34
      %s37 = ssub.s32 %s17, %s36
      %s38 = ssub.s32 %s19, %s28
      %s39 = sor.u32 %s37, %s38
      %p40 = scmp.eq.s32.totalorder %s39, 0
      %s42 = sadd.s32 %s41, 1
      %s43 = scalar_select %p40, %s41, %s42
      %p46 = pneg %p40
      %p47 = scmp.eq.s32.totalorder %s10, 26
      %p48 = por %p46, %p47
      %p49 = scmp.ne.s32.totalorder %s41, %s44
      %p50 = scmp.eq.s32.totalorder %s10, 0
      %p51 = por %p49, %p50
      %p52 = scmp.ne.s32.totalorder %s41, %s44
      %p53 = scmp.eq.s32.totalorder %s15, 26
      %p54 = por %p52, %p53
      %p55 = scmp.ne.s32.totalorder %s44, %s45
      %p56 = scmp.eq.s32.totalorder %s15, 0
      %p57 = por %p55, %p56
      %p58 = scmp.ne.s32.totalorder %s44, %s45
      %p59 = scmp.eq.s32.totalorder %s16, 26
      %p60 = por %p58, %p59
      %p62 = scmp.ne.s32.totalorder %s45, %s61
      %p63 = scmp.eq.s32.totalorder %s16, 0
      %p64 = por %p62, %p63
      %s65 = ssub.s32 %s19, %s28
      %s66 = ssub.s32 %s18, %s32
      %s67 = sor.u32 %s65, %s66
      %p68 = scmp.eq.s32.totalorder %s67, 0
      %s70 = sadd.s32 %s69, 1
      %s71 = scalar_select %p68, %s69, %s70
      %p74 = pneg %p68
      %p75 = scmp.eq.s32.totalorder %s10, 26
      %p76 = por %p74, %p75
      %p77 = scmp.ne.s32.totalorder %s69, %s72
      %p78 = scmp.eq.s32.totalorder %s10, 0
      %p79 = por %p77, %p78
      %p80 = scmp.ne.s32.totalorder %s69, %s72
      %p81 = scmp.eq.s32.totalorder %s15, 26
      %p82 = por %p80, %p81
      %p83 = scmp.ne.s32.totalorder %s72, %s73
      %p84 = scmp.eq.s32.totalorder %s15, 0
      %p85 = por %p83, %p84
      %p86 = scmp.ne.s32.totalorder %s72, %s73
      %p87 = scmp.eq.s32.totalorder %s16, 26
      %p88 = por %p86, %p87
      %p90 = scmp.ne.s32.totalorder %s73, %s89
      %p91 = scmp.eq.s32.totalorder %s16, 0
      %p92 = por %p90, %p91
      %s93 = ssub.s32 %s18, %s32
      %p94 = scmp.eq.s32.totalorder %s93, 0
      %s96 = sadd.s32 %s95, 1
      %s97 = scalar_select %p94, %s95, %s96
      %p100 = pneg %p94
      %p101 = scmp.eq.s32.totalorder %s10, 26
      %p102 = por %p100, %p101
      %p103 = scmp.ne.s32.totalorder %s95, %s98
      %p104 = scmp.eq.s32.totalorder %s10, 0
      %p105 = por %p103, %p104
      %p106 = scmp.ne.s32.totalorder %s95, %s98
      %p107 = scmp.eq.s32.totalorder %s15, 26
      %p108 = por %p106, %p107
      %p109 = scmp.ne.s32.totalorder %s98, %s99
      %p110 = scmp.eq.s32.totalorder %s15, 0
      %p111 = por %p109, %p110
      %p112 = scmp.ne.s32.totalorder %s98, %s99
      %p113 = scmp.eq.s32.totalorder %s16, 26
      %p114 = por %p112, %p113
      %p116 = scmp.ne.s32.totalorder %s99, %s115
      %p117 = scmp.eq.s32.totalorder %s16, 0
      %p118 = por %p116, %p117
      %s119 = ssub.s32 %s18, %s32
      %p120 = scmp.eq.s32.totalorder %s119, 0
      %s122 = sadd.s32 %s121, 1
      %s123 = scalar_select %p120, %s121, %s122
      %p126 = pneg %p120
      %p127 = scmp.eq.s32.totalorder %s10, 26
      %p128 = por %p126, %p127
      %p129 = scmp.ne.s32.totalorder %s121, %s124
      %p130 = scmp.eq.s32.totalorder %s10, 0
      %p131 = por %p129, %p130
      %p132 = scmp.ne.s32.totalorder %s121, %s124
      %p133 = scmp.eq.s32.totalorder %s15, 26
      %p134 = por %p132, %p133
      %p135 = scmp.ne.s32.totalorder %s124, %s125
      %p136 = scmp.eq.s32.totalorder %s15, 0
      %p137 = por %p135, %p136
      %p138 = scmp.ne.s32.totalorder %s124, %s125
      %p139 = scmp.eq.s32.totalorder %s16, 26
      %p140 = por %p138, %p139
      %p142 = scmp.ne.s32.totalorder %s125, %s141
      %p143 = scmp.eq.s32.totalorder %s16, 0
      %p144 = por %p142, %p143
      %s145 = ssub.s32 %s17, %s36
      %s146 = ssub.s32 %s18, %s32
      %s147 = sor.u32 %s145, %s146
      %p148 = scmp.eq.s32.totalorder %s147, 0
      %s150 = sadd.s32 %s149, 1
      %s151 = scalar_select %p148, %s149, %s150
      %p154 = pneg %p148
      %p155 = scmp.eq.s32.totalorder %s10, 26
      %p156 = por %p154, %p155
      %p157 = scmp.ne.s32.totalorder %s149, %s152
      %p158 = scmp.eq.s32.totalorder %s10, 0
      %p159 = por %p157, %p158
      %p160 = scmp.ne.s32.totalorder %s149, %s152
      %p161 = scmp.eq.s32.totalorder %s15, 26
      %p162 = por %p160, %p161
      %p163 = scmp.ne.s32.totalorder %s152, %s153
      %p164 = scmp.eq.s32.totalorder %s15, 0
      %p165 = por %p163, %p164
      %p166 = scmp.ne.s32.totalorder %s152, %s153
      %p167 = scmp.eq.s32.totalorder %s16, 26
      %p168 = por %p166, %p167
      %p170 = scmp.ne.s32.totalorder %s153, %s169
      %p171 = scmp.eq.s32.totalorder %s16, 0
      %p172 = por %p170, %p171
      %p173 = scmp.le.s32.totalorder 1, %s10
      %p174 = scmp.lt.s32.totalorder %s10, 28
      %p175 = pnand %p173, %p174
      %p176 = pneg %p175
      // Predicated region
      $region9: #{osnet_reid_forward.10} parent=5 // pred_check
        _
      $region10: #{osnet_reid_forward.10} parent=5 // pred_check_branch
        %178 = sbr.rel (%p175) target = $region12
      $region11: #{osnet_reid_forward.10} parent=5 // pred_region
        %s179 = ssub.s32 %s10, 1
      $region12: #{osnet_reid_forward.10} parent=5 // pred_fallthru
        _
      %p180 = scmp.lt.s32.totalorder %s10, 27
      // Predicated region
      $region13: #{osnet_reid_forward.10} parent=5 // pred_check
        %p181 = pneg %p180
      $region14: #{osnet_reid_forward.10} parent=5 // pred_check_branch
        %183 = sbr.rel (%p181) target = $region16
      $region15: #{osnet_reid_forward.10} parent=5 // pred_region
        // Predicated region
        $region17: #{osnet_reid_forward.10} parent=15 // pred_check
          %p184 = pneg %p51
        $region18: #{osnet_reid_forward.10} parent=15 // pred_check_branch
          %186 = sbr.rel (%p184) target = $region20
        $region19: #{osnet_reid_forward.10} parent=15 // pred_region
          %s187 = sand.u32 %s41, 1
          %s188 = sand.u32 %s41, 1
          %s189 = smul.addr %s188, 32
          %s190 = scalar_lea.vmem [#allocation3], %s189
          %s191 = smul.u32 4, %s17
          %s192 = smul.u32 2, %s19
          %s193 = smul.addr %s191, 18
          %s194 = sadd.s32 %s192, %s193
          %s195 = smul.addr %s194, 4
          %s196 = scalar_lea.vmem %s0, %s195
          // Predicated region
          $region21: #{osnet_reid_forward.10} parent=19 // pred_check
            _
          $region22: #{osnet_reid_forward.10} parent=19 // pred_check_branch
            %198 = sbr.rel (0) target = $region24
          $region23: #{osnet_reid_forward.10} parent=19 // pred_region
            // Predicated region
            $region25: #{osnet_reid_forward.10} parent=23 // pred_check
              _
            $region26: #{osnet_reid_forward.10} parent=23 // pred_check_branch
              %200 = sbr.rel (0) target = $region28
            $region27: #{osnet_reid_forward.10} parent=23 // pred_region
              // Predicated region
              $region40: #{osnet_reid_forward.10} parent=27 // pred_check
                _
              $region41: #{osnet_reid_forward.10} parent=27 // pred_check_branch
                %221 = sbr.rel (0) target = $region43
              $region42: #{osnet_reid_forward.10} parent=27 // pred_region
                loop: start=0, step=1, limit=1
                $region44: #{osnet_reid_forward.10} parent=42 // loop_pre_header
                  _
                $region45: #{osnet_reid_forward.10} parent=42 // loop_header
                  %s223 = sphi 0, %s227
                  %p224 = scmp.ge.s32.totalorder %s223, 1
                  %s228 = sphi %s196, %s196
                  %s229 = sphi %s190, %s190
                $region46: #{osnet_reid_forward.10} parent=42 // loop_header_branch
                  %226 = sbr.rel (%p224) target = $region50
                $region47: #{osnet_reid_forward.10} parent=42 // loop_body
                  %v230 = vld [vmem:[%s228] sm:$0xff]
                  %231 = vst [vmem:[%s229] sm:$0xff] %v230
                  %v232 = vld [vmem:[%s228 + $0x48] sm:$0xff]
                  %233 = vst [vmem:[%s229 + $0x8] sm:$0xff] %v232
                  %v234 = vld [vmem:[%s228 + $0x90] sm:$0xff]
                  %235 = vst [vmem:[%s229 + $0x10] sm:$0xff] %v234
                  %v236 = vld [vmem:[%s228 + $0xd8] sm:$0xff]
                  %237 = vst [vmem:[%s229 + $0x18] sm:$0xff] %v236
                $region48: #{osnet_reid_forward.10} parent=42 // loop_footer
                  %s227 = sadd.s32 1, %s223
                $region49: #{osnet_reid_forward.10} parent=42 // loop_footer_branch
                  %222 = sbr.rel target = $region45
                $region50: #{osnet_reid_forward.10} parent=42 // loop_exit
                  _
              $region43: #{osnet_reid_forward.10} parent=27 // pred_fallthru
                _
              // Predicated region
              $region51: #{osnet_reid_forward.10} parent=27 // pred_check
                _
              $region52: #{osnet_reid_forward.10} parent=27 // pred_check_branch
                %239 = sbr.rel target = $region54
              $region53: #{osnet_reid_forward.10} parent=27 // pred_region
                _
              $region54: #{osnet_reid_forward.10} parent=27 // pred_fallthru
                _
            $region28: #{osnet_reid_forward.10} parent=23 // pred_fallthru
              _
            // Predicated region
            $region29: #{osnet_reid_forward.10} parent=23 // pred_check
              _
            $region30: #{osnet_reid_forward.10} parent=23 // pred_check_branch
              %202 = sbr.rel target = $region32
            $region31: #{osnet_reid_forward.10} parent=23 // pred_region
              loop: start=0, step=1, limit=1
              $region33: #{osnet_reid_forward.10} parent=31 // loop_pre_header
                _
              $region34: #{osnet_reid_forward.10} parent=31 // loop_header
                %s205 = sphi 0, %s209
                %p206 = scmp.ge.s32.totalorder %s205, 1
                %s210 = sphi %s196, %s196
                %s211 = sphi %s190, %s190
              $region35: #{osnet_reid_forward.10} parent=31 // loop_header_branch
                %208 = sbr.rel (%p206) target = $region39
              $region36: #{osnet_reid_forward.10} parent=31 // loop_body
                %v212 = vld [vmem:[%s210] sm:$0xff]
                %213 = vst [vmem:[%s211] sm:$0xff] %v212
                %v214 = vld [vmem:[%s210 + $0x48] sm:$0xff]
                %215 = vst [vmem:[%s211 + $0x8] sm:$0xff] %v214
                %v216 = vld [vmem:[%s210 + $0x90] sm:$0xff]
                %217 = vst [vmem:[%s211 + $0x10] sm:$0xff] %v216
                %v218 = vld [vmem:[%s210 + $0xd8] sm:$0xff]
                %219 = vst [vmem:[%s211 + $0x18] sm:$0xff] %v218
              $region37: #{osnet_reid_forward.10} parent=31 // loop_footer
                %s209 = sadd.s32 1, %s205
              $region38: #{osnet_reid_forward.10} parent=31 // loop_footer_branch
                %204 = sbr.rel target = $region34
              $region39: #{osnet_reid_forward.10} parent=31 // loop_exit
                _
            $region32: #{osnet_reid_forward.10} parent=23 // pred_fallthru
              _
          $region24: #{osnet_reid_forward.10} parent=19 // pred_fallthru
            _
          %240 = vnop
        $region20: #{osnet_reid_forward.10} parent=15 // pred_fallthru
          _
        // Predicated region
        $region55: #{osnet_reid_forward.10} parent=15 // pred_check
          %p241 = pneg %p79
        $region56: #{osnet_reid_forward.10} parent=15 // pred_check_branch
          %243 = sbr.rel (%p241) target = $region58
        $region57: #{osnet_reid_forward.10} parent=15 // pred_region
          %s244 = sand.u32 %s69, 1
          %s245 = sand.u32 %s69, 1
          %s246 = smul.addr %s245, 128
          %s247 = scalar_lea.vmem [#allocation4], %s246
          %s248 = smul.u32 32, %s19
          %s249 = smul.addr %s248, 3
          %s250 = sadd.s32 %s18, %s249
          %s251 = smul.addr %s250, 4
          %s252 = scalar_lea.vmem %s1, %s251
          // Predicated region
          $region59: #{osnet_reid_forward.10} parent=57 // pred_check
            _
          $region60: #{osnet_reid_forward.10} parent=57 // pred_check_branch
            %254 = sbr.rel (0) target = $region62
          $region61: #{osnet_reid_forward.10} parent=57 // pred_region
            // Predicated region
            $region63: #{osnet_reid_forward.10} parent=61 // pred_check
              _
            $region64: #{osnet_reid_forward.10} parent=61 // pred_check_branch
              %256 = sbr.rel target = $region66
            $region65: #{osnet_reid_forward.10} parent=61 // pred_region
              // Predicated region
              $region78: #{osnet_reid_forward.10} parent=65 // pred_check
                _
              $region79: #{osnet_reid_forward.10} parent=65 // pred_check_branch
                %333 = sbr.rel (0) target = $region81
              $region80: #{osnet_reid_forward.10} parent=65 // pred_region
                loop: start=0, step=1, limit=1
                $region82: #{osnet_reid_forward.10} parent=80 // loop_pre_header
                  _
                $region83: #{osnet_reid_forward.10} parent=80 // loop_header
                  %s335 = sphi 0, %s339
                  %p336 = scmp.ge.s32.totalorder %s335, 1
                  %s340 = sphi %s252, %s252
                  %s341 = sphi %s247, %s247
                $region84: #{osnet_reid_forward.10} parent=80 // loop_header_branch
                  %338 = sbr.rel (%p336) target = $region88
                $region85: #{osnet_reid_forward.10} parent=80 // loop_body
                  _
                $region86: #{osnet_reid_forward.10} parent=80 // loop_footer
                  %s339 = sadd.s32 1, %s335
                $region87: #{osnet_reid_forward.10} parent=80 // loop_footer_branch
                  %334 = sbr.rel target = $region83
                $region88: #{osnet_reid_forward.10} parent=80 // loop_exit
                  _
                loop: start=0, step=1, limit=1
                $region89: #{osnet_reid_forward.10} parent=80 // loop_pre_header
                  _
                $region90: #{osnet_reid_forward.10} parent=80 // loop_header
                  %s344 = sphi 0, %s348
                  %p345 = scmp.ge.s32.totalorder %s344, 1
                  %s349 = sphi %s252, %s252
                  %s350 = sphi %s247, %s247
                $region91: #{osnet_reid_forward.10} parent=80 // loop_header_branch
                  %347 = sbr.rel (%p345) target = $region95
                $region92: #{osnet_reid_forward.10} parent=80 // loop_body
                  %v351 = vld [vmem:[%s349] sm:$0xf]
                  %352 = vst [vmem:[%s350] sm:$0xf] %v351
                  %v353 = vld [vmem:[%s349 + $0xc] sm:$0xf]
                  %354 = vst [vmem:[%s350 + $0x4] sm:$0xf] %v353
                  %v355 = vld [vmem:[%s349 + $0x18] sm:$0xf]
                  %356 = vst [vmem:[%s350 + $0x8] sm:$0xf] %v355
                  %v357 = vld [vmem:[%s349 + $0x24] sm:$0xf]
                  %358 = vst [vmem:[%s350 + $0xc] sm:$0xf] %v357
                  %v359 = vld [vmem:[%s349 + $0x30] sm:$0xf]
                  %360 = vst [vmem:[%s350 + $0x10] sm:$0xf] %v359
                  %v361 = vld [vmem:[%s349 + $0x3c] sm:$0xf]
                  %362 = vst [vmem:[%s350 + $0x14] sm:$0xf] %v361
                  %v363 = vld [vmem:[%s349 + $0x48] sm:$0xf]
                  %364 = vst [vmem:[%s350 + $0x18] sm:$0xf] %v363
                  %v365 = vld [vmem:[%s349 + $0x54] sm:$0xf]
                  %366 = vst [vmem:[%s350 + $0x1c] sm:$0xf] %v365
                  %v367 = vld [vmem:[%s349 + $0x60] sm:$0xf]
                  %368 = vst [vmem:[%s350 + $0x20] sm:$0xf] %v367
                  %v369 = vld [vmem:[%s349 + $0x6c] sm:$0xf]
                  %370 = vst [vmem:[%s350 + $0x24] sm:$0xf] %v369
                  %v371 = vld [vmem:[%s349 + $0x78] sm:$0xf]
                  %372 = vst [vmem:[%s350 + $0x28] sm:$0xf] %v371
                  %v373 = vld [vmem:[%s349 + $0x84] sm:$0xf]
                  %374 = vst [vmem:[%s350 + $0x2c] sm:$0xf] %v373
                  %v375 = vld [vmem:[%s349 + $0x90] sm:$0xf]
                  %376 = vst [vmem:[%s350 + $0x30] sm:$0xf] %v375
                  %v377 = vld [vmem:[%s349 + $0x9c] sm:$0xf]
                  %378 = vst [vmem:[%s350 + $0x34] sm:$0xf] %v377
                  %v379 = vld [vmem:[%s349 + $0xa8] sm:$0xf]
                  %380 = vst [vmem:[%s350 + $0x38] sm:$0xf] %v379
                  %v381 = vld [vmem:[%s349 + $0xb4] sm:$0xf]
                  %382 = vst [vmem:[%s350 + $0x3c] sm:$0xf] %v381
                  %v383 = vld [vmem:[%s349 + $0xc0] sm:$0xf]
                  %384 = vst [vmem:[%s350 + $0x40] sm:$0xf] %v383
                  %v385 = vld [vmem:[%s349 + $0xcc] sm:$0xf]
                  %386 = vst [vmem:[%s350 + $0x44] sm:$0xf] %v385
                  %v387 = vld [vmem:[%s349 + $0xd8] sm:$0xf]
                  %388 = vst [vmem:[%s350 + $0x48] sm:$0xf] %v387
                  %v389 = vld [vmem:[%s349 + $0xe4] sm:$0xf]
                  %390 = vst [vmem:[%s350 + $0x4c] sm:$0xf] %v389
                  %v391 = vld [vmem:[%s349 + $0xf0] sm:$0xf]
                  %392 = vst [vmem:[%s350 + $0x50] sm:$0xf] %v391
                  %v393 = vld [vmem:[%s349 + $0xfc] sm:$0xf]
                  %394 = vst [vmem:[%s350 + $0x54] sm:$0xf] %v393
                  %v395 = vld [vmem:[%s349 + $0x108] sm:$0xf]
                  %396 = vst [vmem:[%s350 + $0x58] sm:$0xf] %v395
                  %v397 = vld [vmem:[%s349 + $0x114] sm:$0xf]
                  %398 = vst [vmem:[%s350 + $0x5c] sm:$0xf] %v397
                  %v399 = vld [vmem:[%s349 + $0x120] sm:$0xf]
                  %400 = vst [vmem:[%s350 + $0x60] sm:$0xf] %v399
                  %v401 = vld [vmem:[%s349 + $0x12c] sm:$0xf]
                  %402 = vst [vmem:[%s350 + $0x64] sm:$0xf] %v401
                  %v403 = vld [vmem:[%s349 + $0x138] sm:$0xf]
                  %404 = vst [vmem:[%s350 + $0x68] sm:$0xf] %v403
                  %v405 = vld [vmem:[%s349 + $0x144] sm:$0xf]
                  %406 = vst [vmem:[%s350 + $0x6c] sm:$0xf] %v405
                  %v407 = vld [vmem:[%s349 + $0x150] sm:$0xf]
                  %408 = vst [vmem:[%s350 + $0x70] sm:$0xf] %v407
                  %v409 = vld [vmem:[%s349 + $0x15c] sm:$0xf]
                  %410 = vst [vmem:[%s350 + $0x74] sm:$0xf] %v409
                  %v411 = vld [vmem:[%s349 + $0x168] sm:$0xf]
                  %412 = vst [vmem:[%s350 + $0x78] sm:$0xf] %v411
                  %v413 = vld [vmem:[%s349 + $0x174] sm:$0xf]
                  %414 = vst [vmem:[%s350 + $0x7c] sm:$0xf] %v413
                $region93: #{osnet_reid_forward.10} parent=80 // loop_footer
                  %s348 = sadd.s32 1, %s344
                $region94: #{osnet_reid_forward.10} parent=80 // loop_footer_branch
                  %343 = sbr.rel target = $region90
                $region95: #{osnet_reid_forward.10} parent=80 // loop_exit
                  _
              $region81: #{osnet_reid_forward.10} parent=65 // pred_fallthru
                _
            $region66: #{osnet_reid_forward.10} parent=61 // pred_fallthru
              _
            // Predicated region
            $region67: #{osnet_reid_forward.10} parent=61 // pred_check
              _
            $region68: #{osnet_reid_forward.10} parent=61 // pred_check_branch
              %258 = sbr.rel (0) target = $region70
            $region69: #{osnet_reid_forward.10} parent=61 // pred_region
              loop: start=0, step=1, limit=1
              $region71: #{osnet_reid_forward.10} parent=69 // loop_pre_header
                _
              $region72: #{osnet_reid_forward.10} parent=69 // loop_header
                %s261 = sphi 0, %s265
                %p262 = scmp.ge.s32.totalorder %s261, 1
                %s266 = sphi %s252, %s252
                %s267 = sphi %s247, %s247
              $region73: #{osnet_reid_forward.10} parent=69 // loop_header_branch
                %264 = sbr.rel (%p262) target = $region77
              $region74: #{osnet_reid_forward.10} parent=69 // loop_body
                %v268 = vld [vmem:[%s266] sm:$0xf]
                %269 = vst [vmem:[%s267] sm:$0xf] %v268
                %v270 = vld [vmem:[%s266 + $0xc] sm:$0xf]
                %271 = vst [vmem:[%s267 + $0x4] sm:$0xf] %v270
                %v272 = vld [vmem:[%s266 + $0x18] sm:$0xf]
                %273 = vst [vmem:[%s267 + $0x8] sm:$0xf] %v272
                %v274 = vld [vmem:[%s266 + $0x24] sm:$0xf]
                %275 = vst [vmem:[%s267 + $0xc] sm:$0xf] %v274
                %v276 = vld [vmem:[%s266 + $0x30] sm:$0xf]
                %277 = vst [vmem:[%s267 + $0x10] sm:$0xf] %v276
                %v278 = vld [vmem:[%s266 + $0x3c] sm:$0xf]
                %279 = vst [vmem:[%s267 + $0x14] sm:$0xf] %v278
                %v280 = vld [vmem:[%s266 + $0x48] sm:$0xf]
                %281 = vst [vmem:[%s267 + $0x18] sm:$0xf] %v280
                %v282 = vld [vmem:[%s266 + $0x54] sm:$0xf]
                %283 = vst [vmem:[%s267 + $0x1c] sm:$0xf] %v282
                %v284 = vld [vmem:[%s266 + $0x60] sm:$0xf]
                %285 = vst [vmem:[%s267 + $0x20] sm:$0xf] %v284
                %v286 = vld [vmem:[%s266 + $0x6c] sm:$0xf]
                %287 = vst [vmem:[%s267 + $0x24] sm:$0xf] %v286
                %v288 = vld [vmem:[%s266 + $0x78] sm:$0xf]
                %289 = vst [vmem:[%s267 + $0x28] sm:$0xf] %v288
                %v290 = vld [vmem:[%s266 + $0x84] sm:$0xf]
                %291 = vst [vmem:[%s267 + $0x2c] sm:$0xf] %v290
                %v292 = vld [vmem:[%s266 + $0x90] sm:$0xf]
                %293 = vst [vmem:[%s267 + $0x30] sm:$0xf] %v292
                %v294 = vld [vmem:[%s266 + $0x9c] sm:$0xf]
                %295 = vst [vmem:[%s267 + $0x34] sm:$0xf] %v294
                %v296 = vld [vmem:[%s266 + $0xa8] sm:$0xf]
                %297 = vst [vmem:[%s267 + $0x38] sm:$0xf] %v296
                %v298 = vld [vmem:[%s266 + $0xb4] sm:$0xf]
                %299 = vst [vmem:[%s267 + $0x3c] sm:$0xf] %v298
                %v300 = vld [vmem:[%s266 + $0xc0] sm:$0xf]
                %301 = vst [vmem:[%s267 + $0x40] sm:$0xf] %v300
                %v302 = vld [vmem:[%s266 + $0xcc] sm:$0xf]
                %303 = vst [vmem:[%s267 + $0x44] sm:$0xf] %v302
                %v304 = vld [vmem:[%s266 + $0xd8] sm:$0xf]
                %305 = vst [vmem:[%s267 + $0x48] sm:$0xf] %v304
                %v306 = vld [vmem:[%s266 + $0xe4] sm:$0xf]
                %307 = vst [vmem:[%s267 + $0x4c] sm:$0xf] %v306
                %v308 = vld [vmem:[%s266 + $0xf0] sm:$0xf]
                %309 = vst [vmem:[%s267 + $0x50] sm:$0xf] %v308
                %v310 = vld [vmem:[%s266 + $0xfc] sm:$0xf]
                %311 = vst [vmem:[%s267 + $0x54] sm:$0xf] %v310
                %v312 = vld [vmem:[%s266 + $0x108] sm:$0xf]
                %313 = vst [vmem:[%s267 + $0x58] sm:$0xf] %v312
                %v314 = vld [vmem:[%s266 + $0x114] sm:$0xf]
                %315 = vst [vmem:[%s267 + $0x5c] sm:$0xf] %v314
                %v316 = vld [vmem:[%s266 + $0x120] sm:$0xf]
                %317 = vst [vmem:[%s267 + $0x60] sm:$0xf] %v316
                %v318 = vld [vmem:[%s266 + $0x12c] sm:$0xf]
                %319 = vst [vmem:[%s267 + $0x64] sm:$0xf] %v318
                %v320 = vld [vmem:[%s266 + $0x138] sm:$0xf]
                %321 = vst [vmem:[%s267 + $0x68] sm:$0xf] %v320
                %v322 = vld [vmem:[%s266 + $0x144] sm:$0xf]
                %323 = vst [vmem:[%s267 + $0x6c] sm:$0xf] %v322
                %v324 = vld [vmem:[%s266 + $0x150] sm:$0xf]
                %325 = vst [vmem:[%s267 + $0x70] sm:$0xf] %v324
                %v326 = vld [vmem:[%s266 + $0x15c] sm:$0xf]
                %327 = vst [vmem:[%s267 + $0x74] sm:$0xf] %v326
                %v328 = vld [vmem:[%s266 + $0x168] sm:$0xf]
                %329 = vst [vmem:[%s267 + $0x78] sm:$0xf] %v328
                %v330 = vld [vmem:[%s266 + $0x174] sm:$0xf]
                %331 = vst [vmem:[%s267 + $0x7c] sm:$0xf] %v330
              $region75: #{osnet_reid_forward.10} parent=69 // loop_footer
                %s265 = sadd.s32 1, %s261
              $region76: #{osnet_reid_forward.10} parent=69 // loop_footer_branch
                %260 = sbr.rel target = $region72
              $region77: #{osnet_reid_forward.10} parent=69 // loop_exit
                _
            $region70: #{osnet_reid_forward.10} parent=61 // pred_fallthru
              _
          $region62: #{osnet_reid_forward.10} parent=57 // pred_fallthru
            _
          %415 = vnop
        $region58: #{osnet_reid_forward.10} parent=15 // pred_fallthru
          _
        // Predicated region
        $region96: #{osnet_reid_forward.10} parent=15 // pred_check
          %p416 = pneg %p105
        $region97: #{osnet_reid_forward.10} parent=15 // pred_check_branch
          %418 = sbr.rel (%p416) target = $region99
        $region98: #{osnet_reid_forward.10} parent=15 // pred_region
          %p419 = scmp.lt.s32.totalorder %s18, 2
          %s420 = scalar_select %p419, %s18, 2
          %s421 = scalar_lea.vmem %s2, %s420
        $region99: #{osnet_reid_forward.10} parent=15 // pred_fallthru
          _
        // Predicated region
        $region100: #{osnet_reid_forward.10} parent=15 // pred_check
          %p422 = pneg %p131
        $region101: #{osnet_reid_forward.10} parent=15 // pred_check_branch
          %424 = sbr.rel (%p422) target = $region103
        $region102: #{osnet_reid_forward.10} parent=15 // pred_region
          %p425 = scmp.lt.s32.totalorder %s18, 2
          %s426 = scalar_select %p425, %s18, 2
          %s427 = scalar_lea.vmem %s3, %s426
        $region103: #{osnet_reid_forward.10} parent=15 // pred_fallthru
          _
      $region16: #{osnet_reid_forward.10} parent=5 // pred_fallthru
        _
      %p428 = scmp.le.s32.totalorder 1, %s10
      %p429 = scmp.lt.s32.totalorder %s10, 28
      %p430 = pnand %p428, %p429
      %p431 = pneg %p430
      // Predicated region
      $region104: #{osnet_reid_forward.10} parent=5 // pred_check
        _
      $region105: #{osnet_reid_forward.10} parent=5 // pred_check_branch
        %433 = sbr.rel (%p430) target = $region107
      $region106: #{osnet_reid_forward.10} parent=5 // pred_region
        %s434 = ssub.s32 %s10, 1
        %s435 = sand.u32 %s44, 1
        %s436 = sand.u32 %s44, 1
        %s437 = smul.addr %s436, 32
        %s438 = scalar_lea.vmem [#allocation3], %s437
        // Predicated region
        $region108: #{osnet_reid_forward.10} parent=106 // pred_check
          %p439 = pneg %p57
        $region109: #{osnet_reid_forward.10} parent=106 // pred_check_branch
          %441 = sbr.rel (%p439) target = $region111
        $region110: #{osnet_reid_forward.10} parent=106 // pred_region
          _
        $region111: #{osnet_reid_forward.10} parent=106 // pred_fallthru
          _
        %s442 = sand.u32 %s72, 1
        %s443 = sand.u32 %s72, 1
        %s444 = smul.addr %s443, 128
        %s445 = scalar_lea.vmem [#allocation4], %s444
        // Predicated region
        $region112: #{osnet_reid_forward.10} parent=106 // pred_check
          %p446 = pneg %p85
        $region113: #{osnet_reid_forward.10} parent=106 // pred_check_branch
          %448 = sbr.rel (%p446) target = $region115
        $region114: #{osnet_reid_forward.10} parent=106 // pred_region
          _
        $region115: #{osnet_reid_forward.10} parent=106 // pred_fallthru
          _
        %s449 = sand.u32 %s44, 1
        %s450 = sand.u32 %s44, 1
        %s451 = smul.addr %s450, 32
        %s452 = scalar_lea.vmem [#allocation3], %s451
        %p453 = pneg %p57
        %p454 = pneg %p54
        %s455 = sand.u32 %s72, 1
        %s456 = sand.u32 %s72, 1
        %s457 = smul.addr %s456, 128
        %s458 = scalar_lea.vmem [#allocation4], %s457
        %p459 = pneg %p85
        %p460 = pneg %p82
        %p461 = scmp.lt.s32.totalorder %s21, 2
        %s462 = scalar_select %p461, %s21, 2
        %s463 = scalar_lea.vmem %s2, %s462
        %p464 = pneg %p111
        %p465 = pneg %p108
        %p466 = scmp.lt.s32.totalorder %s21, 2
        %s467 = scalar_select %p466, %s21, 2
        %s468 = scalar_lea.vmem %s3, %s467
        %p469 = pneg %p137
        %p470 = pneg %p134
        %p471 = pneg %p165
        %p472 = pneg %p162
        %s473 = sand.u32 %s152, 1
        %s474 = sand.u32 %s152, 1
        %s475 = smul.addr %s474, 32
        %s476 = scalar_lea.vmem [#allocation5], %s475
        %s477 = smul.u32 4, %s20
        %s478 = smul.u32 2, %s22
        %s479 = smul.u32 32, %s22
        %p480 = scmp.lt.s32.totalorder %s21, 2
        %s481 = scalar_select %p480, %s21, 2
        %s482 = scalar_lea.vmem %s2, %s481
        %p483 = scmp.lt.s32.totalorder %s21, 2
        %s484 = scalar_select %p483, %s21, 2
        %s485 = scalar_lea.vmem %s3, %s484
        %s486 = smul.u32 4, %s20
        %p488 = scmp.eq.s32.totalorder %s22, 0
        // Predicated region
        $region116: #{osnet_reid_forward.10} parent=106 // pred_check
          %p489 = pneg %p488
        $region117: #{osnet_reid_forward.10} parent=106 // pred_check_branch
          %491 = sbr.rel (%p489) target = $region119
        $region118: #{osnet_reid_forward.10} parent=106 // pred_region
          %492 = vst [vmem:[#allocation2] sm:$0xff] 0.0
          %493 = vst [vmem:[#allocation2 + $0x8] sm:$0xff] 0.0
          %494 = vst [vmem:[#allocation2 + $0x10] sm:$0xff] 0.0
          %495 = vst [vmem:[#allocation2 + $0x18] sm:$0xff] 0.0
        $region119: #{osnet_reid_forward.10} parent=106 // pred_fallthru
          _
        %v496 = vld [vmem:[#allocation2] sm:$0xff]
        %v497 = vld [vmem:[#allocation2 + $0x8] sm:$0xff]
        %v498 = vld [vmem:[#allocation2 + $0x10] sm:$0xff]
        %v499 = vld [vmem:[#allocation2 + $0x18] sm:$0xff]
        %v500 = vld [vmem:[%s438] sm:$0xff]
        %v501 = vld [vmem:[%s438 + $0x8] sm:$0xff]
        %v502 = vld [vmem:[%s438 + $0x10] sm:$0xff]
        %v503 = vld [vmem:[%s438 + $0x18] sm:$0xff]
        %v504 = vld [vmem:[%s445] sm:$0xf]
        %v505 = vld [vmem:[%s445 + $0x4] sm:$0xf]
        %v506 = vld [vmem:[%s445 + $0x8] sm:$0xf]
        %v507 = vld [vmem:[%s445 + $0xc] sm:$0xf]
        %v508 = vld [vmem:[%s445 + $0x10] sm:$0xf]
        %v509 = vld [vmem:[%s445 + $0x14] sm:$0xf]
        %v510 = vld [vmem:[%s445 + $0x18] sm:$0xf]
        %v511 = vld [vmem:[%s445 + $0x1c] sm:$0xf]
        %v512 = vld [vmem:[%s445 + $0x20] sm:$0xf]
        %v513 = vld [vmem:[%s445 + $0x24] sm:$0xf]
        %v514 = vld [vmem:[%s445 + $0x28] sm:$0xf]
        %v515 = vld [vmem:[%s445 + $0x2c] sm:$0xf]
        %v516 = vld [vmem:[%s445 + $0x30] sm:$0xf]
        %v517 = vld [vmem:[%s445 + $0x34] sm:$0xf]
        %v518 = vld [vmem:[%s445 + $0x38] sm:$0xf]
        %v519 = vld [vmem:[%s445 + $0x3c] sm:$0xf]
        %v520 = vld [vmem:[%s445 + $0x40] sm:$0xf]
        %v521 = vld [vmem:[%s445 + $0x44] sm:$0xf]
        %v522 = vld [vmem:[%s445 + $0x48] sm:$0xf]
        %v523 = vld [vmem:[%s445 + $0x4c] sm:$0xf]
        %v524 = vld [vmem:[%s445 + $0x50] sm:$0xf]
        %v525 = vld [vmem:[%s445 + $0x54] sm:$0xf]
        %v526 = vld [vmem:[%s445 + $0x58] sm:$0xf]
        %v527 = vld [vmem:[%s445 + $0x5c] sm:$0xf]
        %v528 = vld [vmem:[%s445 + $0x60] sm:$0xf]
        %v529 = vld [vmem:[%s445 + $0x64] sm:$0xf]
        %v530 = vld [vmem:[%s445 + $0x68] sm:$0xf]
        %v531 = vld [vmem:[%s445 + $0x6c] sm:$0xf]
        %v532 = vld [vmem:[%s445 + $0x70] sm:$0xf]
        %v533 = vld [vmem:[%s445 + $0x74] sm:$0xf]
        %v534 = vld [vmem:[%s445 + $0x78] sm:$0xf]
        %v535 = vld [vmem:[%s445 + $0x7c] sm:$0xf]
        %v540 = vunpack.c.l.b16 %v500
        %v541 = vunpack.c.h.b16 %v500
        %v542 = vunpack.c.l.b16 %v501
        %v543 = vunpack.c.h.b16 %v501
        %v544 = vunpack.c.l.b16 %v502
        %v545 = vunpack.c.h.b16 %v502
        %v546 = vunpack.c.l.b16 %v503
        %v547 = vunpack.c.h.b16 %v503
        %v548 = vpack.c.b16 %v542, %v540
        %v549 = vpack.c.b16 %v543, %v541
        %v550 = vpack.c.b16 %v546, %v544
        %v551 = vpack.c.b16 %v547, %v545
        %v588 = vunpack.c.l.b16 %v504
        %v589 = vunpack.c.l.b16 %v505
        %v590 = vunpack.c.l.b16 %v506
        %v591 = vunpack.c.l.b16 %v507
        %v592 = vunpack.c.l.b16 %v508
        %v593 = vunpack.c.l.b16 %v509
        %v594 = vunpack.c.l.b16 %v510
        %v595 = vunpack.c.l.b16 %v511
        %v596 = vunpack.c.l.b16 %v512
        %v597 = vunpack.c.l.b16 %v513
        %v598 = vunpack.c.l.b16 %v514
        %v599 = vunpack.c.l.b16 %v515
        %v600 = vunpack.c.l.b16 %v516
        %v601 = vunpack.c.l.b16 %v517
        %v602 = vunpack.c.l.b16 %v518
        %v603 = vunpack.c.l.b16 %v519
        %v604 = vunpack.c.l.b16 %v520
        %v605 = vunpack.c.l.b16 %v521
        %v606 = vunpack.c.l.b16 %v522
        %v607 = vunpack.c.l.b16 %v523
        %v608 = vunpack.c.l.b16 %v524
        %v609 = vunpack.c.l.b16 %v525
        %v610 = vunpack.c.l.b16 %v526
        %v611 = vunpack.c.l.b16 %v527
        %v612 = vunpack.c.l.b16 %v528
        %v613 = vunpack.c.l.b16 %v529
        %v614 = vunpack.c.l.b16 %v530
        %v615 = vunpack.c.l.b16 %v531
        %v616 = vunpack.c.l.b16 %v532
        %v617 = vunpack.c.l.b16 %v533
        %v618 = vunpack.c.l.b16 %v534
        %v619 = vunpack.c.l.b16 %v535
        %v620 = vpack.c.b16 %v589, %v588
        %v621 = vpack.c.b16 %v591, %v590
        %v622 = vpack.c.b16 %v593, %v592
        %v623 = vpack.c.b16 %v595, %v594
        %v624 = vpack.c.b16 %v597, %v596
        %v625 = vpack.c.b16 %v599, %v598
        %v626 = vpack.c.b16 %v601, %v600
        %v627 = vpack.c.b16 %v603, %v602
        %v628 = vpack.c.b16 %v605, %v604
        %v629 = vpack.c.b16 %v607, %v606
        %v630 = vpack.c.b16 %v609, %v608
        %v631 = vpack.c.b16 %v611, %v610
        %v632 = vpack.c.b16 %v613, %v612
        %v633 = vpack.c.b16 %v615, %v614
        %v634 = vpack.c.b16 %v617, %v616
        %v635 = vpack.c.b16 %v619, %v618
        %652 = vmatprep.subr.bf16.mxu0 0
        %653 = vmatpush1.bf16.msra.mxu0 %v620
        %654 = vmatprep.subr.bf16.mxu0 0
        %655 = vmatpush1.bf16.msra.mxu0 %v621
        %656 = vmatprep.subr.bf16.mxu0 0
        %657 = vmatpush1.bf16.msra.mxu0 %v622
        %658 = vmatprep.subr.bf16.mxu0 0
        %659 = vmatpush1.bf16.msra.mxu0 %v623
        %660 = vmatprep.subr.bf16.mxu0 0
        %661 = vmatpush1.bf16.msra.mxu0 %v624
        %662 = vmatprep.subr.bf16.mxu0 0
        %663 = vmatpush1.bf16.msra.mxu0 %v625
        %664 = vmatprep.subr.bf16.mxu0 0
        %665 = vmatpush1.bf16.msra.mxu0 %v626
        %666 = vmatprep.subr.bf16.mxu0 0
        %667 = vmatpush1.bf16.msra.mxu0 %v627
        %668 = vmatprep.subr.bf16.mxu0 0
        %669 = vmatpush1.bf16.msra.mxu0 %v628
        %670 = vmatprep.subr.bf16.mxu0 0
        %671 = vmatpush1.bf16.msra.mxu0 %v629
        %672 = vmatprep.subr.bf16.mxu0 0
        %673 = vmatpush1.bf16.msra.mxu0 %v630
        %674 = vmatprep.subr.bf16.mxu0 0
        %675 = vmatpush1.bf16.msra.mxu0 %v631
        %676 = vmatprep.subr.bf16.mxu0 0
        %677 = vmatpush1.bf16.msra.mxu0 %v632
        %678 = vmatprep.subr.bf16.mxu0 0
        %679 = vmatpush1.bf16.msra.mxu0 %v633
        %680 = vmatprep.subr.bf16.mxu0 0
        %681 = vmatpush1.bf16.msra.mxu0 %v634
        %682 = vmatprep.subr.bf16.mxu0 0
        %683 = vmatpush1.bf16.msra.mxu0 %v635
        %684 = vmatprep.mubr.bf16.mxu0 %v549
        %685 = vmatmul.mubr.bf16.gmra.mrb[0].mxu0 %v548
        %v686 = vpop.f32.mrb[0].mxu0
        %v687 = vadd.f32 0.0, %v686
        %v688 = vpop.f32.mrb[0].mxu0
        %v689 = vpop.f32.mrb[0].mxu0
        %v690 = vadd.f32 0.0, %v689
        %v691 = vpop.f32.mrb[0].mxu0
        %692 = vmatprep.mubr.bf16.mxu0 %v551
        %693 = vmatmul.mubr.bf16.gmra.mrb[0].mxu0 %v550
        %v694 = vpop.f32.mrb[0].mxu0
        %v695 = vadd.f32 0.0, %v694
        %v696 = vpop.f32.mrb[0].mxu0
        %v697 = vpop.f32.mrb[0].mxu0
        %v698 = vadd.f32 0.0, %v697
        %v699 = vpop.f32.mrb[0].mxu0
        %700 = vdwg.mxu0
        %v701 = vadd.f32 %v496, %v687
        %v702 = vadd.f32 %v497, %v690
        %v703 = vadd.f32 %v498, %v695
        %v704 = vadd.f32 %v499, %v698
        %705 = vst [vmem:[#allocation2] sm:$0xff] %v701
        %706 = vst [vmem:[#allocation2 + $0x8] sm:$0xff] %v702
        %707 = vst [vmem:[#allocation2 + $0x10] sm:$0xff] %v703
        %708 = vst [vmem:[#allocation2 + $0x18] sm:$0xff] %v704
        %p709 = scmp.eq.s32.totalorder %s22, 8
        // Predicated region
        $region120: #{osnet_reid_forward.10} parent=106 // pred_check
          %p710 = pneg %p709
        $region121: #{osnet_reid_forward.10} parent=106 // pred_check_branch
          %712 = sbr.rel (%p710) target = $region123
        $region122: #{osnet_reid_forward.10} parent=106 // pred_region
          %v713 = vld [vmem:[#allocation2] sm:$0xff]
          %v714 = vld [vmem:[#allocation2 + $0x8] sm:$0xff]
          %v715 = vld [vmem:[#allocation2 + $0x10] sm:$0xff]
          %v716 = vld [vmem:[#allocation2 + $0x18] sm:$0xff]
          %v717 = vld [vmem:[%s482] sm:$0x1]
          %v719 = vlaneseq
          %v720 = vshrl.u32 %v719, 7
          %v721 = vsub.s32 0, %v720
          %v722 = vrot.slane %v717, %v721
          %v724 = vmul.f32 %v713, %v722
          %v725 = vmul.f32 %v714, %v722
          %v726 = vmul.f32 %v715, %v722
          %v727 = vmul.f32 %v716, %v722
          %v728 = vld [vmem:[%s485] sm:$0x1]
          %v730 = vlaneseq
          %v731 = vshrl.u32 %v730, 7
          %v732 = vsub.s32 0, %v731
          %v733 = vrot.slane %v728, %v732
          %v735 = vadd.f32 %v724, %v733
          %v736 = vadd.f32 %v725, %v733
          %v737 = vadd.f32 %v726, %v733
          %v738 = vadd.f32 %v727, %v733
          %v739 = vmax.f32 %v735, 0.0
          %v740 = vmax.f32 %v736, 0.0
          %v741 = vmax.f32 %v737, 0.0
          %v742 = vmax.f32 %v738, 0.0
          %743 = vst [vmem:[%s476] sm:$0xff] %v739
          %744 = vst [vmem:[%s476 + $0x8] sm:$0xff] %v740
          %745 = vst [vmem:[%s476 + $0x10] sm:$0xff] %v741
          %746 = vst [vmem:[%s476 + $0x18] sm:$0xff] %v742
        $region123: #{osnet_reid_forward.10} parent=106 // pred_fallthru
          _
        %s747 = sand.u32 %s152, 1
        %s748 = sand.u32 %s152, 1
        %s749 = smul.addr %s748, 32
        %s750 = scalar_lea.vmem [#allocation5], %s749
        // Predicated region
        $region124: #{osnet_reid_forward.10} parent=106 // pred_check
          %p751 = pneg %p162
        $region125: #{osnet_reid_forward.10} parent=106 // pred_check_branch
          %753 = sbr.rel (%p751) target = $region127
        $region126: #{osnet_reid_forward.10} parent=106 // pred_region
          %s754 = smul.u32 4, %s20
          %s755 = smul.addr %s754, 3
          %s756 = sadd.s32 %s21, %s755
          %s757 = smul.addr %s756, 8
          %s758 = scalar_lea.vmem %s4, %s757
          // Predicated region
          $region128: #{osnet_reid_forward.10} parent=126 // pred_check
            _
          $region129: #{osnet_reid_forward.10} parent=126 // pred_check_branch
            %760 = sbr.rel (0) target = $region131
          $region130: #{osnet_reid_forward.10} parent=126 // pred_region
            // Predicated region
            $region132: #{osnet_reid_forward.10} parent=130 // pred_check
              _
            $region133: #{osnet_reid_forward.10} parent=130 // pred_check_branch
              %762 = sbr.rel (0) target = $region135
            $region134: #{osnet_reid_forward.10} parent=130 // pred_region
              // Predicated region
              $region147: #{osnet_reid_forward.10} parent=134 // pred_check
                _
              $region148: #{osnet_reid_forward.10} parent=134 // pred_check_branch
                %783 = sbr.rel (0) target = $region150
              $region149: #{osnet_reid_forward.10} parent=134 // pred_region
                loop: start=0, step=1, limit=1
                $region151: #{osnet_reid_forward.10} parent=149 // loop_pre_header
                  _
                $region152: #{osnet_reid_forward.10} parent=149 // loop_header
                  %s785 = sphi 0, %s789
                  %p786 = scmp.ge.s32.totalorder %s785, 1
                  %s790 = sphi %s750, %s750
                  %s791 = sphi %s758, %s758
                $region153: #{osnet_reid_forward.10} parent=149 // loop_header_branch
                  %788 = sbr.rel (%p786) target = $region157
                $region154: #{osnet_reid_forward.10} parent=149 // loop_body
                  %v792 = vld [vmem:[%s790] sm:$0xff]
                  %793 = vst [vmem:[%s791] sm:$0xff] %v792
                  %v794 = vld [vmem:[%s790 + $0x8] sm:$0xff]
                  %795 = vst [vmem:[%s791 + $0x18] sm:$0xff] %v794
                  %v796 = vld [vmem:[%s790 + $0x10] sm:$0xff]
                  %797 = vst [vmem:[%s791 + $0x30] sm:$0xff] %v796
                  %v798 = vld [vmem:[%s790 + $0x18] sm:$0xff]
                  %799 = vst [vmem:[%s791 + $0x48] sm:$0xff] %v798
                $region155: #{osnet_reid_forward.10} parent=149 // loop_footer
                  %s789 = sadd.s32 1, %s785
                $region156: #{osnet_reid_forward.10} parent=149 // loop_footer_branch
                  %784 = sbr.rel target = $region152
                $region157: #{osnet_reid_forward.10} parent=149 // loop_exit
                  _
              $region150: #{osnet_reid_forward.10} parent=134 // pred_fallthru
                _
              // Predicated region
              $region158: #{osnet_reid_forward.10} parent=134 // pred_check
                _
              $region159: #{osnet_reid_forward.10} parent=134 // pred_check_branch
                %801 = sbr.rel target = $region161
              $region160: #{osnet_reid_forward.10} parent=134 // pred_region
                _
              $region161: #{osnet_reid_forward.10} parent=134 // pred_fallthru
                _
            $region135: #{osnet_reid_forward.10} parent=130 // pred_fallthru
              _
            // Predicated region
            $region136: #{osnet_reid_forward.10} parent=130 // pred_check
              _
            $region137: #{osnet_reid_forward.10} parent=130 // pred_check_branch
              %764 = sbr.rel target = $region139
            $region138: #{osnet_reid_forward.10} parent=130 // pred_region
              loop: start=0, step=1, limit=1
              $region140: #{osnet_reid_forward.10} parent=138 // loop_pre_header
                _
              $region141: #{osnet_reid_forward.10} parent=138 // loop_header
                %s767 = sphi 0, %s771
                %p768 = scmp.ge.s32.totalorder %s767, 1
                %s772 = sphi %s750, %s750
                %s773 = sphi %s758, %s758
              $region142: #{osnet_reid_forward.10} parent=138 // loop_header_branch
                %770 = sbr.rel (%p768) target = $region146
              $region143: #{osnet_reid_forward.10} parent=138 // loop_body
                %v774 = vld [vmem:[%s772] sm:$0xff]
                %775 = vst [vmem:[%s773] sm:$0xff] %v774
                %v776 = vld [vmem:[%s772 + $0x8] sm:$0xff]
                %777 = vst [vmem:[%s773 + $0x18] sm:$0xff] %v776
                %v778 = vld [vmem:[%s772 + $0x10] sm:$0xff]
                %779 = vst [vmem:[%s773 + $0x30] sm:$0xff] %v778
                %v780 = vld [vmem:[%s772 + $0x18] sm:$0xff]
                %781 = vst [vmem:[%s773 + $0x48] sm:$0xff] %v780
              $region144: #{osnet_reid_forward.10} parent=138 // loop_footer
                %s771 = sadd.s32 1, %s767
              $region145: #{osnet_reid_forward.10} parent=138 // loop_footer_branch
                %766 = sbr.rel target = $region141
              $region146: #{osnet_reid_forward.10} parent=138 // loop_exit
                _
            $region139: #{osnet_reid_forward.10} parent=130 // pred_fallthru
              _
          $region131: #{osnet_reid_forward.10} parent=126 // pred_fallthru
            _
          %802 = vnop
        $region127: #{osnet_reid_forward.10} parent=106 // pred_fallthru
          _
      $region107: #{osnet_reid_forward.10} parent=5 // pred_fallthru
        _
      %p803 = scmp.le.s32.totalorder 2, %s10
      // Predicated region
      $region162: #{osnet_reid_forward.10} parent=5 // pred_check
        %p804 = pneg %p803
      $region163: #{osnet_reid_forward.10} parent=5 // pred_check_branch
        %806 = sbr.rel (%p804) target = $region165
      $region164: #{osnet_reid_forward.10} parent=5 // pred_region
        %s807 = ssub.s32 %s10, 2
        // Predicated region
        $region166: #{osnet_reid_forward.10} parent=164 // pred_check
          %p808 = pneg %p168
        $region167: #{osnet_reid_forward.10} parent=164 // pred_check_branch
          %810 = sbr.rel (%p808) target = $region169
        $region168: #{osnet_reid_forward.10} parent=164 // pred_region
          %s811 = sand.u32 %s153, 1
          %s812 = sand.u32 %s153, 1
          %s813 = smul.addr %s812, 32
          %s814 = scalar_lea.vmem [#allocation5], %s813
        $region169: #{osnet_reid_forward.10} parent=164 // pred_fallthru
          _
      $region165: #{osnet_reid_forward.10} parent=5 // pred_fallthru
        _
    $region6: #{osnet_reid_forward.10} parent=1 // loop_footer
      %s14 = sadd.s32 1, %s10
    $region7: #{osnet_reid_forward.10} parent=1 // loop_footer_branch
      %9 = sbr.rel target = $region3
    $region8: #{osnet_reid_forward.10} parent=1 // loop_exit
      _

// kernel: osnet_reid_forward.11
$region0: #{osnet_reid_forward.11}
  #allocation0 [shape = 'u32[]', space=smem, size = 0x4, offset = 0x4, fixed_abs, tag = 'smem constant byte address 0x4 - core index']
  #allocation1 [shape = 'u32[144,128]{1,0:T(1,128)}', space=vmem, size = 0x12000, scoped, tag = 'internal scratch']
  #allocation2 [shape = 'f32[8,256]{1,0:T(8,128)}', space=vmem, size = 0x2000, scoped, tag = 'scratch operand']
  %s0 = inlined_call_operand.vmem [shape: bf16[8,3456], index: 0, kind: input, shape index: {}]
  %s1 = inlined_call_operand.vmem [shape: bf16[3456,512], index: 1, kind: input, shape index: {}]
  %s2 = inlined_call_operand.vmem [shape: f32[1,512], index: 2, kind: input, shape index: {}]
  %s3 = inlined_call_operand.vmem [shape: f32[1,512], index: 3, kind: input, shape index: {}]
  %s4 = inlined_call_operand.vmem [shape: f32[8,512], index: 4, kind: output, shape index: {}]
  %s5 = sld [smem:[#allocation0]]
  $region95: #{osnet_reid_forward.11} parent=0
    _
  %s7 = ssub.s32 1, %s5
  %s8 = scalar_select 0, %s7, %s5
  $region1: #{osnet_reid_forward.11} parent=0
    #allocation3 [shape = 'u8[131072]{0}', space=vmem, size = 0x20000, scoped, tag = 'input window, operand 1']
    loop: start=0, step=1, limit=56
    $region2: #{osnet_reid_forward.11} parent=1 // loop_pre_header
      _
    $region3: #{osnet_reid_forward.11} parent=1 // loop_header
      %s10 = sphi 0, %s14
      %p11 = scmp.ge.s32.totalorder %s10, 56
      %s17 = sphi 0, %s36
      %s18 = sphi 0, %s32
      %s19 = sphi 0, %s28
      %s20 = sphi 0, %s17
      %s21 = sphi 0, %s18
      %s22 = sphi 0, %s19
      %s23 = sphi 0, %s20
      %s24 = sphi 0, %s21
      %s25 = sphi 0, %s22
      %s41 = sphi 0, %s43
      %s44 = sphi 0, %s41
      %s45 = sphi 0, %s44
      %s61 = sphi 0, %s45
      %s69 = sphi 0, %s71
      %s72 = sphi 0, %s69
      %s73 = sphi 0, %s72
      %s89 = sphi 0, %s73
      %s95 = sphi 0, %s97
      %s98 = sphi 0, %s95
      %s99 = sphi 0, %s98
      %s115 = sphi 0, %s99
      %s121 = sphi 0, %s123
      %s124 = sphi 0, %s121
      %s125 = sphi 0, %s124
      %s141 = sphi 0, %s125
      %s149 = sphi 0, %s151
      %s152 = sphi 0, %s149
      %s153 = sphi 0, %s152
      %s169 = sphi 0, %s153
    $region4: #{osnet_reid_forward.11} parent=1 // loop_header_branch
      %13 = sbr.rel (%p11) target = $region8
    $region5: #{osnet_reid_forward.11} parent=1 // loop_body
      %s15 = ssub.s32 %s10, 1
      %s16 = ssub.s32 %s10, 2
      %s26 = sadd.s32 1, %s19
      %p27 = scmp.ge.s32.totalorder %s26, 27
      %s28 = scalar_select %p27, 0, %s26
      %s29 = sadd.s32 1, %s18
      %s30 = scalar_select %p27, %s29, %s18
      %p31 = scmp.ge.s32.totalorder %s30, 2
      %s32 = scalar_select %p31, 0, %s30
      %s33 = sadd.s32 1, %s17
      %s34 = scalar_select %p31, %s33, %s17
      %p35 = scmp.ge.s32.totalorder %s34, 1
      %s36 = scalar_select %p35, 0, %s34
      %s37 = ssub.s32 %s17, %s36
      %s38 = ssub.s32 %s19, %s28
      %s39 = sor.u32 %s37, %s38
      %p40 = scmp.eq.s32.totalorder %s39, 0
      %s42 = sadd.s32 %s41, 1
      %s43 = scalar_select %p40, %s41, %s42
      %p46 = pneg %p40
      %p47 = scmp.eq.s32.totalorder %s10, 53
      %p48 = por %p46, %p47
      %p49 = scmp.ne.s32.totalorder %s41, %s44
      %p50 = scmp.eq.s32.totalorder %s10, 0
      %p51 = por %p49, %p50
      %p52 = scmp.ne.s32.totalorder %s41, %s44
      %p53 = scmp.eq.s32.totalorder %s15, 53
      %p54 = por %p52, %p53
      %p55 = scmp.ne.s32.totalorder %s44, %s45
      %p56 = scmp.eq.s32.totalorder %s15, 0
      %p57 = por %p55, %p56
      %p58 = scmp.ne.s32.totalorder %s44, %s45
      %p59 = scmp.eq.s32.totalorder %s16, 53
      %p60 = por %p58, %p59
      %p62 = scmp.ne.s32.totalorder %s45, %s61
      %p63 = scmp.eq.s32.totalorder %s16, 0
      %p64 = por %p62, %p63
      %s65 = ssub.s32 %s19, %s28
      %s66 = ssub.s32 %s18, %s32
      %s67 = sor.u32 %s65, %s66
      %p68 = scmp.eq.s32.totalorder %s67, 0
      %s70 = sadd.s32 %s69, 1
      %s71 = scalar_select %p68, %s69, %s70
      %p74 = pneg %p68
      %p75 = scmp.eq.s32.totalorder %s10, 53
      %p76 = por %p74, %p75
      %p77 = scmp.ne.s32.totalorder %s69, %s72
      %p78 = scmp.eq.s32.totalorder %s10, 0
      %p79 = por %p77, %p78
      %p80 = scmp.ne.s32.totalorder %s69, %s72
      %p81 = scmp.eq.s32.totalorder %s15, 53
      %p82 = por %p80, %p81
      %p83 = scmp.ne.s32.totalorder %s72, %s73
      %p84 = scmp.eq.s32.totalorder %s15, 0
      %p85 = por %p83, %p84
      %p86 = scmp.ne.s32.totalorder %s72, %s73
      %p87 = scmp.eq.s32.totalorder %s16, 53
      %p88 = por %p86, %p87
      %p90 = scmp.ne.s32.totalorder %s73, %s89
      %p91 = scmp.eq.s32.totalorder %s16, 0
      %p92 = por %p90, %p91
      %s93 = ssub.s32 %s18, %s32
      %p94 = scmp.eq.s32.totalorder %s93, 0
      %s96 = sadd.s32 %s95, 1
      %s97 = scalar_select %p94, %s95, %s96
      %p100 = pneg %p94
      %p101 = scmp.eq.s32.totalorder %s10, 53
      %p102 = por %p100, %p101
      %p103 = scmp.ne.s32.totalorder %s95, %s98
      %p104 = scmp.eq.s32.totalorder %s10, 0
      %p105 = por %p103, %p104
      %p106 = scmp.ne.s32.totalorder %s95, %s98
      %p107 = scmp.eq.s32.totalorder %s15, 53
      %p108 = por %p106, %p107
      %p109 = scmp.ne.s32.totalorder %s98, %s99
      %p110 = scmp.eq.s32.totalorder %s15, 0
      %p111 = por %p109, %p110
      %p112 = scmp.ne.s32.totalorder %s98, %s99
      %p113 = scmp.eq.s32.totalorder %s16, 53
      %p114 = por %p112, %p113
      %p116 = scmp.ne.s32.totalorder %s99, %s115
      %p117 = scmp.eq.s32.totalorder %s16, 0
      %p118 = por %p116, %p117
      %s119 = ssub.s32 %s18, %s32
      %p120 = scmp.eq.s32.totalorder %s119, 0
      %s122 = sadd.s32 %s121, 1
      %s123 = scalar_select %p120, %s121, %s122
      %p126 = pneg %p120
      %p127 = scmp.eq.s32.totalorder %s10, 53
      %p128 = por %p126, %p127
      %p129 = scmp.ne.s32.totalorder %s121, %s124
      %p130 = scmp.eq.s32.totalorder %s10, 0
      %p131 = por %p129, %p130
      %p132 = scmp.ne.s32.totalorder %s121, %s124
      %p133 = scmp.eq.s32.totalorder %s15, 53
      %p134 = por %p132, %p133
      %p135 = scmp.ne.s32.totalorder %s124, %s125
      %p136 = scmp.eq.s32.totalorder %s15, 0
      %p137 = por %p135, %p136
      %p138 = scmp.ne.s32.totalorder %s124, %s125
      %p139 = scmp.eq.s32.totalorder %s16, 53
      %p140 = por %p138, %p139
      %p142 = scmp.ne.s32.totalorder %s125, %s141
      %p143 = scmp.eq.s32.totalorder %s16, 0
      %p144 = por %p142, %p143
      %s145 = ssub.s32 %s17, %s36
      %s146 = ssub.s32 %s18, %s32
      %s147 = sor.u32 %s145, %s146
      %p148 = scmp.eq.s32.totalorder %s147, 0
      %s150 = sadd.s32 %s149, 1
      %s151 = scalar_select %p148, %s149, %s150
      %p154 = pneg %p148
      %p155 = scmp.eq.s32.totalorder %s10, 53
      %p156 = por %p154, %p155
      %p157 = scmp.ne.s32.totalorder %s149, %s152
      %p158 = scmp.eq.s32.totalorder %s10, 0
      %p159 = por %p157, %p158
      %p160 = scmp.ne.s32.totalorder %s149, %s152
      %p161 = scmp.eq.s32.totalorder %s15, 53
      %p162 = por %p160, %p161
      %p163 = scmp.ne.s32.totalorder %s152, %s153
      %p164 = scmp.eq.s32.totalorder %s15, 0
      %p165 = por %p163, %p164
      %p166 = scmp.ne.s32.totalorder %s152, %s153
      %p167 = scmp.eq.s32.totalorder %s16, 53
      %p168 = por %p166, %p167
      %p170 = scmp.ne.s32.totalorder %s153, %s169
      %p171 = scmp.eq.s32.totalorder %s16, 0
      %p172 = por %p170, %p171
      %p173 = scmp.le.s32.totalorder 1, %s10
      %p174 = scmp.lt.s32.totalorder %s10, 55
      %p175 = pnand %p173, %p174
      %p176 = pneg %p175
      // Predicated region
      $region9: #{osnet_reid_forward.11} parent=5 // pred_check
        _
      $region10: #{osnet_reid_forward.11} parent=5 // pred_check_branch
        %178 = sbr.rel (%p175) target = $region12
      $region11: #{osnet_reid_forward.11} parent=5 // pred_region
        %s179 = ssub.s32 %s10, 1
      $region12: #{osnet_reid_forward.11} parent=5 // pred_fallthru
        _
      %p180 = scmp.lt.s32.totalorder %s10, 54
      // Predicated region
      $region13: #{osnet_reid_forward.11} parent=5 // pred_check
        %p181 = pneg %p180
      $region14: #{osnet_reid_forward.11} parent=5 // pred_check_branch
        %183 = sbr.rel (%p181) target = $region16
      $region15: #{osnet_reid_forward.11} parent=5 // pred_region
        // Predicated region
        $region17: #{osnet_reid_forward.11} parent=15 // pred_check
          %p184 = pneg %p51
        $region18: #{osnet_reid_forward.11} parent=15 // pred_check_branch
          %186 = sbr.rel (%p184) target = $region20
        $region19: #{osnet_reid_forward.11} parent=15 // pred_region
          %p187 = scmp.lt.s32.totalorder %s17, 0
          %s188 = scalar_select %p187, %s17, 0
          %p189 = scmp.lt.s32.totalorder %s19, 26
          %s190 = scalar_select %p189, %s19, 26
          %s191 = smul.addr %s188, 27
          %s192 = sadd.s32 %s190, %s191
          %s193 = smul.addr %s192, 4
          %s194 = scalar_lea.vmem %s0, %s193
        $region20: #{osnet_reid_forward.11} parent=15 // pred_fallthru
          _
        // Predicated region
        $region21: #{osnet_reid_forward.11} parent=15 // pred_check
          %p195 = pneg %p79
        $region22: #{osnet_reid_forward.11} parent=15 // pred_check_branch
          %197 = sbr.rel (%p195) target = $region24
        $region23: #{osnet_reid_forward.11} parent=15 // pred_region
          %s198 = sand.u32 %s69, 1
          %s199 = sand.u32 %s69, 1
          %s200 = smul.addr %s199, 128
          %s201 = scalar_lea.vmem [#allocation3], %s200
          %s202 = smul.u32 16, %s19
          %s203 = smul.u32 2, %s18
          %s204 = smul.addr %s202, 4
          %s205 = sadd.s32 %s203, %s204
          %s206 = smul.addr %s205, 4
          %s207 = scalar_lea.vmem %s1, %s206
          // Predicated region
          $region25: #{osnet_reid_forward.11} parent=23 // pred_check
            _
          $region26: #{osnet_reid_forward.11} parent=23 // pred_check_branch
            %209 = sbr.rel (0) target = $region28
          $region27: #{osnet_reid_forward.11} parent=23 // pred_region
            // Predicated region
            $region29: #{osnet_reid_forward.11} parent=27 // pred_check
              _
            $region30: #{osnet_reid_forward.11} parent=27 // pred_check_branch
              %211 = sbr.rel (0) target = $region32
            $region31: #{osnet_reid_forward.11} parent=27 // pred_region
              // Predicated region
              $region44: #{osnet_reid_forward.11} parent=31 // pred_check
                _
              $region45: #{osnet_reid_forward.11} parent=31 // pred_check_branch
                %256 = sbr.rel (0) target = $region47
              $region46: #{osnet_reid_forward.11} parent=31 // pred_region
                loop: start=0, step=1, limit=1
                $region48: #{osnet_reid_forward.11} parent=46 // loop_pre_header
                  _
                $region49: #{osnet_reid_forward.11} parent=46 // loop_header
                  %s258 = sphi 0, %s262
                  %p259 = scmp.ge.s32.totalorder %s258, 1
                  %s263 = sphi %s207, %s207
                  %s264 = sphi %s201, %s201
                $region50: #{osnet_reid_forward.11} parent=46 // loop_header_branch
                  %261 = sbr.rel (%p259) target = $region54
                $region51: #{osnet_reid_forward.11} parent=46 // loop_body
                  %v265 = vld [vmem:[%s263] sm:$0xff]
                  %266 = vst [vmem:[%s264] sm:$0xff] %v265
                  %v267 = vld [vmem:[%s263 + $0x10] sm:$0xff]
                  %268 = vst [vmem:[%s264 + $0x8] sm:$0xff] %v267
                  %v269 = vld [vmem:[%s263 + $0x20] sm:$0xff]
                  %270 = vst [vmem:[%s264 + $0x10] sm:$0xff] %v269
                  %v271 = vld [vmem:[%s263 + $0x30] sm:$0xff]
                  %272 = vst [vmem:[%s264 + $0x18] sm:$0xff] %v271
                  %v273 = vld [vmem:[%s263 + $0x40] sm:$0xff]
                  %274 = vst [vmem:[%s264 + $0x20] sm:$0xff] %v273
                  %v275 = vld [vmem:[%s263 + $0x50] sm:$0xff]
                  %276 = vst [vmem:[%s264 + $0x28] sm:$0xff] %v275
                  %v277 = vld [vmem:[%s263 + $0x60] sm:$0xff]
                  %278 = vst [vmem:[%s264 + $0x30] sm:$0xff] %v277
                  %v279 = vld [vmem:[%s263 + $0x70] sm:$0xff]
                  %280 = vst [vmem:[%s264 + $0x38] sm:$0xff] %v279
                  %v281 = vld [vmem:[%s263 + $0x80] sm:$0xff]
                  %282 = vst [vmem:[%s264 + $0x40] sm:$0xff] %v281
                  %v283 = vld [vmem:[%s263 + $0x90] sm:$0xff]
                  %284 = vst [vmem:[%s264 + $0x48] sm:$0xff] %v283
                  %v285 = vld [vmem:[%s263 + $0xa0] sm:$0xff]
                  %286 = vst [vmem:[%s264 + $0x50] sm:$0xff] %v285
                  %v287 = vld [vmem:[%s263 + $0xb0] sm:$0xff]
                  %288 = vst [vmem:[%s264 + $0x58] sm:$0xff] %v287
                  %v289 = vld [vmem:[%s263 + $0xc0] sm:$0xff]
                  %290 = vst [vmem:[%s264 + $0x60] sm:$0xff] %v289
                  %v291 = vld [vmem:[%s263 + $0xd0] sm:$0xff]
                  %292 = vst [vmem:[%s264 + $0x68] sm:$0xff] %v291
                  %v293 = vld [vmem:[%s263 + $0xe0] sm:$0xff]
                  %294 = vst [vmem:[%s264 + $0x70] sm:$0xff] %v293
                  %v295 = vld [vmem:[%s263 + $0xf0] sm:$0xff]
                  %296 = vst [vmem:[%s264 + $0x78] sm:$0xff] %v295
                $region52: #{osnet_reid_forward.11} parent=46 // loop_footer
                  %s262 = sadd.s32 1, %s258
                $region53: #{osnet_reid_forward.11} parent=46 // loop_footer_branch
                  %257 = sbr.rel target = $region49
                $region54: #{osnet_reid_forward.11} parent=46 // loop_exit
                  _
              $region47: #{osnet_reid_forward.11} parent=31 // pred_fallthru
                _
              // Predicated region
              $region55: #{osnet_reid_forward.11} parent=31 // pred_check
                _
              $region56: #{osnet_reid_forward.11} parent=31 // pred_check_branch
                %298 = sbr.rel target = $region58
              $region57: #{osnet_reid_forward.11} parent=31 // pred_region
                _
              $region58: #{osnet_reid_forward.11} parent=31 // pred_fallthru
                _
            $region32: #{osnet_reid_forward.11} parent=27 // pred_fallthru
              _
            // Predicated region
            $region33: #{osnet_reid_forward.11} parent=27 // pred_check
              _
            $region34: #{osnet_reid_forward.11} parent=27 // pred_check_branch
              %213 = sbr.rel target = $region36
            $region35: #{osnet_reid_forward.11} parent=27 // pred_region
              loop: start=0, step=1, limit=1
              $region37: #{osnet_reid_forward.11} parent=35 // loop_pre_header
                _
              $region38: #{osnet_reid_forward.11} parent=35 // loop_header
                %s216 = sphi 0, %s220
                %p217 = scmp.ge.s32.totalorder %s216, 1
                %s221 = sphi %s207, %s207
                %s222 = sphi %s201, %s201
              $region39: #{osnet_reid_forward.11} parent=35 // loop_header_branch
                %219 = sbr.rel (%p217) target = $region43
              $region40: #{osnet_reid_forward.11} parent=35 // loop_body
                %v223 = vld [vmem:[%s221] sm:$0xff]
                %224 = vst [vmem:[%s222] sm:$0xff] %v223
                %v225 = vld [vmem:[%s221 + $0x10] sm:$0xff]
                %226 = vst [vmem:[%s222 + $0x8] sm:$0xff] %v225
                %v227 = vld [vmem:[%s221 + $0x20] sm:$0xff]
                %228 = vst [vmem:[%s222 + $0x10] sm:$0xff] %v227
                %v229 = vld [vmem:[%s221 + $0x30] sm:$0xff]
                %230 = vst [vmem:[%s222 + $0x18] sm:$0xff] %v229
                %v231 = vld [vmem:[%s221 + $0x40] sm:$0xff]
                %232 = vst [vmem:[%s222 + $0x20] sm:$0xff] %v231
                %v233 = vld [vmem:[%s221 + $0x50] sm:$0xff]
                %234 = vst [vmem:[%s222 + $0x28] sm:$0xff] %v233
                %v235 = vld [vmem:[%s221 + $0x60] sm:$0xff]
                %236 = vst [vmem:[%s222 + $0x30] sm:$0xff] %v235
                %v237 = vld [vmem:[%s221 + $0x70] sm:$0xff]
                %238 = vst [vmem:[%s222 + $0x38] sm:$0xff] %v237
                %v239 = vld [vmem:[%s221 + $0x80] sm:$0xff]
                %240 = vst [vmem:[%s222 + $0x40] sm:$0xff] %v239
                %v241 = vld [vmem:[%s221 + $0x90] sm:$0xff]
                %242 = vst [vmem:[%s222 + $0x48] sm:$0xff] %v241
                %v243 = vld [vmem:[%s221 + $0xa0] sm:$0xff]
                %244 = vst [vmem:[%s222 + $0x50] sm:$0xff] %v243
                %v245 = vld [vmem:[%s221 + $0xb0] sm:$0xff]
                %246 = vst [vmem:[%s222 + $0x58] sm:$0xff] %v245
                %v247 = vld [vmem:[%s221 + $0xc0] sm:$0xff]
                %248 = vst [vmem:[%s222 + $0x60] sm:$0xff] %v247
                %v249 = vld [vmem:[%s221 + $0xd0] sm:$0xff]
                %250 = vst [vmem:[%s222 + $0x68] sm:$0xff] %v249
                %v251 = vld [vmem:[%s221 + $0xe0] sm:$0xff]
                %252 = vst [vmem:[%s222 + $0x70] sm:$0xff] %v251
                %v253 = vld [vmem:[%s221 + $0xf0] sm:$0xff]
                %254 = vst [vmem:[%s222 + $0x78] sm:$0xff] %v253
              $region41: #{osnet_reid_forward.11} parent=35 // loop_footer
                %s220 = sadd.s32 1, %s216
              $region42: #{osnet_reid_forward.11} parent=35 // loop_footer_branch
                %215 = sbr.rel target = $region38
              $region43: #{osnet_reid_forward.11} parent=35 // loop_exit
                _
            $region36: #{osnet_reid_forward.11} parent=27 // pred_fallthru
              _
          $region28: #{osnet_reid_forward.11} parent=23 // pred_fallthru
            _
          %299 = vnop
        $region24: #{osnet_reid_forward.11} parent=15 // pred_fallthru
          _
        // Predicated region
        $region59: #{osnet_reid_forward.11} parent=15 // pred_check
          %p300 = pneg %p105
        $region60: #{osnet_reid_forward.11} parent=15 // pred_check_branch
          %302 = sbr.rel (%p300) target = $region62
        $region61: #{osnet_reid_forward.11} parent=15 // pred_region
          %s303 = smul.u32 2, %s18
          %p304 = scmp.lt.s32.totalorder %s303, 3
          %s305 = scalar_select %p304, %s303, 3
          %s306 = scalar_lea.vmem %s2, %s305
          %s307 = smul.u32 2, %s18
        $region62: #{osnet_reid_forward.11} parent=15 // pred_fallthru
          _
        // Predicated region
        $region63: #{osnet_reid_forward.11} parent=15 // pred_check
          %p308 = pneg %p131
        $region64: #{osnet_reid_forward.11} parent=15 // pred_check_branch
          %310 = sbr.rel (%p308) target = $region66
        $region65: #{osnet_reid_forward.11} parent=15 // pred_region
          %s311 = smul.u32 2, %s18
          %p312 = scmp.lt.s32.totalorder %s311, 3
          %s313 = scalar_select %p312, %s311, 3
          %s314 = scalar_lea.vmem %s3, %s313
          %s315 = smul.u32 2, %s18
        $region66: #{osnet_reid_forward.11} parent=15 // pred_fallthru
          _
      $region16: #{osnet_reid_forward.11} parent=5 // pred_fallthru
        _
      %p316 = scmp.le.s32.totalorder 1, %s10
      %p317 = scmp.lt.s32.totalorder %s10, 55
      %p318 = pnand %p316, %p317
      %p319 = pneg %p318
      // Predicated region
      $region67: #{osnet_reid_forward.11} parent=5 // pred_check
        _
      $region68: #{osnet_reid_forward.11} parent=5 // pred_check_branch
        %321 = sbr.rel (%p318) target = $region70
      $region69: #{osnet_reid_forward.11} parent=5 // pred_region
        %s322 = ssub.s32 %s10, 1
        %s323 = sand.u32 %s72, 1
        %s324 = sand.u32 %s72, 1
        %s325 = smul.addr %s324, 128
        %s326 = scalar_lea.vmem [#allocation3], %s325
        // Predicated region
        $region71: #{osnet_reid_forward.11} parent=69 // pred_check
          %p327 = pneg %p85
        $region72: #{osnet_reid_forward.11} parent=69 // pred_check_branch
          %329 = sbr.rel (%p327) target = $region74
        $region73: #{osnet_reid_forward.11} parent=69 // pred_region
          _
        $region74: #{osnet_reid_forward.11} parent=69 // pred_fallthru
          _
        %p330 = scmp.lt.s32.totalorder %s20, 0
        %s331 = scalar_select %p330, %s20, 0
        %p332 = scmp.lt.s32.totalorder %s22, 26
        %s333 = scalar_select %p332, %s22, 26
        %s334 = smul.addr %s331, 27
        %s335 = sadd.s32 %s333, %s334
        %s336 = smul.addr %s335, 4
        %s337 = scalar_lea.vmem %s0, %s336
        %p338 = pneg %p57
        %p339 = pneg %p54
        %s340 = sand.u32 %s72, 1
        %s341 = sand.u32 %s72, 1
        %s342 = smul.addr %s341, 128
        %s343 = scalar_lea.vmem [#allocation3], %s342
        %p344 = pneg %p85
        %p345 = pneg %p82
        %s346 = smul.u32 2, %s21
        %p347 = scmp.lt.s32.totalorder %s346, 3
        %s348 = scalar_select %p347, %s346, 3
        %s349 = scalar_lea.vmem %s2, %s348
        %p350 = pneg %p111
        %p351 = pneg %p108
        %s352 = smul.u32 2, %s21
        %p353 = scmp.lt.s32.totalorder %s352, 3
        %s354 = scalar_select %p353, %s352, 3
        %s355 = scalar_lea.vmem %s3, %s354
        %p356 = pneg %p137
        %p357 = pneg %p134
        %p358 = pneg %p165
        %p359 = pneg %p162
        %s360 = smul.u32 2, %s21
        %p361 = scmp.lt.s32.totalorder %s20, 0
        %s362 = scalar_select %p361, %s20, 0
        %p363 = scmp.lt.s32.totalorder %s360, 3
        %s364 = scalar_select %p363, %s360, 3
        %s365 = smul.addr %s362, 4
        %s366 = sadd.s32 %s364, %s365
        %s367 = smul.addr %s366, 8
        %s368 = scalar_lea.vmem %s4, %s367
        %p369 = scmp.lt.s32.totalorder %s20, 0
        %s370 = scalar_select %p369, %s20, 0
        %p371 = scmp.lt.s32.totalorder %s22, 26
        %s372 = scalar_select %p371, %s22, 26
        %s373 = smul.addr %s370, 27
        %s374 = sadd.s32 %s372, %s373
        %s375 = smul.addr %s374, 4
        %s376 = scalar_lea.vmem %s0, %s375
        %s377 = smul.u32 16, %s22
        %s378 = smul.u32 2, %s21
        %s379 = smul.u32 2, %s21
        %p380 = scmp.lt.s32.totalorder %s379, 3
        %s381 = scalar_select %p380, %s379, 3
        %s382 = scalar_lea.vmem %s2, %s381
        %s383 = smul.u32 2, %s21
        %s384 = smul.u32 2, %s21
        %p385 = scmp.lt.s32.totalorder %s384, 3
        %s386 = scalar_select %p385, %s384, 3
        %s387 = scalar_lea.vmem %s3, %s386
        %s388 = smul.u32 2, %s21
        %s389 = smul.u32 2, %s21
        %p390 = scmp.lt.s32.totalorder %s20, 0
        %s391 = scalar_select %p390, %s20, 0
        %p392 = scmp.lt.s32.totalorder %s389, 3
        %s393 = scalar_select %p392, %s389, 3
        %s394 = smul.addr %s391, 4
        %s395 = sadd.s32 %s393, %s394
        %s396 = smul.addr %s395, 8
        %s397 = scalar_lea.vmem %s4, %s396
        %s398 = smul.u32 2, %s21
        %p400 = scmp.eq.s32.totalorder %s22, 0
        // Predicated region
        $region75: #{osnet_reid_forward.11} parent=69 // pred_check
          %p401 = pneg %p400
        $region76: #{osnet_reid_forward.11} parent=69 // pred_check_branch
          %403 = sbr.rel (%p401) target = $region78
        $region77: #{osnet_reid_forward.11} parent=69 // pred_region
          %404 = vst [vmem:[#allocation2] sm:$0xff] 0.0
          %405 = vst [vmem:[#allocation2 + $0x8] sm:$0xff] 0.0
        $region78: #{osnet_reid_forward.11} parent=69 // pred_fallthru
          _
        %v406 = vld [vmem:[#allocation2] sm:$0xff]
        %v407 = vld [vmem:[#allocation2 + $0x8] sm:$0xff]
        %v408 = vld [vmem:[%s376] sm:$0xf]
        %v409 = vld [vmem:[%s326] sm:$0xff]
        %v410 = vld [vmem:[%s326 + $0x8] sm:$0xff]
        %v411 = vld [vmem:[%s326 + $0x10] sm:$0xff]
        %v412 = vld [vmem:[%s326 + $0x18] sm:$0xff]
        %v413 = vld [vmem:[%s326 + $0x20] sm:$0xff]
        %v414 = vld [vmem:[%s326 + $0x28] sm:$0xff]
        %v415 = vld [vmem:[%s326 + $0x30] sm:$0xff]
        %v416 = vld [vmem:[%s326 + $0x38] sm:$0xff]
        %v417 = vld [vmem:[%s326 + $0x40] sm:$0xff]
        %v418 = vld [vmem:[%s326 + $0x48] sm:$0xff]
        %v419 = vld [vmem:[%s326 + $0x50] sm:$0xff]
        %v420 = vld [vmem:[%s326 + $0x58] sm:$0xff]
        %v421 = vld [vmem:[%s326 + $0x60] sm:$0xff]
        %v422 = vld [vmem:[%s326 + $0x68] sm:$0xff]
        %v423 = vld [vmem:[%s326 + $0x70] sm:$0xff]
        %v424 = vld [vmem:[%s326 + $0x78] sm:$0xff]
        %v441 = vunpack.c.l.b16 %v409
        %v442 = vunpack.c.h.b16 %v409
        %v443 = vunpack.c.l.b16 %v410
        %v444 = vunpack.c.h.b16 %v410
        %v445 = vunpack.c.l.b16 %v411
        %v446 = vunpack.c.h.b16 %v411
        %v447 = vunpack.c.l.b16 %v412
        %v448 = vunpack.c.h.b16 %v412
        %v449 = vunpack.c.l.b16 %v413
        %v450 = vunpack.c.h.b16 %v413
        %v451 = vunpack.c.l.b16 %v414
        %v452 = vunpack.c.h.b16 %v414
        %v453 = vunpack.c.l.b16 %v415
        %v454 = vunpack.c.h.b16 %v415
        %v455 = vunpack.c.l.b16 %v416
        %v456 = vunpack.c.h.b16 %v416
        %v457 = vunpack.c.l.b16 %v417
        %v458 = vunpack.c.h.b16 %v417
        %v459 = vunpack.c.l.b16 %v418
        %v460 = vunpack.c.h.b16 %v418
        %v461 = vunpack.c.l.b16 %v419
        %v462 = vunpack.c.h.b16 %v419
        %v463 = vunpack.c.l.b16 %v420
        %v464 = vunpack.c.h.b16 %v420
        %v465 = vunpack.c.l.b16 %v421
        %v466 = vunpack.c.h.b16 %v421
        %v467 = vunpack.c.l.b16 %v422
        %v468 = vunpack.c.h.b16 %v422
        %v469 = vunpack.c.l.b16 %v423
        %v470 = vunpack.c.h.b16 %v423
        %v471 = vunpack.c.l.b16 %v424
        %v472 = vunpack.c.h.b16 %v424
        %v473 = vpack.c.b16 %v443, %v441
        %v474 = vpack.c.b16 %v444, %v442
        %v475 = vpack.c.b16 %v447, %v445
        %v476 = vpack.c.b16 %v448, %v446
        %v477 = vpack.c.b16 %v451, %v449
        %v478 = vpack.c.b16 %v452, %v450
        %v479 = vpack.c.b16 %v455, %v453
        %v480 = vpack.c.b16 %v456, %v454
        %v481 = vpack.c.b16 %v459, %v457
        %v482 = vpack.c.b16 %v460, %v458
        %v483 = vpack.c.b16 %v463, %v461
        %v484 = vpack.c.b16 %v464, %v462
        %v485 = vpack.c.b16 %v467, %v465
        %v486 = vpack.c.b16 %v468, %v466
        %v487 = vpack.c.b16 %v471, %v469
        %v488 = vpack.c.b16 %v472, %v470
        %505 = vmatprep.subr.bf16.mxu0 %v474
        %506 = vmatpush1.bf16.msra.mxu0 %v473
        %507 = vmatprep.subr.bf16.mxu0 %v476
        %508 = vmatpush1.bf16.msra.mxu0 %v475
        %509 = vmatprep.subr.bf16.mxu0 %v478
        %510 = vmatpush1.bf16.msra.mxu0 %v477
        %511 = vmatprep.subr.bf16.mxu0 %v480
        %512 = vmatpush1.bf16.msra.mxu0 %v479
        %513 = vmatprep.subr.bf16.mxu0 %v482
        %514 = vmatpush1.bf16.msra.mxu0 %v481
        %515 = vmatprep.subr.bf16.mxu0 %v484
        %516 = vmatpush1.bf16.msra.mxu0 %v483
        %517 = vmatprep.subr.bf16.mxu0 %v486
        %518 = vmatpush1.bf16.msra.mxu0 %v485
        %519 = vmatprep.subr.bf16.mxu0 %v488
        %520 = vmatpush1.bf16.msra.mxu0 %v487
        %521 = vmatprep.subr.bf16.mxu0 0
        %522 = vmatpush1.bf16.msra.mxu0 0
        %523 = vmatprep.subr.bf16.mxu0 0
        %524 = vmatpush1.bf16.msra.mxu0 0
        %525 = vmatprep.subr.bf16.mxu0 0
        %526 = vmatpush1.bf16.msra.mxu0 0
        %527 = vmatprep.subr.bf16.mxu0 0
        %528 = vmatpush1.bf16.msra.mxu0 0
        %529 = vmatprep.subr.bf16.mxu0 0
        %530 = vmatpush1.bf16.msra.mxu0 0
        %531 = vmatprep.subr.bf16.mxu0 0
        %532 = vmatpush1.bf16.msra.mxu0 0
        %533 = vmatprep.subr.bf16.mxu0 0
        %534 = vmatpush1.bf16.msra.mxu0 0
        %535 = vmatprep.subr.bf16.mxu0 0
        %536 = vmatpush1.bf16.msra.mxu0 0
        %537 = vmatprep.mubr.bf16.mxu0 0
        %538 = vmatmul.mubr.bf16.gmra.mrb[0].mxu0 %v408
        %v539 = vpop.f32.mrb[0].mxu0
        %v540 = vadd.f32 0.0, %v539
        %v541 = vpop.f32.mrb[0].mxu0
        %v542 = vadd.f32 0.0, %v541
        %v543 = vpop.f32.mrb[0].mxu0
        %v544 = vpop.f32.mrb[0].mxu0
        %545 = vdwg.mxu0
        %v546 = vadd.f32 %v406, %v540
        %v547 = vadd.f32 %v407, %v542
        %548 = vst [vmem:[#allocation2] sm:$0xff] %v546
        %549 = vst [vmem:[#allocation2 + $0x8] sm:$0xff] %v547
        %p550 = scmp.eq.s32.totalorder %s22, 26
        // Predicated region
        $region79: #{osnet_reid_forward.11} parent=69 // pred_check
          %p551 = pneg %p550
        $region80: #{osnet_reid_forward.11} parent=69 // pred_check_branch
          %553 = sbr.rel (%p551) target = $region82
        $region81: #{osnet_reid_forward.11} parent=69 // pred_region
          %v554 = vld [vmem:[#allocation2] sm:$0xff]
          %v555 = vld [vmem:[#allocation2 + $0x8] sm:$0xff]
          %v556 = vld [vmem:[%s382] sm:$0x3]
          %v558 = vlaneseq
          %v559 = vshrl.u32 %v558, 7
          %v560 = vsub.s32 0, %v559
          %v561 = vrot.slane %v556, %v560
          %v562 = vlaneseq
          %v563 = vshrl.u32 %v562, 7
          %v564 = vsub.s32 1, %v563
          %v565 = vrot.slane %v556, %v564
          %v568 = vmul.f32 %v554, %v561
          %v569 = vmul.f32 %v555, %v565
          %v570 = vld [vmem:[%s387] sm:$0x3]
          %v572 = vlaneseq
          %v573 = vshrl.u32 %v572, 7
          %v574 = vsub.s32 0, %v573
          %v575 = vrot.slane %v570, %v574
          %v576 = vlaneseq
          %v577 = vshrl.u32 %v576, 7
          %v578 = vsub.s32 1, %v577
          %v579 = vrot.slane %v570, %v578
          %v582 = vadd.f32 %v568, %v575
          %v583 = vadd.f32 %v569, %v579
          %v584 = vmax.f32 %v582, 0.0
          %v585 = vmax.f32 %v583, 0.0
          %586 = vst [vmem:[%s397] sm:$0xff] %v584
          %587 = vst [vmem:[%s397 + $0x8] sm:$0xff] %v585
        $region82: #{osnet_reid_forward.11} parent=69 // pred_fallthru
          _
        %s588 = smul.u32 2, %s21
        %p589 = scmp.lt.s32.totalorder %s20, 0
        %s590 = scalar_select %p589, %s20, 0
        %p591 = scmp.lt.s32.totalorder %s588, 3
        %s592 = scalar_select %p591, %s588, 3
        %s593 = smul.addr %s590, 4
        %s594 = sadd.s32 %s592, %s593
        %s595 = smul.addr %s594, 8
        %s596 = scalar_lea.vmem %s4, %s595
        // Predicated region
        $region83: #{osnet_reid_forward.11} parent=69 // pred_check
          %p597 = pneg %p162
        $region84: #{osnet_reid_forward.11} parent=69 // pred_check_branch
          %599 = sbr.rel (%p597) target = $region86
        $region85: #{osnet_reid_forward.11} parent=69 // pred_region
          %s600 = smul.u32 2, %s21
        $region86: #{osnet_reid_forward.11} parent=69 // pred_fallthru
          _
      $region70: #{osnet_reid_forward.11} parent=5 // pred_fallthru
        _
      %p601 = scmp.le.s32.totalorder 2, %s10
      // Predicated region
      $region87: #{osnet_reid_forward.11} parent=5 // pred_check
        %p602 = pneg %p601
      $region88: #{osnet_reid_forward.11} parent=5 // pred_check_branch
        %604 = sbr.rel (%p602) target = $region90
      $region89: #{osnet_reid_forward.11} parent=5 // pred_region
        %s605 = ssub.s32 %s10, 2
        // Predicated region
        $region91: #{osnet_reid_forward.11} parent=89 // pred_check
          %p606 = pneg %p168
        $region92: #{osnet_reid_forward.11} parent=89 // pred_check_branch
          %608 = sbr.rel (%p606) target = $region94
        $region93: #{osnet_reid_forward.11} parent=89 // pred_region
          %s609 = smul.u32 2, %s24
          %p610 = scmp.lt.s32.totalorder %s23, 0
          %s611 = scalar_select %p610, %s23, 0
          %p612 = scmp.lt.s32.totalorder %s609, 3
          %s613 = scalar_select %p612, %s609, 3
          %s614 = smul.addr %s611, 4
          %s615 = sadd.s32 %s613, %s614
          %s616 = smul.addr %s615, 8
          %s617 = scalar_lea.vmem %s4, %s616
        $region94: #{osnet_reid_forward.11} parent=89 // pred_fallthru
          _
      $region90: #{osnet_reid_forward.11} parent=5 // pred_fallthru
        _
    $region6: #{osnet_reid_forward.11} parent=1 // loop_footer
      %s14 = sadd.s32 1, %s10
    $region7: #{osnet_reid_forward.11} parent=1 // loop_footer_branch
      %9 = sbr.rel target = $region3
    $region8: #{osnet_reid_forward.11} parent=1 // loop_exit
      _

// kernel: osnet_reid_forward.12
$region0: #{osnet_reid_forward.12}
  #allocation0 [shape = 'u32[]', space=smem, size = 0x4, offset = 0x4, fixed_abs, tag = 'smem constant byte address 0x4 - core index']
  #allocation1 [shape = 'u32[144,128]{1,0:T(1,128)}', space=vmem, size = 0x12000, scoped, tag = 'internal scratch']
  #allocation2 [shape = 'f32[8,256]{1,0:T(8,128)}', space=vmem, size = 0x2000, scoped, tag = 'scratch operand']
  %s0 = inlined_call_operand.vmem [shape: bf16[8,512], index: 0, kind: input, shape index: {}]
  %s1 = inlined_call_operand.vmem [shape: bf16[512,512], index: 1, kind: input, shape index: {}]
  %s2 = inlined_call_operand.vmem [shape: f32[1,512], index: 2, kind: input, shape index: {}]
  %s3 = inlined_call_operand.vmem [shape: f32[1,512], index: 3, kind: input, shape index: {}]
  %s4 = inlined_call_operand.vmem [shape: f32[8,512], index: 4, kind: output, shape index: {}]
  %s5 = sld [smem:[#allocation0]]
  $region95: #{osnet_reid_forward.12} parent=0
    _
  %s7 = ssub.s32 1, %s5
  %s8 = scalar_select 0, %s7, %s5
  $region1: #{osnet_reid_forward.12} parent=0
    #allocation3 [shape = 'u8[524288]{0}', space=vmem, size = 0x80000, scoped, tag = 'input window, operand 1']
    loop: start=0, step=1, limit=4
    $region2: #{osnet_reid_forward.12} parent=1 // loop_pre_header
      _
    $region3: #{osnet_reid_forward.12} parent=1 // loop_header
      %s10 = sphi 0, %s14
      %p11 = scmp.ge.s32.totalorder %s10, 4
      %s17 = sphi 0, %s36
      %s18 = sphi 0, %s32
      %s19 = sphi 0, %s28
      %s20 = sphi 0, %s17
      %s21 = sphi 0, %s18
      %s22 = sphi 0, %s19
      %s23 = sphi 0, %s20
      %s24 = sphi 0, %s21
      %s25 = sphi 0, %s22
      %s41 = sphi 0, %s43
      %s44 = sphi 0, %s41
      %s45 = sphi 0, %s44
      %s61 = sphi 0, %s45
      %s69 = sphi 0, %s71
      %s72 = sphi 0, %s69
      %s73 = sphi 0, %s72
      %s89 = sphi 0, %s73
      %s95 = sphi 0, %s97
      %s98 = sphi 0, %s95
      %s99 = sphi 0, %s98
      %s115 = sphi 0, %s99
      %s121 = sphi 0, %s123
      %s124 = sphi 0, %s121
      %s125 = sphi 0, %s124
      %s141 = sphi 0, %s125
      %s149 = sphi 0, %s151
      %s152 = sphi 0, %s149
      %s153 = sphi 0, %s152
      %s169 = sphi 0, %s153
    $region4: #{osnet_reid_forward.12} parent=1 // loop_header_branch
      %13 = sbr.rel (%p11) target = $region8
    $region5: #{osnet_reid_forward.12} parent=1 // loop_body
      %s15 = ssub.s32 %s10, 1
      %s16 = ssub.s32 %s10, 2
      %s26 = sadd.s32 1, %s19
      %p27 = scmp.ge.s32.totalorder %s26, 1
      %s28 = scalar_select %p27, 0, %s26
      %s29 = sadd.s32 1, %s18
      %s30 = scalar_select %p27, %s29, %s18
      %p31 = scmp.ge.s32.totalorder %s30, 2
      %s32 = scalar_select %p31, 0, %s30
      %s33 = sadd.s32 1, %s17
      %s34 = scalar_select %p31, %s33, %s17
      %p35 = scmp.ge.s32.totalorder %s34, 1
      %s36 = scalar_select %p35, 0, %s34
      %s37 = ssub.s32 %s17, %s36
      %s38 = ssub.s32 %s19, %s28
      %s39 = sor.u32 %s37, %s38
      %p40 = scmp.eq.s32.totalorder %s39, 0
      %s42 = sadd.s32 %s41, 1
      %s43 = scalar_select %p40, %s41, %s42
      %p46 = pneg %p40
      %p47 = scmp.eq.s32.totalorder %s10, 1
      %p48 = por %p46, %p47
      %p49 = scmp.ne.s32.totalorder %s41, %s44
      %p50 = scmp.eq.s32.totalorder %s10, 0
      %p51 = por %p49, %p50
      %p52 = scmp.ne.s32.totalorder %s41, %s44
      %p53 = scmp.eq.s32.totalorder %s15, 1
      %p54 = por %p52, %p53
      %p55 = scmp.ne.s32.totalorder %s44, %s45
      %p56 = scmp.eq.s32.totalorder %s15, 0
      %p57 = por %p55, %p56
      %p58 = scmp.ne.s32.totalorder %s44, %s45
      %p59 = scmp.eq.s32.totalorder %s16, 1
      %p60 = por %p58, %p59
      %p62 = scmp.ne.s32.totalorder %s45, %s61
      %p63 = scmp.eq.s32.totalorder %s16, 0
      %p64 = por %p62, %p63
      %s65 = ssub.s32 %s19, %s28
      %s66 = ssub.s32 %s18, %s32
      %s67 = sor.u32 %s65, %s66
      %p68 = scmp.eq.s32.totalorder %s67, 0
      %s70 = sadd.s32 %s69, 1
      %s71 = scalar_select %p68, %s69, %s70
      %p74 = pneg %p68
      %p75 = scmp.eq.s32.totalorder %s10, 1
      %p76 = por %p74, %p75
      %p77 = scmp.ne.s32.totalorder %s69, %s72
      %p78 = scmp.eq.s32.totalorder %s10, 0
      %p79 = por %p77, %p78
      %p80 = scmp.ne.s32.totalorder %s69, %s72
      %p81 = scmp.eq.s32.totalorder %s15, 1
      %p82 = por %p80, %p81
      %p83 = scmp.ne.s32.totalorder %s72, %s73
      %p84 = scmp.eq.s32.totalorder %s15, 0
      %p85 = por %p83, %p84
      %p86 = scmp.ne.s32.totalorder %s72, %s73
      %p87 = scmp.eq.s32.totalorder %s16, 1
      %p88 = por %p86, %p87
      %p90 = scmp.ne.s32.totalorder %s73, %s89
      %p91 = scmp.eq.s32.totalorder %s16, 0
      %p92 = por %p90, %p91
      %s93 = ssub.s32 %s18, %s32
      %p94 = scmp.eq.s32.totalorder %s93, 0
      %s96 = sadd.s32 %s95, 1
      %s97 = scalar_select %p94, %s95, %s96
      %p100 = pneg %p94
      %p101 = scmp.eq.s32.totalorder %s10, 1
      %p102 = por %p100, %p101
      %p103 = scmp.ne.s32.totalorder %s95, %s98
      %p104 = scmp.eq.s32.totalorder %s10, 0
      %p105 = por %p103, %p104
      %p106 = scmp.ne.s32.totalorder %s95, %s98
      %p107 = scmp.eq.s32.totalorder %s15, 1
      %p108 = por %p106, %p107
      %p109 = scmp.ne.s32.totalorder %s98, %s99
      %p110 = scmp.eq.s32.totalorder %s15, 0
      %p111 = por %p109, %p110
      %p112 = scmp.ne.s32.totalorder %s98, %s99
      %p113 = scmp.eq.s32.totalorder %s16, 1
      %p114 = por %p112, %p113
      %p116 = scmp.ne.s32.totalorder %s99, %s115
      %p117 = scmp.eq.s32.totalorder %s16, 0
      %p118 = por %p116, %p117
      %s119 = ssub.s32 %s18, %s32
      %p120 = scmp.eq.s32.totalorder %s119, 0
      %s122 = sadd.s32 %s121, 1
      %s123 = scalar_select %p120, %s121, %s122
      %p126 = pneg %p120
      %p127 = scmp.eq.s32.totalorder %s10, 1
      %p128 = por %p126, %p127
      %p129 = scmp.ne.s32.totalorder %s121, %s124
      %p130 = scmp.eq.s32.totalorder %s10, 0
      %p131 = por %p129, %p130
      %p132 = scmp.ne.s32.totalorder %s121, %s124
      %p133 = scmp.eq.s32.totalorder %s15, 1
      %p134 = por %p132, %p133
      %p135 = scmp.ne.s32.totalorder %s124, %s125
      %p136 = scmp.eq.s32.totalorder %s15, 0
      %p137 = por %p135, %p136
      %p138 = scmp.ne.s32.totalorder %s124, %s125
      %p139 = scmp.eq.s32.totalorder %s16, 1
      %p140 = por %p138, %p139
      %p142 = scmp.ne.s32.totalorder %s125, %s141
      %p143 = scmp.eq.s32.totalorder %s16, 0
      %p144 = por %p142, %p143
      %s145 = ssub.s32 %s17, %s36
      %s146 = ssub.s32 %s18, %s32
      %s147 = sor.u32 %s145, %s146
      %p148 = scmp.eq.s32.totalorder %s147, 0
      %s150 = sadd.s32 %s149, 1
      %s151 = scalar_select %p148, %s149, %s150
      %p154 = pneg %p148
      %p155 = scmp.eq.s32.totalorder %s10, 1
      %p156 = por %p154, %p155
      %p157 = scmp.ne.s32.totalorder %s149, %s152
      %p158 = scmp.eq.s32.totalorder %s10, 0
      %p159 = por %p157, %p158
      %p160 = scmp.ne.s32.totalorder %s149, %s152
      %p161 = scmp.eq.s32.totalorder %s15, 1
      %p162 = por %p160, %p161
      %p163 = scmp.ne.s32.totalorder %s152, %s153
      %p164 = scmp.eq.s32.totalorder %s15, 0
      %p165 = por %p163, %p164
      %p166 = scmp.ne.s32.totalorder %s152, %s153
      %p167 = scmp.eq.s32.totalorder %s16, 1
      %p168 = por %p166, %p167
      %p170 = scmp.ne.s32.totalorder %s153, %s169
      %p171 = scmp.eq.s32.totalorder %s16, 0
      %p172 = por %p170, %p171
      %p173 = scmp.le.s32.totalorder 1, %s10
      %p174 = scmp.lt.s32.totalorder %s10, 3
      %p175 = pnand %p173, %p174
      %p176 = pneg %p175
      // Predicated region
      $region9: #{osnet_reid_forward.12} parent=5 // pred_check
        _
      $region10: #{osnet_reid_forward.12} parent=5 // pred_check_branch
        %178 = sbr.rel (%p175) target = $region12
      $region11: #{osnet_reid_forward.12} parent=5 // pred_region
        %s179 = ssub.s32 %s10, 1
        // Predicated region
        $region13: #{osnet_reid_forward.12} parent=11 // pred_check
          %p180 = pneg %p57
        $region14: #{osnet_reid_forward.12} parent=11 // pred_check_branch
          %182 = sbr.rel (%p180) target = $region16
        $region15: #{osnet_reid_forward.12} parent=11 // pred_region
          %s183 = smul.u32 4, %s22
          %p184 = scmp.lt.s32.totalorder %s20, 0
          %s185 = scalar_select %p184, %s20, 0
          %p186 = scmp.lt.s32.totalorder %s183, 3
          %s187 = scalar_select %p186, %s183, 3
          %s188 = smul.addr %s185, 4
          %s189 = sadd.s32 %s187, %s188
          %s190 = smul.addr %s189, 4
          %s191 = scalar_lea.vmem %s0, %s190
          %s192 = smul.u32 4, %s22
        $region16: #{osnet_reid_forward.12} parent=11 // pred_fallthru
          _
      $region12: #{osnet_reid_forward.12} parent=5 // pred_fallthru
        _
      %p193 = scmp.lt.s32.totalorder %s10, 2
      // Predicated region
      $region17: #{osnet_reid_forward.12} parent=5 // pred_check
        %p194 = pneg %p193
      $region18: #{osnet_reid_forward.12} parent=5 // pred_check_branch
        %196 = sbr.rel (%p194) target = $region20
      $region19: #{osnet_reid_forward.12} parent=5 // pred_region
        // Predicated region
        $region21: #{osnet_reid_forward.12} parent=19 // pred_check
          %p197 = pneg %p79
        $region22: #{osnet_reid_forward.12} parent=19 // pred_check_branch
          %199 = sbr.rel (%p197) target = $region24
        $region23: #{osnet_reid_forward.12} parent=19 // pred_region
          %s200 = sand.u32 %s69, 1
          %s201 = sand.u32 %s69, 1
          %s202 = smul.addr %s201, 512
          %s203 = scalar_lea.vmem [#allocation3], %s202
          %s204 = smul.u32 64, %s19
          %s205 = smul.u32 2, %s18
          %s206 = smul.addr %s204, 4
          %s207 = sadd.s32 %s205, %s206
          %s208 = smul.addr %s207, 4
          %s209 = scalar_lea.vmem %s1, %s208
          // Predicated region
          $region25: #{osnet_reid_forward.12} parent=23 // pred_check
            _
          $region26: #{osnet_reid_forward.12} parent=23 // pred_check_branch
            %211 = sbr.rel (0) target = $region28
          $region27: #{osnet_reid_forward.12} parent=23 // pred_region
            // Predicated region
            $region29: #{osnet_reid_forward.12} parent=27 // pred_check
              _
            $region30: #{osnet_reid_forward.12} parent=27 // pred_check_branch
              %213 = sbr.rel (0) target = $region32
            $region31: #{osnet_reid_forward.12} parent=27 // pred_region
              // Predicated region
              $region44: #{osnet_reid_forward.12} parent=31 // pred_check
                _
              $region45: #{osnet_reid_forward.12} parent=31 // pred_check_branch
                %354 = sbr.rel (0) target = $region47
              $region46: #{osnet_reid_forward.12} parent=31 // pred_region
                loop: start=0, step=1, limit=1
                $region48: #{osnet_reid_forward.12} parent=46 // loop_pre_header
                  _
                $region49: #{osnet_reid_forward.12} parent=46 // loop_header
                  %s356 = sphi 0, %s360
                  %p357 = scmp.ge.s32.totalorder %s356, 1
                  %s361 = sphi %s209, %s209
                  %s362 = sphi %s203, %s203
                $region50: #{osnet_reid_forward.12} parent=46 // loop_header_branch
                  %359 = sbr.rel (%p357) target = $region54
                $region51: #{osnet_reid_forward.12} parent=46 // loop_body
                  %v363 = vld [vmem:[%s361] sm:$0xff]
                  %364 = vst [vmem:[%s362] sm:$0xff] %v363
                  %v365 = vld [vmem:[%s361 + $0x10] sm:$0xff]
                  %366 = vst [vmem:[%s362 + $0x8] sm:$0xff] %v365
                  %v367 = vld [vmem:[%s361 + $0x20] sm:$0xff]
                  %368 = vst [vmem:[%s362 + $0x10] sm:$0xff] %v367
                  %v369 = vld [vmem:[%s361 + $0x30] sm:$0xff]
                  %370 = vst [vmem:[%s362 + $0x18] sm:$0xff] %v369
                  %v371 = vld [vmem:[%s361 + $0x40] sm:$0xff]
                  %372 = vst [vmem:[%s362 + $0x20] sm:$0xff] %v371
                  %v373 = vld [vmem:[%s361 + $0x50] sm:$0xff]
                  %374 = vst [vmem:[%s362 + $0x28] sm:$0xff] %v373
                  %v375 = vld [vmem:[%s361 + $0x60] sm:$0xff]
                  %376 = vst [vmem:[%s362 + $0x30] sm:$0xff] %v375
                  %v377 = vld [vmem:[%s361 + $0x70] sm:$0xff]
                  %378 = vst [vmem:[%s362 + $0x38] sm:$0xff] %v377
                  %v379 = vld [vmem:[%s361 + $0x80] sm:$0xff]
                  %380 = vst [vmem:[%s362 + $0x40] sm:$0xff] %v379
                  %v381 = vld [vmem:[%s361 + $0x90] sm:$0xff]
                  %382 = vst [vmem:[%s362 + $0x48] sm:$0xff] %v381
                  %v383 = vld [vmem:[%s361 + $0xa0] sm:$0xff]
                  %384 = vst [vmem:[%s362 + $0x50] sm:$0xff] %v383
                  %v385 = vld [vmem:[%s361 + $0xb0] sm:$0xff]
                  %386 = vst [vmem:[%s362 + $0x58] sm:$0xff] %v385
                  %v387 = vld [vmem:[%s361 + $0xc0] sm:$0xff]
                  %388 = vst [vmem:[%s362 + $0x60] sm:$0xff] %v387
                  %v389 = vld [vmem:[%s361 + $0xd0] sm:$0xff]
                  %390 = vst [vmem:[%s362 + $0x68] sm:$0xff] %v389
                  %v391 = vld [vmem:[%s361 + $0xe0] sm:$0xff]
                  %392 = vst [vmem:[%s362 + $0x70] sm:$0xff] %v391
                  %v393 = vld [vmem:[%s361 + $0xf0] sm:$0xff]
                  %394 = vst [vmem:[%s362 + $0x78] sm:$0xff] %v393
                  %v395 = vld [vmem:[%s361 + $0x100] sm:$0xff]
                  %396 = vst [vmem:[%s362 + $0x80] sm:$0xff] %v395
                  %v397 = vld [vmem:[%s361 + $0x110] sm:$0xff]
                  %398 = vst [vmem:[%s362 + $0x88] sm:$0xff] %v397
                  %v399 = vld [vmem:[%s361 + $0x120] sm:$0xff]
                  %400 = vst [vmem:[%s362 + $0x90] sm:$0xff] %v399
                  %v401 = vld [vmem:[%s361 + $0x130] sm:$0xff]
                  %402 = vst [vmem:[%s362 + $0x98] sm:$0xff] %v401
                  %v403 = vld [vmem:[%s361 + $0x140] sm:$0xff]
                  %404 = vst [vmem:[%s362 + $0xa0] sm:$0xff] %v403
                  %v405 = vld [vmem:[%s361 + $0x150] sm:$0xff]
                  %406 = vst [vmem:[%s362 + $0xa8] sm:$0xff] %v405
                  %v407 = vld [vmem:[%s361 + $0x160] sm:$0xff]
                  %408 = vst [vmem:[%s362 + $0xb0] sm:$0xff] %v407
                  %v409 = vld [vmem:[%s361 + $0x170] sm:$0xff]
                  %410 = vst [vmem:[%s362 + $0xb8] sm:$0xff] %v409
                  %v411 = vld [vmem:[%s361 + $0x180] sm:$0xff]
                  %412 = vst [vmem:[%s362 + $0xc0] sm:$0xff] %v411
                  %v413 = vld [vmem:[%s361 + $0x190] sm:$0xff]
                  %414 = vst [vmem:[%s362 + $0xc8] sm:$0xff] %v413
                  %v415 = vld [vmem:[%s361 + $0x1a0] sm:$0xff]
                  %416 = vst [vmem:[%s362 + $0xd0] sm:$0xff] %v415
                  %v417 = vld [vmem:[%s361 + $0x1b0] sm:$0xff]
                  %418 = vst [vmem:[%s362 + $0xd8] sm:$0xff] %v417
                  %v419 = vld [vmem:[%s361 + $0x1c0] sm:$0xff]
                  %420 = vst [vmem:[%s362 + $0xe0] sm:$0xff] %v419
                  %v421 = vld [vmem:[%s361 + $0x1d0] sm:$0xff]
                  %422 = vst [vmem:[%s362 + $0xe8] sm:$0xff] %v421
                  %v423 = vld [vmem:[%s361 + $0x1e0] sm:$0xff]
                  %424 = vst [vmem:[%s362 + $0xf0] sm:$0xff] %v423
                  %v425 = vld [vmem:[%s361 + $0x1f0] sm:$0xff]
                  %426 = vst [vmem:[%s362 + $0xf8] sm:$0xff] %v425
                  %v427 = vld [vmem:[%s361 + $0x200] sm:$0xff]
                  %428 = vst [vmem:[%s362 + $0x100] sm:$0xff] %v427
                  %v429 = vld [vmem:[%s361 + $0x210] sm:$0xff]
                  %430 = vst [vmem:[%s362 + $0x108] sm:$0xff] %v429
                  %v431 = vld [vmem:[%s361 + $0x220] sm:$0xff]
                  %432 = vst [vmem:[%s362 + $0x110] sm:$0xff] %v431
                  %v433 = vld [vmem:[%s361 + $0x230] sm:$0xff]
                  %434 = vst [vmem:[%s362 + $0x118] sm:$0xff] %v433
                  %v435 = vld [vmem:[%s361 + $0x240] sm:$0xff]
                  %436 = vst [vmem:[%s362 + $0x120] sm:$0xff] %v435
                  %v437 = vld [vmem:[%s361 + $0x250] sm:$0xff]
                  %438 = vst [vmem:[%s362 + $0x128] sm:$0xff] %v437
                  %v439 = vld [vmem:[%s361 + $0x260] sm:$0xff]
                  %440 = vst [vmem:[%s362 + $0x130] sm:$0xff] %v439
                  %v441 = vld [vmem:[%s361 + $0x270] sm:$0xff]
                  %442 = vst [vmem:[%s362 + $0x138] sm:$0xff] %v441
                  %v443 = vld [vmem:[%s361 + $0x280] sm:$0xff]
                  %444 = vst [vmem:[%s362 + $0x140] sm:$0xff] %v443
                  %v445 = vld [vmem:[%s361 + $0x290] sm:$0xff]
                  %446 = vst [vmem:[%s362 + $0x148] sm:$0xff] %v445
                  %v447 = vld [vmem:[%s361 + $0x2a0] sm:$0xff]
                  %448 = vst [vmem:[%s362 + $0x150] sm:$0xff] %v447
                  %v449 = vld [vmem:[%s361 + $0x2b0] sm:$0xff]
                  %450 = vst [vmem:[%s362 + $0x158] sm:$0xff] %v449
                  %v451 = vld [vmem:[%s361 + $0x2c0] sm:$0xff]
                  %452 = vst [vmem:[%s362 + $0x160] sm:$0xff] %v451
                  %v453 = vld [vmem:[%s361 + $0x2d0] sm:$0xff]
                  %454 = vst [vmem:[%s362 + $0x168] sm:$0xff] %v453
                  %v455 = vld [vmem:[%s361 + $0x2e0] sm:$0xff]
                  %456 = vst [vmem:[%s362 + $0x170] sm:$0xff] %v455
                  %v457 = vld [vmem:[%s361 + $0x2f0] sm:$0xff]
                  %458 = vst [vmem:[%s362 + $0x178] sm:$0xff] %v457
                  %v459 = vld [vmem:[%s361 + $0x300] sm:$0xff]
                  %460 = vst [vmem:[%s362 + $0x180] sm:$0xff] %v459
                  %v461 = vld [vmem:[%s361 + $0x310] sm:$0xff]
                  %462 = vst [vmem:[%s362 + $0x188] sm:$0xff] %v461
                  %v463 = vld [vmem:[%s361 + $0x320] sm:$0xff]
                  %464 = vst [vmem:[%s362 + $0x190] sm:$0xff] %v463
                  %v465 = vld [vmem:[%s361 + $0x330] sm:$0xff]
                  %466 = vst [vmem:[%s362 + $0x198] sm:$0xff] %v465
                  %v467 = vld [vmem:[%s361 + $0x340] sm:$0xff]
                  %468 = vst [vmem:[%s362 + $0x1a0] sm:$0xff] %v467
                  %v469 = vld [vmem:[%s361 + $0x350] sm:$0xff]
                  %470 = vst [vmem:[%s362 + $0x1a8] sm:$0xff] %v469
                  %v471 = vld [vmem:[%s361 + $0x360] sm:$0xff]
                  %472 = vst [vmem:[%s362 + $0x1b0] sm:$0xff] %v471
                  %v473 = vld [vmem:[%s361 + $0x370] sm:$0xff]
                  %474 = vst [vmem:[%s362 + $0x1b8] sm:$0xff] %v473
                  %v475 = vld [vmem:[%s361 + $0x380] sm:$0xff]
                  %476 = vst [vmem:[%s362 + $0x1c0] sm:$0xff] %v475
                  %v477 = vld [vmem:[%s361 + $0x390] sm:$0xff]
                  %478 = vst [vmem:[%s362 + $0x1c8] sm:$0xff] %v477
                  %v479 = vld [vmem:[%s361 + $0x3a0] sm:$0xff]
                  %480 = vst [vmem:[%s362 + $0x1d0] sm:$0xff] %v479
                  %v481 = vld [vmem:[%s361 + $0x3b0] sm:$0xff]
                  %482 = vst [vmem:[%s362 + $0x1d8] sm:$0xff] %v481
                  %v483 = vld [vmem:[%s361 + $0x3c0] sm:$0xff]
                  %484 = vst [vmem:[%s362 + $0x1e0] sm:$0xff] %v483
                  %v485 = vld [vmem:[%s361 + $0x3d0] sm:$0xff]
                  %486 = vst [vmem:[%s362 + $0x1e8] sm:$0xff] %v485
                  %v487 = vld [vmem:[%s361 + $0x3e0] sm:$0xff]
                  %488 = vst [vmem:[%s362 + $0x1f0] sm:$0xff] %v487
                  %v489 = vld [vmem:[%s361 + $0x3f0] sm:$0xff]
                  %490 = vst [vmem:[%s362 + $0x1f8] sm:$0xff] %v489
                $region52: #{osnet_reid_forward.12} parent=46 // loop_footer
                  %s360 = sadd.s32 1, %s356
                $region53: #{osnet_reid_forward.12} parent=46 // loop_footer_branch
                  %355 = sbr.rel target = $region49
                $region54: #{osnet_reid_forward.12} parent=46 // loop_exit
                  _
              $region47: #{osnet_reid_forward.12} parent=31 // pred_fallthru
                _
              // Predicated region
              $region55: #{osnet_reid_forward.12} parent=31 // pred_check
                _
              $region56: #{osnet_reid_forward.12} parent=31 // pred_check_branch
                %492 = sbr.rel target = $region58
              $region57: #{osnet_reid_forward.12} parent=31 // pred_region
                _
              $region58: #{osnet_reid_forward.12} parent=31 // pred_fallthru
                _
            $region32: #{osnet_reid_forward.12} parent=27 // pred_fallthru
              _
            // Predicated region
            $region33: #{osnet_reid_forward.12} parent=27 // pred_check
              _
            $region34: #{osnet_reid_forward.12} parent=27 // pred_check_branch
              %215 = sbr.rel target = $region36
            $region35: #{osnet_reid_forward.12} parent=27 // pred_region
              loop: start=0, step=1, limit=1
              $region37: #{osnet_reid_forward.12} parent=35 // loop_pre_header
                _
              $region38: #{osnet_reid_forward.12} parent=35 // loop_header
                %s218 = sphi 0, %s222
                %p219 = scmp.ge.s32.totalorder %s218, 1
                %s223 = sphi %s209, %s209
                %s224 = sphi %s203, %s203
              $region39: #{osnet_reid_forward.12} parent=35 // loop_header_branch
                %221 = sbr.rel (%p219) target = $region43
              $region40: #{osnet_reid_forward.12} parent=35 // loop_body
                %v225 = vld [vmem:[%s223] sm:$0xff]
                %226 = vst [vmem:[%s224] sm:$0xff] %v225
                %v227 = vld [vmem:[%s223 + $0x10] sm:$0xff]
                %228 = vst [vmem:[%s224 + $0x8] sm:$0xff] %v227
                %v229 = vld [vmem:[%s223 + $0x20] sm:$0xff]
                %230 = vst [vmem:[%s224 + $0x10] sm:$0xff] %v229
                %v231 = vld [vmem:[%s223 + $0x30] sm:$0xff]
                %232 = vst [vmem:[%s224 + $0x18] sm:$0xff] %v231
                %v233 = vld [vmem:[%s223 + $0x40] sm:$0xff]
                %234 = vst [vmem:[%s224 + $0x20] sm:$0xff] %v233
                %v235 = vld [vmem:[%s223 + $0x50] sm:$0xff]
                %236 = vst [vmem:[%s224 + $0x28] sm:$0xff] %v235
                %v237 = vld [vmem:[%s223 + $0x60] sm:$0xff]
                %238 = vst [vmem:[%s224 + $0x30] sm:$0xff] %v237
                %v239 = vld [vmem:[%s223 + $0x70] sm:$0xff]
                %240 = vst [vmem:[%s224 + $0x38] sm:$0xff] %v239
                %v241 = vld [vmem:[%s223 + $0x80] sm:$0xff]
                %242 = vst [vmem:[%s224 + $0x40] sm:$0xff] %v241
                %v243 = vld [vmem:[%s223 + $0x90] sm:$0xff]
                %244 = vst [vmem:[%s224 + $0x48] sm:$0xff] %v243
                %v245 = vld [vmem:[%s223 + $0xa0] sm:$0xff]
                %246 = vst [vmem:[%s224 + $0x50] sm:$0xff] %v245
                %v247 = vld [vmem:[%s223 + $0xb0] sm:$0xff]
                %248 = vst [vmem:[%s224 + $0x58] sm:$0xff] %v247
                %v249 = vld [vmem:[%s223 + $0xc0] sm:$0xff]
                %250 = vst [vmem:[%s224 + $0x60] sm:$0xff] %v249
                %v251 = vld [vmem:[%s223 + $0xd0] sm:$0xff]
                %252 = vst [vmem:[%s224 + $0x68] sm:$0xff] %v251
                %v253 = vld [vmem:[%s223 + $0xe0] sm:$0xff]
                %254 = vst [vmem:[%s224 + $0x70] sm:$0xff] %v253
                %v255 = vld [vmem:[%s223 + $0xf0] sm:$0xff]
                %256 = vst [vmem:[%s224 + $0x78] sm:$0xff] %v255
                %v257 = vld [vmem:[%s223 + $0x100] sm:$0xff]
                %258 = vst [vmem:[%s224 + $0x80] sm:$0xff] %v257
                %v259 = vld [vmem:[%s223 + $0x110] sm:$0xff]
                %260 = vst [vmem:[%s224 + $0x88] sm:$0xff] %v259
                %v261 = vld [vmem:[%s223 + $0x120] sm:$0xff]
                %262 = vst [vmem:[%s224 + $0x90] sm:$0xff] %v261
                %v263 = vld [vmem:[%s223 + $0x130] sm:$0xff]
                %264 = vst [vmem:[%s224 + $0x98] sm:$0xff] %v263
                %v265 = vld [vmem:[%s223 + $0x140] sm:$0xff]
                %266 = vst [vmem:[%s224 + $0xa0] sm:$0xff] %v265
                %v267 = vld [vmem:[%s223 + $0x150] sm:$0xff]
                %268 = vst [vmem:[%s224 + $0xa8] sm:$0xff] %v267
                %v269 = vld [vmem:[%s223 + $0x160] sm:$0xff]
                %270 = vst [vmem:[%s224 + $0xb0] sm:$0xff] %v269
                %v271 = vld [vmem:[%s223 + $0x170] sm:$0xff]
                %272 = vst [vmem:[%s224 + $0xb8] sm:$0xff] %v271
                %v273 = vld [vmem:[%s223 + $0x180] sm:$0xff]
                %274 = vst [vmem:[%s224 + $0xc0] sm:$0xff] %v273
                %v275 = vld [vmem:[%s223 + $0x190] sm:$0xff]
                %276 = vst [vmem:[%s224 + $0xc8] sm:$0xff] %v275
                %v277 = vld [vmem:[%s223 + $0x1a0] sm:$0xff]
                %278 = vst [vmem:[%s224 + $0xd0] sm:$0xff] %v277
                %v279 = vld [vmem:[%s223 + $0x1b0] sm:$0xff]
                %280 = vst [vmem:[%s224 + $0xd8] sm:$0xff] %v279
                %v281 = vld [vmem:[%s223 + $0x1c0] sm:$0xff]
                %282 = vst [vmem:[%s224 + $0xe0] sm:$0xff] %v281
                %v283 = vld [vmem:[%s223 + $0x1d0] sm:$0xff]
                %284 = vst [vmem:[%s224 + $0xe8] sm:$0xff] %v283
                %v285 = vld [vmem:[%s223 + $0x1e0] sm:$0xff]
                %286 = vst [vmem:[%s224 + $0xf0] sm:$0xff] %v285
                %v287 = vld [vmem:[%s223 + $0x1f0] sm:$0xff]
                %288 = vst [vmem:[%s224 + $0xf8] sm:$0xff] %v287
                %v289 = vld [vmem:[%s223 + $0x200] sm:$0xff]
                %290 = vst [vmem:[%s224 + $0x100] sm:$0xff] %v289
                %v291 = vld [vmem:[%s223 + $0x210] sm:$0xff]
                %292 = vst [vmem:[%s224 + $0x108] sm:$0xff] %v291
                %v293 = vld [vmem:[%s223 + $0x220] sm:$0xff]
                %294 = vst [vmem:[%s224 + $0x110] sm:$0xff] %v293
                %v295 = vld [vmem:[%s223 + $0x230] sm:$0xff]
                %296 = vst [vmem:[%s224 + $0x118] sm:$0xff] %v295
                %v297 = vld [vmem:[%s223 + $0x240] sm:$0xff]
                %298 = vst [vmem:[%s224 + $0x120] sm:$0xff] %v297
                %v299 = vld [vmem:[%s223 + $0x250] sm:$0xff]
                %300 = vst [vmem:[%s224 + $0x128] sm:$0xff] %v299
                %v301 = vld [vmem:[%s223 + $0x260] sm:$0xff]
                %302 = vst [vmem:[%s224 + $0x130] sm:$0xff] %v301
                %v303 = vld [vmem:[%s223 + $0x270] sm:$0xff]
                %304 = vst [vmem:[%s224 + $0x138] sm:$0xff] %v303
                %v305 = vld [vmem:[%s223 + $0x280] sm:$0xff]
                %306 = vst [vmem:[%s224 + $0x140] sm:$0xff] %v305
                %v307 = vld [vmem:[%s223 + $0x290] sm:$0xff]
                %308 = vst [vmem:[%s224 + $0x148] sm:$0xff] %v307
                %v309 = vld [vmem:[%s223 + $0x2a0] sm:$0xff]
                %310 = vst [vmem:[%s224 + $0x150] sm:$0xff] %v309
                %v311 = vld [vmem:[%s223 + $0x2b0] sm:$0xff]
                %312 = vst [vmem:[%s224 + $0x158] sm:$0xff] %v311
                %v313 = vld [vmem:[%s223 + $0x2c0] sm:$0xff]
                %314 = vst [vmem:[%s224 + $0x160] sm:$0xff] %v313
                %v315 = vld [vmem:[%s223 + $0x2d0] sm:$0xff]
                %316 = vst [vmem:[%s224 + $0x168] sm:$0xff] %v315
                %v317 = vld [vmem:[%s223 + $0x2e0] sm:$0xff]
                %318 = vst [vmem:[%s224 + $0x170] sm:$0xff] %v317
                %v319 = vld [vmem:[%s223 + $0x2f0] sm:$0xff]
                %320 = vst [vmem:[%s224 + $0x178] sm:$0xff] %v319
                %v321 = vld [vmem:[%s223 + $0x300] sm:$0xff]
                %322 = vst [vmem:[%s224 + $0x180] sm:$0xff] %v321
                %v323 = vld [vmem:[%s223 + $0x310] sm:$0xff]
                %324 = vst [vmem:[%s224 + $0x188] sm:$0xff] %v323
                %v325 = vld [vmem:[%s223 + $0x320] sm:$0xff]
                %326 = vst [vmem:[%s224 + $0x190] sm:$0xff] %v325
                %v327 = vld [vmem:[%s223 + $0x330] sm:$0xff]
                %328 = vst [vmem:[%s224 + $0x198] sm:$0xff] %v327
                %v329 = vld [vmem:[%s223 + $0x340] sm:$0xff]
                %330 = vst [vmem:[%s224 + $0x1a0] sm:$0xff] %v329
                %v331 = vld [vmem:[%s223 + $0x350] sm:$0xff]
                %332 = vst [vmem:[%s224 + $0x1a8] sm:$0xff] %v331
                %v333 = vld [vmem:[%s223 + $0x360] sm:$0xff]
                %334 = vst [vmem:[%s224 + $0x1b0] sm:$0xff] %v333
                %v335 = vld [vmem:[%s223 + $0x370] sm:$0xff]
                %336 = vst [vmem:[%s224 + $0x1b8] sm:$0xff] %v335
                %v337 = vld [vmem:[%s223 + $0x380] sm:$0xff]
                %338 = vst [vmem:[%s224 + $0x1c0] sm:$0xff] %v337
                %v339 = vld [vmem:[%s223 + $0x390] sm:$0xff]
                %340 = vst [vmem:[%s224 + $0x1c8] sm:$0xff] %v339
                %v341 = vld [vmem:[%s223 + $0x3a0] sm:$0xff]
                %342 = vst [vmem:[%s224 + $0x1d0] sm:$0xff] %v341
                %v343 = vld [vmem:[%s223 + $0x3b0] sm:$0xff]
                %344 = vst [vmem:[%s224 + $0x1d8] sm:$0xff] %v343
                %v345 = vld [vmem:[%s223 + $0x3c0] sm:$0xff]
                %346 = vst [vmem:[%s224 + $0x1e0] sm:$0xff] %v345
                %v347 = vld [vmem:[%s223 + $0x3d0] sm:$0xff]
                %348 = vst [vmem:[%s224 + $0x1e8] sm:$0xff] %v347
                %v349 = vld [vmem:[%s223 + $0x3e0] sm:$0xff]
                %350 = vst [vmem:[%s224 + $0x1f0] sm:$0xff] %v349
                %v351 = vld [vmem:[%s223 + $0x3f0] sm:$0xff]
                %352 = vst [vmem:[%s224 + $0x1f8] sm:$0xff] %v351
              $region41: #{osnet_reid_forward.12} parent=35 // loop_footer
                %s222 = sadd.s32 1, %s218
              $region42: #{osnet_reid_forward.12} parent=35 // loop_footer_branch
                %217 = sbr.rel target = $region38
              $region43: #{osnet_reid_forward.12} parent=35 // loop_exit
                _
            $region36: #{osnet_reid_forward.12} parent=27 // pred_fallthru
              _
          $region28: #{osnet_reid_forward.12} parent=23 // pred_fallthru
            _
          %493 = vnop
        $region24: #{osnet_reid_forward.12} parent=19 // pred_fallthru
          _
        // Predicated region
        $region59: #{osnet_reid_forward.12} parent=19 // pred_check
          %p494 = pneg %p105
        $region60: #{osnet_reid_forward.12} parent=19 // pred_check_branch
          %496 = sbr.rel (%p494) target = $region62
        $region61: #{osnet_reid_forward.12} parent=19 // pred_region
          %s497 = smul.u32 2, %s18
          %p498 = scmp.lt.s32.totalorder %s497, 3
          %s499 = scalar_select %p498, %s497, 3
          %s500 = scalar_lea.vmem %s2, %s499
          %s501 = smul.u32 2, %s18
        $region62: #{osnet_reid_forward.12} parent=19 // pred_fallthru
          _
        // Predicated region
        $region63: #{osnet_reid_forward.12} parent=19 // pred_check
          %p502 = pneg %p131
        $region64: #{osnet_reid_forward.12} parent=19 // pred_check_branch
          %504 = sbr.rel (%p502) target = $region66
        $region65: #{osnet_reid_forward.12} parent=19 // pred_region
          %s505 = smul.u32 2, %s18
          %p506 = scmp.lt.s32.totalorder %s505, 3
          %s507 = scalar_select %p506, %s505, 3
          %s508 = scalar_lea.vmem %s3, %s507
          %s509 = smul.u32 2, %s18
        $region66: #{osnet_reid_forward.12} parent=19 // pred_fallthru
          _
      $region20: #{osnet_reid_forward.12} parent=5 // pred_fallthru
        _
      %p510 = scmp.le.s32.totalorder 1, %s10
      %p511 = scmp.lt.s32.totalorder %s10, 3
      %p512 = pnand %p510, %p511
      %p513 = pneg %p512
      // Predicated region
      $region67: #{osnet_reid_forward.12} parent=5 // pred_check
        _
      $region68: #{osnet_reid_forward.12} parent=5 // pred_check_branch
        %515 = sbr.rel (%p512) target = $region70
      $region69: #{osnet_reid_forward.12} parent=5 // pred_region
        %s516 = ssub.s32 %s10, 1
        %s517 = sand.u32 %s72, 1
        %s518 = sand.u32 %s72, 1
        %s519 = smul.addr %s518, 512
        %s520 = scalar_lea.vmem [#allocation3], %s519
        // Predicated region
        $region71: #{osnet_reid_forward.12} parent=69 // pred_check
          %p521 = pneg %p85
        $region72: #{osnet_reid_forward.12} parent=69 // pred_check_branch
          %523 = sbr.rel (%p521) target = $region74
        $region73: #{osnet_reid_forward.12} parent=69 // pred_region
          _
        $region74: #{osnet_reid_forward.12} parent=69 // pred_fallthru
          _
        %s524 = smul.u32 4, %s22
        %p525 = scmp.lt.s32.totalorder %s20, 0
        %s526 = scalar_select %p525, %s20, 0
        %p527 = scmp.lt.s32.totalorder %s524, 3
        %s528 = scalar_select %p527, %s524, 3
        %s529 = smul.addr %s526, 4
        %s530 = sadd.s32 %s528, %s529
        %s531 = smul.addr %s530, 4
        %s532 = scalar_lea.vmem %s0, %s531
        %p533 = pneg %p57
        %p534 = pneg %p54
        %s535 = sand.u32 %s72, 1
        %s536 = sand.u32 %s72, 1
        %s537 = smul.addr %s536, 512
        %s538 = scalar_lea.vmem [#allocation3], %s537
        %p539 = pneg %p85
        %p540 = pneg %p82
        %s541 = smul.u32 2, %s21
        %p542 = scmp.lt.s32.totalorder %s541, 3
        %s543 = scalar_select %p542, %s541, 3
        %s544 = scalar_lea.vmem %s2, %s543
        %p545 = pneg %p111
        %p546 = pneg %p108
        %s547 = smul.u32 2, %s21
        %p548 = scmp.lt.s32.totalorder %s547, 3
        %s549 = scalar_select %p548, %s547, 3
        %s550 = scalar_lea.vmem %s3, %s549
        %p551 = pneg %p137
        %p552 = pneg %p134
        %p553 = pneg %p165
        %p554 = pneg %p162
        %s555 = smul.u32 2, %s21
        %p556 = scmp.lt.s32.totalorder %s20, 0
        %s557 = scalar_select %p556, %s20, 0
        %p558 = scmp.lt.s32.totalorder %s555, 3
        %s559 = scalar_select %p558, %s555, 3
        %s560 = smul.addr %s557, 4
        %s561 = sadd.s32 %s559, %s560
        %s562 = smul.addr %s561, 8
        %s563 = scalar_lea.vmem %s4, %s562
        %s564 = smul.u32 4, %s22
        %p565 = scmp.lt.s32.totalorder %s20, 0
        %s566 = scalar_select %p565, %s20, 0
        %p567 = scmp.lt.s32.totalorder %s564, 3
        %s568 = scalar_select %p567, %s564, 3
        %s569 = smul.addr %s566, 4
        %s570 = sadd.s32 %s568, %s569
        %s571 = smul.addr %s570, 4
        %s572 = scalar_lea.vmem %s0, %s571
        %s573 = smul.u32 4, %s22
        %s574 = smul.u32 64, %s22
        %s575 = smul.u32 2, %s21
        %s576 = smul.u32 2, %s21
        %p577 = scmp.lt.s32.totalorder %s576, 3
        %s578 = scalar_select %p577, %s576, 3
        %s579 = scalar_lea.vmem %s2, %s578
        %s580 = smul.u32 2, %s21
        %s581 = smul.u32 2, %s21
        %p582 = scmp.lt.s32.totalorder %s581, 3
        %s583 = scalar_select %p582, %s581, 3
        %s584 = scalar_lea.vmem %s3, %s583
        %s585 = smul.u32 2, %s21
        %s586 = smul.u32 2, %s21
        %p587 = scmp.lt.s32.totalorder %s20, 0
        %s588 = scalar_select %p587, %s20, 0
        %p589 = scmp.lt.s32.totalorder %s586, 3
        %s590 = scalar_select %p589, %s586, 3
        %s591 = smul.addr %s588, 4
        %s592 = sadd.s32 %s590, %s591
        %s593 = smul.addr %s592, 8
        %s594 = scalar_lea.vmem %s4, %s593
        %s595 = smul.u32 2, %s21
        %p596 = scmp.eq.s32.totalorder %s22, 0
        // Predicated region
        $region75: #{osnet_reid_forward.12} parent=69 // pred_check
          %p597 = pneg %p596
        $region76: #{osnet_reid_forward.12} parent=69 // pred_check_branch
          %599 = sbr.rel (%p597) target = $region78
        $region77: #{osnet_reid_forward.12} parent=69 // pred_region
          %600 = vst [vmem:[#allocation2] sm:$0xff] 0.0
          %601 = vst [vmem:[#allocation2 + $0x8] sm:$0xff] 0.0
        $region78: #{osnet_reid_forward.12} parent=69 // pred_fallthru
          _
        %v602 = vld [vmem:[#allocation2] sm:$0xff]
        %v603 = vld [vmem:[#allocation2 + $0x8] sm:$0xff]
        %v604 = vld [vmem:[%s572] sm:$0xff]
        %v605 = vld [vmem:[%s572 + $0x8] sm:$0xff]
        %v606 = vld [vmem:[%s520] sm:$0xff]
        %v607 = vld [vmem:[%s520 + $0x8] sm:$0xff]
        %v608 = vld [vmem:[%s520 + $0x10] sm:$0xff]
        %v609 = vld [vmem:[%s520 + $0x18] sm:$0xff]
        %v610 = vld [vmem:[%s520 + $0x20] sm:$0xff]
        %v611 = vld [vmem:[%s520 + $0x28] sm:$0xff]
        %v612 = vld [vmem:[%s520 + $0x30] sm:$0xff]
        %v613 = vld [vmem:[%s520 + $0x38] sm:$0xff]
        %v614 = vld [vmem:[%s520 + $0x40] sm:$0xff]
        %v615 = vld [vmem:[%s520 + $0x48] sm:$0xff]
        %v616 = vld [vmem:[%s520 + $0x50] sm:$0xff]
        %v617 = vld [vmem:[%s520 + $0x58] sm:$0xff]
        %v618 = vld [vmem:[%s520 + $0x60] sm:$0xff]
        %v619 = vld [vmem:[%s520 + $0x68] sm:$0xff]
        %v620 = vld [vmem:[%s520 + $0x70] sm:$0xff]
        %v621 = vld [vmem:[%s520 + $0x78] sm:$0xff]
        %v622 = vld [vmem:[%s520 + $0x80] sm:$0xff]
        %v623 = vld [vmem:[%s520 + $0x88] sm:$0xff]
        %v624 = vld [vmem:[%s520 + $0x90] sm:$0xff]
        %v625 = vld [vmem:[%s520 + $0x98] sm:$0xff]
        %v626 = vld [vmem:[%s520 + $0xa0] sm:$0xff]
        %v627 = vld [vmem:[%s520 + $0xa8] sm:$0xff]
        %v628 = vld [vmem:[%s520 + $0xb0] sm:$0xff]
        %v629 = vld [vmem:[%s520 + $0xb8] sm:$0xff]
        %v630 = vld [vmem:[%s520 + $0xc0] sm:$0xff]
        %v631 = vld [vmem:[%s520 + $0xc8] sm:$0xff]
        %v632 = vld [vmem:[%s520 + $0xd0] sm:$0xff]
        %v633 = vld [vmem:[%s520 + $0xd8] sm:$0xff]
        %v634 = vld [vmem:[%s520 + $0xe0] sm:$0xff]
        %v635 = vld [vmem:[%s520 + $0xe8] sm:$0xff]
        %v636 = vld [vmem:[%s520 + $0xf0] sm:$0xff]
        %v637 = vld [vmem:[%s520 + $0xf8] sm:$0xff]
        %v638 = vld [vmem:[%s520 + $0x100] sm:$0xff]
        %v639 = vld [vmem:[%s520 + $0x108] sm:$0xff]
        %v640 = vld [vmem:[%s520 + $0x110] sm:$0xff]
        %v641 = vld [vmem:[%s520 + $0x118] sm:$0xff]
        %v642 = vld [vmem:[%s520 + $0x120] sm:$0xff]
        %v643 = vld [vmem:[%s520 + $0x128] sm:$0xff]
        %v644 = vld [vmem:[%s520 + $0x130] sm:$0xff]
        %v645 = vld [vmem:[%s520 + $0x138] sm:$0xff]
        %v646 = vld [vmem:[%s520 + $0x140] sm:$0xff]
        %v647 = vld [vmem:[%s520 + $0x148] sm:$0xff]
        %v648 = vld [vmem:[%s520 + $0x150] sm:$0xff]
        %v649 = vld [vmem:[%s520 + $0x158] sm:$0xff]
        %v650 = vld [vmem:[%s520 + $0x160] sm:$0xff]
        %v651 = vld [vmem:[%s520 + $0x168] sm:$0xff]
        %v652 = vld [vmem:[%s520 + $0x170] sm:$0xff]
        %v653 = vld [vmem:[%s520 + $0x178] sm:$0xff]
        %v654 = vld [vmem:[%s520 + $0x180] sm:$0xff]
        %v655 = vld [vmem:[%s520 + $0x188] sm:$0xff]
        %v656 = vld [vmem:[%s520 + $0x190] sm:$0xff]
        %v657 = vld [vmem:[%s520 + $0x198] sm:$0xff]
        %v658 = vld [vmem:[%s520 + $0x1a0] sm:$0xff]
        %v659 = vld [vmem:[%s520 + $0x1a8] sm:$0xff]
        %v660 = vld [vmem:[%s520 + $0x1b0] sm:$0xff]
        %v661 = vld [vmem:[%s520 + $0x1b8] sm:$0xff]
        %v662 = vld [vmem:[%s520 + $0x1c0] sm:$0xff]
        %v663 = vld [vmem:[%s520 + $0x1c8] sm:$0xff]
        %v664 = vld [vmem:[%s520 + $0x1d0] sm:$0xff]
        %v665 = vld [vmem:[%s520 + $0x1d8] sm:$0xff]
        %v666 = vld [vmem:[%s520 + $0x1e0] sm:$0xff]
        %v667 = vld [vmem:[%s520 + $0x1e8] sm:$0xff]
        %v668 = vld [vmem:[%s520 + $0x1f0] sm:$0xff]
        %v669 = vld [vmem:[%s520 + $0x1f8] sm:$0xff]
        %v672 = vunpack.c.l.b16 %v604
        %v673 = vunpack.c.h.b16 %v604
        %v674 = vunpack.c.l.b16 %v605
        %v675 = vunpack.c.h.b16 %v605
        %v676 = vpack.c.b16 %v672, %v672
        %v677 = vpack.c.b16 %v673, %v673
        %v678 = vpack.c.b16 %v674, %v674
        %v679 = vpack.c.b16 %v675, %v675
        %v748 = vunpack.c.l.b16 %v606
        %v749 = vunpack.c.h.b16 %v606
        %v750 = vunpack.c.l.b16 %v607
        %v751 = vunpack.c.h.b16 %v607
        %v752 = vunpack.c.l.b16 %v608
        %v753 = vunpack.c.h.b16 %v608
        %v754 = vunpack.c.l.b16 %v609
        %v755 = vunpack.c.h.b16 %v609
        %v756 = vunpack.c.l.b16 %v610
        %v757 = vunpack.c.h.b16 %v610
        %v758 = vunpack.c.l.b16 %v611
        %v759 = vunpack.c.h.b16 %v611
        %v760 = vunpack.c.l.b16 %v612
        %v761 = vunpack.c.h.b16 %v612
        %v762 = vunpack.c.l.b16 %v613
        %v763 = vunpack.c.h.b16 %v613
        %v764 = vunpack.c.l.b16 %v614
        %v765 = vunpack.c.h.b16 %v614
        %v766 = vunpack.c.l.b16 %v615
        %v767 = vunpack.c.h.b16 %v615
        %v768 = vunpack.c.l.b16 %v616
        %v769 = vunpack.c.h.b16 %v616
        %v770 = vunpack.c.l.b16 %v617
        %v771 = vunpack.c.h.b16 %v617
        %v772 = vunpack.c.l.b16 %v618
        %v773 = vunpack.c.h.b16 %v618
        %v774 = vunpack.c.l.b16 %v619
        %v775 = vunpack.c.h.b16 %v619
        %v776 = vunpack.c.l.b16 %v620
        %v777 = vunpack.c.h.b16 %v620
        %v778 = vunpack.c.l.b16 %v621
        %v779 = vunpack.c.h.b16 %v621
        %v780 = vunpack.c.l.b16 %v622
        %v781 = vunpack.c.h.b16 %v622
        %v782 = vunpack.c.l.b16 %v623
        %v783 = vunpack.c.h.b16 %v623
        %v784 = vunpack.c.l.b16 %v624
        %v785 = vunpack.c.h.b16 %v624
        %v786 = vunpack.c.l.b16 %v625
        %v787 = vunpack.c.h.b16 %v625
        %v788 = vunpack.c.l.b16 %v626
        %v789 = vunpack.c.h.b16 %v626
        %v790 = vunpack.c.l.b16 %v627
        %v791 = vunpack.c.h.b16 %v627
        %v792 = vunpack.c.l.b16 %v628
        %v793 = vunpack.c.h.b16 %v628
        %v794 = vunpack.c.l.b16 %v629
        %v795 = vunpack.c.h.b16 %v629
        %v796 = vunpack.c.l.b16 %v630
        %v797 = vunpack.c.h.b16 %v630
        %v798 = vunpack.c.l.b16 %v631
        %v799 = vunpack.c.h.b16 %v631
        %v800 = vunpack.c.l.b16 %v632
        %v801 = vunpack.c.h.b16 %v632
        %v802 = vunpack.c.l.b16 %v633
        %v803 = vunpack.c.h.b16 %v633
        %v804 = vunpack.c.l.b16 %v634
        %v805 = vunpack.c.h.b16 %v634
        %v806 = vunpack.c.l.b16 %v635
        %v807 = vunpack.c.h.b16 %v635
        %v808 = vunpack.c.l.b16 %v636
        %v809 = vunpack.c.h.b16 %v636
        %v810 = vunpack.c.l.b16 %v637
        %v811 = vunpack.c.h.b16 %v637
        %v812 = vunpack.c.l.b16 %v638
        %v813 = vunpack.c.h.b16 %v638
        %v814 = vunpack.c.l.b16 %v639
        %v815 = vunpack.c.h.b16 %v639
        %v816 = vunpack.c.l.b16 %v640
        %v817 = vunpack.c.h.b16 %v640
        %v818 = vunpack.c.l.b16 %v641
        %v819 = vunpack.c.h.b16 %v641
        %v820 = vunpack.c.l.b16 %v642
        %v821 = vunpack.c.h.b16 %v642
        %v822 = vunpack.c.l.b16 %v643
        %v823 = vunpack.c.h.b16 %v643
        %v824 = vunpack.c.l.b16 %v644
        %v825 = vunpack.c.h.b16 %v644
        %v826 = vunpack.c.l.b16 %v645
        %v827 = vunpack.c.h.b16 %v645
        %v828 = vunpack.c.l.b16 %v646
        %v829 = vunpack.c.h.b16 %v646
        %v830 = vunpack.c.l.b16 %v647
        %v831 = vunpack.c.h.b16 %v647
        %v832 = vunpack.c.l.b16 %v648
        %v833 = vunpack.c.h.b16 %v648
        %v834 = vunpack.c.l.b16 %v649
        %v835 = vunpack.c.h.b16 %v649
        %v836 = vunpack.c.l.b16 %v650
        %v837 = vunpack.c.h.b16 %v650
        %v838 = vunpack.c.l.b16 %v651
        %v839 = vunpack.c.h.b16 %v651
        %v840 = vunpack.c.l.b16 %v652
        %v841 = vunpack.c.h.b16 %v652
        %v842 = vunpack.c.l.b16 %v653
        %v843 = vunpack.c.h.b16 %v653
        %v844 = vunpack.c.l.b16 %v654
        %v845 = vunpack.c.h.b16 %v654
        %v846 = vunpack.c.l.b16 %v655
        %v847 = vunpack.c.h.b16 %v655
        %v848 = vunpack.c.l.b16 %v656
        %v849 = vunpack.c.h.b16 %v656
        %v850 = vunpack.c.l.b16 %v657
        %v851 = vunpack.c.h.b16 %v657
        %v852 = vunpack.c.l.b16 %v658
        %v853 = vunpack.c.h.b16 %v658
        %v854 = vunpack.c.l.b16 %v659
        %v855 = vunpack.c.h.b16 %v659
        %v856 = vunpack.c.l.b16 %v660
        %v857 = vunpack.c.h.b16 %v660
        %v858 = vunpack.c.l.b16 %v661
        %v859 = vunpack.c.h.b16 %v661
        %v860 = vunpack.c.l.b16 %v662
        %v861 = vunpack.c.h.b16 %v662
        %v862 = vunpack.c.l.b16 %v663
        %v863 = vunpack.c.h.b16 %v663
        %v864 = vunpack.c.l.b16 %v664
        %v865 = vunpack.c.h.b16 %v664
        %v866 = vunpack.c.l.b16 %v665
        %v867 = vunpack.c.h.b16 %v665
        %v868 = vunpack.c.l.b16 %v666
        %v869 = vunpack.c.h.b16 %v666
        %v870 = vunpack.c.l.b16 %v667
        %v871 = vunpack.c.h.b16 %v667
        %v872 = vunpack.c.l.b16 %v668
        %v873 = vunpack.c.h.b16 %v668
        %v874 = vunpack.c.l.b16 %v669
        %v875 = vunpack.c.h.b16 %v669
        %v876 = vpack.c.b16 %v750, %v748
        %v877 = vpack.c.b16 %v751, %v749
        %v878 = vpack.c.b16 %v754, %v752
        %v879 = vpack.c.b16 %v755, %v753
        %v880 = vpack.c.b16 %v758, %v756
        %v881 = vpack.c.b16 %v759, %v757
        %v882 = vpack.c.b16 %v762, %v760
        %v883 = vpack.c.b16 %v763, %v761
        %v884 = vpack.c.b16 %v766, %v764
        %v885 = vpack.c.b16 %v767, %v765
        %v886 = vpack.c.b16 %v770, %v768
        %v887 = vpack.c.b16 %v771, %v769
        %v888 = vpack.c.b16 %v774, %v772
        %v889 = vpack.c.b16 %v775, %v773
        %v890 = vpack.c.b16 %v778, %v776
        %v891 = vpack.c.b16 %v779, %v777
        %v892 = vpack.c.b16 %v782, %v780
        %v893 = vpack.c.b16 %v783, %v781
        %v894 = vpack.c.b16 %v786, %v784
        %v895 = vpack.c.b16 %v787, %v785
        %v896 = vpack.c.b16 %v790, %v788
        %v897 = vpack.c.b16 %v791, %v789
        %v898 = vpack.c.b16 %v794, %v792
        %v899 = vpack.c.b16 %v795, %v793
        %v900 = vpack.c.b16 %v798, %v796
        %v901 = vpack.c.b16 %v799, %v797
        %v902 = vpack.c.b16 %v802, %v800
        %v903 = vpack.c.b16 %v803, %v801
        %v904 = vpack.c.b16 %v806, %v804
        %v905 = vpack.c.b16 %v807, %v805
        %v906 = vpack.c.b16 %v810, %v808
        %v907 = vpack.c.b16 %v811, %v809
        %v908 = vpack.c.b16 %v814, %v812
        %v909 = vpack.c.b16 %v815, %v813
        %v910 = vpack.c.b16 %v818, %v816
        %v911 = vpack.c.b16 %v819, %v817
        %v912 = vpack.c.b16 %v822, %v820
        %v913 = vpack.c.b16 %v823, %v821
        %v914 = vpack.c.b16 %v826, %v824
        %v915 = vpack.c.b16 %v827, %v825
        %v916 = vpack.c.b16 %v830, %v828
        %v917 = vpack.c.b16 %v831, %v829
        %v918 = vpack.c.b16 %v834, %v832
        %v919 = vpack.c.b16 %v835, %v833
        %v920 = vpack.c.b16 %v838, %v836
        %v921 = vpack.c.b16 %v839, %v837
        %v922 = vpack.c.b16 %v842, %v840
        %v923 = vpack.c.b16 %v843, %v841
        %v924 = vpack.c.b16 %v846, %v844
        %v925 = vpack.c.b16 %v847, %v845
        %v926 = vpack.c.b16 %v850, %v848
        %v927 = vpack.c.b16 %v851, %v849
        %v928 = vpack.c.b16 %v854, %v852
        %v929 = vpack.c.b16 %v855, %v853
        %v930 = vpack.c.b16 %v858, %v856
        %v931 = vpack.c.b16 %v859, %v857
        %v932 = vpack.c.b16 %v862, %v860
        %v933 = vpack.c.b16 %v863, %v861
        %v934 = vpack.c.b16 %v866, %v864
        %v935 = vpack.c.b16 %v867, %v865
        %v936 = vpack.c.b16 %v870, %v868
        %v937 = vpack.c.b16 %v871, %v869
        %v938 = vpack.c.b16 %v874, %v872
        %v939 = vpack.c.b16 %v875, %v873
        %1004 = vmatprep.subr.bf16.mxu0 %v877
        %1005 = vmatpush1.bf16.msra.mxu0 %v876
        %1006 = vmatprep.subr.bf16.mxu0 %v879
        %1007 = vmatpush1.bf16.msra.mxu0 %v878
        %1008 = vmatprep.subr.bf16.mxu0 %v881
        %1009 = vmatpush1.bf16.msra.mxu0 %v880
        %1010 = vmatprep.subr.bf16.mxu0 %v883
        %1011 = vmatpush1.bf16.msra.mxu0 %v882
        %1012 = vmatprep.subr.bf16.mxu0 %v885
        %1013 = vmatpush1.bf16.msra.mxu0 %v884
        %1014 = vmatprep.subr.bf16.mxu0 %v887
        %1015 = vmatpush1.bf16.msra.mxu0 %v886
        %1016 = vmatprep.subr.bf16.mxu0 %v889
        %1017 = vmatpush1.bf16.msra.mxu0 %v888
        %1018 = vmatprep.subr.bf16.mxu0 %v891
        %1019 = vmatpush1.bf16.msra.mxu0 %v890
        %1020 = vmatprep.subr.bf16.mxu0 %v893
        %1021 = vmatpush1.bf16.msra.mxu0 %v892
        %1022 = vmatprep.subr.bf16.mxu0 %v895
        %1023 = vmatpush1.bf16.msra.mxu0 %v894
        %1024 = vmatprep.subr.bf16.mxu0 %v897
        %1025 = vmatpush1.bf16.msra.mxu0 %v896
        %1026 = vmatprep.subr.bf16.mxu0 %v899
        %1027 = vmatpush1.bf16.msra.mxu0 %v898
        %1028 = vmatprep.subr.bf16.mxu0 %v901
        %1029 = vmatpush1.bf16.msra.mxu0 %v900
        %1030 = vmatprep.subr.bf16.mxu0 %v903
        %1031 = vmatpush1.bf16.msra.mxu0 %v902
        %1032 = vmatprep.subr.bf16.mxu0 %v905
        %1033 = vmatpush1.bf16.msra.mxu0 %v904
        %1034 = vmatprep.subr.bf16.mxu0 %v907
        %1035 = vmatpush1.bf16.msra.mxu0 %v906
        %1036 = vmatprep.mubr.bf16.mxu0 %v677
        %1037 = vmatmul.mubr.bf16.gmra.mrb[0].mxu0 %v676
        %v1038 = vpop.f32.mrb[0].mxu0
        %v1039 = vadd.f32 0.0, %v1038
        %v1040 = vpop.f32.mrb[0].mxu0
        %v1041 = vadd.f32 0.0, %v1040
        %v1042 = vpop.f32.mrb[0].mxu0
        %v1043 = vpop.f32.mrb[0].mxu0
        %1044 = vdwg.mxu0
        %1045 = vmatprep.subr.bf16.mxu0 %v909
        %1046 = vmatpush1.bf16.msra.mxu0 %v908
        %1047 = vmatprep.subr.bf16.mxu0 %v911
        %1048 = vmatpush1.bf16.msra.mxu0 %v910
        %1049 = vmatprep.subr.bf16.mxu0 %v913
        %1050 = vmatpush1.bf16.msra.mxu0 %v912
        %1051 = vmatprep.subr.bf16.mxu0 %v915
        %1052 = vmatpush1.bf16.msra.mxu0 %v914
        %1053 = vmatprep.subr.bf16.mxu0 %v917
        %1054 = vmatpush1.bf16.msra.mxu0 %v916
        %1055 = vmatprep.subr.bf16.mxu0 %v919
        %1056 = vmatpush1.bf16.msra.mxu0 %v918
        %1057 = vmatprep.subr.bf16.mxu0 %v921
        %1058 = vmatpush1.bf16.msra.mxu0 %v920
        %1059 = vmatprep.subr.bf16.mxu0 %v923
        %1060 = vmatpush1.bf16.msra.mxu0 %v922
        %1061 = vmatprep.subr.bf16.mxu0 %v925
        %1062 = vmatpush1.bf16.msra.mxu0 %v924
        %1063 = vmatprep.subr.bf16.mxu0 %v927
        %1064 = vmatpush1.bf16.msra.mxu0 %v926
        %1065 = vmatprep.subr.bf16.mxu0 %v929
        %1066 = vmatpush1.bf16.msra.mxu0 %v928
        %1067 = vmatprep.subr.bf16.mxu0 %v931
        %1068 = vmatpush1.bf16.msra.mxu0 %v930
        %1069 = vmatprep.subr.bf16.mxu0 %v933
        %1070 = vmatpush1.bf16.msra.mxu0 %v932
        %1071 = vmatprep.subr.bf16.mxu0 %v935
        %1072 = vmatpush1.bf16.msra.mxu0 %v934
        %1073 = vmatprep.subr.bf16.mxu0 %v937
        %1074 = vmatpush1.bf16.msra.mxu0 %v936
        %1075 = vmatprep.subr.bf16.mxu0 %v939
        %1076 = vmatpush1.bf16.msra.mxu0 %v938
        %1077 = vmatprep.mubr.bf16.mxu0 %v679
        %1078 = vmatmul.mubr.bf16.gmra.mrb[0].mxu0 %v678
        %v1079 = vpop.f32.mrb[0].mxu0
        %v1080 = vadd.f32 %v1039, %v1079
        %v1081 = vpop.f32.mrb[0].mxu0
        %v1082 = vadd.f32 %v1041, %v1081
        %v1083 = vpop.f32.mrb[0].mxu0
        %v1084 = vpop.f32.mrb[0].mxu0
        %1085 = vdwg.mxu0
        %v1086 = vadd.f32 %v602, %v1080
        %v1087 = vadd.f32 %v603, %v1082
        %1088 = vst [vmem:[#allocation2] sm:$0xff] %v1086
        %1089 = vst [vmem:[#allocation2 + $0x8] sm:$0xff] %v1087
        // Predicated region
        $region79: #{osnet_reid_forward.12} parent=69 // pred_check
          %p1090 = pneg %p596
        $region80: #{osnet_reid_forward.12} parent=69 // pred_check_branch
          %1092 = sbr.rel (%p1090) target = $region82
        $region81: #{osnet_reid_forward.12} parent=69 // pred_region
          %v1093 = vld [vmem:[#allocation2] sm:$0xff]
          %v1094 = vld [vmem:[#allocation2 + $0x8] sm:$0xff]
          %v1095 = vld [vmem:[%s579] sm:$0x3]
          %v1097 = vlaneseq
          %v1098 = vshrl.u32 %v1097, 7
          %v1099 = vsub.s32 0, %v1098
          %v1100 = vrot.slane %v1095, %v1099
          %v1101 = vlaneseq
          %v1102 = vshrl.u32 %v1101, 7
          %v1103 = vsub.s32 1, %v1102
          %v1104 = vrot.slane %v1095, %v1103
          %v1107 = vmul.f32 %v1093, %v1100
          %v1108 = vmul.f32 %v1094, %v1104
          %v1109 = vld [vmem:[%s584] sm:$0x3]
          %v1111 = vlaneseq
          %v1112 = vshrl.u32 %v1111, 7
          %v1113 = vsub.s32 0, %v1112
          %v1114 = vrot.slane %v1109, %v1113
          %v1115 = vlaneseq
          %v1116 = vshrl.u32 %v1115, 7
          %v1117 = vsub.s32 1, %v1116
          %v1118 = vrot.slane %v1109, %v1117
          %v1121 = vadd.f32 %v1107, %v1114
          %v1122 = vadd.f32 %v1108, %v1118
          %v1123 = vmax.f32 %v1121, 0.0
          %v1124 = vmax.f32 %v1122, 0.0
          %1125 = vst [vmem:[%s594] sm:$0xff] %v1123
          %1126 = vst [vmem:[%s594 + $0x8] sm:$0xff] %v1124
        $region82: #{osnet_reid_forward.12} parent=69 // pred_fallthru
          _
        %s1127 = smul.u32 2, %s21
        %p1128 = scmp.lt.s32.totalorder %s20, 0
        %s1129 = scalar_select %p1128, %s20, 0
        %p1130 = scmp.lt.s32.totalorder %s1127, 3
        %s1131 = scalar_select %p1130, %s1127, 3
        %s1132 = smul.addr %s1129, 4
        %s1133 = sadd.s32 %s1131, %s1132
        %s1134 = smul.addr %s1133, 8
        %s1135 = scalar_lea.vmem %s4, %s1134
        // Predicated region
        $region83: #{osnet_reid_forward.12} parent=69 // pred_check
          %p1136 = pneg %p162
        $region84: #{osnet_reid_forward.12} parent=69 // pred_check_branch
          %1138 = sbr.rel (%p1136) target = $region86
        $region85: #{osnet_reid_forward.12} parent=69 // pred_region
          %s1139 = smul.u32 2, %s21
        $region86: #{osnet_reid_forward.12} parent=69 // pred_fallthru
          _
      $region70: #{osnet_reid_forward.12} parent=5 // pred_fallthru
        _
      %p1140 = scmp.le.s32.totalorder 2, %s10
      // Predicated region
      $region87: #{osnet_reid_forward.12} parent=5 // pred_check
        %p1141 = pneg %p1140
      $region88: #{osnet_reid_forward.12} parent=5 // pred_check_branch
        %1143 = sbr.rel (%p1141) target = $region90
      $region89: #{osnet_reid_forward.12} parent=5 // pred_region
        %s1144 = ssub.s32 %s10, 2
        // Predicated region
        $region91: #{osnet_reid_forward.12} parent=89 // pred_check
          %p1145 = pneg %p168
        $region92: #{osnet_reid_forward.12} parent=89 // pred_check_branch
          %1147 = sbr.rel (%p1145) target = $region94
        $region93: #{osnet_reid_forward.12} parent=89 // pred_region
          %s1148 = smul.u32 2, %s24
          %p1149 = scmp.lt.s32.totalorder %s23, 0
          %s1150 = scalar_select %p1149, %s23, 0
          %p1151 = scmp.lt.s32.totalorder %s1148, 3
          %s1152 = scalar_select %p1151, %s1148, 3
          %s1153 = smul.addr %s1150, 4
          %s1154 = sadd.s32 %s1152, %s1153
          %s1155 = smul.addr %s1154, 8
          %s1156 = scalar_lea.vmem %s4, %s1155
        $region94: #{osnet_reid_forward.12} parent=89 // pred_fallthru
          _
      $region90: #{osnet_reid_forward.12} parent=5 // pred_fallthru
        _
    $region6: #{osnet_reid_forward.12} parent=1 // loop_footer
      %s14 = sadd.s32 1, %s10
    $region7: #{osnet_reid_forward.12} parent=1 // loop_footer_branch
      %9 = sbr.rel target = $region3
    $region8: #{osnet_reid_forward.12} parent=1 // loop_exit
      _

// kernel: osnet_reid_forward.13
$region0: #{osnet_reid_forward.13}
  #allocation0 [shape = 'u32[]', space=smem, size = 0x4, offset = 0x4, fixed_abs, tag = 'smem constant byte address 0x4 - core index']
  #allocation1 [shape = 'u32[144,128]{1,0:T(1,128)}', space=vmem, size = 0x12000, scoped, tag = 'internal scratch']
  %s0 = inlined_call_operand.vmem [shape: f32[2,4,512], index: 0, kind: input, shape index: {}]
  %s1 = inlined_call_operand.vmem [shape: f32[1,512], index: 1, kind: input, shape index: {}]
  %s2 = inlined_call_operand.vmem [shape: f32[1,512], index: 2, kind: input, shape index: {}]
  %s3 = inlined_call_operand.hbm [shape: f32[2,512], index: 3, kind: output, shape index: {}]
  %s4 = sld [smem:[#allocation0]]
  $region22: #{osnet_reid_forward.13} parent=0
    _
  %s6 = ssub.s32 1, %s4
  %s7 = scalar_select 0, %s6, %s4
  $region1: #{osnet_reid_forward.13} parent=0
    #allocation2 [shape = 'u8[4096]{0}', space=vmem, size = 0x1000, scoped, tag = 'output window, operand 0, single buffered']
    #allocation3 [shape = 's32[1]{0}', space=sflag, size = 0x4, scoped, tag = 'scoped memory for osnet_reid_forward.13']
    %8 = vsyncpa [#allocation3], 0
    // Predicated region
    $region2: #{osnet_reid_forward.13} parent=1 // pred_check
      _
    $region3: #{osnet_reid_forward.13} parent=1 // pred_check_branch
      %10 = sbr.rel (0) target = $region5
    $region4: #{osnet_reid_forward.13} parent=1 // pred_region
      _
    $region5: #{osnet_reid_forward.13} parent=1 // pred_fallthru
      _
    // Predicated region
    $region6: #{osnet_reid_forward.13} parent=1 // pred_check
      _
    $region7: #{osnet_reid_forward.13} parent=1 // pred_check_branch
      %12 = sbr.rel (0) target = $region9
    $region8: #{osnet_reid_forward.13} parent=1 // pred_region
      _
    $region9: #{osnet_reid_forward.13} parent=1 // pred_fallthru
      _
    // Predicated region
    $region10: #{osnet_reid_forward.13} parent=1 // pred_check
      _
    $region11: #{osnet_reid_forward.13} parent=1 // pred_check_branch
      %14 = sbr.rel (0) target = $region13
    $region12: #{osnet_reid_forward.13} parent=1 // pred_region
      _
    $region13: #{osnet_reid_forward.13} parent=1 // pred_fallthru
      _
    %v15 = vld [vmem:[%s0] sm:$0xff]
    %v16 = vld [vmem:[%s0 + $0x8] sm:$0xff]
    %v17 = vld [vmem:[%s0 + $0x10] sm:$0xff]
    %v18 = vld [vmem:[%s0 + $0x18] sm:$0xff]
    %v23 = vcombine.high %v15, %v15
    %v24 = vcombine.high %v16, %v16
    %v25 = vcombine.high %v17, %v17
    %v26 = vcombine.high %v18, %v18
    %vm31 = vcmask 1043456
    %v32 = vsel %vm31, %v15, 0.0
    %v33 = vrot.slane %v32, 4
    %v34 = vadd.f32 %v32, %v33
    %v35 = vrot.slane %v34, 2
    %v36 = vadd.f32 %v34, %v35
    %v37 = vrot.slane %v36, 1
    %v38 = vadd.f32 %v36, %v37
    %v39 = vsel %vm31, %v23, 0.0
    %v40 = vrot.slane %v39, 4
    %v41 = vadd.f32 %v39, %v40
    %v42 = vrot.slane %v41, 2
    %v43 = vadd.f32 %v41, %v42
    %v44 = vrot.slane %v43, 1
    %v45 = vadd.f32 %v43, %v44
    %v46 = vsel %vm31, %v16, 0.0
    %v47 = vrot.slane %v46, 4
    %v48 = vadd.f32 %v46, %v47
    %v49 = vrot.slane %v48, 2
    %v50 = vadd.f32 %v48, %v49
    %v51 = vrot.slane %v50, 1
    %v52 = vadd.f32 %v50, %v51
    %v53 = vsel %vm31, %v24, 0.0
    %v54 = vrot.slane %v53, 4
    %v55 = vadd.f32 %v53, %v54
    %v56 = vrot.slane %v55, 2
    %v57 = vadd.f32 %v55, %v56
    %v58 = vrot.slane %v57, 1
    %v59 = vadd.f32 %v57, %v58
    %v60 = vsel %vm31, %v17, 0.0
    %v61 = vrot.slane %v60, 4
    %v62 = vadd.f32 %v60, %v61
    %v63 = vrot.slane %v62, 2
    %v64 = vadd.f32 %v62, %v63
    %v65 = vrot.slane %v64, 1
    %v66 = vadd.f32 %v64, %v65
    %v67 = vsel %vm31, %v25, 0.0
    %v68 = vrot.slane %v67, 4
    %v69 = vadd.f32 %v67, %v68
    %v70 = vrot.slane %v69, 2
    %v71 = vadd.f32 %v69, %v70
    %v72 = vrot.slane %v71, 1
    %v73 = vadd.f32 %v71, %v72
    %v74 = vsel %vm31, %v18, 0.0
    %v75 = vrot.slane %v74, 4
    %v76 = vadd.f32 %v74, %v75
    %v77 = vrot.slane %v76, 2
    %v78 = vadd.f32 %v76, %v77
    %v79 = vrot.slane %v78, 1
    %v80 = vadd.f32 %v78, %v79
    %v81 = vsel %vm31, %v26, 0.0
    %v82 = vrot.slane %v81, 4
    %v83 = vadd.f32 %v81, %v82
    %v84 = vrot.slane %v83, 2
    %v85 = vadd.f32 %v83, %v84
    %v86 = vrot.slane %v85, 1
    %v87 = vadd.f32 %v85, %v86
    %v88 = vrcp.pop 4.0
    %v89 = vmul.f32 %v38, %v88
    %v90 = vmul.f32 %v45, %v88
    %v91 = vmul.f32 %v52, %v88
    %v92 = vmul.f32 %v59, %v88
    %v93 = vmul.f32 %v66, %v88
    %v94 = vmul.f32 %v73, %v88
    %v95 = vmul.f32 %v80, %v88
    %v96 = vmul.f32 %v87, %v88
    %v97 = vsel %vm31, %v15, -inf
    %v98 = vrot.slane %v97, 4
    %v99 = vmax.f32 %v97, %v98
    %v100 = vrot.slane %v99, 2
    %v101 = vmax.f32 %v99, %v100
    %v102 = vrot.slane %v101, 1
    %v103 = vmax.f32 %v101, %v102
    %v104 = vsel %vm31, %v23, -inf
    %v105 = vrot.slane %v104, 4
    %v106 = vmax.f32 %v104, %v105
    %v107 = vrot.slane %v106, 2
    %v108 = vmax.f32 %v106, %v107
    %v109 = vrot.slane %v108, 1
    %v110 = vmax.f32 %v108, %v109
    %v111 = vsel %vm31, %v16, -inf
    %v112 = vrot.slane %v111, 4
    %v113 = vmax.f32 %v111, %v112
    %v114 = vrot.slane %v113, 2
    %v115 = vmax.f32 %v113, %v114
    %v116 = vrot.slane %v115, 1
    %v117 = vmax.f32 %v115, %v116
    %v118 = vsel %vm31, %v24, -inf
    %v119 = vrot.slane %v118, 4
    %v120 = vmax.f32 %v118, %v119
    %v121 = vrot.slane %v120, 2
    %v122 = vmax.f32 %v120, %v121
    %v123 = vrot.slane %v122, 1
    %v124 = vmax.f32 %v122, %v123
    %v125 = vsel %vm31, %v17, -inf
    %v126 = vrot.slane %v125, 4
    %v127 = vmax.f32 %v125, %v126
    %v128 = vrot.slane %v127, 2
    %v129 = vmax.f32 %v127, %v128
    %v130 = vrot.slane %v129, 1
    %v131 = vmax.f32 %v129, %v130
    %v132 = vsel %vm31, %v25, -inf
    %v133 = vrot.slane %v132, 4
    %v134 = vmax.f32 %v132, %v133
    %v135 = vrot.slane %v134, 2
    %v136 = vmax.f32 %v134, %v135
    %v137 = vrot.slane %v136, 1
    %v138 = vmax.f32 %v136, %v137
    %v139 = vsel %vm31, %v18, -inf
    %v140 = vrot.slane %v139, 4
    %v141 = vmax.f32 %v139, %v140
    %v142 = vrot.slane %v141, 2
    %v143 = vmax.f32 %v141, %v142
    %v144 = vrot.slane %v143, 1
    %v145 = vmax.f32 %v143, %v144
    %v146 = vsel %vm31, %v26, -inf
    %v147 = vrot.slane %v146, 4
    %v148 = vmax.f32 %v146, %v147
    %v149 = vrot.slane %v148, 2
    %v150 = vmax.f32 %v148, %v149
    %v151 = vrot.slane %v150, 1
    %v152 = vmax.f32 %v150, %v151
    %v153 = vadd.f32 %v89, %v103
    %v154 = vadd.f32 %v90, %v110
    %v155 = vadd.f32 %v91, %v117
    %v156 = vadd.f32 %v92, %v124
    %v157 = vadd.f32 %v93, %v131
    %v158 = vadd.f32 %v94, %v138
    %v159 = vadd.f32 %v95, %v145
    %v160 = vadd.f32 %v96, %v152
    %v161 = vld [vmem:[%s1] sm:$0xf]
    %v163 = vlaneseq
    %v164 = vshrl.u32 %v163, 7
    %v165 = vsub.s32 0, %v164
    %v166 = vrot.slane %v161, %v165
    %v167 = vlaneseq
    %v168 = vshrl.u32 %v167, 7
    %v169 = vsub.s32 1, %v168
    %v170 = vrot.slane %v161, %v169
    %v171 = vlaneseq
    %v172 = vshrl.u32 %v171, 7
    %v173 = vsub.s32 2, %v172
    %v174 = vrot.slane %v161, %v173
    %v175 = vlaneseq
    %v176 = vshrl.u32 %v175, 7
    %v177 = vsub.s32 3, %v176
    %v178 = vrot.slane %v161, %v177
    %v183 = vmul.f32 %v153, %v166
    %v184 = vmul.f32 %v154, %v170
    %v185 = vmul.f32 %v155, %v174
    %v186 = vmul.f32 %v156, %v178
    %v187 = vmul.f32 %v157, %v166
    %v188 = vmul.f32 %v158, %v170
    %v189 = vmul.f32 %v159, %v174
    %v190 = vmul.f32 %v160, %v178
    %v191 = vld [vmem:[%s2] sm:$0xf]
    %v193 = vlaneseq
    %v194 = vshrl.u32 %v193, 7
    %v195 = vsub.s32 0, %v194
    %v196 = vrot.slane %v191, %v195
    %v197 = vlaneseq
    %v198 = vshrl.u32 %v197, 7
    %v199 = vsub.s32 1, %v198
    %v200 = vrot.slane %v191, %v199
    %v201 = vlaneseq
    %v202 = vshrl.u32 %v201, 7
    %v203 = vsub.s32 2, %v202
    %v204 = vrot.slane %v191, %v203
    %v205 = vlaneseq
    %v206 = vshrl.u32 %v205, 7
    %v207 = vsub.s32 3, %v206
    %v208 = vrot.slane %v191, %v207
    %v213 = vadd.f32 %v183, %v196
    %v214 = vadd.f32 %v184, %v200
    %v215 = vadd.f32 %v185, %v204
    %v216 = vadd.f32 %v186, %v208
    %v217 = vadd.f32 %v187, %v196
    %v218 = vadd.f32 %v188, %v200
    %v219 = vadd.f32 %v189, %v204
    %v220 = vadd.f32 %v190, %v208
    %v229 = vcombine.low %v213, %v214
    %v230 = vcombine.low %v215, %v216
    %v232 = vunpack.c.l.s4 1983009808
    %v233 = vunpack.c.0.s8 %v232
    %v234 = vlaneseq
    %v235 = vshrl.u32 %v234, 7
    %v236 = vsub.s32 %v233, %v235
    %v237 = vrot.slane %v229, %v236
    %v239 = vunpack.c.l.s4 1983009808
    %v240 = vunpack.c.0.s8 %v239
    %v241 = vlaneseq
    %v242 = vshrl.u32 %v241, 7
    %v243 = vsub.s32 %v240, %v242
    %v244 = vrot.slane %v230, %v243
    %v245 = vcombine.low %v237, %v244
    %v246 = vcombine.low %v217, %v218
    %v247 = vcombine.low %v219, %v220
    %v249 = vunpack.c.l.s4 1983009808
    %v250 = vunpack.c.0.s8 %v249
    %v251 = vlaneseq
    %v252 = vshrl.u32 %v251, 7
    %v253 = vsub.s32 %v250, %v252
    %v254 = vrot.slane %v246, %v253
    %v256 = vunpack.c.l.s4 1983009808
    %v257 = vunpack.c.0.s8 %v256
    %v258 = vlaneseq
    %v259 = vshrl.u32 %v258, 7
    %v260 = vsub.s32 %v257, %v259
    %v261 = vrot.slane %v247, %v260
    %v262 = vcombine.low %v254, %v261
    %vm263 = vcmask 1044484
    %v264 = vsel %vm263, %v245, %v245
    %vm265 = vcmask 1046534
    %v266 = vsel %vm265, %v245, %v264
    %v267 = vrot.slane %v262, 7
    %vm268 = vcmask 1041409
    %v269 = vsel %vm268, %v267, %v266
    %vm270 = vcmask 1043459
    %v271 = vsel %vm270, %v267, %v269
    %vm272 = vcmask 1045509
    %v273 = vsel %vm272, %v267, %v271
    %vm274 = vcmask 1047559
    %v275 = vsel %vm274, %v267, %v273
    %277 = vst [vmem:[#allocation2] sm:$0xff] %v275
    // Predicated region
    $region14: #{osnet_reid_forward.13} parent=1 // pred_check
      _
    $region15: #{osnet_reid_forward.13} parent=1 // pred_check_branch
      %279 = sbr.rel (0) target = $region17
    $region16: #{osnet_reid_forward.13} parent=1 // pred_region
      %s281 = ssub.s32 128, 128
      %282 = vsyncadd [#allocation3], %s281
      %s284 = sshll.u32 [#allocation2], 4
      %s285 = int_to_ptr.vmem [resolvable:$true] %s284
      %287 = dma.vmem_to_hbm [thread:$0]  %s285, 128, %s3, [#allocation3]
    $region17: #{osnet_reid_forward.13} parent=1 // pred_fallthru
      _
    // Predicated region
    $region18: #{osnet_reid_forward.13} parent=1 // pred_check
      _
    $region19: #{osnet_reid_forward.13} parent=1 // pred_check_branch
      %289 = sbr.rel (0) target = $region21
    $region20: #{osnet_reid_forward.13} parent=1 // pred_region
      %290 = dma.done [#allocation3], 128
    $region21: #{osnet_reid_forward.13} parent=1 // pred_fallthru
      _
    %291 = vsyncpa [#allocation3], 1

</llo_original>
